<compile_context>
chip_gen: v6e
topology: v6e:2x2x1
jax: 0.10.0
libtpu: 0.0.40
codegen_flags: <defaults>
</compile_context>

<pallas_src>
import jax
import jax.numpy as jnp
from jax import lax
from jax.experimental import pallas as pl
from jax.experimental.pallas import tpu as pltpu


def _sigmoid(x):
    # Same formulation in kernel and reference so their numerics match.
    return 0.5 * (jnp.tanh(0.5 * x) + 1.0)


def _elmo_bilstm_mix_kernel(mix_ref,    # SMEM [L+1]            softmax(s) * gamma
                            emb_ref,    # VMEM [T, Bp, D]  f32  time-major embeddings
                            w_ih_ref,   # VMEM [L, D, 8D]  bf16 (fwd | bwd on N axis)
                            w_hh_ref,   # VMEM [2, L, D, 4D] bf16
                            b_ref,      # VMEM [L, 8D]     f32  (fwd | bwd)
                            out_ref,    # VMEM [T, Bp, 2D] f32  packed fwd|bwd ScalarMix
                            gates_ref,  # VMEM scratch [T, Bp, 8D] f32  hoisted x-projection
                            h_ref):     # VMEM scratch [2, T, Bp, D] f32 hidden sequences
    T, Bp, D = emb_ref.shape
    L = w_ih_ref.shape[0]
    H4 = 4 * D

    # ScalarMix layer 0 = token embedding, duplicated on both feature halves.
    e = emb_ref[...]
    m0 = mix_ref[0]
    out_ref[:, :, 0:D] = m0 * e
    out_ref[:, :, D:2 * D] = m0 * e

    for l in range(L):
        # ---- Hoisted input projection: bulk MXU work, off the serial path. ----
        b_l = b_ref[l]                                           # [8D] f32
        if l == 0:
            # Both directions share the same input -> one [T*Bp, D] @ [D, 8D].
            x = e.reshape(T * Bp, D).astype(jnp.bfloat16)
            gates_ref[...] = (
                jnp.dot(x, w_ih_ref[l], preferred_element_type=jnp.float32)
                + b_l[None, :]
            ).reshape(T, Bp, 2 * H4)
        else:
            w_l = w_ih_ref[l]                                    # [D, 8D] bf16
            for d in range(2):
                x = h_ref[d].reshape(T * Bp, D).astype(jnp.bfloat16)
                gates_ref[:, :, d * H4:(d + 1) * H4] = (
                    jnp.dot(x, w_l[:, d * H4:(d + 1) * H4],
                            preferred_element_type=jnp.float32)
                    + b_l[d * H4:(d + 1) * H4][None, :]
                ).reshape(T, Bp, H4)

        # Recurrent weights for this layer, loaded once (small at bf16).
        whh_f = w_hh_ref[0, l]                                   # [D, 4D] bf16
        whh_b = w_hh_ref[1, l]
        mw = mix_ref[l + 1]

        zeros = jnp.zeros((Bp, D), jnp.float32)
        hf, cf = zeros, zeros          # forward  (time 0 .. T-1)
        hb, cb = zeros, zeros          # backward (time T-1 .. 0)

        # ---- Interleaved serial recurrence, fully static time indices. ----
        for i in range(T):
            tf = i
            tb = T - 1 - i

            gf = gates_ref[tf, :, 0:H4] + jnp.dot(
                hf.astype(jnp.bfloat16), whh_f, preferred_element_type=jnp.float32)
            gb = gates_ref[tb, :, H4:2 * H4] + jnp.dot(
                hb.astype(jnp.bfloat16), whh_b, preferred_element_type=jnp.float32)

            i_f = _sigmoid(gf[:, 0 * D:1 * D]); i_b = _sigmoid(gb[:, 0 * D:1 * D])
            f_f = _sigmoid(gf[:, 1 * D:2 * D]); f_b = _sigmoid(gb[:, 1 * D:2 * D])
            g_f = jnp.tanh(gf[:, 2 * D:3 * D]); g_b = jnp.tanh(gb[:, 2 * D:3 * D])
            o_f = _sigmoid(gf[:, 3 * D:4 * D]); o_b = _sigmoid(gb[:, 3 * D:4 * D])

            cf = f_f * cf + i_f * g_f
            cb = f_b * cb + i_b * g_b
            hf = o_f * jnp.tanh(cf)
            hb = o_b * jnp.tanh(cb)

            # Hidden sequence only needed as input to the NEXT layer.
            if l + 1 < L:
                h_ref[0, tf] = hf
                h_ref[1, tb] = hb

            # Fused ScalarMix accumulation (free filler on the latency-bound loop).
            out_ref[tf, :, 0:D] += mw * hf
            out_ref[tb, :, D:2 * D] += mw * hb


def elmo_embedder_forward(seq, params):
    """seq: int32 [B, T] word ids.  Returns float32 [B, T, 2*D]."""
    emb_table = params["embedding"]                     # [V, D] cached word embeddings
    D = emb_table.shape[1]
    L = params["w_ih_f"].shape[0]
    B, T = seq.shape
    H4 = 4 * D

    # Glue: embedding lookup (gather) and ScalarMix normalization.
    emb = emb_table[seq].astype(jnp.float32)                          # [B, T, D]
    mix = (jax.nn.softmax(params["scalar_mix"]) * params["gamma"]).astype(jnp.float32)

    # Time-major, sublane-padded activations.
    Bp = max(8, ((B + 7) // 8) * 8)
    emb_tm = jnp.transpose(emb, (1, 0, 2))                            # [T, B, D]
    if Bp != B:
        emb_tm = jnp.pad(emb_tm, ((0, 0), (0, Bp - B), (0, 0)))

    # bf16 weight storage (matmul operands); biases stay f32.
    w_ih = jnp.concatenate([params["w_ih_f"], params["w_ih_b"]],
                           axis=-1).astype(jnp.bfloat16)              # [L, D, 8D]
    w_hh = jnp.stack([params["w_hh_f"], params["w_hh_b"]]
                     ).astype(jnp.bfloat16)                           # [2, L, D, 4D]
    b = jnp.concatenate([params["b_f"], params["b_b"]],
                        axis=-1).astype(jnp.float32)                  # [L, 8D]

    cost = pl.CostEstimate(
        flops=int(2 * L * 2 * 2 * T * Bp * D * H4),
        transcendentals=int(2 * L * T * Bp * 5 * D),
        bytes_accessed=int(4 * (emb_tm.size + b.size + T * Bp * 2 * D)
                           + 2 * (w_ih.size + w_hh.size)),
    )

    out = pl.pallas_call(
        _elmo_bilstm_mix_kernel,
        out_shape=jax.ShapeDtypeStruct((T, Bp, 2 * D), jnp.float32),
        grid=(1,),
        in_specs=[
            pl.BlockSpec(memory_space=pltpu.MemorySpace.SMEM),          # mix
            pl.BlockSpec((T, Bp, D), lambda i: (0, 0, 0)),              # emb
            pl.BlockSpec((L, D, 2 * H4), lambda i: (0, 0, 0)),          # w_ih
            pl.BlockSpec((2, L, D, H4), lambda i: (0, 0, 0, 0)),        # w_hh
            pl.BlockSpec((L, 2 * H4), lambda i: (0, 0)),                # b
        ],
        out_specs=pl.BlockSpec((T, Bp, 2 * D), lambda i: (0, 0, 0)),
        scratch_shapes=[
            pltpu.VMEM((T, Bp, 2 * H4), jnp.float32),   # hoisted gate projections
            pltpu.VMEM((2, T, Bp, D), jnp.float32),     # hidden sequences (reused per layer)
        ],
        compiler_params=pltpu.CompilerParams(
            dimension_semantics=("arbitrary",),
            vmem_limit_bytes=32 * 1024 * 1024,
        ),
        cost_estimate=cost,
    )(mix, emb_tm, w_ih, w_hh, b)

    # [T, Bp, 2D] (fwd | bwd packed on features) -> [B, T, 2D]
    return jnp.transpose(out[:, :B, :], (1, 0, 2))


def _reference(seq, params):
    """Pure-JAX reference with identical semantics (bf16 at matmul boundaries)."""
    emb = params["embedding"][seq].astype(jnp.float32)                # [B, T, D]
    mix = jax.nn.softmax(params["scalar_mix"]) * params["gamma"]
    B, T, D = emb.shape
    L = params["w_ih_f"].shape[0]

    def run_dir(w_ih, w_hh, b, reverse):
        xs = emb
        mixed = mix[0] * emb
        for l in range(L):
            wi = w_ih[l].astype(jnp.bfloat16)
            wh = w_hh[l].astype(jnp.bfloat16)
            bl = b[l].astype(jnp.float32)

            def cell(carry, x, wi=wi, wh=wh, bl=bl):
                h, c = carry
                g = (jnp.dot(x.astype(jnp.bfloat16), wi,
                             preferred_element_type=jnp.float32)
                     + jnp.dot(h.astype(jnp.bfloat16), wh,
                               preferred_element_type=jnp.float32) + bl)
                i_g, f_g, g_g, o_g = jnp.split(g, 4, axis=-1)
                c = _sigmoid(f_g) * c + _sigmoid(i_g) * jnp.tanh(g_g)
                h = _sigmoid(o_g) * jnp.tanh(c)
                return (h, c), h

            h0 = jnp.zeros((B, D), jnp.float32)
            _, hs = lax.scan(cell, (h0, h0), jnp.swapaxes(xs, 0, 1), reverse=reverse)
            xs = jnp.swapaxes(hs, 0, 1)                               # [B, T, D]
            mixed = mixed + mix[l + 1] * xs
        return mixed

    of = run_dir(params["w_ih_f"], params["w_hh_f"], params["b_f"], reverse=False)
    ob = run_dir(params["w_ih_b"], params["w_hh_b"], params["b_b"], reverse=True)
    return jnp.concatenate([of, ob], axis=-1)


if __name__ == "__main__":
    vocab_size = 50
    D = 64       # per-direction hidden / projection dim  -> output dim = 2*D = 128
    L = 2        # number of BiLSTM layers (ELMo default)
    B, T = 2, 8  # batch, sequence length

    key = jax.random.PRNGKey(0)
    keys = jax.random.split(key, 9)
    params = {
        "embedding": 0.1 * jax.random.normal(keys[0], (vocab_size, D), jnp.float32),
        "w_ih_f": 0.1 * jax.random.normal(keys[1], (L, D, 4 * D), jnp.float32),
        "w_hh_f": 0.1 * jax.random.normal(keys[2], (L, D, 4 * D), jnp.float32),
        "b_f":    0.1 * jax.random.normal(keys[3], (L, 4 * D), jnp.float32),
        "w_ih_b": 0.1 * jax.random.normal(keys[4], (L, D, 4 * D), jnp.float32),
        "w_hh_b": 0.1 * jax.random.normal(keys[5], (L, D, 4 * D), jnp.float32),
        "b_b":    0.1 * jax.random.normal(keys[6], (L, 4 * D), jnp.float32),
        "scalar_mix": jax.random.normal(keys[7], (L + 1,), jnp.float32),
        "gamma": jnp.float32(1.0),
    }
    seq = jax.random.randint(keys[8], (B, T), 0, vocab_size, dtype=jnp.int32)

    out = jax.block_until_ready(elmo_embedder_forward(seq, params))
    assert out.shape == (B, T, 2 * D), out.shape
    assert bool(jnp.all(jnp.isfinite(out)))

    ref = jax.block_until_ready(_reference(seq, params))
    max_err = float(jnp.max(jnp.abs(out - ref)))
    # Tight bound: kernel and reference use identical bf16-at-matmul casts and
    # the same sigmoid formulation, so residual error is transcendental-impl noise.
    assert max_err < 2e-3, f"max abs err vs reference: {max_err}"

    print("KERNEL_OK")
</pallas_src>

<mosaic_0001>
module attributes {stable_mosaic.version = 11 : i64} {
  func.func @_elmo_bilstm_mix_kernel(%arg0: i32, %arg1: memref<3xf32, #tpu.memory_space<smem>>, %arg2: memref<8x8x64xf32, #tpu.memory_space<vmem>>, %arg3: memref<2x64x512xbf16, #tpu.memory_space<vmem>>, %arg4: memref<2x2x64x256xbf16, #tpu.memory_space<vmem>>, %arg5: memref<2x512xf32, #tpu.memory_space<vmem>>, %arg6: memref<8x8x128xf32, #tpu.memory_space<vmem>>, %arg7: memref<8x8x512xf32, #tpu.memory_space<vmem>>, %arg8: memref<2x8x8x64xf32, #tpu.memory_space<vmem>>) attributes {dimension_semantics = [#tpu.dimension_semantics<arbitrary>], iteration_bounds = array<i64: 1>, scalar_prefetch = 0 : i64, scratch_operands = 2 : i64, tpu.core_type = #tpu.core_type<tc>, window_params = [{transform_indices = @transform_0, window_bounds = array<i64: 3>}, {pipeline_mode = #tpu.pipeline_mode<synchronous>, transform_indices = @transform_1, window_bounds = array<i64: 8, 8, 64>}, {pipeline_mode = #tpu.pipeline_mode<synchronous>, transform_indices = @transform_2, window_bounds = array<i64: 2, 64, 512>}, {pipeline_mode = #tpu.pipeline_mode<synchronous>, transform_indices = @transform_3, window_bounds = array<i64: 2, 2, 64, 256>}, {pipeline_mode = #tpu.pipeline_mode<synchronous>, transform_indices = @transform_4, window_bounds = array<i64: 2, 512>}, {pipeline_mode = #tpu.pipeline_mode<synchronous>, transform_indices = @transform_5, window_bounds = array<i64: 8, 8, 128>}]} {
    %c0 = arith.constant 0 : index
    %c0_0 = arith.constant 0 : index
    %c0_1 = arith.constant 0 : index
    %0 = vector.load %arg2[%c0, %c0_0, %c0_1] : memref<8x8x64xf32, #tpu.memory_space<vmem>>, vector<8x8x64xf32>
    %c0_2 = arith.constant 0 : index
    %1 = memref.load %arg1[%c0_2] : memref<3xf32, #tpu.memory_space<smem>>
    %2 = vector.broadcast %1 : f32 to vector<8x8x64xf32>
    %3 = arith.mulf %2, %0 : vector<8x8x64xf32>
    %c0_3 = arith.constant 0 : index
    %c0_4 = arith.constant 0 : index
    %c0_5 = arith.constant 0 : index
    %4 = vector.load %arg6[%c0_3, %c0_4, %c0_5] : memref<8x8x128xf32, #tpu.memory_space<vmem>>, vector<8x8x64xf32>
    tpu.vector_store %arg6[%c0_3, %c0_4, %c0_5], %3 {strides = array<i32>} : memref<8x8x128xf32, #tpu.memory_space<vmem>>, vector<8x8x64xf32>,
    %5 = vector.broadcast %1 : f32 to vector<8x8x64xf32>
    %6 = arith.mulf %5, %0 : vector<8x8x64xf32>
    %c0_6 = arith.constant 0 : index
    %c0_7 = arith.constant 0 : index
    %c64 = arith.constant 64 : index
    %7 = vector.load %arg6[%c0_6, %c0_7, %c64] : memref<8x8x128xf32, #tpu.memory_space<vmem>>, vector<8x8x64xf32>
    tpu.vector_store %arg6[%c0_6, %c0_7, %c64], %6 {strides = array<i32>} : memref<8x8x128xf32, #tpu.memory_space<vmem>>, vector<8x8x64xf32>,
    %c0_8 = arith.constant 0 : index
    %c0_9 = arith.constant 0 : index
    %8 = vector.load %arg5[%c0_8, %c0_9] : memref<2x512xf32, #tpu.memory_space<vmem>>, vector<1x512xf32>
    %9 = vector.shape_cast %8 : vector<1x512xf32> to vector<512xf32>
    %10 = vector.shape_cast %0 : vector<8x8x64xf32> to vector<64x64xf32>
    %11 = arith.truncf %10 : vector<64x64xf32> to vector<64x64xbf16>
    %c0_10 = arith.constant 0 : index
    %c0_11 = arith.constant 0 : index
    %c0_12 = arith.constant 0 : index
    %12 = vector.load %arg3[%c0_10, %c0_11, %c0_12] : memref<2x64x512xbf16, #tpu.memory_space<vmem>>, vector<1x64x512xbf16>
    %13 = vector.shape_cast %12 : vector<1x64x512xbf16> to vector<64x512xbf16>
    %cst = arith.constant dense<0.000000e+00> : vector<64x512xf32>
    %14 = tpu.matmul %11, %13, %cst {dimension_numbers = #tpu.dot_dimension_numbers<[1], [0], [0], [1], [0, 0, 1, 1], [], []>} : vector<64x64xbf16>, vector<64x512xbf16>, vector<64x512xf32> -> vector<64x512xf32>
    %15 = vector.shape_cast %9 : vector<512xf32> to vector<1x512xf32>
    %16 = vector.broadcast %15 : vector<1x512xf32> to vector<64x512xf32>
    %17 = arith.addf %14, %16 : vector<64x512xf32>
    %18 = vector.shape_cast %17 : vector<64x512xf32> to vector<8x8x512xf32>
    %c0_13 = arith.constant 0 : index
    %c0_14 = arith.constant 0 : index
    %c0_15 = arith.constant 0 : index
    %19 = vector.load %arg7[%c0_13, %c0_14, %c0_15] : memref<8x8x512xf32, #tpu.memory_space<vmem>>, vector<8x8x512xf32>
    tpu.vector_store %arg7[%c0_13, %c0_14, %c0_15], %18 {strides = array<i32>} : memref<8x8x512xf32, #tpu.memory_space<vmem>>, vector<8x8x512xf32>,
    %c0_16 = arith.constant 0 : index
    %c0_17 = arith.constant 0 : index
    %c0_18 = arith.constant 0 : index
    %c0_19 = arith.constant 0 : index
    %20 = vector.load %arg4[%c0_16, %c0_17, %c0_18, %c0_19] : memref<2x2x64x256xbf16, #tpu.memory_space<vmem>>, vector<1x1x64x256xbf16>
    %21 = vector.shape_cast %20 : vector<1x1x64x256xbf16> to vector<64x256xbf16>
    %c1 = arith.constant 1 : index
    %c0_20 = arith.constant 0 : index
    %c0_21 = arith.constant 0 : index
    %c0_22 = arith.constant 0 : index
    %22 = vector.load %arg4[%c1, %c0_20, %c0_21, %c0_22] : memref<2x2x64x256xbf16, #tpu.memory_space<vmem>>, vector<1x1x64x256xbf16>
    %23 = vector.shape_cast %22 : vector<1x1x64x256xbf16> to vector<64x256xbf16>
    %c1_23 = arith.constant 1 : index
    %24 = memref.load %arg1[%c1_23] : memref<3xf32, #tpu.memory_space<smem>>
    %cst_24 = arith.constant 0.000000e+00 : f32
    %25 = vector.broadcast %cst_24 : f32 to vector<8x64xf32>
    %c0_25 = arith.constant 0 : index
    %c0_26 = arith.constant 0 : index
    %c0_27 = arith.constant 0 : index
    %26 = vector.load %arg7[%c0_25, %c0_26, %c0_27] : memref<8x8x512xf32, #tpu.memory_space<vmem>>, vector<1x8x256xf32>
    %27 = vector.shape_cast %26 : vector<1x8x256xf32> to vector<8x256xf32>
    %28 = arith.truncf %25 : vector<8x64xf32> to vector<8x64xbf16>
    %cst_28 = arith.constant dense<0.000000e+00> : vector<8x256xf32>
    %29 = tpu.matmul %28, %21, %cst_28 {dimension_numbers = #tpu.dot_dimension_numbers<[1], [0], [0], [1], [0, 0, 1, 1], [], []>} : vector<8x64xbf16>, vector<64x256xbf16>, vector<8x256xf32> -> vector<8x256xf32>
    %30 = arith.addf %27, %29 : vector<8x256xf32>
    %c7 = arith.constant 7 : index
    %c0_29 = arith.constant 0 : index
    %c256 = arith.constant 256 : index
    %31 = vector.load %arg7[%c7, %c0_29, %c256] : memref<8x8x512xf32, #tpu.memory_space<vmem>>, vector<1x8x256xf32>
    %32 = vector.shape_cast %31 : vector<1x8x256xf32> to vector<8x256xf32>
    %33 = arith.truncf %25 : vector<8x64xf32> to vector<8x64xbf16>
    %cst_30 = arith.constant dense<0.000000e+00> : vector<8x256xf32>
    %34 = tpu.matmul %33, %23, %cst_30 {dimension_numbers = #tpu.dot_dimension_numbers<[1], [0], [0], [1], [0, 0, 1, 1], [], []>} : vector<8x64xbf16>, vector<64x256xbf16>, vector<8x256xf32> -> vector<8x256xf32>
    %35 = arith.addf %32, %34 : vector<8x256xf32>
    %36 = vector.extract_strided_slice %30 {offsets = [0, 0], sizes = [8, 64], strides = [1, 1]} : vector<8x256xf32> to vector<8x64xf32>
    %cst_31 = arith.constant 5.000000e-01 : f32
    %37 = vector.broadcast %cst_31 : f32 to vector<8x64xf32>
    %38 = arith.mulf %37, %36 : vector<8x64xf32>
    %39 = math.tanh %38 : vector<8x64xf32>
    %cst_32 = arith.constant 1.000000e+00 : f32
    %40 = vector.broadcast %cst_32 : f32 to vector<8x64xf32>
    %41 = arith.addf %39, %40 : vector<8x64xf32>
    %cst_33 = arith.constant 5.000000e-01 : f32
    %42 = vector.broadcast %cst_33 : f32 to vector<8x64xf32>
    %43 = arith.mulf %42, %41 : vector<8x64xf32>
    %44 = vector.extract_strided_slice %35 {offsets = [0, 0], sizes = [8, 64], strides = [1, 1]} : vector<8x256xf32> to vector<8x64xf32>
    %cst_34 = arith.constant 5.000000e-01 : f32
    %45 = vector.broadcast %cst_34 : f32 to vector<8x64xf32>
    %46 = arith.mulf %45, %44 : vector<8x64xf32>
    %47 = math.tanh %46 : vector<8x64xf32>
    %cst_35 = arith.constant 1.000000e+00 : f32
    %48 = vector.broadcast %cst_35 : f32 to vector<8x64xf32>
    %49 = arith.addf %47, %48 : vector<8x64xf32>
    %cst_36 = arith.constant 5.000000e-01 : f32
    %50 = vector.broadcast %cst_36 : f32 to vector<8x64xf32>
    %51 = arith.mulf %50, %49 : vector<8x64xf32>
    %52 = vector.extract_strided_slice %30 {offsets = [0, 64], sizes = [8, 64], strides = [1, 1]} : vector<8x256xf32> to vector<8x64xf32>
    %cst_37 = arith.constant 5.000000e-01 : f32
    %53 = vector.broadcast %cst_37 : f32 to vector<8x64xf32>
    %54 = arith.mulf %53, %52 : vector<8x64xf32>
    %55 = math.tanh %54 : vector<8x64xf32>
    %cst_38 = arith.constant 1.000000e+00 : f32
    %56 = vector.broadcast %cst_38 : f32 to vector<8x64xf32>
    %57 = arith.addf %55, %56 : vector<8x64xf32>
    %cst_39 = arith.constant 5.000000e-01 : f32
    %58 = vector.broadcast %cst_39 : f32 to vector<8x64xf32>
    %59 = arith.mulf %58, %57 : vector<8x64xf32>
    %60 = vector.extract_strided_slice %35 {offsets = [0, 64], sizes = [8, 64], strides = [1, 1]} : vector<8x256xf32> to vector<8x64xf32>
    %cst_40 = arith.constant 5.000000e-01 : f32
    %61 = vector.broadcast %cst_40 : f32 to vector<8x64xf32>
    %62 = arith.mulf %61, %60 : vector<8x64xf32>
    %63 = math.tanh %62 : vector<8x64xf32>
    %cst_41 = arith.constant 1.000000e+00 : f32
    %64 = vector.broadcast %cst_41 : f32 to vector<8x64xf32>
    %65 = arith.addf %63, %64 : vector<8x64xf32>
    %cst_42 = arith.constant 5.000000e-01 : f32
    %66 = vector.broadcast %cst_42 : f32 to vector<8x64xf32>
    %67 = arith.mulf %66, %65 : vector<8x64xf32>
    %68 = vector.extract_strided_slice %30 {offsets = [0, 128], sizes = [8, 64], strides = [1, 1]} : vector<8x256xf32> to vector<8x64xf32>
    %69 = math.tanh %68 : vector<8x64xf32>
    %70 = vector.extract_strided_slice %35 {offsets = [0, 128], sizes = [8, 64], strides = [1, 1]} : vector<8x256xf32> to vector<8x64xf32>
    %71 = math.tanh %70 : vector<8x64xf32>
    %72 = vector.extract_strided_slice %30 {offsets = [0, 192], sizes = [8, 64], strides = [1, 1]} : vector<8x256xf32> to vector<8x64xf32>
    %cst_43 = arith.constant 5.000000e-01 : f32
    %73 = vector.broadcast %cst_43 : f32 to vector<8x64xf32>
    %74 = arith.mulf %73, %72 : vector<8x64xf32>
    %75 = math.tanh %74 : vector<8x64xf32>
    %cst_44 = arith.constant 1.000000e+00 : f32
    %76 = vector.broadcast %cst_44 : f32 to vector<8x64xf32>
    %77 = arith.addf %75, %76 : vector<8x64xf32>
    %cst_45 = arith.constant 5.000000e-01 : f32
    %78 = vector.broadcast %cst_45 : f32 to vector<8x64xf32>
    %79 = arith.mulf %78, %77 : vector<8x64xf32>
    %80 = vector.extract_strided_slice %35 {offsets = [0, 192], sizes = [8, 64], strides = [1, 1]} : vector<8x256xf32> to vector<8x64xf32>
    %cst_46 = arith.constant 5.000000e-01 : f32
    %81 = vector.broadcast %cst_46 : f32 to vector<8x64xf32>
    %82 = arith.mulf %81, %80 : vector<8x64xf32>
    %83 = math.tanh %82 : vector<8x64xf32>
    %cst_47 = arith.constant 1.000000e+00 : f32
    %84 = vector.broadcast %cst_47 : f32 to vector<8x64xf32>
    %85 = arith.addf %83, %84 : vector<8x64xf32>
    %cst_48 = arith.constant 5.000000e-01 : f32
    %86 = vector.broadcast %cst_48 : f32 to vector<8x64xf32>
    %87 = arith.mulf %86, %85 : vector<8x64xf32>
    %88 = arith.mulf %59, %25 : vector<8x64xf32>
    %89 = arith.mulf %43, %69 : vector<8x64xf32>
    %90 = arith.addf %88, %89 : vector<8x64xf32>
    %91 = arith.mulf %67, %25 : vector<8x64xf32>
    %92 = arith.mulf %51, %71 : vector<8x64xf32>
    %93 = arith.addf %91, %92 : vector<8x64xf32>
    %94 = math.tanh %90 : vector<8x64xf32>
    %95 = arith.mulf %79, %94 : vector<8x64xf32>
    %96 = math.tanh %93 : vector<8x64xf32>
    %97 = arith.mulf %87, %96 : vector<8x64xf32>
    %c0_49 = arith.constant 0 : index
    %c0_50 = arith.constant 0 : index
    %c0_51 = arith.constant 0 : index
    %c0_52 = arith.constant 0 : index
    %98 = vector.load %arg8[%c0_49, %c0_50, %c0_51, %c0_52] : memref<2x8x8x64xf32, #tpu.memory_space<vmem>>, vector<1x1x8x64xf32>
    %99 = vector.shape_cast %98 : vector<1x1x8x64xf32> to vector<8x64xf32>
    %100 = vector.shape_cast %95 : vector<8x64xf32> to vector<1x1x8x64xf32>
    tpu.vector_store %arg8[%c0_49, %c0_50, %c0_51, %c0_52], %100 {strides = array<i32>} : memref<2x8x8x64xf32, #tpu.memory_space<vmem>>, vector<1x1x8x64xf32>,
    %c1_53 = arith.constant 1 : index
    %c7_54 = arith.constant 7 : index
    %c0_55 = arith.constant 0 : index
    %c0_56 = arith.constant 0 : index
    %101 = vector.load %arg8[%c1_53, %c7_54, %c0_55, %c0_56] : memref<2x8x8x64xf32, #tpu.memory_space<vmem>>, vector<1x1x8x64xf32>
    %102 = vector.shape_cast %101 : vector<1x1x8x64xf32> to vector<8x64xf32>
    %103 = vector.shape_cast %97 : vector<8x64xf32> to vector<1x1x8x64xf32>
    tpu.vector_store %arg8[%c1_53, %c7_54, %c0_55, %c0_56], %103 {strides = array<i32>} : memref<2x8x8x64xf32, #tpu.memory_space<vmem>>, vector<1x1x8x64xf32>,
    %c0_57 = arith.constant 0 : index
    %c0_58 = arith.constant 0 : index
    %c0_59 = arith.constant 0 : index
    %104 = vector.load %arg6[%c0_57, %c0_58, %c0_59] : memref<8x8x128xf32, #tpu.memory_space<vmem>>, vector<1x8x64xf32>
    %105 = vector.shape_cast %104 : vector<1x8x64xf32> to vector<8x64xf32>
    %106 = vector.broadcast %24 : f32 to vector<8x64xf32>
    %107 = arith.mulf %106, %95 : vector<8x64xf32>
    %108 = arith.addf %105, %107 : vector<8x64xf32>
    %c0_60 = arith.constant 0 : index
    %c0_61 = arith.constant 0 : index
    %c0_62 = arith.constant 0 : index
    %109 = vector.load %arg6[%c0_60, %c0_61, %c0_62] : memref<8x8x128xf32, #tpu.memory_space<vmem>>, vector<1x8x64xf32>
    %110 = vector.shape_cast %109 : vector<1x8x64xf32> to vector<8x64xf32>
    %111 = vector.shape_cast %108 : vector<8x64xf32> to vector<1x8x64xf32>
    tpu.vector_store %arg6[%c0_60, %c0_61, %c0_62], %111 {strides = array<i32>} : memref<8x8x128xf32, #tpu.memory_space<vmem>>, vector<1x8x64xf32>,
    %c7_63 = arith.constant 7 : index
    %c0_64 = arith.constant 0 : index
    %c64_65 = arith.constant 64 : index
    %112 = vector.load %arg6[%c7_63, %c0_64, %c64_65] : memref<8x8x128xf32, #tpu.memory_space<vmem>>, vector<1x8x64xf32>
    %113 = vector.shape_cast %112 : vector<1x8x64xf32> to vector<8x64xf32>
    %114 = vector.broadcast %24 : f32 to vector<8x64xf32>
    %115 = arith.mulf %114, %97 : vector<8x64xf32>
    %116 = arith.addf %113, %115 : vector<8x64xf32>
    %c7_66 = arith.constant 7 : index
    %c0_67 = arith.constant 0 : index
    %c64_68 = arith.constant 64 : index
    %117 = vector.load %arg6[%c7_66, %c0_67, %c64_68] : memref<8x8x128xf32, #tpu.memory_space<vmem>>, vector<1x8x64xf32>
    %118 = vector.shape_cast %117 : vector<1x8x64xf32> to vector<8x64xf32>
    %119 = vector.shape_cast %116 : vector<8x64xf32> to vector<1x8x64xf32>
    tpu.vector_store %arg6[%c7_66, %c0_67, %c64_68], %119 {strides = array<i32>} : memref<8x8x128xf32, #tpu.memory_space<vmem>>, vector<1x8x64xf32>,
    %c1_69 = arith.constant 1 : index
    %c0_70 = arith.constant 0 : index
    %c0_71 = arith.constant 0 : index
    %120 = vector.load %arg7[%c1_69, %c0_70, %c0_71] : memref<8x8x512xf32, #tpu.memory_space<vmem>>, vector<1x8x256xf32>
    %121 = vector.shape_cast %120 : vector<1x8x256xf32> to vector<8x256xf32>
    %122 = arith.truncf %95 : vector<8x64xf32> to vector<8x64xbf16>
    %cst_72 = arith.constant dense<0.000000e+00> : vector<8x256xf32>
    %123 = tpu.matmul %122, %21, %cst_72 {dimension_numbers = #tpu.dot_dimension_numbers<[1], [0], [0], [1], [0, 0, 1, 1], [], []>} : vector<8x64xbf16>, vector<64x256xbf16>, vector<8x256xf32> -> vector<8x256xf32>
    %124 = arith.addf %121, %123 : vector<8x256xf32>
    %c6 = arith.constant 6 : index
    %c0_73 = arith.constant 0 : index
    %c256_74 = arith.constant 256 : index
    %125 = vector.load %arg7[%c6, %c0_73, %c256_74] : memref<8x8x512xf32, #tpu.memory_space<vmem>>, vector<1x8x256xf32>
    %126 = vector.shape_cast %125 : vector<1x8x256xf32> to vector<8x256xf32>
    %127 = arith.truncf %97 : vector<8x64xf32> to vector<8x64xbf16>
    %cst_75 = arith.constant dense<0.000000e+00> : vector<8x256xf32>
    %128 = tpu.matmul %127, %23, %cst_75 {dimension_numbers = #tpu.dot_dimension_numbers<[1], [0], [0], [1], [0, 0, 1, 1], [], []>} : vector<8x64xbf16>, vector<64x256xbf16>, vector<8x256xf32> -> vector<8x256xf32>
    %129 = arith.addf %126, %128 : vector<8x256xf32>
    %130 = vector.extract_strided_slice %124 {offsets = [0, 0], sizes = [8, 64], strides = [1, 1]} : vector<8x256xf32> to vector<8x64xf32>
    %cst_76 = arith.constant 5.000000e-01 : f32
    %131 = vector.broadcast %cst_76 : f32 to vector<8x64xf32>
    %132 = arith.mulf %131, %130 : vector<8x64xf32>
    %133 = math.tanh %132 : vector<8x64xf32>
    %cst_77 = arith.constant 1.000000e+00 : f32
    %134 = vector.broadcast %cst_77 : f32 to vector<8x64xf32>
    %135 = arith.addf %133, %134 : vector<8x64xf32>
    %cst_78 = arith.constant 5.000000e-01 : f32
    %136 = vector.broadcast %cst_78 : f32 to vector<8x64xf32>
    %137 = arith.mulf %136, %135 : vector<8x64xf32>
    %138 = vector.extract_strided_slice %129 {offsets = [0, 0], sizes = [8, 64], strides = [1, 1]} : vector<8x256xf32> to vector<8x64xf32>
    %cst_79 = arith.constant 5.000000e-01 : f32
    %139 = vector.broadcast %cst_79 : f32 to vector<8x64xf32>
    %140 = arith.mulf %139, %138 : vector<8x64xf32>
    %141 = math.tanh %140 : vector<8x64xf32>
    %cst_80 = arith.constant 1.000000e+00 : f32
    %142 = vector.broadcast %cst_80 : f32 to vector<8x64xf32>
    %143 = arith.addf %141, %142 : vector<8x64xf32>
    %cst_81 = arith.constant 5.000000e-01 : f32
    %144 = vector.broadcast %cst_81 : f32 to vector<8x64xf32>
    %145 = arith.mulf %144, %143 : vector<8x64xf32>
    %146 = vector.extract_strided_slice %124 {offsets = [0, 64], sizes = [8, 64], strides = [1, 1]} : vector<8x256xf32> to vector<8x64xf32>
    %cst_82 = arith.constant 5.000000e-01 : f32
    %147 = vector.broadcast %cst_82 : f32 to vector<8x64xf32>
    %148 = arith.mulf %147, %146 : vector<8x64xf32>
    %149 = math.tanh %148 : vector<8x64xf32>
    %cst_83 = arith.constant 1.000000e+00 : f32
    %150 = vector.broadcast %cst_83 : f32 to vector<8x64xf32>
    %151 = arith.addf %149, %150 : vector<8x64xf32>
    %cst_84 = arith.constant 5.000000e-01 : f32
    %152 = vector.broadcast %cst_84 : f32 to vector<8x64xf32>
    %153 = arith.mulf %152, %151 : vector<8x64xf32>
    %154 = vector.extract_strided_slice %129 {offsets = [0, 64], sizes = [8, 64], strides = [1, 1]} : vector<8x256xf32> to vector<8x64xf32>
    %cst_85 = arith.constant 5.000000e-01 : f32
    %155 = vector.broadcast %cst_85 : f32 to vector<8x64xf32>
    %156 = arith.mulf %155, %154 : vector<8x64xf32>
    %157 = math.tanh %156 : vector<8x64xf32>
    %cst_86 = arith.constant 1.000000e+00 : f32
    %158 = vector.broadcast %cst_86 : f32 to vector<8x64xf32>
    %159 = arith.addf %157, %158 : vector<8x64xf32>
    %cst_87 = arith.constant 5.000000e-01 : f32
    %160 = vector.broadcast %cst_87 : f32 to vector<8x64xf32>
    %161 = arith.mulf %160, %159 : vector<8x64xf32>
    %162 = vector.extract_strided_slice %124 {offsets = [0, 128], sizes = [8, 64], strides = [1, 1]} : vector<8x256xf32> to vector<8x64xf32>
    %163 = math.tanh %162 : vector<8x64xf32>
    %164 = vector.extract_strided_slice %129 {offsets = [0, 128], sizes = [8, 64], strides = [1, 1]} : vector<8x256xf32> to vector<8x64xf32>
    %165 = math.tanh %164 : vector<8x64xf32>
    %166 = vector.extract_strided_slice %124 {offsets = [0, 192], sizes = [8, 64], strides = [1, 1]} : vector<8x256xf32> to vector<8x64xf32>
    %cst_88 = arith.constant 5.000000e-01 : f32
    %167 = vector.broadcast %cst_88 : f32 to vector<8x64xf32>
    %168 = arith.mulf %167, %166 : vector<8x64xf32>
    %169 = math.tanh %168 : vector<8x64xf32>
    %cst_89 = arith.constant 1.000000e+00 : f32
    %170 = vector.broadcast %cst_89 : f32 to vector<8x64xf32>
    %171 = arith.addf %169, %170 : vector<8x64xf32>
    %cst_90 = arith.constant 5.000000e-01 : f32
    %172 = vector.broadcast %cst_90 : f32 to vector<8x64xf32>
    %173 = arith.mulf %172, %171 : vector<8x64xf32>
    %174 = vector.extract_strided_slice %129 {offsets = [0, 192], sizes = [8, 64], strides = [1, 1]} : vector<8x256xf32> to vector<8x64xf32>
    %cst_91 = arith.constant 5.000000e-01 : f32
    %175 = vector.broadcast %cst_91 : f32 to vector<8x64xf32>
    %176 = arith.mulf %175, %174 : vector<8x64xf32>
    %177 = math.tanh %176 : vector<8x64xf32>
    %cst_92 = arith.constant 1.000000e+00 : f32
    %178 = vector.broadcast %cst_92 : f32 to vector<8x64xf32>
    %179 = arith.addf %177, %178 : vector<8x64xf32>
    %cst_93 = arith.constant 5.000000e-01 : f32
    %180 = vector.broadcast %cst_93 : f32 to vector<8x64xf32>
    %181 = arith.mulf %180, %179 : vector<8x64xf32>
    %182 = arith.mulf %153, %90 : vector<8x64xf32>
    %183 = arith.mulf %137, %163 : vector<8x64xf32>
    %184 = arith.addf %182, %183 : vector<8x64xf32>
    %185 = arith.mulf %161, %93 : vector<8x64xf32>
    %186 = arith.mulf %145, %165 : vector<8x64xf32>
    %187 = arith.addf %185, %186 : vector<8x64xf32>
    %188 = math.tanh %184 : vector<8x64xf32>
    %189 = arith.mulf %173, %188 : vector<8x64xf32>
    %190 = math.tanh %187 : vector<8x64xf32>
    %191 = arith.mulf %181, %190 : vector<8x64xf32>
    %c0_94 = arith.constant 0 : index
    %c1_95 = arith.constant 1 : index
    %c0_96 = arith.constant 0 : index
    %c0_97 = arith.constant 0 : index
    %192 = vector.load %arg8[%c0_94, %c1_95, %c0_96, %c0_97] : memref<2x8x8x64xf32, #tpu.memory_space<vmem>>, vector<1x1x8x64xf32>
    %193 = vector.shape_cast %192 : vector<1x1x8x64xf32> to vector<8x64xf32>
    %194 = vector.shape_cast %189 : vector<8x64xf32> to vector<1x1x8x64xf32>
    tpu.vector_store %arg8[%c0_94, %c1_95, %c0_96, %c0_97], %194 {strides = array<i32>} : memref<2x8x8x64xf32, #tpu.memory_space<vmem>>, vector<1x1x8x64xf32>,
    %c1_98 = arith.constant 1 : index
    %c6_99 = arith.constant 6 : index
    %c0_100 = arith.constant 0 : index
    %c0_101 = arith.constant 0 : index
    %195 = vector.load %arg8[%c1_98, %c6_99, %c0_100, %c0_101] : memref<2x8x8x64xf32, #tpu.memory_space<vmem>>, vector<1x1x8x64xf32>
    %196 = vector.shape_cast %195 : vector<1x1x8x64xf32> to vector<8x64xf32>
    %197 = vector.shape_cast %191 : vector<8x64xf32> to vector<1x1x8x64xf32>
    tpu.vector_store %arg8[%c1_98, %c6_99, %c0_100, %c0_101], %197 {strides = array<i32>} : memref<2x8x8x64xf32, #tpu.memory_space<vmem>>, vector<1x1x8x64xf32>,
    %c1_102 = arith.constant 1 : index
    %c0_103 = arith.constant 0 : index
    %c0_104 = arith.constant 0 : index
    %198 = vector.load %arg6[%c1_102, %c0_103, %c0_104] : memref<8x8x128xf32, #tpu.memory_space<vmem>>, vector<1x8x64xf32>
    %199 = vector.shape_cast %198 : vector<1x8x64xf32> to vector<8x64xf32>
    %200 = vector.broadcast %24 : f32 to vector<8x64xf32>
    %201 = arith.mulf %200, %189 : vector<8x64xf32>
    %202 = arith.addf %199, %201 : vector<8x64xf32>
    %c1_105 = arith.constant 1 : index
    %c0_106 = arith.constant 0 : index
    %c0_107 = arith.constant 0 : index
    %203 = vector.load %arg6[%c1_105, %c0_106, %c0_107] : memref<8x8x128xf32, #tpu.memory_space<vmem>>, vector<1x8x64xf32>
    %204 = vector.shape_cast %203 : vector<1x8x64xf32> to vector<8x64xf32>
    %205 = vector.shape_cast %202 : vector<8x64xf32> to vector<1x8x64xf32>
    tpu.vector_store %arg6[%c1_105, %c0_106, %c0_107], %205 {strides = array<i32>} : memref<8x8x128xf32, #tpu.memory_space<vmem>>, vector<1x8x64xf32>,
    %c6_108 = arith.constant 6 : index
    %c0_109 = arith.constant 0 : index
    %c64_110 = arith.constant 64 : index
    %206 = vector.load %arg6[%c6_108, %c0_109, %c64_110] : memref<8x8x128xf32, #tpu.memory_space<vmem>>, vector<1x8x64xf32>
    %207 = vector.shape_cast %206 : vector<1x8x64xf32> to vector<8x64xf32>
    %208 = vector.broadcast %24 : f32 to vector<8x64xf32>
    %209 = arith.mulf %208, %191 : vector<8x64xf32>
    %210 = arith.addf %207, %209 : vector<8x64xf32>
    %c6_111 = arith.constant 6 : index
    %c0_112 = arith.constant 0 : index
    %c64_113 = arith.constant 64 : index
    %211 = vector.load %arg6[%c6_111, %c0_112, %c64_113] : memref<8x8x128xf32, #tpu.memory_space<vmem>>, vector<1x8x64xf32>
    %212 = vector.shape_cast %211 : vector<1x8x64xf32> to vector<8x64xf32>
    %213 = vector.shape_cast %210 : vector<8x64xf32> to vector<1x8x64xf32>
    tpu.vector_store %arg6[%c6_111, %c0_112, %c64_113], %213 {strides = array<i32>} : memref<8x8x128xf32, #tpu.memory_space<vmem>>, vector<1x8x64xf32>,
    %c2 = arith.constant 2 : index
    %c0_114 = arith.constant 0 : index
    %c0_115 = arith.constant 0 : index
    %214 = vector.load %arg7[%c2, %c0_114, %c0_115] : memref<8x8x512xf32, #tpu.memory_space<vmem>>, vector<1x8x256xf32>
    %215 = vector.shape_cast %214 : vector<1x8x256xf32> to vector<8x256xf32>
    %216 = arith.truncf %189 : vector<8x64xf32> to vector<8x64xbf16>
    %cst_116 = arith.constant dense<0.000000e+00> : vector<8x256xf32>
    %217 = tpu.matmul %216, %21, %cst_116 {dimension_numbers = #tpu.dot_dimension_numbers<[1], [0], [0], [1], [0, 0, 1, 1], [], []>} : vector<8x64xbf16>, vector<64x256xbf16>, vector<8x256xf32> -> vector<8x256xf32>
    %218 = arith.addf %215, %217 : vector<8x256xf32>
    %c5 = arith.constant 5 : index
    %c0_117 = arith.constant 0 : index
    %c256_118 = arith.constant 256 : index
    %219 = vector.load %arg7[%c5, %c0_117, %c256_118] : memref<8x8x512xf32, #tpu.memory_space<vmem>>, vector<1x8x256xf32>
    %220 = vector.shape_cast %219 : vector<1x8x256xf32> to vector<8x256xf32>
    %221 = arith.truncf %191 : vector<8x64xf32> to vector<8x64xbf16>
    %cst_119 = arith.constant dense<0.000000e+00> : vector<8x256xf32>
    %222 = tpu.matmul %221, %23, %cst_119 {dimension_numbers = #tpu.dot_dimension_numbers<[1], [0], [0], [1], [0, 0, 1, 1], [], []>} : vector<8x64xbf16>, vector<64x256xbf16>, vector<8x256xf32> -> vector<8x256xf32>
    %223 = arith.addf %220, %222 : vector<8x256xf32>
    %224 = vector.extract_strided_slice %218 {offsets = [0, 0], sizes = [8, 64], strides = [1, 1]} : vector<8x256xf32> to vector<8x64xf32>
    %cst_120 = arith.constant 5.000000e-01 : f32
    %225 = vector.broadcast %cst_120 : f32 to vector<8x64xf32>
    %226 = arith.mulf %225, %224 : vector<8x64xf32>
    %227 = math.tanh %226 : vector<8x64xf32>
    %cst_121 = arith.constant 1.000000e+00 : f32
    %228 = vector.broadcast %cst_121 : f32 to vector<8x64xf32>
    %229 = arith.addf %227, %228 : vector<8x64xf32>
    %cst_122 = arith.constant 5.000000e-01 : f32
    %230 = vector.broadcast %cst_122 : f32 to vector<8x64xf32>
    %231 = arith.mulf %230, %229 : vector<8x64xf32>
    %232 = vector.extract_strided_slice %223 {offsets = [0, 0], sizes = [8, 64], strides = [1, 1]} : vector<8x256xf32> to vector<8x64xf32>
    %cst_123 = arith.constant 5.000000e-01 : f32
    %233 = vector.broadcast %cst_123 : f32 to vector<8x64xf32>
    %234 = arith.mulf %233, %232 : vector<8x64xf32>
    %235 = math.tanh %234 : vector<8x64xf32>
    %cst_124 = arith.constant 1.000000e+00 : f32
    %236 = vector.broadcast %cst_124 : f32 to vector<8x64xf32>
    %237 = arith.addf %235, %236 : vector<8x64xf32>
    %cst_125 = arith.constant 5.000000e-01 : f32
    %238 = vector.broadcast %cst_125 : f32 to vector<8x64xf32>
    %239 = arith.mulf %238, %237 : vector<8x64xf32>
    %240 = vector.extract_strided_slice %218 {offsets = [0, 64], sizes = [8, 64], strides = [1, 1]} : vector<8x256xf32> to vector<8x64xf32>
    %cst_126 = arith.constant 5.000000e-01 : f32
    %241 = vector.broadcast %cst_126 : f32 to vector<8x64xf32>
    %242 = arith.mulf %241, %240 : vector<8x64xf32>
    %243 = math.tanh %242 : vector<8x64xf32>
    %cst_127 = arith.constant 1.000000e+00 : f32
    %244 = vector.broadcast %cst_127 : f32 to vector<8x64xf32>
    %245 = arith.addf %243, %244 : vector<8x64xf32>
    %cst_128 = arith.constant 5.000000e-01 : f32
    %246 = vector.broadcast %cst_128 : f32 to vector<8x64xf32>
    %247 = arith.mulf %246, %245 : vector<8x64xf32>
    %248 = vector.extract_strided_slice %223 {offsets = [0, 64], sizes = [8, 64], strides = [1, 1]} : vector<8x256xf32> to vector<8x64xf32>
    %cst_129 = arith.constant 5.000000e-01 : f32
    %249 = vector.broadcast %cst_129 : f32 to vector<8x64xf32>
    %250 = arith.mulf %249, %248 : vector<8x64xf32>
    %251 = math.tanh %250 : vector<8x64xf32>
    %cst_130 = arith.constant 1.000000e+00 : f32
    %252 = vector.broadcast %cst_130 : f32 to vector<8x64xf32>
    %253 = arith.addf %251, %252 : vector<8x64xf32>
    %cst_131 = arith.constant 5.000000e-01 : f32
    %254 = vector.broadcast %cst_131 : f32 to vector<8x64xf32>
    %255 = arith.mulf %254, %253 : vector<8x64xf32>
    %256 = vector.extract_strided_slice %218 {offsets = [0, 128], sizes = [8, 64], strides = [1, 1]} : vector<8x256xf32> to vector<8x64xf32>
    %257 = math.tanh %256 : vector<8x64xf32>
    %258 = vector.extract_strided_slice %223 {offsets = [0, 128], sizes = [8, 64], strides = [1, 1]} : vector<8x256xf32> to vector<8x64xf32>
    %259 = math.tanh %258 : vector<8x64xf32>
    %260 = vector.extract_strided_slice %218 {offsets = [0, 192], sizes = [8, 64], strides = [1, 1]} : vector<8x256xf32> to vector<8x64xf32>
    %cst_132 = arith.constant 5.000000e-01 : f32
    %261 = vector.broadcast %cst_132 : f32 to vector<8x64xf32>
    %262 = arith.mulf %261, %260 : vector<8x64xf32>
    %263 = math.tanh %262 : vector<8x64xf32>
    %cst_133 = arith.constant 1.000000e+00 : f32
    %264 = vector.broadcast %cst_133 : f32 to vector<8x64xf32>
    %265 = arith.addf %263, %264 : vector<8x64xf32>
    %cst_134 = arith.constant 5.000000e-01 : f32
    %266 = vector.broadcast %cst_134 : f32 to vector<8x64xf32>
    %267 = arith.mulf %266, %265 : vector<8x64xf32>
    %268 = vector.extract_strided_slice %223 {offsets = [0, 192], sizes = [8, 64], strides = [1, 1]} : vector<8x256xf32> to vector<8x64xf32>
    %cst_135 = arith.constant 5.000000e-01 : f32
    %269 = vector.broadcast %cst_135 : f32 to vector<8x64xf32>
    %270 = arith.mulf %269, %268 : vector<8x64xf32>
    %271 = math.tanh %270 : vector<8x64xf32>
    %cst_136 = arith.constant 1.000000e+00 : f32
    %272 = vector.broadcast %cst_136 : f32 to vector<8x64xf32>
    %273 = arith.addf %271, %272 : vector<8x64xf32>
    %cst_137 = arith.constant 5.000000e-01 : f32
    %274 = vector.broadcast %cst_137 : f32 to vector<8x64xf32>
    %275 = arith.mulf %274, %273 : vector<8x64xf32>
    %276 = arith.mulf %247, %184 : vector<8x64xf32>
    %277 = arith.mulf %231, %257 : vector<8x64xf32>
    %278 = arith.addf %276, %277 : vector<8x64xf32>
    %279 = arith.mulf %255, %187 : vector<8x64xf32>
    %280 = arith.mulf %239, %259 : vector<8x64xf32>
    %281 = arith.addf %279, %280 : vector<8x64xf32>
    %282 = math.tanh %278 : vector<8x64xf32>
    %283 = arith.mulf %267, %282 : vector<8x64xf32>
    %284 = math.tanh %281 : vector<8x64xf32>
    %285 = arith.mulf %275, %284 : vector<8x64xf32>
    %c0_138 = arith.constant 0 : index
    %c2_139 = arith.constant 2 : index
    %c0_140 = arith.constant 0 : index
    %c0_141 = arith.constant 0 : index
    %286 = vector.load %arg8[%c0_138, %c2_139, %c0_140, %c0_141] : memref<2x8x8x64xf32, #tpu.memory_space<vmem>>, vector<1x1x8x64xf32>
    %287 = vector.shape_cast %286 : vector<1x1x8x64xf32> to vector<8x64xf32>
    %288 = vector.shape_cast %283 : vector<8x64xf32> to vector<1x1x8x64xf32>
    tpu.vector_store %arg8[%c0_138, %c2_139, %c0_140, %c0_141], %288 {strides = array<i32>} : memref<2x8x8x64xf32, #tpu.memory_space<vmem>>, vector<1x1x8x64xf32>,
    %c1_142 = arith.constant 1 : index
    %c5_143 = arith.constant 5 : index
    %c0_144 = arith.constant 0 : index
    %c0_145 = arith.constant 0 : index
    %289 = vector.load %arg8[%c1_142, %c5_143, %c0_144, %c0_145] : memref<2x8x8x64xf32, #tpu.memory_space<vmem>>, vector<1x1x8x64xf32>
    %290 = vector.shape_cast %289 : vector<1x1x8x64xf32> to vector<8x64xf32>
    %291 = vector.shape_cast %285 : vector<8x64xf32> to vector<1x1x8x64xf32>
    tpu.vector_store %arg8[%c1_142, %c5_143, %c0_144, %c0_145], %291 {strides = array<i32>} : memref<2x8x8x64xf32, #tpu.memory_space<vmem>>, vector<1x1x8x64xf32>,
    %c2_146 = arith.constant 2 : index
    %c0_147 = arith.constant 0 : index
    %c0_148 = arith.constant 0 : index
    %292 = vector.load %arg6[%c2_146, %c0_147, %c0_148] : memref<8x8x128xf32, #tpu.memory_space<vmem>>, vector<1x8x64xf32>
    %293 = vector.shape_cast %292 : vector<1x8x64xf32> to vector<8x64xf32>
    %294 = vector.broadcast %24 : f32 to vector<8x64xf32>
    %295 = arith.mulf %294, %283 : vector<8x64xf32>
    %296 = arith.addf %293, %295 : vector<8x64xf32>
    %c2_149 = arith.constant 2 : index
    %c0_150 = arith.constant 0 : index
    %c0_151 = arith.constant 0 : index
    %297 = vector.load %arg6[%c2_149, %c0_150, %c0_151] : memref<8x8x128xf32, #tpu.memory_space<vmem>>, vector<1x8x64xf32>
    %298 = vector.shape_cast %297 : vector<1x8x64xf32> to vector<8x64xf32>
    %299 = vector.shape_cast %296 : vector<8x64xf32> to vector<1x8x64xf32>
    tpu.vector_store %arg6[%c2_149, %c0_150, %c0_151], %299 {strides = array<i32>} : memref<8x8x128xf32, #tpu.memory_space<vmem>>, vector<1x8x64xf32>,
    %c5_152 = arith.constant 5 : index
    %c0_153 = arith.constant 0 : index
    %c64_154 = arith.constant 64 : index
    %300 = vector.load %arg6[%c5_152, %c0_153, %c64_154] : memref<8x8x128xf32, #tpu.memory_space<vmem>>, vector<1x8x64xf32>
    %301 = vector.shape_cast %300 : vector<1x8x64xf32> to vector<8x64xf32>
    %302 = vector.broadcast %24 : f32 to vector<8x64xf32>
    %303 = arith.mulf %302, %285 : vector<8x64xf32>
    %304 = arith.addf %301, %303 : vector<8x64xf32>
    %c5_155 = arith.constant 5 : index
    %c0_156 = arith.constant 0 : index
    %c64_157 = arith.constant 64 : index
    %305 = vector.load %arg6[%c5_155, %c0_156, %c64_157] : memref<8x8x128xf32, #tpu.memory_space<vmem>>, vector<1x8x64xf32>
    %306 = vector.shape_cast %305 : vector<1x8x64xf32> to vector<8x64xf32>
    %307 = vector.shape_cast %304 : vector<8x64xf32> to vector<1x8x64xf32>
    tpu.vector_store %arg6[%c5_155, %c0_156, %c64_157], %307 {strides = array<i32>} : memref<8x8x128xf32, #tpu.memory_space<vmem>>, vector<1x8x64xf32>,
    %c3 = arith.constant 3 : index
    %c0_158 = arith.constant 0 : index
    %c0_159 = arith.constant 0 : index
    %308 = vector.load %arg7[%c3, %c0_158, %c0_159] : memref<8x8x512xf32, #tpu.memory_space<vmem>>, vector<1x8x256xf32>
    %309 = vector.shape_cast %308 : vector<1x8x256xf32> to vector<8x256xf32>
    %310 = arith.truncf %283 : vector<8x64xf32> to vector<8x64xbf16>
    %cst_160 = arith.constant dense<0.000000e+00> : vector<8x256xf32>
    %311 = tpu.matmul %310, %21, %cst_160 {dimension_numbers = #tpu.dot_dimension_numbers<[1], [0], [0], [1], [0, 0, 1, 1], [], []>} : vector<8x64xbf16>, vector<64x256xbf16>, vector<8x256xf32> -> vector<8x256xf32>
    %312 = arith.addf %309, %311 : vector<8x256xf32>
    %c4 = arith.constant 4 : index
    %c0_161 = arith.constant 0 : index
    %c256_162 = arith.constant 256 : index
    %313 = vector.load %arg7[%c4, %c0_161, %c256_162] : memref<8x8x512xf32, #tpu.memory_space<vmem>>, vector<1x8x256xf32>
    %314 = vector.shape_cast %313 : vector<1x8x256xf32> to vector<8x256xf32>
    %315 = arith.truncf %285 : vector<8x64xf32> to vector<8x64xbf16>
    %cst_163 = arith.constant dense<0.000000e+00> : vector<8x256xf32>
    %316 = tpu.matmul %315, %23, %cst_163 {dimension_numbers = #tpu.dot_dimension_numbers<[1], [0], [0], [1], [0, 0, 1, 1], [], []>} : vector<8x64xbf16>, vector<64x256xbf16>, vector<8x256xf32> -> vector<8x256xf32>
    %317 = arith.addf %314, %316 : vector<8x256xf32>
    %318 = vector.extract_strided_slice %312 {offsets = [0, 0], sizes = [8, 64], strides = [1, 1]} : vector<8x256xf32> to vector<8x64xf32>
    %cst_164 = arith.constant 5.000000e-01 : f32
    %319 = vector.broadcast %cst_164 : f32 to vector<8x64xf32>
    %320 = arith.mulf %319, %318 : vector<8x64xf32>
    %321 = math.tanh %320 : vector<8x64xf32>
    %cst_165 = arith.constant 1.000000e+00 : f32
    %322 = vector.broadcast %cst_165 : f32 to vector<8x64xf32>
    %323 = arith.addf %321, %322 : vector<8x64xf32>
    %cst_166 = arith.constant 5.000000e-01 : f32
    %324 = vector.broadcast %cst_166 : f32 to vector<8x64xf32>
    %325 = arith.mulf %324, %323 : vector<8x64xf32>
    %326 = vector.extract_strided_slice %317 {offsets = [0, 0], sizes = [8, 64], strides = [1, 1]} : vector<8x256xf32> to vector<8x64xf32>
    %cst_167 = arith.constant 5.000000e-01 : f32
    %327 = vector.broadcast %cst_167 : f32 to vector<8x64xf32>
    %328 = arith.mulf %327, %326 : vector<8x64xf32>
    %329 = math.tanh %328 : vector<8x64xf32>
    %cst_168 = arith.constant 1.000000e+00 : f32
    %330 = vector.broadcast %cst_168 : f32 to vector<8x64xf32>
    %331 = arith.addf %329, %330 : vector<8x64xf32>
    %cst_169 = arith.constant 5.000000e-01 : f32
    %332 = vector.broadcast %cst_169 : f32 to vector<8x64xf32>
    %333 = arith.mulf %332, %331 : vector<8x64xf32>
    %334 = vector.extract_strided_slice %312 {offsets = [0, 64], sizes = [8, 64], strides = [1, 1]} : vector<8x256xf32> to vector<8x64xf32>
    %cst_170 = arith.constant 5.000000e-01 : f32
    %335 = vector.broadcast %cst_170 : f32 to vector<8x64xf32>
    %336 = arith.mulf %335, %334 : vector<8x64xf32>
    %337 = math.tanh %336 : vector<8x64xf32>
    %cst_171 = arith.constant 1.000000e+00 : f32
    %338 = vector.broadcast %cst_171 : f32 to vector<8x64xf32>
    %339 = arith.addf %337, %338 : vector<8x64xf32>
    %cst_172 = arith.constant 5.000000e-01 : f32
    %340 = vector.broadcast %cst_172 : f32 to vector<8x64xf32>
    %341 = arith.mulf %340, %339 : vector<8x64xf32>
    %342 = vector.extract_strided_slice %317 {offsets = [0, 64], sizes = [8, 64], strides = [1, 1]} : vector<8x256xf32> to vector<8x64xf32>
    %cst_173 = arith.constant 5.000000e-01 : f32
    %343 = vector.broadcast %cst_173 : f32 to vector<8x64xf32>
    %344 = arith.mulf %343, %342 : vector<8x64xf32>
    %345 = math.tanh %344 : vector<8x64xf32>
    %cst_174 = arith.constant 1.000000e+00 : f32
    %346 = vector.broadcast %cst_174 : f32 to vector<8x64xf32>
    %347 = arith.addf %345, %346 : vector<8x64xf32>
    %cst_175 = arith.constant 5.000000e-01 : f32
    %348 = vector.broadcast %cst_175 : f32 to vector<8x64xf32>
    %349 = arith.mulf %348, %347 : vector<8x64xf32>
    %350 = vector.extract_strided_slice %312 {offsets = [0, 128], sizes = [8, 64], strides = [1, 1]} : vector<8x256xf32> to vector<8x64xf32>
    %351 = math.tanh %350 : vector<8x64xf32>
    %352 = vector.extract_strided_slice %317 {offsets = [0, 128], sizes = [8, 64], strides = [1, 1]} : vector<8x256xf32> to vector<8x64xf32>
    %353 = math.tanh %352 : vector<8x64xf32>
    %354 = vector.extract_strided_slice %312 {offsets = [0, 192], sizes = [8, 64], strides = [1, 1]} : vector<8x256xf32> to vector<8x64xf32>
    %cst_176 = arith.constant 5.000000e-01 : f32
    %355 = vector.broadcast %cst_176 : f32 to vector<8x64xf32>
    %356 = arith.mulf %355, %354 : vector<8x64xf32>
    %357 = math.tanh %356 : vector<8x64xf32>
    %cst_177 = arith.constant 1.000000e+00 : f32
    %358 = vector.broadcast %cst_177 : f32 to vector<8x64xf32>
    %359 = arith.addf %357, %358 : vector<8x64xf32>
    %cst_178 = arith.constant 5.000000e-01 : f32
    %360 = vector.broadcast %cst_178 : f32 to vector<8x64xf32>
    %361 = arith.mulf %360, %359 : vector<8x64xf32>
    %362 = vector.extract_strided_slice %317 {offsets = [0, 192], sizes = [8, 64], strides = [1, 1]} : vector<8x256xf32> to vector<8x64xf32>
    %cst_179 = arith.constant 5.000000e-01 : f32
    %363 = vector.broadcast %cst_179 : f32 to vector<8x64xf32>
    %364 = arith.mulf %363, %362 : vector<8x64xf32>
    %365 = math.tanh %364 : vector<8x64xf32>
    %cst_180 = arith.constant 1.000000e+00 : f32
    %366 = vector.broadcast %cst_180 : f32 to vector<8x64xf32>
    %367 = arith.addf %365, %366 : vector<8x64xf32>
    %cst_181 = arith.constant 5.000000e-01 : f32
    %368 = vector.broadcast %cst_181 : f32 to vector<8x64xf32>
    %369 = arith.mulf %368, %367 : vector<8x64xf32>
    %370 = arith.mulf %341, %278 : vector<8x64xf32>
    %371 = arith.mulf %325, %351 : vector<8x64xf32>
    %372 = arith.addf %370, %371 : vector<8x64xf32>
    %373 = arith.mulf %349, %281 : vector<8x64xf32>
    %374 = arith.mulf %333, %353 : vector<8x64xf32>
    %375 = arith.addf %373, %374 : vector<8x64xf32>
    %376 = math.tanh %372 : vector<8x64xf32>
    %377 = arith.mulf %361, %376 : vector<8x64xf32>
    %378 = math.tanh %375 : vector<8x64xf32>
    %379 = arith.mulf %369, %378 : vector<8x64xf32>
    %c0_182 = arith.constant 0 : index
    %c3_183 = arith.constant 3 : index
    %c0_184 = arith.constant 0 : index
    %c0_185 = arith.constant 0 : index
    %380 = vector.load %arg8[%c0_182, %c3_183, %c0_184, %c0_185] : memref<2x8x8x64xf32, #tpu.memory_space<vmem>>, vector<1x1x8x64xf32>
    %381 = vector.shape_cast %380 : vector<1x1x8x64xf32> to vector<8x64xf32>
    %382 = vector.shape_cast %377 : vector<8x64xf32> to vector<1x1x8x64xf32>
    tpu.vector_store %arg8[%c0_182, %c3_183, %c0_184, %c0_185], %382 {strides = array<i32>} : memref<2x8x8x64xf32, #tpu.memory_space<vmem>>, vector<1x1x8x64xf32>,
    %c1_186 = arith.constant 1 : index
    %c4_187 = arith.constant 4 : index
    %c0_188 = arith.constant 0 : index
    %c0_189 = arith.constant 0 : index
    %383 = vector.load %arg8[%c1_186, %c4_187, %c0_188, %c0_189] : memref<2x8x8x64xf32, #tpu.memory_space<vmem>>, vector<1x1x8x64xf32>
    %384 = vector.shape_cast %383 : vector<1x1x8x64xf32> to vector<8x64xf32>
    %385 = vector.shape_cast %379 : vector<8x64xf32> to vector<1x1x8x64xf32>
    tpu.vector_store %arg8[%c1_186, %c4_187, %c0_188, %c0_189], %385 {strides = array<i32>} : memref<2x8x8x64xf32, #tpu.memory_space<vmem>>, vector<1x1x8x64xf32>,
    %c3_190 = arith.constant 3 : index
    %c0_191 = arith.constant 0 : index
    %c0_192 = arith.constant 0 : index
    %386 = vector.load %arg6[%c3_190, %c0_191, %c0_192] : memref<8x8x128xf32, #tpu.memory_space<vmem>>, vector<1x8x64xf32>
    %387 = vector.shape_cast %386 : vector<1x8x64xf32> to vector<8x64xf32>
    %388 = vector.broadcast %24 : f32 to vector<8x64xf32>
    %389 = arith.mulf %388, %377 : vector<8x64xf32>
    %390 = arith.addf %387, %389 : vector<8x64xf32>
    %c3_193 = arith.constant 3 : index
    %c0_194 = arith.constant 0 : index
    %c0_195 = arith.constant 0 : index
    %391 = vector.load %arg6[%c3_193, %c0_194, %c0_195] : memref<8x8x128xf32, #tpu.memory_space<vmem>>, vector<1x8x64xf32>
    %392 = vector.shape_cast %391 : vector<1x8x64xf32> to vector<8x64xf32>
    %393 = vector.shape_cast %390 : vector<8x64xf32> to vector<1x8x64xf32>
    tpu.vector_store %arg6[%c3_193, %c0_194, %c0_195], %393 {strides = array<i32>} : memref<8x8x128xf32, #tpu.memory_space<vmem>>, vector<1x8x64xf32>,
    %c4_196 = arith.constant 4 : index
    %c0_197 = arith.constant 0 : index
    %c64_198 = arith.constant 64 : index
    %394 = vector.load %arg6[%c4_196, %c0_197, %c64_198] : memref<8x8x128xf32, #tpu.memory_space<vmem>>, vector<1x8x64xf32>
    %395 = vector.shape_cast %394 : vector<1x8x64xf32> to vector<8x64xf32>
    %396 = vector.broadcast %24 : f32 to vector<8x64xf32>
    %397 = arith.mulf %396, %379 : vector<8x64xf32>
    %398 = arith.addf %395, %397 : vector<8x64xf32>
    %c4_199 = arith.constant 4 : index
    %c0_200 = arith.constant 0 : index
    %c64_201 = arith.constant 64 : index
    %399 = vector.load %arg6[%c4_199, %c0_200, %c64_201] : memref<8x8x128xf32, #tpu.memory_space<vmem>>, vector<1x8x64xf32>
    %400 = vector.shape_cast %399 : vector<1x8x64xf32> to vector<8x64xf32>
    %401 = vector.shape_cast %398 : vector<8x64xf32> to vector<1x8x64xf32>
    tpu.vector_store %arg6[%c4_199, %c0_200, %c64_201], %401 {strides = array<i32>} : memref<8x8x128xf32, #tpu.memory_space<vmem>>, vector<1x8x64xf32>,
    %c4_202 = arith.constant 4 : index
    %c0_203 = arith.constant 0 : index
    %c0_204 = arith.constant 0 : index
    %402 = vector.load %arg7[%c4_202, %c0_203, %c0_204] : memref<8x8x512xf32, #tpu.memory_space<vmem>>, vector<1x8x256xf32>
    %403 = vector.shape_cast %402 : vector<1x8x256xf32> to vector<8x256xf32>
    %404 = arith.truncf %377 : vector<8x64xf32> to vector<8x64xbf16>
    %cst_205 = arith.constant dense<0.000000e+00> : vector<8x256xf32>
    %405 = tpu.matmul %404, %21, %cst_205 {dimension_numbers = #tpu.dot_dimension_numbers<[1], [0], [0], [1], [0, 0, 1, 1], [], []>} : vector<8x64xbf16>, vector<64x256xbf16>, vector<8x256xf32> -> vector<8x256xf32>
    %406 = arith.addf %403, %405 : vector<8x256xf32>
    %c3_206 = arith.constant 3 : index
    %c0_207 = arith.constant 0 : index
    %c256_208 = arith.constant 256 : index
    %407 = vector.load %arg7[%c3_206, %c0_207, %c256_208] : memref<8x8x512xf32, #tpu.memory_space<vmem>>, vector<1x8x256xf32>
    %408 = vector.shape_cast %407 : vector<1x8x256xf32> to vector<8x256xf32>
    %409 = arith.truncf %379 : vector<8x64xf32> to vector<8x64xbf16>
    %cst_209 = arith.constant dense<0.000000e+00> : vector<8x256xf32>
    %410 = tpu.matmul %409, %23, %cst_209 {dimension_numbers = #tpu.dot_dimension_numbers<[1], [0], [0], [1], [0, 0, 1, 1], [], []>} : vector<8x64xbf16>, vector<64x256xbf16>, vector<8x256xf32> -> vector<8x256xf32>
    %411 = arith.addf %408, %410 : vector<8x256xf32>
    %412 = vector.extract_strided_slice %406 {offsets = [0, 0], sizes = [8, 64], strides = [1, 1]} : vector<8x256xf32> to vector<8x64xf32>
    %cst_210 = arith.constant 5.000000e-01 : f32
    %413 = vector.broadcast %cst_210 : f32 to vector<8x64xf32>
    %414 = arith.mulf %413, %412 : vector<8x64xf32>
    %415 = math.tanh %414 : vector<8x64xf32>
    %cst_211 = arith.constant 1.000000e+00 : f32
    %416 = vector.broadcast %cst_211 : f32 to vector<8x64xf32>
    %417 = arith.addf %415, %416 : vector<8x64xf32>
    %cst_212 = arith.constant 5.000000e-01 : f32
    %418 = vector.broadcast %cst_212 : f32 to vector<8x64xf32>
    %419 = arith.mulf %418, %417 : vector<8x64xf32>
    %420 = vector.extract_strided_slice %411 {offsets = [0, 0], sizes = [8, 64], strides = [1, 1]} : vector<8x256xf32> to vector<8x64xf32>
    %cst_213 = arith.constant 5.000000e-01 : f32
    %421 = vector.broadcast %cst_213 : f32 to vector<8x64xf32>
    %422 = arith.mulf %421, %420 : vector<8x64xf32>
    %423 = math.tanh %422 : vector<8x64xf32>
    %cst_214 = arith.constant 1.000000e+00 : f32
    %424 = vector.broadcast %cst_214 : f32 to vector<8x64xf32>
    %425 = arith.addf %423, %424 : vector<8x64xf32>
    %cst_215 = arith.constant 5.000000e-01 : f32
    %426 = vector.broadcast %cst_215 : f32 to vector<8x64xf32>
    %427 = arith.mulf %426, %425 : vector<8x64xf32>
    %428 = vector.extract_strided_slice %406 {offsets = [0, 64], sizes = [8, 64], strides = [1, 1]} : vector<8x256xf32> to vector<8x64xf32>
    %cst_216 = arith.constant 5.000000e-01 : f32
    %429 = vector.broadcast %cst_216 : f32 to vector<8x64xf32>
    %430 = arith.mulf %429, %428 : vector<8x64xf32>
    %431 = math.tanh %430 : vector<8x64xf32>
    %cst_217 = arith.constant 1.000000e+00 : f32
    %432 = vector.broadcast %cst_217 : f32 to vector<8x64xf32>
    %433 = arith.addf %431, %432 : vector<8x64xf32>
    %cst_218 = arith.constant 5.000000e-01 : f32
    %434 = vector.broadcast %cst_218 : f32 to vector<8x64xf32>
    %435 = arith.mulf %434, %433 : vector<8x64xf32>
    %436 = vector.extract_strided_slice %411 {offsets = [0, 64], sizes = [8, 64], strides = [1, 1]} : vector<8x256xf32> to vector<8x64xf32>
    %cst_219 = arith.constant 5.000000e-01 : f32
    %437 = vector.broadcast %cst_219 : f32 to vector<8x64xf32>
    %438 = arith.mulf %437, %436 : vector<8x64xf32>
    %439 = math.tanh %438 : vector<8x64xf32>
    %cst_220 = arith.constant 1.000000e+00 : f32
    %440 = vector.broadcast %cst_220 : f32 to vector<8x64xf32>
    %441 = arith.addf %439, %440 : vector<8x64xf32>
    %cst_221 = arith.constant 5.000000e-01 : f32
    %442 = vector.broadcast %cst_221 : f32 to vector<8x64xf32>
    %443 = arith.mulf %442, %441 : vector<8x64xf32>
    %444 = vector.extract_strided_slice %406 {offsets = [0, 128], sizes = [8, 64], strides = [1, 1]} : vector<8x256xf32> to vector<8x64xf32>
    %445 = math.tanh %444 : vector<8x64xf32>
    %446 = vector.extract_strided_slice %411 {offsets = [0, 128], sizes = [8, 64], strides = [1, 1]} : vector<8x256xf32> to vector<8x64xf32>
    %447 = math.tanh %446 : vector<8x64xf32>
    %448 = vector.extract_strided_slice %406 {offsets = [0, 192], sizes = [8, 64], strides = [1, 1]} : vector<8x256xf32> to vector<8x64xf32>
    %cst_222 = arith.constant 5.000000e-01 : f32
    %449 = vector.broadcast %cst_222 : f32 to vector<8x64xf32>
    %450 = arith.mulf %449, %448 : vector<8x64xf32>
    %451 = math.tanh %450 : vector<8x64xf32>
    %cst_223 = arith.constant 1.000000e+00 : f32
    %452 = vector.broadcast %cst_223 : f32 to vector<8x64xf32>
    %453 = arith.addf %451, %452 : vector<8x64xf32>
    %cst_224 = arith.constant 5.000000e-01 : f32
    %454 = vector.broadcast %cst_224 : f32 to vector<8x64xf32>
    %455 = arith.mulf %454, %453 : vector<8x64xf32>
    %456 = vector.extract_strided_slice %411 {offsets = [0, 192], sizes = [8, 64], strides = [1, 1]} : vector<8x256xf32> to vector<8x64xf32>
    %cst_225 = arith.constant 5.000000e-01 : f32
    %457 = vector.broadcast %cst_225 : f32 to vector<8x64xf32>
    %458 = arith.mulf %457, %456 : vector<8x64xf32>
    %459 = math.tanh %458 : vector<8x64xf32>
    %cst_226 = arith.constant 1.000000e+00 : f32
    %460 = vector.broadcast %cst_226 : f32 to vector<8x64xf32>
    %461 = arith.addf %459, %460 : vector<8x64xf32>
    %cst_227 = arith.constant 5.000000e-01 : f32
    %462 = vector.broadcast %cst_227 : f32 to vector<8x64xf32>
    %463 = arith.mulf %462, %461 : vector<8x64xf32>
    %464 = arith.mulf %435, %372 : vector<8x64xf32>
    %465 = arith.mulf %419, %445 : vector<8x64xf32>
    %466 = arith.addf %464, %465 : vector<8x64xf32>
    %467 = arith.mulf %443, %375 : vector<8x64xf32>
    %468 = arith.mulf %427, %447 : vector<8x64xf32>
    %469 = arith.addf %467, %468 : vector<8x64xf32>
    %470 = math.tanh %466 : vector<8x64xf32>
    %471 = arith.mulf %455, %470 : vector<8x64xf32>
    %472 = math.tanh %469 : vector<8x64xf32>
    %473 = arith.mulf %463, %472 : vector<8x64xf32>
    %c0_228 = arith.constant 0 : index
    %c4_229 = arith.constant 4 : index
    %c0_230 = arith.constant 0 : index
    %c0_231 = arith.constant 0 : index
    %474 = vector.load %arg8[%c0_228, %c4_229, %c0_230, %c0_231] : memref<2x8x8x64xf32, #tpu.memory_space<vmem>>, vector<1x1x8x64xf32>
    %475 = vector.shape_cast %474 : vector<1x1x8x64xf32> to vector<8x64xf32>
    %476 = vector.shape_cast %471 : vector<8x64xf32> to vector<1x1x8x64xf32>
    tpu.vector_store %arg8[%c0_228, %c4_229, %c0_230, %c0_231], %476 {strides = array<i32>} : memref<2x8x8x64xf32, #tpu.memory_space<vmem>>, vector<1x1x8x64xf32>,
    %c1_232 = arith.constant 1 : index
    %c3_233 = arith.constant 3 : index
    %c0_234 = arith.constant 0 : index
    %c0_235 = arith.constant 0 : index
    %477 = vector.load %arg8[%c1_232, %c3_233, %c0_234, %c0_235] : memref<2x8x8x64xf32, #tpu.memory_space<vmem>>, vector<1x1x8x64xf32>
    %478 = vector.shape_cast %477 : vector<1x1x8x64xf32> to vector<8x64xf32>
    %479 = vector.shape_cast %473 : vector<8x64xf32> to vector<1x1x8x64xf32>
    tpu.vector_store %arg8[%c1_232, %c3_233, %c0_234, %c0_235], %479 {strides = array<i32>} : memref<2x8x8x64xf32, #tpu.memory_space<vmem>>, vector<1x1x8x64xf32>,
    %c4_236 = arith.constant 4 : index
    %c0_237 = arith.constant 0 : index
    %c0_238 = arith.constant 0 : index
    %480 = vector.load %arg6[%c4_236, %c0_237, %c0_238] : memref<8x8x128xf32, #tpu.memory_space<vmem>>, vector<1x8x64xf32>
    %481 = vector.shape_cast %480 : vector<1x8x64xf32> to vector<8x64xf32>
    %482 = vector.broadcast %24 : f32 to vector<8x64xf32>
    %483 = arith.mulf %482, %471 : vector<8x64xf32>
    %484 = arith.addf %481, %483 : vector<8x64xf32>
    %c4_239 = arith.constant 4 : index
    %c0_240 = arith.constant 0 : index
    %c0_241 = arith.constant 0 : index
    %485 = vector.load %arg6[%c4_239, %c0_240, %c0_241] : memref<8x8x128xf32, #tpu.memory_space<vmem>>, vector<1x8x64xf32>
    %486 = vector.shape_cast %485 : vector<1x8x64xf32> to vector<8x64xf32>
    %487 = vector.shape_cast %484 : vector<8x64xf32> to vector<1x8x64xf32>
    tpu.vector_store %arg6[%c4_239, %c0_240, %c0_241], %487 {strides = array<i32>} : memref<8x8x128xf32, #tpu.memory_space<vmem>>, vector<1x8x64xf32>,
    %c3_242 = arith.constant 3 : index
    %c0_243 = arith.constant 0 : index
    %c64_244 = arith.constant 64 : index
    %488 = vector.load %arg6[%c3_242, %c0_243, %c64_244] : memref<8x8x128xf32, #tpu.memory_space<vmem>>, vector<1x8x64xf32>
    %489 = vector.shape_cast %488 : vector<1x8x64xf32> to vector<8x64xf32>
    %490 = vector.broadcast %24 : f32 to vector<8x64xf32>
    %491 = arith.mulf %490, %473 : vector<8x64xf32>
    %492 = arith.addf %489, %491 : vector<8x64xf32>
    %c3_245 = arith.constant 3 : index
    %c0_246 = arith.constant 0 : index
    %c64_247 = arith.constant 64 : index
    %493 = vector.load %arg6[%c3_245, %c0_246, %c64_247] : memref<8x8x128xf32, #tpu.memory_space<vmem>>, vector<1x8x64xf32>
    %494 = vector.shape_cast %493 : vector<1x8x64xf32> to vector<8x64xf32>
    %495 = vector.shape_cast %492 : vector<8x64xf32> to vector<1x8x64xf32>
    tpu.vector_store %arg6[%c3_245, %c0_246, %c64_247], %495 {strides = array<i32>} : memref<8x8x128xf32, #tpu.memory_space<vmem>>, vector<1x8x64xf32>,
    %c5_248 = arith.constant 5 : index
    %c0_249 = arith.constant 0 : index
    %c0_250 = arith.constant 0 : index
    %496 = vector.load %arg7[%c5_248, %c0_249, %c0_250] : memref<8x8x512xf32, #tpu.memory_space<vmem>>, vector<1x8x256xf32>
    %497 = vector.shape_cast %496 : vector<1x8x256xf32> to vector<8x256xf32>
    %498 = arith.truncf %471 : vector<8x64xf32> to vector<8x64xbf16>
    %cst_251 = arith.constant dense<0.000000e+00> : vector<8x256xf32>
    %499 = tpu.matmul %498, %21, %cst_251 {dimension_numbers = #tpu.dot_dimension_numbers<[1], [0], [0], [1], [0, 0, 1, 1], [], []>} : vector<8x64xbf16>, vector<64x256xbf16>, vector<8x256xf32> -> vector<8x256xf32>
    %500 = arith.addf %497, %499 : vector<8x256xf32>
    %c2_252 = arith.constant 2 : index
    %c0_253 = arith.constant 0 : index
    %c256_254 = arith.constant 256 : index
    %501 = vector.load %arg7[%c2_252, %c0_253, %c256_254] : memref<8x8x512xf32, #tpu.memory_space<vmem>>, vector<1x8x256xf32>
    %502 = vector.shape_cast %501 : vector<1x8x256xf32> to vector<8x256xf32>
    %503 = arith.truncf %473 : vector<8x64xf32> to vector<8x64xbf16>
    %cst_255 = arith.constant dense<0.000000e+00> : vector<8x256xf32>
    %504 = tpu.matmul %503, %23, %cst_255 {dimension_numbers = #tpu.dot_dimension_numbers<[1], [0], [0], [1], [0, 0, 1, 1], [], []>} : vector<8x64xbf16>, vector<64x256xbf16>, vector<8x256xf32> -> vector<8x256xf32>
    %505 = arith.addf %502, %504 : vector<8x256xf32>
    %506 = vector.extract_strided_slice %500 {offsets = [0, 0], sizes = [8, 64], strides = [1, 1]} : vector<8x256xf32> to vector<8x64xf32>
    %cst_256 = arith.constant 5.000000e-01 : f32
    %507 = vector.broadcast %cst_256 : f32 to vector<8x64xf32>
    %508 = arith.mulf %507, %506 : vector<8x64xf32>
    %509 = math.tanh %508 : vector<8x64xf32>
    %cst_257 = arith.constant 1.000000e+00 : f32
    %510 = vector.broadcast %cst_257 : f32 to vector<8x64xf32>
    %511 = arith.addf %509, %510 : vector<8x64xf32>
    %cst_258 = arith.constant 5.000000e-01 : f32
    %512 = vector.broadcast %cst_258 : f32 to vector<8x64xf32>
    %513 = arith.mulf %512, %511 : vector<8x64xf32>
    %514 = vector.extract_strided_slice %505 {offsets = [0, 0], sizes = [8, 64], strides = [1, 1]} : vector<8x256xf32> to vector<8x64xf32>
    %cst_259 = arith.constant 5.000000e-01 : f32
    %515 = vector.broadcast %cst_259 : f32 to vector<8x64xf32>
    %516 = arith.mulf %515, %514 : vector<8x64xf32>
    %517 = math.tanh %516 : vector<8x64xf32>
    %cst_260 = arith.constant 1.000000e+00 : f32
    %518 = vector.broadcast %cst_260 : f32 to vector<8x64xf32>
    %519 = arith.addf %517, %518 : vector<8x64xf32>
    %cst_261 = arith.constant 5.000000e-01 : f32
    %520 = vector.broadcast %cst_261 : f32 to vector<8x64xf32>
    %521 = arith.mulf %520, %519 : vector<8x64xf32>
    %522 = vector.extract_strided_slice %500 {offsets = [0, 64], sizes = [8, 64], strides = [1, 1]} : vector<8x256xf32> to vector<8x64xf32>
    %cst_262 = arith.constant 5.000000e-01 : f32
    %523 = vector.broadcast %cst_262 : f32 to vector<8x64xf32>
    %524 = arith.mulf %523, %522 : vector<8x64xf32>
    %525 = math.tanh %524 : vector<8x64xf32>
    %cst_263 = arith.constant 1.000000e+00 : f32
    %526 = vector.broadcast %cst_263 : f32 to vector<8x64xf32>
    %527 = arith.addf %525, %526 : vector<8x64xf32>
    %cst_264 = arith.constant 5.000000e-01 : f32
    %528 = vector.broadcast %cst_264 : f32 to vector<8x64xf32>
    %529 = arith.mulf %528, %527 : vector<8x64xf32>
    %530 = vector.extract_strided_slice %505 {offsets = [0, 64], sizes = [8, 64], strides = [1, 1]} : vector<8x256xf32> to vector<8x64xf32>
    %cst_265 = arith.constant 5.000000e-01 : f32
    %531 = vector.broadcast %cst_265 : f32 to vector<8x64xf32>
    %532 = arith.mulf %531, %530 : vector<8x64xf32>
    %533 = math.tanh %532 : vector<8x64xf32>
    %cst_266 = arith.constant 1.000000e+00 : f32
    %534 = vector.broadcast %cst_266 : f32 to vector<8x64xf32>
    %535 = arith.addf %533, %534 : vector<8x64xf32>
    %cst_267 = arith.constant 5.000000e-01 : f32
    %536 = vector.broadcast %cst_267 : f32 to vector<8x64xf32>
    %537 = arith.mulf %536, %535 : vector<8x64xf32>
    %538 = vector.extract_strided_slice %500 {offsets = [0, 128], sizes = [8, 64], strides = [1, 1]} : vector<8x256xf32> to vector<8x64xf32>
    %539 = math.tanh %538 : vector<8x64xf32>
    %540 = vector.extract_strided_slice %505 {offsets = [0, 128], sizes = [8, 64], strides = [1, 1]} : vector<8x256xf32> to vector<8x64xf32>
    %541 = math.tanh %540 : vector<8x64xf32>
    %542 = vector.extract_strided_slice %500 {offsets = [0, 192], sizes = [8, 64], strides = [1, 1]} : vector<8x256xf32> to vector<8x64xf32>
    %cst_268 = arith.constant 5.000000e-01 : f32
    %543 = vector.broadcast %cst_268 : f32 to vector<8x64xf32>
    %544 = arith.mulf %543, %542 : vector<8x64xf32>
    %545 = math.tanh %544 : vector<8x64xf32>
    %cst_269 = arith.constant 1.000000e+00 : f32
    %546 = vector.broadcast %cst_269 : f32 to vector<8x64xf32>
    %547 = arith.addf %545, %546 : vector<8x64xf32>
    %cst_270 = arith.constant 5.000000e-01 : f32
    %548 = vector.broadcast %cst_270 : f32 to vector<8x64xf32>
    %549 = arith.mulf %548, %547 : vector<8x64xf32>
    %550 = vector.extract_strided_slice %505 {offsets = [0, 192], sizes = [8, 64], strides = [1, 1]} : vector<8x256xf32> to vector<8x64xf32>
    %cst_271 = arith.constant 5.000000e-01 : f32
    %551 = vector.broadcast %cst_271 : f32 to vector<8x64xf32>
    %552 = arith.mulf %551, %550 : vector<8x64xf32>
    %553 = math.tanh %552 : vector<8x64xf32>
    %cst_272 = arith.constant 1.000000e+00 : f32
    %554 = vector.broadcast %cst_272 : f32 to vector<8x64xf32>
    %555 = arith.addf %553, %554 : vector<8x64xf32>
    %cst_273 = arith.constant 5.000000e-01 : f32
    %556 = vector.broadcast %cst_273 : f32 to vector<8x64xf32>
    %557 = arith.mulf %556, %555 : vector<8x64xf32>
    %558 = arith.mulf %529, %466 : vector<8x64xf32>
    %559 = arith.mulf %513, %539 : vector<8x64xf32>
    %560 = arith.addf %558, %559 : vector<8x64xf32>
    %561 = arith.mulf %537, %469 : vector<8x64xf32>
    %562 = arith.mulf %521, %541 : vector<8x64xf32>
    %563 = arith.addf %561, %562 : vector<8x64xf32>
    %564 = math.tanh %560 : vector<8x64xf32>
    %565 = arith.mulf %549, %564 : vector<8x64xf32>
    %566 = math.tanh %563 : vector<8x64xf32>
    %567 = arith.mulf %557, %566 : vector<8x64xf32>
    %c0_274 = arith.constant 0 : index
    %c5_275 = arith.constant 5 : index
    %c0_276 = arith.constant 0 : index
    %c0_277 = arith.constant 0 : index
    %568 = vector.load %arg8[%c0_274, %c5_275, %c0_276, %c0_277] : memref<2x8x8x64xf32, #tpu.memory_space<vmem>>, vector<1x1x8x64xf32>
    %569 = vector.shape_cast %568 : vector<1x1x8x64xf32> to vector<8x64xf32>
    %570 = vector.shape_cast %565 : vector<8x64xf32> to vector<1x1x8x64xf32>
    tpu.vector_store %arg8[%c0_274, %c5_275, %c0_276, %c0_277], %570 {strides = array<i32>} : memref<2x8x8x64xf32, #tpu.memory_space<vmem>>, vector<1x1x8x64xf32>,
    %c1_278 = arith.constant 1 : index
    %c2_279 = arith.constant 2 : index
    %c0_280 = arith.constant 0 : index
    %c0_281 = arith.constant 0 : index
    %571 = vector.load %arg8[%c1_278, %c2_279, %c0_280, %c0_281] : memref<2x8x8x64xf32, #tpu.memory_space<vmem>>, vector<1x1x8x64xf32>
    %572 = vector.shape_cast %571 : vector<1x1x8x64xf32> to vector<8x64xf32>
    %573 = vector.shape_cast %567 : vector<8x64xf32> to vector<1x1x8x64xf32>
    tpu.vector_store %arg8[%c1_278, %c2_279, %c0_280, %c0_281], %573 {strides = array<i32>} : memref<2x8x8x64xf32, #tpu.memory_space<vmem>>, vector<1x1x8x64xf32>,
    %c5_282 = arith.constant 5 : index
    %c0_283 = arith.constant 0 : index
    %c0_284 = arith.constant 0 : index
    %574 = vector.load %arg6[%c5_282, %c0_283, %c0_284] : memref<8x8x128xf32, #tpu.memory_space<vmem>>, vector<1x8x64xf32>
    %575 = vector.shape_cast %574 : vector<1x8x64xf32> to vector<8x64xf32>
    %576 = vector.broadcast %24 : f32 to vector<8x64xf32>
    %577 = arith.mulf %576, %565 : vector<8x64xf32>
    %578 = arith.addf %575, %577 : vector<8x64xf32>
    %c5_285 = arith.constant 5 : index
    %c0_286 = arith.constant 0 : index
    %c0_287 = arith.constant 0 : index
    %579 = vector.load %arg6[%c5_285, %c0_286, %c0_287] : memref<8x8x128xf32, #tpu.memory_space<vmem>>, vector<1x8x64xf32>
    %580 = vector.shape_cast %579 : vector<1x8x64xf32> to vector<8x64xf32>
    %581 = vector.shape_cast %578 : vector<8x64xf32> to vector<1x8x64xf32>
    tpu.vector_store %arg6[%c5_285, %c0_286, %c0_287], %581 {strides = array<i32>} : memref<8x8x128xf32, #tpu.memory_space<vmem>>, vector<1x8x64xf32>,
    %c2_288 = arith.constant 2 : index
    %c0_289 = arith.constant 0 : index
    %c64_290 = arith.constant 64 : index
    %582 = vector.load %arg6[%c2_288, %c0_289, %c64_290] : memref<8x8x128xf32, #tpu.memory_space<vmem>>, vector<1x8x64xf32>
    %583 = vector.shape_cast %582 : vector<1x8x64xf32> to vector<8x64xf32>
    %584 = vector.broadcast %24 : f32 to vector<8x64xf32>
    %585 = arith.mulf %584, %567 : vector<8x64xf32>
    %586 = arith.addf %583, %585 : vector<8x64xf32>
    %c2_291 = arith.constant 2 : index
    %c0_292 = arith.constant 0 : index
    %c64_293 = arith.constant 64 : index
    %587 = vector.load %arg6[%c2_291, %c0_292, %c64_293] : memref<8x8x128xf32, #tpu.memory_space<vmem>>, vector<1x8x64xf32>
    %588 = vector.shape_cast %587 : vector<1x8x64xf32> to vector<8x64xf32>
    %589 = vector.shape_cast %586 : vector<8x64xf32> to vector<1x8x64xf32>
    tpu.vector_store %arg6[%c2_291, %c0_292, %c64_293], %589 {strides = array<i32>} : memref<8x8x128xf32, #tpu.memory_space<vmem>>, vector<1x8x64xf32>,
    %c6_294 = arith.constant 6 : index
    %c0_295 = arith.constant 0 : index
    %c0_296 = arith.constant 0 : index
    %590 = vector.load %arg7[%c6_294, %c0_295, %c0_296] : memref<8x8x512xf32, #tpu.memory_space<vmem>>, vector<1x8x256xf32>
    %591 = vector.shape_cast %590 : vector<1x8x256xf32> to vector<8x256xf32>
    %592 = arith.truncf %565 : vector<8x64xf32> to vector<8x64xbf16>
    %cst_297 = arith.constant dense<0.000000e+00> : vector<8x256xf32>
    %593 = tpu.matmul %592, %21, %cst_297 {dimension_numbers = #tpu.dot_dimension_numbers<[1], [0], [0], [1], [0, 0, 1, 1], [], []>} : vector<8x64xbf16>, vector<64x256xbf16>, vector<8x256xf32> -> vector<8x256xf32>
    %594 = arith.addf %591, %593 : vector<8x256xf32>
    %c1_298 = arith.constant 1 : index
    %c0_299 = arith.constant 0 : index
    %c256_300 = arith.constant 256 : index
    %595 = vector.load %arg7[%c1_298, %c0_299, %c256_300] : memref<8x8x512xf32, #tpu.memory_space<vmem>>, vector<1x8x256xf32>
    %596 = vector.shape_cast %595 : vector<1x8x256xf32> to vector<8x256xf32>
    %597 = arith.truncf %567 : vector<8x64xf32> to vector<8x64xbf16>
    %cst_301 = arith.constant dense<0.000000e+00> : vector<8x256xf32>
    %598 = tpu.matmul %597, %23, %cst_301 {dimension_numbers = #tpu.dot_dimension_numbers<[1], [0], [0], [1], [0, 0, 1, 1], [], []>} : vector<8x64xbf16>, vector<64x256xbf16>, vector<8x256xf32> -> vector<8x256xf32>
    %599 = arith.addf %596, %598 : vector<8x256xf32>
    %600 = vector.extract_strided_slice %594 {offsets = [0, 0], sizes = [8, 64], strides = [1, 1]} : vector<8x256xf32> to vector<8x64xf32>
    %cst_302 = arith.constant 5.000000e-01 : f32
    %601 = vector.broadcast %cst_302 : f32 to vector<8x64xf32>
    %602 = arith.mulf %601, %600 : vector<8x64xf32>
    %603 = math.tanh %602 : vector<8x64xf32>
    %cst_303 = arith.constant 1.000000e+00 : f32
    %604 = vector.broadcast %cst_303 : f32 to vector<8x64xf32>
    %605 = arith.addf %603, %604 : vector<8x64xf32>
    %cst_304 = arith.constant 5.000000e-01 : f32
    %606 = vector.broadcast %cst_304 : f32 to vector<8x64xf32>
    %607 = arith.mulf %606, %605 : vector<8x64xf32>
    %608 = vector.extract_strided_slice %599 {offsets = [0, 0], sizes = [8, 64], strides = [1, 1]} : vector<8x256xf32> to vector<8x64xf32>
    %cst_305 = arith.constant 5.000000e-01 : f32
    %609 = vector.broadcast %cst_305 : f32 to vector<8x64xf32>
    %610 = arith.mulf %609, %608 : vector<8x64xf32>
    %611 = math.tanh %610 : vector<8x64xf32>
    %cst_306 = arith.constant 1.000000e+00 : f32
    %612 = vector.broadcast %cst_306 : f32 to vector<8x64xf32>
    %613 = arith.addf %611, %612 : vector<8x64xf32>
    %cst_307 = arith.constant 5.000000e-01 : f32
    %614 = vector.broadcast %cst_307 : f32 to vector<8x64xf32>
    %615 = arith.mulf %614, %613 : vector<8x64xf32>
    %616 = vector.extract_strided_slice %594 {offsets = [0, 64], sizes = [8, 64], strides = [1, 1]} : vector<8x256xf32> to vector<8x64xf32>
    %cst_308 = arith.constant 5.000000e-01 : f32
    %617 = vector.broadcast %cst_308 : f32 to vector<8x64xf32>
    %618 = arith.mulf %617, %616 : vector<8x64xf32>
    %619 = math.tanh %618 : vector<8x64xf32>
    %cst_309 = arith.constant 1.000000e+00 : f32
    %620 = vector.broadcast %cst_309 : f32 to vector<8x64xf32>
    %621 = arith.addf %619, %620 : vector<8x64xf32>
    %cst_310 = arith.constant 5.000000e-01 : f32
    %622 = vector.broadcast %cst_310 : f32 to vector<8x64xf32>
    %623 = arith.mulf %622, %621 : vector<8x64xf32>
    %624 = vector.extract_strided_slice %599 {offsets = [0, 64], sizes = [8, 64], strides = [1, 1]} : vector<8x256xf32> to vector<8x64xf32>
    %cst_311 = arith.constant 5.000000e-01 : f32
    %625 = vector.broadcast %cst_311 : f32 to vector<8x64xf32>
    %626 = arith.mulf %625, %624 : vector<8x64xf32>
    %627 = math.tanh %626 : vector<8x64xf32>
    %cst_312 = arith.constant 1.000000e+00 : f32
    %628 = vector.broadcast %cst_312 : f32 to vector<8x64xf32>
    %629 = arith.addf %627, %628 : vector<8x64xf32>
    %cst_313 = arith.constant 5.000000e-01 : f32
    %630 = vector.broadcast %cst_313 : f32 to vector<8x64xf32>
    %631 = arith.mulf %630, %629 : vector<8x64xf32>
    %632 = vector.extract_strided_slice %594 {offsets = [0, 128], sizes = [8, 64], strides = [1, 1]} : vector<8x256xf32> to vector<8x64xf32>
    %633 = math.tanh %632 : vector<8x64xf32>
    %634 = vector.extract_strided_slice %599 {offsets = [0, 128], sizes = [8, 64], strides = [1, 1]} : vector<8x256xf32> to vector<8x64xf32>
    %635 = math.tanh %634 : vector<8x64xf32>
    %636 = vector.extract_strided_slice %594 {offsets = [0, 192], sizes = [8, 64], strides = [1, 1]} : vector<8x256xf32> to vector<8x64xf32>
    %cst_314 = arith.constant 5.000000e-01 : f32
    %637 = vector.broadcast %cst_314 : f32 to vector<8x64xf32>
    %638 = arith.mulf %637, %636 : vector<8x64xf32>
    %639 = math.tanh %638 : vector<8x64xf32>
    %cst_315 = arith.constant 1.000000e+00 : f32
    %640 = vector.broadcast %cst_315 : f32 to vector<8x64xf32>
    %641 = arith.addf %639, %640 : vector<8x64xf32>
    %cst_316 = arith.constant 5.000000e-01 : f32
    %642 = vector.broadcast %cst_316 : f32 to vector<8x64xf32>
    %643 = arith.mulf %642, %641 : vector<8x64xf32>
    %644 = vector.extract_strided_slice %599 {offsets = [0, 192], sizes = [8, 64], strides = [1, 1]} : vector<8x256xf32> to vector<8x64xf32>
    %cst_317 = arith.constant 5.000000e-01 : f32
    %645 = vector.broadcast %cst_317 : f32 to vector<8x64xf32>
    %646 = arith.mulf %645, %644 : vector<8x64xf32>
    %647 = math.tanh %646 : vector<8x64xf32>
    %cst_318 = arith.constant 1.000000e+00 : f32
    %648 = vector.broadcast %cst_318 : f32 to vector<8x64xf32>
    %649 = arith.addf %647, %648 : vector<8x64xf32>
    %cst_319 = arith.constant 5.000000e-01 : f32
    %650 = vector.broadcast %cst_319 : f32 to vector<8x64xf32>
    %651 = arith.mulf %650, %649 : vector<8x64xf32>
    %652 = arith.mulf %623, %560 : vector<8x64xf32>
    %653 = arith.mulf %607, %633 : vector<8x64xf32>
    %654 = arith.addf %652, %653 : vector<8x64xf32>
    %655 = arith.mulf %631, %563 : vector<8x64xf32>
    %656 = arith.mulf %615, %635 : vector<8x64xf32>
    %657 = arith.addf %655, %656 : vector<8x64xf32>
    %658 = math.tanh %654 : vector<8x64xf32>
    %659 = arith.mulf %643, %658 : vector<8x64xf32>
    %660 = math.tanh %657 : vector<8x64xf32>
    %661 = arith.mulf %651, %660 : vector<8x64xf32>
    %c0_320 = arith.constant 0 : index
    %c6_321 = arith.constant 6 : index
    %c0_322 = arith.constant 0 : index
    %c0_323 = arith.constant 0 : index
    %662 = vector.load %arg8[%c0_320, %c6_321, %c0_322, %c0_323] : memref<2x8x8x64xf32, #tpu.memory_space<vmem>>, vector<1x1x8x64xf32>
    %663 = vector.shape_cast %662 : vector<1x1x8x64xf32> to vector<8x64xf32>
    %664 = vector.shape_cast %659 : vector<8x64xf32> to vector<1x1x8x64xf32>
    tpu.vector_store %arg8[%c0_320, %c6_321, %c0_322, %c0_323], %664 {strides = array<i32>} : memref<2x8x8x64xf32, #tpu.memory_space<vmem>>, vector<1x1x8x64xf32>,
    %c1_324 = arith.constant 1 : index
    %c1_325 = arith.constant 1 : index
    %c0_326 = arith.constant 0 : index
    %c0_327 = arith.constant 0 : index
    %665 = vector.load %arg8[%c1_324, %c1_325, %c0_326, %c0_327] : memref<2x8x8x64xf32, #tpu.memory_space<vmem>>, vector<1x1x8x64xf32>
    %666 = vector.shape_cast %665 : vector<1x1x8x64xf32> to vector<8x64xf32>
    %667 = vector.shape_cast %661 : vector<8x64xf32> to vector<1x1x8x64xf32>
    tpu.vector_store %arg8[%c1_324, %c1_325, %c0_326, %c0_327], %667 {strides = array<i32>} : memref<2x8x8x64xf32, #tpu.memory_space<vmem>>, vector<1x1x8x64xf32>,
    %c6_328 = arith.constant 6 : index
    %c0_329 = arith.constant 0 : index
    %c0_330 = arith.constant 0 : index
    %668 = vector.load %arg6[%c6_328, %c0_329, %c0_330] : memref<8x8x128xf32, #tpu.memory_space<vmem>>, vector<1x8x64xf32>
    %669 = vector.shape_cast %668 : vector<1x8x64xf32> to vector<8x64xf32>
    %670 = vector.broadcast %24 : f32 to vector<8x64xf32>
    %671 = arith.mulf %670, %659 : vector<8x64xf32>
    %672 = arith.addf %669, %671 : vector<8x64xf32>
    %c6_331 = arith.constant 6 : index
    %c0_332 = arith.constant 0 : index
    %c0_333 = arith.constant 0 : index
    %673 = vector.load %arg6[%c6_331, %c0_332, %c0_333] : memref<8x8x128xf32, #tpu.memory_space<vmem>>, vector<1x8x64xf32>
    %674 = vector.shape_cast %673 : vector<1x8x64xf32> to vector<8x64xf32>
    %675 = vector.shape_cast %672 : vector<8x64xf32> to vector<1x8x64xf32>
    tpu.vector_store %arg6[%c6_331, %c0_332, %c0_333], %675 {strides = array<i32>} : memref<8x8x128xf32, #tpu.memory_space<vmem>>, vector<1x8x64xf32>,
    %c1_334 = arith.constant 1 : index
    %c0_335 = arith.constant 0 : index
    %c64_336 = arith.constant 64 : index
    %676 = vector.load %arg6[%c1_334, %c0_335, %c64_336] : memref<8x8x128xf32, #tpu.memory_space<vmem>>, vector<1x8x64xf32>
    %677 = vector.shape_cast %676 : vector<1x8x64xf32> to vector<8x64xf32>
    %678 = vector.broadcast %24 : f32 to vector<8x64xf32>
    %679 = arith.mulf %678, %661 : vector<8x64xf32>
    %680 = arith.addf %677, %679 : vector<8x64xf32>
    %c1_337 = arith.constant 1 : index
    %c0_338 = arith.constant 0 : index
    %c64_339 = arith.constant 64 : index
    %681 = vector.load %arg6[%c1_337, %c0_338, %c64_339] : memref<8x8x128xf32, #tpu.memory_space<vmem>>, vector<1x8x64xf32>
    %682 = vector.shape_cast %681 : vector<1x8x64xf32> to vector<8x64xf32>
    %683 = vector.shape_cast %680 : vector<8x64xf32> to vector<1x8x64xf32>
    tpu.vector_store %arg6[%c1_337, %c0_338, %c64_339], %683 {strides = array<i32>} : memref<8x8x128xf32, #tpu.memory_space<vmem>>, vector<1x8x64xf32>,
    %c7_340 = arith.constant 7 : index
    %c0_341 = arith.constant 0 : index
    %c0_342 = arith.constant 0 : index
    %684 = vector.load %arg7[%c7_340, %c0_341, %c0_342] : memref<8x8x512xf32, #tpu.memory_space<vmem>>, vector<1x8x256xf32>
    %685 = vector.shape_cast %684 : vector<1x8x256xf32> to vector<8x256xf32>
    %686 = arith.truncf %659 : vector<8x64xf32> to vector<8x64xbf16>
    %cst_343 = arith.constant dense<0.000000e+00> : vector<8x256xf32>
    %687 = tpu.matmul %686, %21, %cst_343 {dimension_numbers = #tpu.dot_dimension_numbers<[1], [0], [0], [1], [0, 0, 1, 1], [], []>} : vector<8x64xbf16>, vector<64x256xbf16>, vector<8x256xf32> -> vector<8x256xf32>
    %688 = arith.addf %685, %687 : vector<8x256xf32>
    %c0_344 = arith.constant 0 : index
    %c0_345 = arith.constant 0 : index
    %c256_346 = arith.constant 256 : index
    %689 = vector.load %arg7[%c0_344, %c0_345, %c256_346] : memref<8x8x512xf32, #tpu.memory_space<vmem>>, vector<1x8x256xf32>
    %690 = vector.shape_cast %689 : vector<1x8x256xf32> to vector<8x256xf32>
    %691 = arith.truncf %661 : vector<8x64xf32> to vector<8x64xbf16>
    %cst_347 = arith.constant dense<0.000000e+00> : vector<8x256xf32>
    %692 = tpu.matmul %691, %23, %cst_347 {dimension_numbers = #tpu.dot_dimension_numbers<[1], [0], [0], [1], [0, 0, 1, 1], [], []>} : vector<8x64xbf16>, vector<64x256xbf16>, vector<8x256xf32> -> vector<8x256xf32>
    %693 = arith.addf %690, %692 : vector<8x256xf32>
    %694 = vector.extract_strided_slice %688 {offsets = [0, 0], sizes = [8, 64], strides = [1, 1]} : vector<8x256xf32> to vector<8x64xf32>
    %cst_348 = arith.constant 5.000000e-01 : f32
    %695 = vector.broadcast %cst_348 : f32 to vector<8x64xf32>
    %696 = arith.mulf %695, %694 : vector<8x64xf32>
    %697 = math.tanh %696 : vector<8x64xf32>
    %cst_349 = arith.constant 1.000000e+00 : f32
    %698 = vector.broadcast %cst_349 : f32 to vector<8x64xf32>
    %699 = arith.addf %697, %698 : vector<8x64xf32>
    %cst_350 = arith.constant 5.000000e-01 : f32
    %700 = vector.broadcast %cst_350 : f32 to vector<8x64xf32>
    %701 = arith.mulf %700, %699 : vector<8x64xf32>
    %702 = vector.extract_strided_slice %693 {offsets = [0, 0], sizes = [8, 64], strides = [1, 1]} : vector<8x256xf32> to vector<8x64xf32>
    %cst_351 = arith.constant 5.000000e-01 : f32
    %703 = vector.broadcast %cst_351 : f32 to vector<8x64xf32>
    %704 = arith.mulf %703, %702 : vector<8x64xf32>
    %705 = math.tanh %704 : vector<8x64xf32>
    %cst_352 = arith.constant 1.000000e+00 : f32
    %706 = vector.broadcast %cst_352 : f32 to vector<8x64xf32>
    %707 = arith.addf %705, %706 : vector<8x64xf32>
    %cst_353 = arith.constant 5.000000e-01 : f32
    %708 = vector.broadcast %cst_353 : f32 to vector<8x64xf32>
    %709 = arith.mulf %708, %707 : vector<8x64xf32>
    %710 = vector.extract_strided_slice %688 {offsets = [0, 64], sizes = [8, 64], strides = [1, 1]} : vector<8x256xf32> to vector<8x64xf32>
    %cst_354 = arith.constant 5.000000e-01 : f32
    %711 = vector.broadcast %cst_354 : f32 to vector<8x64xf32>
    %712 = arith.mulf %711, %710 : vector<8x64xf32>
    %713 = math.tanh %712 : vector<8x64xf32>
    %cst_355 = arith.constant 1.000000e+00 : f32
    %714 = vector.broadcast %cst_355 : f32 to vector<8x64xf32>
    %715 = arith.addf %713, %714 : vector<8x64xf32>
    %cst_356 = arith.constant 5.000000e-01 : f32
    %716 = vector.broadcast %cst_356 : f32 to vector<8x64xf32>
    %717 = arith.mulf %716, %715 : vector<8x64xf32>
    %718 = vector.extract_strided_slice %693 {offsets = [0, 64], sizes = [8, 64], strides = [1, 1]} : vector<8x256xf32> to vector<8x64xf32>
    %cst_357 = arith.constant 5.000000e-01 : f32
    %719 = vector.broadcast %cst_357 : f32 to vector<8x64xf32>
    %720 = arith.mulf %719, %718 : vector<8x64xf32>
    %721 = math.tanh %720 : vector<8x64xf32>
    %cst_358 = arith.constant 1.000000e+00 : f32
    %722 = vector.broadcast %cst_358 : f32 to vector<8x64xf32>
    %723 = arith.addf %721, %722 : vector<8x64xf32>
    %cst_359 = arith.constant 5.000000e-01 : f32
    %724 = vector.broadcast %cst_359 : f32 to vector<8x64xf32>
    %725 = arith.mulf %724, %723 : vector<8x64xf32>
    %726 = vector.extract_strided_slice %688 {offsets = [0, 128], sizes = [8, 64], strides = [1, 1]} : vector<8x256xf32> to vector<8x64xf32>
    %727 = math.tanh %726 : vector<8x64xf32>
    %728 = vector.extract_strided_slice %693 {offsets = [0, 128], sizes = [8, 64], strides = [1, 1]} : vector<8x256xf32> to vector<8x64xf32>
    %729 = math.tanh %728 : vector<8x64xf32>
    %730 = vector.extract_strided_slice %688 {offsets = [0, 192], sizes = [8, 64], strides = [1, 1]} : vector<8x256xf32> to vector<8x64xf32>
    %cst_360 = arith.constant 5.000000e-01 : f32
    %731 = vector.broadcast %cst_360 : f32 to vector<8x64xf32>
    %732 = arith.mulf %731, %730 : vector<8x64xf32>
    %733 = math.tanh %732 : vector<8x64xf32>
    %cst_361 = arith.constant 1.000000e+00 : f32
    %734 = vector.broadcast %cst_361 : f32 to vector<8x64xf32>
    %735 = arith.addf %733, %734 : vector<8x64xf32>
    %cst_362 = arith.constant 5.000000e-01 : f32
    %736 = vector.broadcast %cst_362 : f32 to vector<8x64xf32>
    %737 = arith.mulf %736, %735 : vector<8x64xf32>
    %738 = vector.extract_strided_slice %693 {offsets = [0, 192], sizes = [8, 64], strides = [1, 1]} : vector<8x256xf32> to vector<8x64xf32>
    %cst_363 = arith.constant 5.000000e-01 : f32
    %739 = vector.broadcast %cst_363 : f32 to vector<8x64xf32>
    %740 = arith.mulf %739, %738 : vector<8x64xf32>
    %741 = math.tanh %740 : vector<8x64xf32>
    %cst_364 = arith.constant 1.000000e+00 : f32
    %742 = vector.broadcast %cst_364 : f32 to vector<8x64xf32>
    %743 = arith.addf %741, %742 : vector<8x64xf32>
    %cst_365 = arith.constant 5.000000e-01 : f32
    %744 = vector.broadcast %cst_365 : f32 to vector<8x64xf32>
    %745 = arith.mulf %744, %743 : vector<8x64xf32>
    %746 = arith.mulf %717, %654 : vector<8x64xf32>
    %747 = arith.mulf %701, %727 : vector<8x64xf32>
    %748 = arith.addf %746, %747 : vector<8x64xf32>
    %749 = arith.mulf %725, %657 : vector<8x64xf32>
    %750 = arith.mulf %709, %729 : vector<8x64xf32>
    %751 = arith.addf %749, %750 : vector<8x64xf32>
    %752 = math.tanh %748 : vector<8x64xf32>
    %753 = arith.mulf %737, %752 : vector<8x64xf32>
    %754 = math.tanh %751 : vector<8x64xf32>
    %755 = arith.mulf %745, %754 : vector<8x64xf32>
    %c0_366 = arith.constant 0 : index
    %c7_367 = arith.constant 7 : index
    %c0_368 = arith.constant 0 : index
    %c0_369 = arith.constant 0 : index
    %756 = vector.load %arg8[%c0_366, %c7_367, %c0_368, %c0_369] : memref<2x8x8x64xf32, #tpu.memory_space<vmem>>, vector<1x1x8x64xf32>
    %757 = vector.shape_cast %756 : vector<1x1x8x64xf32> to vector<8x64xf32>
    %758 = vector.shape_cast %753 : vector<8x64xf32> to vector<1x1x8x64xf32>
    tpu.vector_store %arg8[%c0_366, %c7_367, %c0_368, %c0_369], %758 {strides = array<i32>} : memref<2x8x8x64xf32, #tpu.memory_space<vmem>>, vector<1x1x8x64xf32>,
    %c1_370 = arith.constant 1 : index
    %c0_371 = arith.constant 0 : index
    %c0_372 = arith.constant 0 : index
    %c0_373 = arith.constant 0 : index
    %759 = vector.load %arg8[%c1_370, %c0_371, %c0_372, %c0_373] : memref<2x8x8x64xf32, #tpu.memory_space<vmem>>, vector<1x1x8x64xf32>
    %760 = vector.shape_cast %759 : vector<1x1x8x64xf32> to vector<8x64xf32>
    %761 = vector.shape_cast %755 : vector<8x64xf32> to vector<1x1x8x64xf32>
    tpu.vector_store %arg8[%c1_370, %c0_371, %c0_372, %c0_373], %761 {strides = array<i32>} : memref<2x8x8x64xf32, #tpu.memory_space<vmem>>, vector<1x1x8x64xf32>,
    %c7_374 = arith.constant 7 : index
    %c0_375 = arith.constant 0 : index
    %c0_376 = arith.constant 0 : index
    %762 = vector.load %arg6[%c7_374, %c0_375, %c0_376] : memref<8x8x128xf32, #tpu.memory_space<vmem>>, vector<1x8x64xf32>
    %763 = vector.shape_cast %762 : vector<1x8x64xf32> to vector<8x64xf32>
    %764 = vector.broadcast %24 : f32 to vector<8x64xf32>
    %765 = arith.mulf %764, %753 : vector<8x64xf32>
    %766 = arith.addf %763, %765 : vector<8x64xf32>
    %c7_377 = arith.constant 7 : index
    %c0_378 = arith.constant 0 : index
    %c0_379 = arith.constant 0 : index
    %767 = vector.load %arg6[%c7_377, %c0_378, %c0_379] : memref<8x8x128xf32, #tpu.memory_space<vmem>>, vector<1x8x64xf32>
    %768 = vector.shape_cast %767 : vector<1x8x64xf32> to vector<8x64xf32>
    %769 = vector.shape_cast %766 : vector<8x64xf32> to vector<1x8x64xf32>
    tpu.vector_store %arg6[%c7_377, %c0_378, %c0_379], %769 {strides = array<i32>} : memref<8x8x128xf32, #tpu.memory_space<vmem>>, vector<1x8x64xf32>,
    %c0_380 = arith.constant 0 : index
    %c0_381 = arith.constant 0 : index
    %c64_382 = arith.constant 64 : index
    %770 = vector.load %arg6[%c0_380, %c0_381, %c64_382] : memref<8x8x128xf32, #tpu.memory_space<vmem>>, vector<1x8x64xf32>
    %771 = vector.shape_cast %770 : vector<1x8x64xf32> to vector<8x64xf32>
    %772 = vector.broadcast %24 : f32 to vector<8x64xf32>
    %773 = arith.mulf %772, %755 : vector<8x64xf32>
    %774 = arith.addf %771, %773 : vector<8x64xf32>
    %c0_383 = arith.constant 0 : index
    %c0_384 = arith.constant 0 : index
    %c64_385 = arith.constant 64 : index
    %775 = vector.load %arg6[%c0_383, %c0_384, %c64_385] : memref<8x8x128xf32, #tpu.memory_space<vmem>>, vector<1x8x64xf32>
    %776 = vector.shape_cast %775 : vector<1x8x64xf32> to vector<8x64xf32>
    %777 = vector.shape_cast %774 : vector<8x64xf32> to vector<1x8x64xf32>
    tpu.vector_store %arg6[%c0_383, %c0_384, %c64_385], %777 {strides = array<i32>} : memref<8x8x128xf32, #tpu.memory_space<vmem>>, vector<1x8x64xf32>,
    %c1_386 = arith.constant 1 : index
    %c0_387 = arith.constant 0 : index
    %778 = vector.load %arg5[%c1_386, %c0_387] : memref<2x512xf32, #tpu.memory_space<vmem>>, vector<1x512xf32>
    %779 = vector.shape_cast %778 : vector<1x512xf32> to vector<512xf32>
    %c1_388 = arith.constant 1 : index
    %c0_389 = arith.constant 0 : index
    %c0_390 = arith.constant 0 : index
    %780 = vector.load %arg3[%c1_388, %c0_389, %c0_390] : memref<2x64x512xbf16, #tpu.memory_space<vmem>>, vector<1x64x512xbf16>
    %781 = vector.shape_cast %780 : vector<1x64x512xbf16> to vector<64x512xbf16>
    %c0_391 = arith.constant 0 : index
    %c0_392 = arith.constant 0 : index
    %c0_393 = arith.constant 0 : index
    %c0_394 = arith.constant 0 : index
    %782 = vector.load %arg8[%c0_391, %c0_392, %c0_393, %c0_394] : memref<2x8x8x64xf32, #tpu.memory_space<vmem>>, vector<1x8x8x64xf32>
    %783 = vector.shape_cast %782 : vector<1x8x8x64xf32> to vector<8x8x64xf32>
    %784 = vector.shape_cast %783 : vector<8x8x64xf32> to vector<64x64xf32>
    %785 = arith.truncf %784 : vector<64x64xf32> to vector<64x64xbf16>
    %786 = vector.extract_strided_slice %781 {offsets = [0, 0], sizes = [64, 256], strides = [1, 1]} : vector<64x512xbf16> to vector<64x256xbf16>
    %cst_395 = arith.constant dense<0.000000e+00> : vector<64x256xf32>
    %787 = tpu.matmul %785, %786, %cst_395 {dimension_numbers = #tpu.dot_dimension_numbers<[1], [0], [0], [1], [0, 0, 1, 1], [], []>} : vector<64x64xbf16>, vector<64x256xbf16>, vector<64x256xf32> -> vector<64x256xf32>
    %788 = vector.extract_strided_slice %779 {offsets = [0], sizes = [256], strides = [1]} : vector<512xf32> to vector<256xf32>
    %789 = vector.shape_cast %788 : vector<256xf32> to vector<1x256xf32>
    %790 = vector.broadcast %789 : vector<1x256xf32> to vector<64x256xf32>
    %791 = arith.addf %787, %790 : vector<64x256xf32>
    %792 = vector.shape_cast %791 : vector<64x256xf32> to vector<8x8x256xf32>
    %c0_396 = arith.constant 0 : index
    %c0_397 = arith.constant 0 : index
    %c0_398 = arith.constant 0 : index
    %793 = vector.load %arg7[%c0_396, %c0_397, %c0_398] : memref<8x8x512xf32, #tpu.memory_space<vmem>>, vector<8x8x256xf32>
    tpu.vector_store %arg7[%c0_396, %c0_397, %c0_398], %792 {strides = array<i32>} : memref<8x8x512xf32, #tpu.memory_space<vmem>>, vector<8x8x256xf32>,
    %c1_399 = arith.constant 1 : index
    %c0_400 = arith.constant 0 : index
    %c0_401 = arith.constant 0 : index
    %c0_402 = arith.constant 0 : index
    %794 = vector.load %arg8[%c1_399, %c0_400, %c0_401, %c0_402] : memref<2x8x8x64xf32, #tpu.memory_space<vmem>>, vector<1x8x8x64xf32>
    %795 = vector.shape_cast %794 : vector<1x8x8x64xf32> to vector<8x8x64xf32>
    %796 = vector.shape_cast %795 : vector<8x8x64xf32> to vector<64x64xf32>
    %797 = arith.truncf %796 : vector<64x64xf32> to vector<64x64xbf16>
    %798 = vector.extract_strided_slice %781 {offsets = [0, 256], sizes = [64, 256], strides = [1, 1]} : vector<64x512xbf16> to vector<64x256xbf16>
    %cst_403 = arith.constant dense<0.000000e+00> : vector<64x256xf32>
    %799 = tpu.matmul %797, %798, %cst_403 {dimension_numbers = #tpu.dot_dimension_numbers<[1], [0], [0], [1], [0, 0, 1, 1], [], []>} : vector<64x64xbf16>, vector<64x256xbf16>, vector<64x256xf32> -> vector<64x256xf32>
    %800 = vector.extract_strided_slice %779 {offsets = [256], sizes = [256], strides = [1]} : vector<512xf32> to vector<256xf32>
    %801 = vector.shape_cast %800 : vector<256xf32> to vector<1x256xf32>
    %802 = vector.broadcast %801 : vector<1x256xf32> to vector<64x256xf32>
    %803 = arith.addf %799, %802 : vector<64x256xf32>
    %804 = vector.shape_cast %803 : vector<64x256xf32> to vector<8x8x256xf32>
    %c0_404 = arith.constant 0 : index
    %c0_405 = arith.constant 0 : index
    %c256_406 = arith.constant 256 : index
    %805 = vector.load %arg7[%c0_404, %c0_405, %c256_406] : memref<8x8x512xf32, #tpu.memory_space<vmem>>, vector<8x8x256xf32>
    tpu.vector_store %arg7[%c0_404, %c0_405, %c256_406], %804 {strides = array<i32>} : memref<8x8x512xf32, #tpu.memory_space<vmem>>, vector<8x8x256xf32>,
    %c0_407 = arith.constant 0 : index
    %c1_408 = arith.constant 1 : index
    %c0_409 = arith.constant 0 : index
    %c0_410 = arith.constant 0 : index
    %806 = vector.load %arg4[%c0_407, %c1_408, %c0_409, %c0_410] : memref<2x2x64x256xbf16, #tpu.memory_space<vmem>>, vector<1x1x64x256xbf16>
    %807 = vector.shape_cast %806 : vector<1x1x64x256xbf16> to vector<64x256xbf16>
    %c1_411 = arith.constant 1 : index
    %c1_412 = arith.constant 1 : index
    %c0_413 = arith.constant 0 : index
    %c0_414 = arith.constant 0 : index
    %808 = vector.load %arg4[%c1_411, %c1_412, %c0_413, %c0_414] : memref<2x2x64x256xbf16, #tpu.memory_space<vmem>>, vector<1x1x64x256xbf16>
    %809 = vector.shape_cast %808 : vector<1x1x64x256xbf16> to vector<64x256xbf16>
    %c2_415 = arith.constant 2 : index
    %810 = memref.load %arg1[%c2_415] : memref<3xf32, #tpu.memory_space<smem>>
    %cst_416 = arith.constant 0.000000e+00 : f32
    %811 = vector.broadcast %cst_416 : f32 to vector<8x64xf32>
    %c0_417 = arith.constant 0 : index
    %c0_418 = arith.constant 0 : index
    %c0_419 = arith.constant 0 : index
    %812 = vector.load %arg7[%c0_417, %c0_418, %c0_419] : memref<8x8x512xf32, #tpu.memory_space<vmem>>, vector<1x8x256xf32>
    %813 = vector.shape_cast %812 : vector<1x8x256xf32> to vector<8x256xf32>
    %814 = arith.truncf %811 : vector<8x64xf32> to vector<8x64xbf16>
    %cst_420 = arith.constant dense<0.000000e+00> : vector<8x256xf32>
    %815 = tpu.matmul %814, %807, %cst_420 {dimension_numbers = #tpu.dot_dimension_numbers<[1], [0], [0], [1], [0, 0, 1, 1], [], []>} : vector<8x64xbf16>, vector<64x256xbf16>, vector<8x256xf32> -> vector<8x256xf32>
    %816 = arith.addf %813, %815 : vector<8x256xf32>
    %c7_421 = arith.constant 7 : index
    %c0_422 = arith.constant 0 : index
    %c256_423 = arith.constant 256 : index
    %817 = vector.load %arg7[%c7_421, %c0_422, %c256_423] : memref<8x8x512xf32, #tpu.memory_space<vmem>>, vector<1x8x256xf32>
    %818 = vector.shape_cast %817 : vector<1x8x256xf32> to vector<8x256xf32>
    %819 = arith.truncf %811 : vector<8x64xf32> to vector<8x64xbf16>
    %cst_424 = arith.constant dense<0.000000e+00> : vector<8x256xf32>
    %820 = tpu.matmul %819, %809, %cst_424 {dimension_numbers = #tpu.dot_dimension_numbers<[1], [0], [0], [1], [0, 0, 1, 1], [], []>} : vector<8x64xbf16>, vector<64x256xbf16>, vector<8x256xf32> -> vector<8x256xf32>
    %821 = arith.addf %818, %820 : vector<8x256xf32>
    %822 = vector.extract_strided_slice %816 {offsets = [0, 0], sizes = [8, 64], strides = [1, 1]} : vector<8x256xf32> to vector<8x64xf32>
    %cst_425 = arith.constant 5.000000e-01 : f32
    %823 = vector.broadcast %cst_425 : f32 to vector<8x64xf32>
    %824 = arith.mulf %823, %822 : vector<8x64xf32>
    %825 = math.tanh %824 : vector<8x64xf32>
    %cst_426 = arith.constant 1.000000e+00 : f32
    %826 = vector.broadcast %cst_426 : f32 to vector<8x64xf32>
    %827 = arith.addf %825, %826 : vector<8x64xf32>
    %cst_427 = arith.constant 5.000000e-01 : f32
    %828 = vector.broadcast %cst_427 : f32 to vector<8x64xf32>
    %829 = arith.mulf %828, %827 : vector<8x64xf32>
    %830 = vector.extract_strided_slice %821 {offsets = [0, 0], sizes = [8, 64], strides = [1, 1]} : vector<8x256xf32> to vector<8x64xf32>
    %cst_428 = arith.constant 5.000000e-01 : f32
    %831 = vector.broadcast %cst_428 : f32 to vector<8x64xf32>
    %832 = arith.mulf %831, %830 : vector<8x64xf32>
    %833 = math.tanh %832 : vector<8x64xf32>
    %cst_429 = arith.constant 1.000000e+00 : f32
    %834 = vector.broadcast %cst_429 : f32 to vector<8x64xf32>
    %835 = arith.addf %833, %834 : vector<8x64xf32>
    %cst_430 = arith.constant 5.000000e-01 : f32
    %836 = vector.broadcast %cst_430 : f32 to vector<8x64xf32>
    %837 = arith.mulf %836, %835 : vector<8x64xf32>
    %838 = vector.extract_strided_slice %816 {offsets = [0, 64], sizes = [8, 64], strides = [1, 1]} : vector<8x256xf32> to vector<8x64xf32>
    %cst_431 = arith.constant 5.000000e-01 : f32
    %839 = vector.broadcast %cst_431 : f32 to vector<8x64xf32>
    %840 = arith.mulf %839, %838 : vector<8x64xf32>
    %841 = math.tanh %840 : vector<8x64xf32>
    %cst_432 = arith.constant 1.000000e+00 : f32
    %842 = vector.broadcast %cst_432 : f32 to vector<8x64xf32>
    %843 = arith.addf %841, %842 : vector<8x64xf32>
    %cst_433 = arith.constant 5.000000e-01 : f32
    %844 = vector.broadcast %cst_433 : f32 to vector<8x64xf32>
    %845 = arith.mulf %844, %843 : vector<8x64xf32>
    %846 = vector.extract_strided_slice %821 {offsets = [0, 64], sizes = [8, 64], strides = [1, 1]} : vector<8x256xf32> to vector<8x64xf32>
    %cst_434 = arith.constant 5.000000e-01 : f32
    %847 = vector.broadcast %cst_434 : f32 to vector<8x64xf32>
    %848 = arith.mulf %847, %846 : vector<8x64xf32>
    %849 = math.tanh %848 : vector<8x64xf32>
    %cst_435 = arith.constant 1.000000e+00 : f32
    %850 = vector.broadcast %cst_435 : f32 to vector<8x64xf32>
    %851 = arith.addf %849, %850 : vector<8x64xf32>
    %cst_436 = arith.constant 5.000000e-01 : f32
    %852 = vector.broadcast %cst_436 : f32 to vector<8x64xf32>
    %853 = arith.mulf %852, %851 : vector<8x64xf32>
    %854 = vector.extract_strided_slice %816 {offsets = [0, 128], sizes = [8, 64], strides = [1, 1]} : vector<8x256xf32> to vector<8x64xf32>
    %855 = math.tanh %854 : vector<8x64xf32>
    %856 = vector.extract_strided_slice %821 {offsets = [0, 128], sizes = [8, 64], strides = [1, 1]} : vector<8x256xf32> to vector<8x64xf32>
    %857 = math.tanh %856 : vector<8x64xf32>
    %858 = vector.extract_strided_slice %816 {offsets = [0, 192], sizes = [8, 64], strides = [1, 1]} : vector<8x256xf32> to vector<8x64xf32>
    %cst_437 = arith.constant 5.000000e-01 : f32
    %859 = vector.broadcast %cst_437 : f32 to vector<8x64xf32>
    %860 = arith.mulf %859, %858 : vector<8x64xf32>
    %861 = math.tanh %860 : vector<8x64xf32>
    %cst_438 = arith.constant 1.000000e+00 : f32
    %862 = vector.broadcast %cst_438 : f32 to vector<8x64xf32>
    %863 = arith.addf %861, %862 : vector<8x64xf32>
    %cst_439 = arith.constant 5.000000e-01 : f32
    %864 = vector.broadcast %cst_439 : f32 to vector<8x64xf32>
    %865 = arith.mulf %864, %863 : vector<8x64xf32>
    %866 = vector.extract_strided_slice %821 {offsets = [0, 192], sizes = [8, 64], strides = [1, 1]} : vector<8x256xf32> to vector<8x64xf32>
    %cst_440 = arith.constant 5.000000e-01 : f32
    %867 = vector.broadcast %cst_440 : f32 to vector<8x64xf32>
    %868 = arith.mulf %867, %866 : vector<8x64xf32>
    %869 = math.tanh %868 : vector<8x64xf32>
    %cst_441 = arith.constant 1.000000e+00 : f32
    %870 = vector.broadcast %cst_441 : f32 to vector<8x64xf32>
    %871 = arith.addf %869, %870 : vector<8x64xf32>
    %cst_442 = arith.constant 5.000000e-01 : f32
    %872 = vector.broadcast %cst_442 : f32 to vector<8x64xf32>
    %873 = arith.mulf %872, %871 : vector<8x64xf32>
    %874 = arith.mulf %845, %811 : vector<8x64xf32>
    %875 = arith.mulf %829, %855 : vector<8x64xf32>
    %876 = arith.addf %874, %875 : vector<8x64xf32>
    %877 = arith.mulf %853, %811 : vector<8x64xf32>
    %878 = arith.mulf %837, %857 : vector<8x64xf32>
    %879 = arith.addf %877, %878 : vector<8x64xf32>
    %880 = math.tanh %876 : vector<8x64xf32>
    %881 = arith.mulf %865, %880 : vector<8x64xf32>
    %882 = math.tanh %879 : vector<8x64xf32>
    %883 = arith.mulf %873, %882 : vector<8x64xf32>
    %c0_443 = arith.constant 0 : index
    %c0_444 = arith.constant 0 : index
    %c0_445 = arith.constant 0 : index
    %884 = vector.load %arg6[%c0_443, %c0_444, %c0_445] : memref<8x8x128xf32, #tpu.memory_space<vmem>>, vector<1x8x64xf32>
    %885 = vector.shape_cast %884 : vector<1x8x64xf32> to vector<8x64xf32>
    %886 = vector.broadcast %810 : f32 to vector<8x64xf32>
    %887 = arith.mulf %886, %881 : vector<8x64xf32>
    %888 = arith.addf %885, %887 : vector<8x64xf32>
    %c0_446 = arith.constant 0 : index
    %c0_447 = arith.constant 0 : index
    %c0_448 = arith.constant 0 : index
    %889 = vector.load %arg6[%c0_446, %c0_447, %c0_448] : memref<8x8x128xf32, #tpu.memory_space<vmem>>, vector<1x8x64xf32>
    %890 = vector.shape_cast %889 : vector<1x8x64xf32> to vector<8x64xf32>
    %891 = vector.shape_cast %888 : vector<8x64xf32> to vector<1x8x64xf32>
    tpu.vector_store %arg6[%c0_446, %c0_447, %c0_448], %891 {strides = array<i32>} : memref<8x8x128xf32, #tpu.memory_space<vmem>>, vector<1x8x64xf32>,
    %c7_449 = arith.constant 7 : index
    %c0_450 = arith.constant 0 : index
    %c64_451 = arith.constant 64 : index
    %892 = vector.load %arg6[%c7_449, %c0_450, %c64_451] : memref<8x8x128xf32, #tpu.memory_space<vmem>>, vector<1x8x64xf32>
    %893 = vector.shape_cast %892 : vector<1x8x64xf32> to vector<8x64xf32>
    %894 = vector.broadcast %810 : f32 to vector<8x64xf32>
    %895 = arith.mulf %894, %883 : vector<8x64xf32>
    %896 = arith.addf %893, %895 : vector<8x64xf32>
    %c7_452 = arith.constant 7 : index
    %c0_453 = arith.constant 0 : index
    %c64_454 = arith.constant 64 : index
    %897 = vector.load %arg6[%c7_452, %c0_453, %c64_454] : memref<8x8x128xf32, #tpu.memory_space<vmem>>, vector<1x8x64xf32>
    %898 = vector.shape_cast %897 : vector<1x8x64xf32> to vector<8x64xf32>
    %899 = vector.shape_cast %896 : vector<8x64xf32> to vector<1x8x64xf32>
    tpu.vector_store %arg6[%c7_452, %c0_453, %c64_454], %899 {strides = array<i32>} : memref<8x8x128xf32, #tpu.memory_space<vmem>>, vector<1x8x64xf32>,
    %c1_455 = arith.constant 1 : index
    %c0_456 = arith.constant 0 : index
    %c0_457 = arith.constant 0 : index
    %900 = vector.load %arg7[%c1_455, %c0_456, %c0_457] : memref<8x8x512xf32, #tpu.memory_space<vmem>>, vector<1x8x256xf32>
    %901 = vector.shape_cast %900 : vector<1x8x256xf32> to vector<8x256xf32>
    %902 = arith.truncf %881 : vector<8x64xf32> to vector<8x64xbf16>
    %cst_458 = arith.constant dense<0.000000e+00> : vector<8x256xf32>
    %903 = tpu.matmul %902, %807, %cst_458 {dimension_numbers = #tpu.dot_dimension_numbers<[1], [0], [0], [1], [0, 0, 1, 1], [], []>} : vector<8x64xbf16>, vector<64x256xbf16>, vector<8x256xf32> -> vector<8x256xf32>
    %904 = arith.addf %901, %903 : vector<8x256xf32>
    %c6_459 = arith.constant 6 : index
    %c0_460 = arith.constant 0 : index
    %c256_461 = arith.constant 256 : index
    %905 = vector.load %arg7[%c6_459, %c0_460, %c256_461] : memref<8x8x512xf32, #tpu.memory_space<vmem>>, vector<1x8x256xf32>
    %906 = vector.shape_cast %905 : vector<1x8x256xf32> to vector<8x256xf32>
    %907 = arith.truncf %883 : vector<8x64xf32> to vector<8x64xbf16>
    %cst_462 = arith.constant dense<0.000000e+00> : vector<8x256xf32>
    %908 = tpu.matmul %907, %809, %cst_462 {dimension_numbers = #tpu.dot_dimension_numbers<[1], [0], [0], [1], [0, 0, 1, 1], [], []>} : vector<8x64xbf16>, vector<64x256xbf16>, vector<8x256xf32> -> vector<8x256xf32>
    %909 = arith.addf %906, %908 : vector<8x256xf32>
    %910 = vector.extract_strided_slice %904 {offsets = [0, 0], sizes = [8, 64], strides = [1, 1]} : vector<8x256xf32> to vector<8x64xf32>
    %cst_463 = arith.constant 5.000000e-01 : f32
    %911 = vector.broadcast %cst_463 : f32 to vector<8x64xf32>
    %912 = arith.mulf %911, %910 : vector<8x64xf32>
    %913 = math.tanh %912 : vector<8x64xf32>
    %cst_464 = arith.constant 1.000000e+00 : f32
    %914 = vector.broadcast %cst_464 : f32 to vector<8x64xf32>
    %915 = arith.addf %913, %914 : vector<8x64xf32>
    %cst_465 = arith.constant 5.000000e-01 : f32
    %916 = vector.broadcast %cst_465 : f32 to vector<8x64xf32>
    %917 = arith.mulf %916, %915 : vector<8x64xf32>
    %918 = vector.extract_strided_slice %909 {offsets = [0, 0], sizes = [8, 64], strides = [1, 1]} : vector<8x256xf32> to vector<8x64xf32>
    %cst_466 = arith.constant 5.000000e-01 : f32
    %919 = vector.broadcast %cst_466 : f32 to vector<8x64xf32>
    %920 = arith.mulf %919, %918 : vector<8x64xf32>
    %921 = math.tanh %920 : vector<8x64xf32>
    %cst_467 = arith.constant 1.000000e+00 : f32
    %922 = vector.broadcast %cst_467 : f32 to vector<8x64xf32>
    %923 = arith.addf %921, %922 : vector<8x64xf32>
    %cst_468 = arith.constant 5.000000e-01 : f32
    %924 = vector.broadcast %cst_468 : f32 to vector<8x64xf32>
    %925 = arith.mulf %924, %923 : vector<8x64xf32>
    %926 = vector.extract_strided_slice %904 {offsets = [0, 64], sizes = [8, 64], strides = [1, 1]} : vector<8x256xf32> to vector<8x64xf32>
    %cst_469 = arith.constant 5.000000e-01 : f32
    %927 = vector.broadcast %cst_469 : f32 to vector<8x64xf32>
    %928 = arith.mulf %927, %926 : vector<8x64xf32>
    %929 = math.tanh %928 : vector<8x64xf32>
    %cst_470 = arith.constant 1.000000e+00 : f32
    %930 = vector.broadcast %cst_470 : f32 to vector<8x64xf32>
    %931 = arith.addf %929, %930 : vector<8x64xf32>
    %cst_471 = arith.constant 5.000000e-01 : f32
    %932 = vector.broadcast %cst_471 : f32 to vector<8x64xf32>
    %933 = arith.mulf %932, %931 : vector<8x64xf32>
    %934 = vector.extract_strided_slice %909 {offsets = [0, 64], sizes = [8, 64], strides = [1, 1]} : vector<8x256xf32> to vector<8x64xf32>
    %cst_472 = arith.constant 5.000000e-01 : f32
    %935 = vector.broadcast %cst_472 : f32 to vector<8x64xf32>
    %936 = arith.mulf %935, %934 : vector<8x64xf32>
    %937 = math.tanh %936 : vector<8x64xf32>
    %cst_473 = arith.constant 1.000000e+00 : f32
    %938 = vector.broadcast %cst_473 : f32 to vector<8x64xf32>
    %939 = arith.addf %937, %938 : vector<8x64xf32>
    %cst_474 = arith.constant 5.000000e-01 : f32
    %940 = vector.broadcast %cst_474 : f32 to vector<8x64xf32>
    %941 = arith.mulf %940, %939 : vector<8x64xf32>
    %942 = vector.extract_strided_slice %904 {offsets = [0, 128], sizes = [8, 64], strides = [1, 1]} : vector<8x256xf32> to vector<8x64xf32>
    %943 = math.tanh %942 : vector<8x64xf32>
    %944 = vector.extract_strided_slice %909 {offsets = [0, 128], sizes = [8, 64], strides = [1, 1]} : vector<8x256xf32> to vector<8x64xf32>
    %945 = math.tanh %944 : vector<8x64xf32>
    %946 = vector.extract_strided_slice %904 {offsets = [0, 192], sizes = [8, 64], strides = [1, 1]} : vector<8x256xf32> to vector<8x64xf32>
    %cst_475 = arith.constant 5.000000e-01 : f32
    %947 = vector.broadcast %cst_475 : f32 to vector<8x64xf32>
    %948 = arith.mulf %947, %946 : vector<8x64xf32>
    %949 = math.tanh %948 : vector<8x64xf32>
    %cst_476 = arith.constant 1.000000e+00 : f32
    %950 = vector.broadcast %cst_476 : f32 to vector<8x64xf32>
    %951 = arith.addf %949, %950 : vector<8x64xf32>
    %cst_477 = arith.constant 5.000000e-01 : f32
    %952 = vector.broadcast %cst_477 : f32 to vector<8x64xf32>
    %953 = arith.mulf %952, %951 : vector<8x64xf32>
    %954 = vector.extract_strided_slice %909 {offsets = [0, 192], sizes = [8, 64], strides = [1, 1]} : vector<8x256xf32> to vector<8x64xf32>
    %cst_478 = arith.constant 5.000000e-01 : f32
    %955 = vector.broadcast %cst_478 : f32 to vector<8x64xf32>
    %956 = arith.mulf %955, %954 : vector<8x64xf32>
    %957 = math.tanh %956 : vector<8x64xf32>
    %cst_479 = arith.constant 1.000000e+00 : f32
    %958 = vector.broadcast %cst_479 : f32 to vector<8x64xf32>
    %959 = arith.addf %957, %958 : vector<8x64xf32>
    %cst_480 = arith.constant 5.000000e-01 : f32
    %960 = vector.broadcast %cst_480 : f32 to vector<8x64xf32>
    %961 = arith.mulf %960, %959 : vector<8x64xf32>
    %962 = arith.mulf %933, %876 : vector<8x64xf32>
    %963 = arith.mulf %917, %943 : vector<8x64xf32>
    %964 = arith.addf %962, %963 : vector<8x64xf32>
    %965 = arith.mulf %941, %879 : vector<8x64xf32>
    %966 = arith.mulf %925, %945 : vector<8x64xf32>
    %967 = arith.addf %965, %966 : vector<8x64xf32>
    %968 = math.tanh %964 : vector<8x64xf32>
    %969 = arith.mulf %953, %968 : vector<8x64xf32>
    %970 = math.tanh %967 : vector<8x64xf32>
    %971 = arith.mulf %961, %970 : vector<8x64xf32>
    %c1_481 = arith.constant 1 : index
    %c0_482 = arith.constant 0 : index
    %c0_483 = arith.constant 0 : index
    %972 = vector.load %arg6[%c1_481, %c0_482, %c0_483] : memref<8x8x128xf32, #tpu.memory_space<vmem>>, vector<1x8x64xf32>
    %973 = vector.shape_cast %972 : vector<1x8x64xf32> to vector<8x64xf32>
    %974 = vector.broadcast %810 : f32 to vector<8x64xf32>
    %975 = arith.mulf %974, %969 : vector<8x64xf32>
    %976 = arith.addf %973, %975 : vector<8x64xf32>
    %c1_484 = arith.constant 1 : index
    %c0_485 = arith.constant 0 : index
    %c0_486 = arith.constant 0 : index
    %977 = vector.load %arg6[%c1_484, %c0_485, %c0_486] : memref<8x8x128xf32, #tpu.memory_space<vmem>>, vector<1x8x64xf32>
    %978 = vector.shape_cast %977 : vector<1x8x64xf32> to vector<8x64xf32>
    %979 = vector.shape_cast %976 : vector<8x64xf32> to vector<1x8x64xf32>
    tpu.vector_store %arg6[%c1_484, %c0_485, %c0_486], %979 {strides = array<i32>} : memref<8x8x128xf32, #tpu.memory_space<vmem>>, vector<1x8x64xf32>,
    %c6_487 = arith.constant 6 : index
    %c0_488 = arith.constant 0 : index
    %c64_489 = arith.constant 64 : index
    %980 = vector.load %arg6[%c6_487, %c0_488, %c64_489] : memref<8x8x128xf32, #tpu.memory_space<vmem>>, vector<1x8x64xf32>
    %981 = vector.shape_cast %980 : vector<1x8x64xf32> to vector<8x64xf32>
    %982 = vector.broadcast %810 : f32 to vector<8x64xf32>
    %983 = arith.mulf %982, %971 : vector<8x64xf32>
    %984 = arith.addf %981, %983 : vector<8x64xf32>
    %c6_490 = arith.constant 6 : index
    %c0_491 = arith.constant 0 : index
    %c64_492 = arith.constant 64 : index
    %985 = vector.load %arg6[%c6_490, %c0_491, %c64_492] : memref<8x8x128xf32, #tpu.memory_space<vmem>>, vector<1x8x64xf32>
    %986 = vector.shape_cast %985 : vector<1x8x64xf32> to vector<8x64xf32>
    %987 = vector.shape_cast %984 : vector<8x64xf32> to vector<1x8x64xf32>
    tpu.vector_store %arg6[%c6_490, %c0_491, %c64_492], %987 {strides = array<i32>} : memref<8x8x128xf32, #tpu.memory_space<vmem>>, vector<1x8x64xf32>,
    %c2_493 = arith.constant 2 : index
    %c0_494 = arith.constant 0 : index
    %c0_495 = arith.constant 0 : index
    %988 = vector.load %arg7[%c2_493, %c0_494, %c0_495] : memref<8x8x512xf32, #tpu.memory_space<vmem>>, vector<1x8x256xf32>
    %989 = vector.shape_cast %988 : vector<1x8x256xf32> to vector<8x256xf32>
    %990 = arith.truncf %969 : vector<8x64xf32> to vector<8x64xbf16>
    %cst_496 = arith.constant dense<0.000000e+00> : vector<8x256xf32>
    %991 = tpu.matmul %990, %807, %cst_496 {dimension_numbers = #tpu.dot_dimension_numbers<[1], [0], [0], [1], [0, 0, 1, 1], [], []>} : vector<8x64xbf16>, vector<64x256xbf16>, vector<8x256xf32> -> vector<8x256xf32>
    %992 = arith.addf %989, %991 : vector<8x256xf32>
    %c5_497 = arith.constant 5 : index
    %c0_498 = arith.constant 0 : index
    %c256_499 = arith.constant 256 : index
    %993 = vector.load %arg7[%c5_497, %c0_498, %c256_499] : memref<8x8x512xf32, #tpu.memory_space<vmem>>, vector<1x8x256xf32>
    %994 = vector.shape_cast %993 : vector<1x8x256xf32> to vector<8x256xf32>
    %995 = arith.truncf %971 : vector<8x64xf32> to vector<8x64xbf16>
    %cst_500 = arith.constant dense<0.000000e+00> : vector<8x256xf32>
    %996 = tpu.matmul %995, %809, %cst_500 {dimension_numbers = #tpu.dot_dimension_numbers<[1], [0], [0], [1], [0, 0, 1, 1], [], []>} : vector<8x64xbf16>, vector<64x256xbf16>, vector<8x256xf32> -> vector<8x256xf32>
    %997 = arith.addf %994, %996 : vector<8x256xf32>
    %998 = vector.extract_strided_slice %992 {offsets = [0, 0], sizes = [8, 64], strides = [1, 1]} : vector<8x256xf32> to vector<8x64xf32>
    %cst_501 = arith.constant 5.000000e-01 : f32
    %999 = vector.broadcast %cst_501 : f32 to vector<8x64xf32>
    %1000 = arith.mulf %999, %998 : vector<8x64xf32>
    %1001 = math.tanh %1000 : vector<8x64xf32>
    %cst_502 = arith.constant 1.000000e+00 : f32
    %1002 = vector.broadcast %cst_502 : f32 to vector<8x64xf32>
    %1003 = arith.addf %1001, %1002 : vector<8x64xf32>
    %cst_503 = arith.constant 5.000000e-01 : f32
    %1004 = vector.broadcast %cst_503 : f32 to vector<8x64xf32>
    %1005 = arith.mulf %1004, %1003 : vector<8x64xf32>
    %1006 = vector.extract_strided_slice %997 {offsets = [0, 0], sizes = [8, 64], strides = [1, 1]} : vector<8x256xf32> to vector<8x64xf32>
    %cst_504 = arith.constant 5.000000e-01 : f32
    %1007 = vector.broadcast %cst_504 : f32 to vector<8x64xf32>
    %1008 = arith.mulf %1007, %1006 : vector<8x64xf32>
    %1009 = math.tanh %1008 : vector<8x64xf32>
    %cst_505 = arith.constant 1.000000e+00 : f32
    %1010 = vector.broadcast %cst_505 : f32 to vector<8x64xf32>
    %1011 = arith.addf %1009, %1010 : vector<8x64xf32>
    %cst_506 = arith.constant 5.000000e-01 : f32
    %1012 = vector.broadcast %cst_506 : f32 to vector<8x64xf32>
    %1013 = arith.mulf %1012, %1011 : vector<8x64xf32>
    %1014 = vector.extract_strided_slice %992 {offsets = [0, 64], sizes = [8, 64], strides = [1, 1]} : vector<8x256xf32> to vector<8x64xf32>
    %cst_507 = arith.constant 5.000000e-01 : f32
    %1015 = vector.broadcast %cst_507 : f32 to vector<8x64xf32>
    %1016 = arith.mulf %1015, %1014 : vector<8x64xf32>
    %1017 = math.tanh %1016 : vector<8x64xf32>
    %cst_508 = arith.constant 1.000000e+00 : f32
    %1018 = vector.broadcast %cst_508 : f32 to vector<8x64xf32>
    %1019 = arith.addf %1017, %1018 : vector<8x64xf32>
    %cst_509 = arith.constant 5.000000e-01 : f32
    %1020 = vector.broadcast %cst_509 : f32 to vector<8x64xf32>
    %1021 = arith.mulf %1020, %1019 : vector<8x64xf32>
    %1022 = vector.extract_strided_slice %997 {offsets = [0, 64], sizes = [8, 64], strides = [1, 1]} : vector<8x256xf32> to vector<8x64xf32>
    %cst_510 = arith.constant 5.000000e-01 : f32
    %1023 = vector.broadcast %cst_510 : f32 to vector<8x64xf32>
    %1024 = arith.mulf %1023, %1022 : vector<8x64xf32>
    %1025 = math.tanh %1024 : vector<8x64xf32>
    %cst_511 = arith.constant 1.000000e+00 : f32
    %1026 = vector.broadcast %cst_511 : f32 to vector<8x64xf32>
    %1027 = arith.addf %1025, %1026 : vector<8x64xf32>
    %cst_512 = arith.constant 5.000000e-01 : f32
    %1028 = vector.broadcast %cst_512 : f32 to vector<8x64xf32>
    %1029 = arith.mulf %1028, %1027 : vector<8x64xf32>
    %1030 = vector.extract_strided_slice %992 {offsets = [0, 128], sizes = [8, 64], strides = [1, 1]} : vector<8x256xf32> to vector<8x64xf32>
    %1031 = math.tanh %1030 : vector<8x64xf32>
    %1032 = vector.extract_strided_slice %997 {offsets = [0, 128], sizes = [8, 64], strides = [1, 1]} : vector<8x256xf32> to vector<8x64xf32>
    %1033 = math.tanh %1032 : vector<8x64xf32>
    %1034 = vector.extract_strided_slice %992 {offsets = [0, 192], sizes = [8, 64], strides = [1, 1]} : vector<8x256xf32> to vector<8x64xf32>
    %cst_513 = arith.constant 5.000000e-01 : f32
    %1035 = vector.broadcast %cst_513 : f32 to vector<8x64xf32>
    %1036 = arith.mulf %1035, %1034 : vector<8x64xf32>
    %1037 = math.tanh %1036 : vector<8x64xf32>
    %cst_514 = arith.constant 1.000000e+00 : f32
    %1038 = vector.broadcast %cst_514 : f32 to vector<8x64xf32>
    %1039 = arith.addf %1037, %1038 : vector<8x64xf32>
    %cst_515 = arith.constant 5.000000e-01 : f32
    %1040 = vector.broadcast %cst_515 : f32 to vector<8x64xf32>
    %1041 = arith.mulf %1040, %1039 : vector<8x64xf32>
    %1042 = vector.extract_strided_slice %997 {offsets = [0, 192], sizes = [8, 64], strides = [1, 1]} : vector<8x256xf32> to vector<8x64xf32>
    %cst_516 = arith.constant 5.000000e-01 : f32
    %1043 = vector.broadcast %cst_516 : f32 to vector<8x64xf32>
    %1044 = arith.mulf %1043, %1042 : vector<8x64xf32>
    %1045 = math.tanh %1044 : vector<8x64xf32>
    %cst_517 = arith.constant 1.000000e+00 : f32
    %1046 = vector.broadcast %cst_517 : f32 to vector<8x64xf32>
    %1047 = arith.addf %1045, %1046 : vector<8x64xf32>
    %cst_518 = arith.constant 5.000000e-01 : f32
    %1048 = vector.broadcast %cst_518 : f32 to vector<8x64xf32>
    %1049 = arith.mulf %1048, %1047 : vector<8x64xf32>
    %1050 = arith.mulf %1021, %964 : vector<8x64xf32>
    %1051 = arith.mulf %1005, %1031 : vector<8x64xf32>
    %1052 = arith.addf %1050, %1051 : vector<8x64xf32>
    %1053 = arith.mulf %1029, %967 : vector<8x64xf32>
    %1054 = arith.mulf %1013, %1033 : vector<8x64xf32>
    %1055 = arith.addf %1053, %1054 : vector<8x64xf32>
    %1056 = math.tanh %1052 : vector<8x64xf32>
    %1057 = arith.mulf %1041, %1056 : vector<8x64xf32>
    %1058 = math.tanh %1055 : vector<8x64xf32>
    %1059 = arith.mulf %1049, %1058 : vector<8x64xf32>
    %c2_519 = arith.constant 2 : index
    %c0_520 = arith.constant 0 : index
    %c0_521 = arith.constant 0 : index
    %1060 = vector.load %arg6[%c2_519, %c0_520, %c0_521] : memref<8x8x128xf32, #tpu.memory_space<vmem>>, vector<1x8x64xf32>
    %1061 = vector.shape_cast %1060 : vector<1x8x64xf32> to vector<8x64xf32>
    %1062 = vector.broadcast %810 : f32 to vector<8x64xf32>
    %1063 = arith.mulf %1062, %1057 : vector<8x64xf32>
    %1064 = arith.addf %1061, %1063 : vector<8x64xf32>
    %c2_522 = arith.constant 2 : index
    %c0_523 = arith.constant 0 : index
    %c0_524 = arith.constant 0 : index
    %1065 = vector.load %arg6[%c2_522, %c0_523, %c0_524] : memref<8x8x128xf32, #tpu.memory_space<vmem>>, vector<1x8x64xf32>
    %1066 = vector.shape_cast %1065 : vector<1x8x64xf32> to vector<8x64xf32>
    %1067 = vector.shape_cast %1064 : vector<8x64xf32> to vector<1x8x64xf32>
    tpu.vector_store %arg6[%c2_522, %c0_523, %c0_524], %1067 {strides = array<i32>} : memref<8x8x128xf32, #tpu.memory_space<vmem>>, vector<1x8x64xf32>,
    %c5_525 = arith.constant 5 : index
    %c0_526 = arith.constant 0 : index
    %c64_527 = arith.constant 64 : index
    %1068 = vector.load %arg6[%c5_525, %c0_526, %c64_527] : memref<8x8x128xf32, #tpu.memory_space<vmem>>, vector<1x8x64xf32>
    %1069 = vector.shape_cast %1068 : vector<1x8x64xf32> to vector<8x64xf32>
    %1070 = vector.broadcast %810 : f32 to vector<8x64xf32>
    %1071 = arith.mulf %1070, %1059 : vector<8x64xf32>
    %1072 = arith.addf %1069, %1071 : vector<8x64xf32>
    %c5_528 = arith.constant 5 : index
    %c0_529 = arith.constant 0 : index
    %c64_530 = arith.constant 64 : index
    %1073 = vector.load %arg6[%c5_528, %c0_529, %c64_530] : memref<8x8x128xf32, #tpu.memory_space<vmem>>, vector<1x8x64xf32>
    %1074 = vector.shape_cast %1073 : vector<1x8x64xf32> to vector<8x64xf32>
    %1075 = vector.shape_cast %1072 : vector<8x64xf32> to vector<1x8x64xf32>
    tpu.vector_store %arg6[%c5_528, %c0_529, %c64_530], %1075 {strides = array<i32>} : memref<8x8x128xf32, #tpu.memory_space<vmem>>, vector<1x8x64xf32>,
    %c3_531 = arith.constant 3 : index
    %c0_532 = arith.constant 0 : index
    %c0_533 = arith.constant 0 : index
    %1076 = vector.load %arg7[%c3_531, %c0_532, %c0_533] : memref<8x8x512xf32, #tpu.memory_space<vmem>>, vector<1x8x256xf32>
    %1077 = vector.shape_cast %1076 : vector<1x8x256xf32> to vector<8x256xf32>
    %1078 = arith.truncf %1057 : vector<8x64xf32> to vector<8x64xbf16>
    %cst_534 = arith.constant dense<0.000000e+00> : vector<8x256xf32>
    %1079 = tpu.matmul %1078, %807, %cst_534 {dimension_numbers = #tpu.dot_dimension_numbers<[1], [0], [0], [1], [0, 0, 1, 1], [], []>} : vector<8x64xbf16>, vector<64x256xbf16>, vector<8x256xf32> -> vector<8x256xf32>
    %1080 = arith.addf %1077, %1079 : vector<8x256xf32>
    %c4_535 = arith.constant 4 : index
    %c0_536 = arith.constant 0 : index
    %c256_537 = arith.constant 256 : index
    %1081 = vector.load %arg7[%c4_535, %c0_536, %c256_537] : memref<8x8x512xf32, #tpu.memory_space<vmem>>, vector<1x8x256xf32>
    %1082 = vector.shape_cast %1081 : vector<1x8x256xf32> to vector<8x256xf32>
    %1083 = arith.truncf %1059 : vector<8x64xf32> to vector<8x64xbf16>
    %cst_538 = arith.constant dense<0.000000e+00> : vector<8x256xf32>
    %1084 = tpu.matmul %1083, %809, %cst_538 {dimension_numbers = #tpu.dot_dimension_numbers<[1], [0], [0], [1], [0, 0, 1, 1], [], []>} : vector<8x64xbf16>, vector<64x256xbf16>, vector<8x256xf32> -> vector<8x256xf32>
    %1085 = arith.addf %1082, %1084 : vector<8x256xf32>
    %1086 = vector.extract_strided_slice %1080 {offsets = [0, 0], sizes = [8, 64], strides = [1, 1]} : vector<8x256xf32> to vector<8x64xf32>
    %cst_539 = arith.constant 5.000000e-01 : f32
    %1087 = vector.broadcast %cst_539 : f32 to vector<8x64xf32>
    %1088 = arith.mulf %1087, %1086 : vector<8x64xf32>
    %1089 = math.tanh %1088 : vector<8x64xf32>
    %cst_540 = arith.constant 1.000000e+00 : f32
    %1090 = vector.broadcast %cst_540 : f32 to vector<8x64xf32>
    %1091 = arith.addf %1089, %1090 : vector<8x64xf32>
    %cst_541 = arith.constant 5.000000e-01 : f32
    %1092 = vector.broadcast %cst_541 : f32 to vector<8x64xf32>
    %1093 = arith.mulf %1092, %1091 : vector<8x64xf32>
    %1094 = vector.extract_strided_slice %1085 {offsets = [0, 0], sizes = [8, 64], strides = [1, 1]} : vector<8x256xf32> to vector<8x64xf32>
    %cst_542 = arith.constant 5.000000e-01 : f32
    %1095 = vector.broadcast %cst_542 : f32 to vector<8x64xf32>
    %1096 = arith.mulf %1095, %1094 : vector<8x64xf32>
    %1097 = math.tanh %1096 : vector<8x64xf32>
    %cst_543 = arith.constant 1.000000e+00 : f32
    %1098 = vector.broadcast %cst_543 : f32 to vector<8x64xf32>
    %1099 = arith.addf %1097, %1098 : vector<8x64xf32>
    %cst_544 = arith.constant 5.000000e-01 : f32
    %1100 = vector.broadcast %cst_544 : f32 to vector<8x64xf32>
    %1101 = arith.mulf %1100, %1099 : vector<8x64xf32>
    %1102 = vector.extract_strided_slice %1080 {offsets = [0, 64], sizes = [8, 64], strides = [1, 1]} : vector<8x256xf32> to vector<8x64xf32>
    %cst_545 = arith.constant 5.000000e-01 : f32
    %1103 = vector.broadcast %cst_545 : f32 to vector<8x64xf32>
    %1104 = arith.mulf %1103, %1102 : vector<8x64xf32>
    %1105 = math.tanh %1104 : vector<8x64xf32>
    %cst_546 = arith.constant 1.000000e+00 : f32
    %1106 = vector.broadcast %cst_546 : f32 to vector<8x64xf32>
    %1107 = arith.addf %1105, %1106 : vector<8x64xf32>
    %cst_547 = arith.constant 5.000000e-01 : f32
    %1108 = vector.broadcast %cst_547 : f32 to vector<8x64xf32>
    %1109 = arith.mulf %1108, %1107 : vector<8x64xf32>
    %1110 = vector.extract_strided_slice %1085 {offsets = [0, 64], sizes = [8, 64], strides = [1, 1]} : vector<8x256xf32> to vector<8x64xf32>
    %cst_548 = arith.constant 5.000000e-01 : f32
    %1111 = vector.broadcast %cst_548 : f32 to vector<8x64xf32>
    %1112 = arith.mulf %1111, %1110 : vector<8x64xf32>
    %1113 = math.tanh %1112 : vector<8x64xf32>
    %cst_549 = arith.constant 1.000000e+00 : f32
    %1114 = vector.broadcast %cst_549 : f32 to vector<8x64xf32>
    %1115 = arith.addf %1113, %1114 : vector<8x64xf32>
    %cst_550 = arith.constant 5.000000e-01 : f32
    %1116 = vector.broadcast %cst_550 : f32 to vector<8x64xf32>
    %1117 = arith.mulf %1116, %1115 : vector<8x64xf32>
    %1118 = vector.extract_strided_slice %1080 {offsets = [0, 128], sizes = [8, 64], strides = [1, 1]} : vector<8x256xf32> to vector<8x64xf32>
    %1119 = math.tanh %1118 : vector<8x64xf32>
    %1120 = vector.extract_strided_slice %1085 {offsets = [0, 128], sizes = [8, 64], strides = [1, 1]} : vector<8x256xf32> to vector<8x64xf32>
    %1121 = math.tanh %1120 : vector<8x64xf32>
    %1122 = vector.extract_strided_slice %1080 {offsets = [0, 192], sizes = [8, 64], strides = [1, 1]} : vector<8x256xf32> to vector<8x64xf32>
    %cst_551 = arith.constant 5.000000e-01 : f32
    %1123 = vector.broadcast %cst_551 : f32 to vector<8x64xf32>
    %1124 = arith.mulf %1123, %1122 : vector<8x64xf32>
    %1125 = math.tanh %1124 : vector<8x64xf32>
    %cst_552 = arith.constant 1.000000e+00 : f32
    %1126 = vector.broadcast %cst_552 : f32 to vector<8x64xf32>
    %1127 = arith.addf %1125, %1126 : vector<8x64xf32>
    %cst_553 = arith.constant 5.000000e-01 : f32
    %1128 = vector.broadcast %cst_553 : f32 to vector<8x64xf32>
    %1129 = arith.mulf %1128, %1127 : vector<8x64xf32>
    %1130 = vector.extract_strided_slice %1085 {offsets = [0, 192], sizes = [8, 64], strides = [1, 1]} : vector<8x256xf32> to vector<8x64xf32>
    %cst_554 = arith.constant 5.000000e-01 : f32
    %1131 = vector.broadcast %cst_554 : f32 to vector<8x64xf32>
    %1132 = arith.mulf %1131, %1130 : vector<8x64xf32>
    %1133 = math.tanh %1132 : vector<8x64xf32>
    %cst_555 = arith.constant 1.000000e+00 : f32
    %1134 = vector.broadcast %cst_555 : f32 to vector<8x64xf32>
    %1135 = arith.addf %1133, %1134 : vector<8x64xf32>
    %cst_556 = arith.constant 5.000000e-01 : f32
    %1136 = vector.broadcast %cst_556 : f32 to vector<8x64xf32>
    %1137 = arith.mulf %1136, %1135 : vector<8x64xf32>
    %1138 = arith.mulf %1109, %1052 : vector<8x64xf32>
    %1139 = arith.mulf %1093, %1119 : vector<8x64xf32>
    %1140 = arith.addf %1138, %1139 : vector<8x64xf32>
    %1141 = arith.mulf %1117, %1055 : vector<8x64xf32>
    %1142 = arith.mulf %1101, %1121 : vector<8x64xf32>
    %1143 = arith.addf %1141, %1142 : vector<8x64xf32>
    %1144 = math.tanh %1140 : vector<8x64xf32>
    %1145 = arith.mulf %1129, %1144 : vector<8x64xf32>
    %1146 = math.tanh %1143 : vector<8x64xf32>
    %1147 = arith.mulf %1137, %1146 : vector<8x64xf32>
    %c3_557 = arith.constant 3 : index
    %c0_558 = arith.constant 0 : index
    %c0_559 = arith.constant 0 : index
    %1148 = vector.load %arg6[%c3_557, %c0_558, %c0_559] : memref<8x8x128xf32, #tpu.memory_space<vmem>>, vector<1x8x64xf32>
    %1149 = vector.shape_cast %1148 : vector<1x8x64xf32> to vector<8x64xf32>
    %1150 = vector.broadcast %810 : f32 to vector<8x64xf32>
    %1151 = arith.mulf %1150, %1145 : vector<8x64xf32>
    %1152 = arith.addf %1149, %1151 : vector<8x64xf32>
    %c3_560 = arith.constant 3 : index
    %c0_561 = arith.constant 0 : index
    %c0_562 = arith.constant 0 : index
    %1153 = vector.load %arg6[%c3_560, %c0_561, %c0_562] : memref<8x8x128xf32, #tpu.memory_space<vmem>>, vector<1x8x64xf32>
    %1154 = vector.shape_cast %1153 : vector<1x8x64xf32> to vector<8x64xf32>
    %1155 = vector.shape_cast %1152 : vector<8x64xf32> to vector<1x8x64xf32>
    tpu.vector_store %arg6[%c3_560, %c0_561, %c0_562], %1155 {strides = array<i32>} : memref<8x8x128xf32, #tpu.memory_space<vmem>>, vector<1x8x64xf32>,
    %c4_563 = arith.constant 4 : index
    %c0_564 = arith.constant 0 : index
    %c64_565 = arith.constant 64 : index
    %1156 = vector.load %arg6[%c4_563, %c0_564, %c64_565] : memref<8x8x128xf32, #tpu.memory_space<vmem>>, vector<1x8x64xf32>
    %1157 = vector.shape_cast %1156 : vector<1x8x64xf32> to vector<8x64xf32>
    %1158 = vector.broadcast %810 : f32 to vector<8x64xf32>
    %1159 = arith.mulf %1158, %1147 : vector<8x64xf32>
    %1160 = arith.addf %1157, %1159 : vector<8x64xf32>
    %c4_566 = arith.constant 4 : index
    %c0_567 = arith.constant 0 : index
    %c64_568 = arith.constant 64 : index
    %1161 = vector.load %arg6[%c4_566, %c0_567, %c64_568] : memref<8x8x128xf32, #tpu.memory_space<vmem>>, vector<1x8x64xf32>
    %1162 = vector.shape_cast %1161 : vector<1x8x64xf32> to vector<8x64xf32>
    %1163 = vector.shape_cast %1160 : vector<8x64xf32> to vector<1x8x64xf32>
    tpu.vector_store %arg6[%c4_566, %c0_567, %c64_568], %1163 {strides = array<i32>} : memref<8x8x128xf32, #tpu.memory_space<vmem>>, vector<1x8x64xf32>,
    %c4_569 = arith.constant 4 : index
    %c0_570 = arith.constant 0 : index
    %c0_571 = arith.constant 0 : index
    %1164 = vector.load %arg7[%c4_569, %c0_570, %c0_571] : memref<8x8x512xf32, #tpu.memory_space<vmem>>, vector<1x8x256xf32>
    %1165 = vector.shape_cast %1164 : vector<1x8x256xf32> to vector<8x256xf32>
    %1166 = arith.truncf %1145 : vector<8x64xf32> to vector<8x64xbf16>
    %cst_572 = arith.constant dense<0.000000e+00> : vector<8x256xf32>
    %1167 = tpu.matmul %1166, %807, %cst_572 {dimension_numbers = #tpu.dot_dimension_numbers<[1], [0], [0], [1], [0, 0, 1, 1], [], []>} : vector<8x64xbf16>, vector<64x256xbf16>, vector<8x256xf32> -> vector<8x256xf32>
    %1168 = arith.addf %1165, %1167 : vector<8x256xf32>
    %c3_573 = arith.constant 3 : index
    %c0_574 = arith.constant 0 : index
    %c256_575 = arith.constant 256 : index
    %1169 = vector.load %arg7[%c3_573, %c0_574, %c256_575] : memref<8x8x512xf32, #tpu.memory_space<vmem>>, vector<1x8x256xf32>
    %1170 = vector.shape_cast %1169 : vector<1x8x256xf32> to vector<8x256xf32>
    %1171 = arith.truncf %1147 : vector<8x64xf32> to vector<8x64xbf16>
    %cst_576 = arith.constant dense<0.000000e+00> : vector<8x256xf32>
    %1172 = tpu.matmul %1171, %809, %cst_576 {dimension_numbers = #tpu.dot_dimension_numbers<[1], [0], [0], [1], [0, 0, 1, 1], [], []>} : vector<8x64xbf16>, vector<64x256xbf16>, vector<8x256xf32> -> vector<8x256xf32>
    %1173 = arith.addf %1170, %1172 : vector<8x256xf32>
    %1174 = vector.extract_strided_slice %1168 {offsets = [0, 0], sizes = [8, 64], strides = [1, 1]} : vector<8x256xf32> to vector<8x64xf32>
    %cst_577 = arith.constant 5.000000e-01 : f32
    %1175 = vector.broadcast %cst_577 : f32 to vector<8x64xf32>
    %1176 = arith.mulf %1175, %1174 : vector<8x64xf32>
    %1177 = math.tanh %1176 : vector<8x64xf32>
    %cst_578 = arith.constant 1.000000e+00 : f32
    %1178 = vector.broadcast %cst_578 : f32 to vector<8x64xf32>
    %1179 = arith.addf %1177, %1178 : vector<8x64xf32>
    %cst_579 = arith.constant 5.000000e-01 : f32
    %1180 = vector.broadcast %cst_579 : f32 to vector<8x64xf32>
    %1181 = arith.mulf %1180, %1179 : vector<8x64xf32>
    %1182 = vector.extract_strided_slice %1173 {offsets = [0, 0], sizes = [8, 64], strides = [1, 1]} : vector<8x256xf32> to vector<8x64xf32>
    %cst_580 = arith.constant 5.000000e-01 : f32
    %1183 = vector.broadcast %cst_580 : f32 to vector<8x64xf32>
    %1184 = arith.mulf %1183, %1182 : vector<8x64xf32>
    %1185 = math.tanh %1184 : vector<8x64xf32>
    %cst_581 = arith.constant 1.000000e+00 : f32
    %1186 = vector.broadcast %cst_581 : f32 to vector<8x64xf32>
    %1187 = arith.addf %1185, %1186 : vector<8x64xf32>
    %cst_582 = arith.constant 5.000000e-01 : f32
    %1188 = vector.broadcast %cst_582 : f32 to vector<8x64xf32>
    %1189 = arith.mulf %1188, %1187 : vector<8x64xf32>
    %1190 = vector.extract_strided_slice %1168 {offsets = [0, 64], sizes = [8, 64], strides = [1, 1]} : vector<8x256xf32> to vector<8x64xf32>
    %cst_583 = arith.constant 5.000000e-01 : f32
    %1191 = vector.broadcast %cst_583 : f32 to vector<8x64xf32>
    %1192 = arith.mulf %1191, %1190 : vector<8x64xf32>
    %1193 = math.tanh %1192 : vector<8x64xf32>
    %cst_584 = arith.constant 1.000000e+00 : f32
    %1194 = vector.broadcast %cst_584 : f32 to vector<8x64xf32>
    %1195 = arith.addf %1193, %1194 : vector<8x64xf32>
    %cst_585 = arith.constant 5.000000e-01 : f32
    %1196 = vector.broadcast %cst_585 : f32 to vector<8x64xf32>
    %1197 = arith.mulf %1196, %1195 : vector<8x64xf32>
    %1198 = vector.extract_strided_slice %1173 {offsets = [0, 64], sizes = [8, 64], strides = [1, 1]} : vector<8x256xf32> to vector<8x64xf32>
    %cst_586 = arith.constant 5.000000e-01 : f32
    %1199 = vector.broadcast %cst_586 : f32 to vector<8x64xf32>
    %1200 = arith.mulf %1199, %1198 : vector<8x64xf32>
    %1201 = math.tanh %1200 : vector<8x64xf32>
    %cst_587 = arith.constant 1.000000e+00 : f32
    %1202 = vector.broadcast %cst_587 : f32 to vector<8x64xf32>
    %1203 = arith.addf %1201, %1202 : vector<8x64xf32>
    %cst_588 = arith.constant 5.000000e-01 : f32
    %1204 = vector.broadcast %cst_588 : f32 to vector<8x64xf32>
    %1205 = arith.mulf %1204, %1203 : vector<8x64xf32>
    %1206 = vector.extract_strided_slice %1168 {offsets = [0, 128], sizes = [8, 64], strides = [1, 1]} : vector<8x256xf32> to vector<8x64xf32>
    %1207 = math.tanh %1206 : vector<8x64xf32>
    %1208 = vector.extract_strided_slice %1173 {offsets = [0, 128], sizes = [8, 64], strides = [1, 1]} : vector<8x256xf32> to vector<8x64xf32>
    %1209 = math.tanh %1208 : vector<8x64xf32>
    %1210 = vector.extract_strided_slice %1168 {offsets = [0, 192], sizes = [8, 64], strides = [1, 1]} : vector<8x256xf32> to vector<8x64xf32>
    %cst_589 = arith.constant 5.000000e-01 : f32
    %1211 = vector.broadcast %cst_589 : f32 to vector<8x64xf32>
    %1212 = arith.mulf %1211, %1210 : vector<8x64xf32>
    %1213 = math.tanh %1212 : vector<8x64xf32>
    %cst_590 = arith.constant 1.000000e+00 : f32
    %1214 = vector.broadcast %cst_590 : f32 to vector<8x64xf32>
    %1215 = arith.addf %1213, %1214 : vector<8x64xf32>
    %cst_591 = arith.constant 5.000000e-01 : f32
    %1216 = vector.broadcast %cst_591 : f32 to vector<8x64xf32>
    %1217 = arith.mulf %1216, %1215 : vector<8x64xf32>
    %1218 = vector.extract_strided_slice %1173 {offsets = [0, 192], sizes = [8, 64], strides = [1, 1]} : vector<8x256xf32> to vector<8x64xf32>
    %cst_592 = arith.constant 5.000000e-01 : f32
    %1219 = vector.broadcast %cst_592 : f32 to vector<8x64xf32>
    %1220 = arith.mulf %1219, %1218 : vector<8x64xf32>
    %1221 = math.tanh %1220 : vector<8x64xf32>
    %cst_593 = arith.constant 1.000000e+00 : f32
    %1222 = vector.broadcast %cst_593 : f32 to vector<8x64xf32>
    %1223 = arith.addf %1221, %1222 : vector<8x64xf32>
    %cst_594 = arith.constant 5.000000e-01 : f32
    %1224 = vector.broadcast %cst_594 : f32 to vector<8x64xf32>
    %1225 = arith.mulf %1224, %1223 : vector<8x64xf32>
    %1226 = arith.mulf %1197, %1140 : vector<8x64xf32>
    %1227 = arith.mulf %1181, %1207 : vector<8x64xf32>
    %1228 = arith.addf %1226, %1227 : vector<8x64xf32>
    %1229 = arith.mulf %1205, %1143 : vector<8x64xf32>
    %1230 = arith.mulf %1189, %1209 : vector<8x64xf32>
    %1231 = arith.addf %1229, %1230 : vector<8x64xf32>
    %1232 = math.tanh %1228 : vector<8x64xf32>
    %1233 = arith.mulf %1217, %1232 : vector<8x64xf32>
    %1234 = math.tanh %1231 : vector<8x64xf32>
    %1235 = arith.mulf %1225, %1234 : vector<8x64xf32>
    %c4_595 = arith.constant 4 : index
    %c0_596 = arith.constant 0 : index
    %c0_597 = arith.constant 0 : index
    %1236 = vector.load %arg6[%c4_595, %c0_596, %c0_597] : memref<8x8x128xf32, #tpu.memory_space<vmem>>, vector<1x8x64xf32>
    %1237 = vector.shape_cast %1236 : vector<1x8x64xf32> to vector<8x64xf32>
    %1238 = vector.broadcast %810 : f32 to vector<8x64xf32>
    %1239 = arith.mulf %1238, %1233 : vector<8x64xf32>
    %1240 = arith.addf %1237, %1239 : vector<8x64xf32>
    %c4_598 = arith.constant 4 : index
    %c0_599 = arith.constant 0 : index
    %c0_600 = arith.constant 0 : index
    %1241 = vector.load %arg6[%c4_598, %c0_599, %c0_600] : memref<8x8x128xf32, #tpu.memory_space<vmem>>, vector<1x8x64xf32>
    %1242 = vector.shape_cast %1241 : vector<1x8x64xf32> to vector<8x64xf32>
    %1243 = vector.shape_cast %1240 : vector<8x64xf32> to vector<1x8x64xf32>
    tpu.vector_store %arg6[%c4_598, %c0_599, %c0_600], %1243 {strides = array<i32>} : memref<8x8x128xf32, #tpu.memory_space<vmem>>, vector<1x8x64xf32>,
    %c3_601 = arith.constant 3 : index
    %c0_602 = arith.constant 0 : index
    %c64_603 = arith.constant 64 : index
    %1244 = vector.load %arg6[%c3_601, %c0_602, %c64_603] : memref<8x8x128xf32, #tpu.memory_space<vmem>>, vector<1x8x64xf32>
    %1245 = vector.shape_cast %1244 : vector<1x8x64xf32> to vector<8x64xf32>
    %1246 = vector.broadcast %810 : f32 to vector<8x64xf32>
    %1247 = arith.mulf %1246, %1235 : vector<8x64xf32>
    %1248 = arith.addf %1245, %1247 : vector<8x64xf32>
    %c3_604 = arith.constant 3 : index
    %c0_605 = arith.constant 0 : index
    %c64_606 = arith.constant 64 : index
    %1249 = vector.load %arg6[%c3_604, %c0_605, %c64_606] : memref<8x8x128xf32, #tpu.memory_space<vmem>>, vector<1x8x64xf32>
    %1250 = vector.shape_cast %1249 : vector<1x8x64xf32> to vector<8x64xf32>
    %1251 = vector.shape_cast %1248 : vector<8x64xf32> to vector<1x8x64xf32>
    tpu.vector_store %arg6[%c3_604, %c0_605, %c64_606], %1251 {strides = array<i32>} : memref<8x8x128xf32, #tpu.memory_space<vmem>>, vector<1x8x64xf32>,
    %c5_607 = arith.constant 5 : index
    %c0_608 = arith.constant 0 : index
    %c0_609 = arith.constant 0 : index
    %1252 = vector.load %arg7[%c5_607, %c0_608, %c0_609] : memref<8x8x512xf32, #tpu.memory_space<vmem>>, vector<1x8x256xf32>
    %1253 = vector.shape_cast %1252 : vector<1x8x256xf32> to vector<8x256xf32>
    %1254 = arith.truncf %1233 : vector<8x64xf32> to vector<8x64xbf16>
    %cst_610 = arith.constant dense<0.000000e+00> : vector<8x256xf32>
    %1255 = tpu.matmul %1254, %807, %cst_610 {dimension_numbers = #tpu.dot_dimension_numbers<[1], [0], [0], [1], [0, 0, 1, 1], [], []>} : vector<8x64xbf16>, vector<64x256xbf16>, vector<8x256xf32> -> vector<8x256xf32>
    %1256 = arith.addf %1253, %1255 : vector<8x256xf32>
    %c2_611 = arith.constant 2 : index
    %c0_612 = arith.constant 0 : index
    %c256_613 = arith.constant 256 : index
    %1257 = vector.load %arg7[%c2_611, %c0_612, %c256_613] : memref<8x8x512xf32, #tpu.memory_space<vmem>>, vector<1x8x256xf32>
    %1258 = vector.shape_cast %1257 : vector<1x8x256xf32> to vector<8x256xf32>
    %1259 = arith.truncf %1235 : vector<8x64xf32> to vector<8x64xbf16>
    %cst_614 = arith.constant dense<0.000000e+00> : vector<8x256xf32>
    %1260 = tpu.matmul %1259, %809, %cst_614 {dimension_numbers = #tpu.dot_dimension_numbers<[1], [0], [0], [1], [0, 0, 1, 1], [], []>} : vector<8x64xbf16>, vector<64x256xbf16>, vector<8x256xf32> -> vector<8x256xf32>
    %1261 = arith.addf %1258, %1260 : vector<8x256xf32>
    %1262 = vector.extract_strided_slice %1256 {offsets = [0, 0], sizes = [8, 64], strides = [1, 1]} : vector<8x256xf32> to vector<8x64xf32>
    %cst_615 = arith.constant 5.000000e-01 : f32
    %1263 = vector.broadcast %cst_615 : f32 to vector<8x64xf32>
    %1264 = arith.mulf %1263, %1262 : vector<8x64xf32>
    %1265 = math.tanh %1264 : vector<8x64xf32>
    %cst_616 = arith.constant 1.000000e+00 : f32
    %1266 = vector.broadcast %cst_616 : f32 to vector<8x64xf32>
    %1267 = arith.addf %1265, %1266 : vector<8x64xf32>
    %cst_617 = arith.constant 5.000000e-01 : f32
    %1268 = vector.broadcast %cst_617 : f32 to vector<8x64xf32>
    %1269 = arith.mulf %1268, %1267 : vector<8x64xf32>
    %1270 = vector.extract_strided_slice %1261 {offsets = [0, 0], sizes = [8, 64], strides = [1, 1]} : vector<8x256xf32> to vector<8x64xf32>
    %cst_618 = arith.constant 5.000000e-01 : f32
    %1271 = vector.broadcast %cst_618 : f32 to vector<8x64xf32>
    %1272 = arith.mulf %1271, %1270 : vector<8x64xf32>
    %1273 = math.tanh %1272 : vector<8x64xf32>
    %cst_619 = arith.constant 1.000000e+00 : f32
    %1274 = vector.broadcast %cst_619 : f32 to vector<8x64xf32>
    %1275 = arith.addf %1273, %1274 : vector<8x64xf32>
    %cst_620 = arith.constant 5.000000e-01 : f32
    %1276 = vector.broadcast %cst_620 : f32 to vector<8x64xf32>
    %1277 = arith.mulf %1276, %1275 : vector<8x64xf32>
    %1278 = vector.extract_strided_slice %1256 {offsets = [0, 64], sizes = [8, 64], strides = [1, 1]} : vector<8x256xf32> to vector<8x64xf32>
    %cst_621 = arith.constant 5.000000e-01 : f32
    %1279 = vector.broadcast %cst_621 : f32 to vector<8x64xf32>
    %1280 = arith.mulf %1279, %1278 : vector<8x64xf32>
    %1281 = math.tanh %1280 : vector<8x64xf32>
    %cst_622 = arith.constant 1.000000e+00 : f32
    %1282 = vector.broadcast %cst_622 : f32 to vector<8x64xf32>
    %1283 = arith.addf %1281, %1282 : vector<8x64xf32>
    %cst_623 = arith.constant 5.000000e-01 : f32
    %1284 = vector.broadcast %cst_623 : f32 to vector<8x64xf32>
    %1285 = arith.mulf %1284, %1283 : vector<8x64xf32>
    %1286 = vector.extract_strided_slice %1261 {offsets = [0, 64], sizes = [8, 64], strides = [1, 1]} : vector<8x256xf32> to vector<8x64xf32>
    %cst_624 = arith.constant 5.000000e-01 : f32
    %1287 = vector.broadcast %cst_624 : f32 to vector<8x64xf32>
    %1288 = arith.mulf %1287, %1286 : vector<8x64xf32>
    %1289 = math.tanh %1288 : vector<8x64xf32>
    %cst_625 = arith.constant 1.000000e+00 : f32
    %1290 = vector.broadcast %cst_625 : f32 to vector<8x64xf32>
    %1291 = arith.addf %1289, %1290 : vector<8x64xf32>
    %cst_626 = arith.constant 5.000000e-01 : f32
    %1292 = vector.broadcast %cst_626 : f32 to vector<8x64xf32>
    %1293 = arith.mulf %1292, %1291 : vector<8x64xf32>
    %1294 = vector.extract_strided_slice %1256 {offsets = [0, 128], sizes = [8, 64], strides = [1, 1]} : vector<8x256xf32> to vector<8x64xf32>
    %1295 = math.tanh %1294 : vector<8x64xf32>
    %1296 = vector.extract_strided_slice %1261 {offsets = [0, 128], sizes = [8, 64], strides = [1, 1]} : vector<8x256xf32> to vector<8x64xf32>
    %1297 = math.tanh %1296 : vector<8x64xf32>
    %1298 = vector.extract_strided_slice %1256 {offsets = [0, 192], sizes = [8, 64], strides = [1, 1]} : vector<8x256xf32> to vector<8x64xf32>
    %cst_627 = arith.constant 5.000000e-01 : f32
    %1299 = vector.broadcast %cst_627 : f32 to vector<8x64xf32>
    %1300 = arith.mulf %1299, %1298 : vector<8x64xf32>
    %1301 = math.tanh %1300 : vector<8x64xf32>
    %cst_628 = arith.constant 1.000000e+00 : f32
    %1302 = vector.broadcast %cst_628 : f32 to vector<8x64xf32>
    %1303 = arith.addf %1301, %1302 : vector<8x64xf32>
    %cst_629 = arith.constant 5.000000e-01 : f32
    %1304 = vector.broadcast %cst_629 : f32 to vector<8x64xf32>
    %1305 = arith.mulf %1304, %1303 : vector<8x64xf32>
    %1306 = vector.extract_strided_slice %1261 {offsets = [0, 192], sizes = [8, 64], strides = [1, 1]} : vector<8x256xf32> to vector<8x64xf32>
    %cst_630 = arith.constant 5.000000e-01 : f32
    %1307 = vector.broadcast %cst_630 : f32 to vector<8x64xf32>
    %1308 = arith.mulf %1307, %1306 : vector<8x64xf32>
    %1309 = math.tanh %1308 : vector<8x64xf32>
    %cst_631 = arith.constant 1.000000e+00 : f32
    %1310 = vector.broadcast %cst_631 : f32 to vector<8x64xf32>
    %1311 = arith.addf %1309, %1310 : vector<8x64xf32>
    %cst_632 = arith.constant 5.000000e-01 : f32
    %1312 = vector.broadcast %cst_632 : f32 to vector<8x64xf32>
    %1313 = arith.mulf %1312, %1311 : vector<8x64xf32>
    %1314 = arith.mulf %1285, %1228 : vector<8x64xf32>
    %1315 = arith.mulf %1269, %1295 : vector<8x64xf32>
    %1316 = arith.addf %1314, %1315 : vector<8x64xf32>
    %1317 = arith.mulf %1293, %1231 : vector<8x64xf32>
    %1318 = arith.mulf %1277, %1297 : vector<8x64xf32>
    %1319 = arith.addf %1317, %1318 : vector<8x64xf32>
    %1320 = math.tanh %1316 : vector<8x64xf32>
    %1321 = arith.mulf %1305, %1320 : vector<8x64xf32>
    %1322 = math.tanh %1319 : vector<8x64xf32>
    %1323 = arith.mulf %1313, %1322 : vector<8x64xf32>
    %c5_633 = arith.constant 5 : index
    %c0_634 = arith.constant 0 : index
    %c0_635 = arith.constant 0 : index
    %1324 = vector.load %arg6[%c5_633, %c0_634, %c0_635] : memref<8x8x128xf32, #tpu.memory_space<vmem>>, vector<1x8x64xf32>
    %1325 = vector.shape_cast %1324 : vector<1x8x64xf32> to vector<8x64xf32>
    %1326 = vector.broadcast %810 : f32 to vector<8x64xf32>
    %1327 = arith.mulf %1326, %1321 : vector<8x64xf32>
    %1328 = arith.addf %1325, %1327 : vector<8x64xf32>
    %c5_636 = arith.constant 5 : index
    %c0_637 = arith.constant 0 : index
    %c0_638 = arith.constant 0 : index
    %1329 = vector.load %arg6[%c5_636, %c0_637, %c0_638] : memref<8x8x128xf32, #tpu.memory_space<vmem>>, vector<1x8x64xf32>
    %1330 = vector.shape_cast %1329 : vector<1x8x64xf32> to vector<8x64xf32>
    %1331 = vector.shape_cast %1328 : vector<8x64xf32> to vector<1x8x64xf32>
    tpu.vector_store %arg6[%c5_636, %c0_637, %c0_638], %1331 {strides = array<i32>} : memref<8x8x128xf32, #tpu.memory_space<vmem>>, vector<1x8x64xf32>,
    %c2_639 = arith.constant 2 : index
    %c0_640 = arith.constant 0 : index
    %c64_641 = arith.constant 64 : index
    %1332 = vector.load %arg6[%c2_639, %c0_640, %c64_641] : memref<8x8x128xf32, #tpu.memory_space<vmem>>, vector<1x8x64xf32>
    %1333 = vector.shape_cast %1332 : vector<1x8x64xf32> to vector<8x64xf32>
    %1334 = vector.broadcast %810 : f32 to vector<8x64xf32>
    %1335 = arith.mulf %1334, %1323 : vector<8x64xf32>
    %1336 = arith.addf %1333, %1335 : vector<8x64xf32>
    %c2_642 = arith.constant 2 : index
    %c0_643 = arith.constant 0 : index
    %c64_644 = arith.constant 64 : index
    %1337 = vector.load %arg6[%c2_642, %c0_643, %c64_644] : memref<8x8x128xf32, #tpu.memory_space<vmem>>, vector<1x8x64xf32>
    %1338 = vector.shape_cast %1337 : vector<1x8x64xf32> to vector<8x64xf32>
    %1339 = vector.shape_cast %1336 : vector<8x64xf32> to vector<1x8x64xf32>
    tpu.vector_store %arg6[%c2_642, %c0_643, %c64_644], %1339 {strides = array<i32>} : memref<8x8x128xf32, #tpu.memory_space<vmem>>, vector<1x8x64xf32>,
    %c6_645 = arith.constant 6 : index
    %c0_646 = arith.constant 0 : index
    %c0_647 = arith.constant 0 : index
    %1340 = vector.load %arg7[%c6_645, %c0_646, %c0_647] : memref<8x8x512xf32, #tpu.memory_space<vmem>>, vector<1x8x256xf32>
    %1341 = vector.shape_cast %1340 : vector<1x8x256xf32> to vector<8x256xf32>
    %1342 = arith.truncf %1321 : vector<8x64xf32> to vector<8x64xbf16>
    %cst_648 = arith.constant dense<0.000000e+00> : vector<8x256xf32>
    %1343 = tpu.matmul %1342, %807, %cst_648 {dimension_numbers = #tpu.dot_dimension_numbers<[1], [0], [0], [1], [0, 0, 1, 1], [], []>} : vector<8x64xbf16>, vector<64x256xbf16>, vector<8x256xf32> -> vector<8x256xf32>
    %1344 = arith.addf %1341, %1343 : vector<8x256xf32>
    %c1_649 = arith.constant 1 : index
    %c0_650 = arith.constant 0 : index
    %c256_651 = arith.constant 256 : index
    %1345 = vector.load %arg7[%c1_649, %c0_650, %c256_651] : memref<8x8x512xf32, #tpu.memory_space<vmem>>, vector<1x8x256xf32>
    %1346 = vector.shape_cast %1345 : vector<1x8x256xf32> to vector<8x256xf32>
    %1347 = arith.truncf %1323 : vector<8x64xf32> to vector<8x64xbf16>
    %cst_652 = arith.constant dense<0.000000e+00> : vector<8x256xf32>
    %1348 = tpu.matmul %1347, %809, %cst_652 {dimension_numbers = #tpu.dot_dimension_numbers<[1], [0], [0], [1], [0, 0, 1, 1], [], []>} : vector<8x64xbf16>, vector<64x256xbf16>, vector<8x256xf32> -> vector<8x256xf32>
    %1349 = arith.addf %1346, %1348 : vector<8x256xf32>
    %1350 = vector.extract_strided_slice %1344 {offsets = [0, 0], sizes = [8, 64], strides = [1, 1]} : vector<8x256xf32> to vector<8x64xf32>
    %cst_653 = arith.constant 5.000000e-01 : f32
    %1351 = vector.broadcast %cst_653 : f32 to vector<8x64xf32>
    %1352 = arith.mulf %1351, %1350 : vector<8x64xf32>
    %1353 = math.tanh %1352 : vector<8x64xf32>
    %cst_654 = arith.constant 1.000000e+00 : f32
    %1354 = vector.broadcast %cst_654 : f32 to vector<8x64xf32>
    %1355 = arith.addf %1353, %1354 : vector<8x64xf32>
    %cst_655 = arith.constant 5.000000e-01 : f32
    %1356 = vector.broadcast %cst_655 : f32 to vector<8x64xf32>
    %1357 = arith.mulf %1356, %1355 : vector<8x64xf32>
    %1358 = vector.extract_strided_slice %1349 {offsets = [0, 0], sizes = [8, 64], strides = [1, 1]} : vector<8x256xf32> to vector<8x64xf32>
    %cst_656 = arith.constant 5.000000e-01 : f32
    %1359 = vector.broadcast %cst_656 : f32 to vector<8x64xf32>
    %1360 = arith.mulf %1359, %1358 : vector<8x64xf32>
    %1361 = math.tanh %1360 : vector<8x64xf32>
    %cst_657 = arith.constant 1.000000e+00 : f32
    %1362 = vector.broadcast %cst_657 : f32 to vector<8x64xf32>
    %1363 = arith.addf %1361, %1362 : vector<8x64xf32>
    %cst_658 = arith.constant 5.000000e-01 : f32
    %1364 = vector.broadcast %cst_658 : f32 to vector<8x64xf32>
    %1365 = arith.mulf %1364, %1363 : vector<8x64xf32>
    %1366 = vector.extract_strided_slice %1344 {offsets = [0, 64], sizes = [8, 64], strides = [1, 1]} : vector<8x256xf32> to vector<8x64xf32>
    %cst_659 = arith.constant 5.000000e-01 : f32
    %1367 = vector.broadcast %cst_659 : f32 to vector<8x64xf32>
    %1368 = arith.mulf %1367, %1366 : vector<8x64xf32>
    %1369 = math.tanh %1368 : vector<8x64xf32>
    %cst_660 = arith.constant 1.000000e+00 : f32
    %1370 = vector.broadcast %cst_660 : f32 to vector<8x64xf32>
    %1371 = arith.addf %1369, %1370 : vector<8x64xf32>
    %cst_661 = arith.constant 5.000000e-01 : f32
    %1372 = vector.broadcast %cst_661 : f32 to vector<8x64xf32>
    %1373 = arith.mulf %1372, %1371 : vector<8x64xf32>
    %1374 = vector.extract_strided_slice %1349 {offsets = [0, 64], sizes = [8, 64], strides = [1, 1]} : vector<8x256xf32> to vector<8x64xf32>
    %cst_662 = arith.constant 5.000000e-01 : f32
    %1375 = vector.broadcast %cst_662 : f32 to vector<8x64xf32>
    %1376 = arith.mulf %1375, %1374 : vector<8x64xf32>
    %1377 = math.tanh %1376 : vector<8x64xf32>
    %cst_663 = arith.constant 1.000000e+00 : f32
    %1378 = vector.broadcast %cst_663 : f32 to vector<8x64xf32>
    %1379 = arith.addf %1377, %1378 : vector<8x64xf32>
    %cst_664 = arith.constant 5.000000e-01 : f32
    %1380 = vector.broadcast %cst_664 : f32 to vector<8x64xf32>
    %1381 = arith.mulf %1380, %1379 : vector<8x64xf32>
    %1382 = vector.extract_strided_slice %1344 {offsets = [0, 128], sizes = [8, 64], strides = [1, 1]} : vector<8x256xf32> to vector<8x64xf32>
    %1383 = math.tanh %1382 : vector<8x64xf32>
    %1384 = vector.extract_strided_slice %1349 {offsets = [0, 128], sizes = [8, 64], strides = [1, 1]} : vector<8x256xf32> to vector<8x64xf32>
    %1385 = math.tanh %1384 : vector<8x64xf32>
    %1386 = vector.extract_strided_slice %1344 {offsets = [0, 192], sizes = [8, 64], strides = [1, 1]} : vector<8x256xf32> to vector<8x64xf32>
    %cst_665 = arith.constant 5.000000e-01 : f32
    %1387 = vector.broadcast %cst_665 : f32 to vector<8x64xf32>
    %1388 = arith.mulf %1387, %1386 : vector<8x64xf32>
    %1389 = math.tanh %1388 : vector<8x64xf32>
    %cst_666 = arith.constant 1.000000e+00 : f32
    %1390 = vector.broadcast %cst_666 : f32 to vector<8x64xf32>
    %1391 = arith.addf %1389, %1390 : vector<8x64xf32>
    %cst_667 = arith.constant 5.000000e-01 : f32
    %1392 = vector.broadcast %cst_667 : f32 to vector<8x64xf32>
    %1393 = arith.mulf %1392, %1391 : vector<8x64xf32>
    %1394 = vector.extract_strided_slice %1349 {offsets = [0, 192], sizes = [8, 64], strides = [1, 1]} : vector<8x256xf32> to vector<8x64xf32>
    %cst_668 = arith.constant 5.000000e-01 : f32
    %1395 = vector.broadcast %cst_668 : f32 to vector<8x64xf32>
    %1396 = arith.mulf %1395, %1394 : vector<8x64xf32>
    %1397 = math.tanh %1396 : vector<8x64xf32>
    %cst_669 = arith.constant 1.000000e+00 : f32
    %1398 = vector.broadcast %cst_669 : f32 to vector<8x64xf32>
    %1399 = arith.addf %1397, %1398 : vector<8x64xf32>
    %cst_670 = arith.constant 5.000000e-01 : f32
    %1400 = vector.broadcast %cst_670 : f32 to vector<8x64xf32>
    %1401 = arith.mulf %1400, %1399 : vector<8x64xf32>
    %1402 = arith.mulf %1373, %1316 : vector<8x64xf32>
    %1403 = arith.mulf %1357, %1383 : vector<8x64xf32>
    %1404 = arith.addf %1402, %1403 : vector<8x64xf32>
    %1405 = arith.mulf %1381, %1319 : vector<8x64xf32>
    %1406 = arith.mulf %1365, %1385 : vector<8x64xf32>
    %1407 = arith.addf %1405, %1406 : vector<8x64xf32>
    %1408 = math.tanh %1404 : vector<8x64xf32>
    %1409 = arith.mulf %1393, %1408 : vector<8x64xf32>
    %1410 = math.tanh %1407 : vector<8x64xf32>
    %1411 = arith.mulf %1401, %1410 : vector<8x64xf32>
    %c6_671 = arith.constant 6 : index
    %c0_672 = arith.constant 0 : index
    %c0_673 = arith.constant 0 : index
    %1412 = vector.load %arg6[%c6_671, %c0_672, %c0_673] : memref<8x8x128xf32, #tpu.memory_space<vmem>>, vector<1x8x64xf32>
    %1413 = vector.shape_cast %1412 : vector<1x8x64xf32> to vector<8x64xf32>
    %1414 = vector.broadcast %810 : f32 to vector<8x64xf32>
    %1415 = arith.mulf %1414, %1409 : vector<8x64xf32>
    %1416 = arith.addf %1413, %1415 : vector<8x64xf32>
    %c6_674 = arith.constant 6 : index
    %c0_675 = arith.constant 0 : index
    %c0_676 = arith.constant 0 : index
    %1417 = vector.load %arg6[%c6_674, %c0_675, %c0_676] : memref<8x8x128xf32, #tpu.memory_space<vmem>>, vector<1x8x64xf32>
    %1418 = vector.shape_cast %1417 : vector<1x8x64xf32> to vector<8x64xf32>
    %1419 = vector.shape_cast %1416 : vector<8x64xf32> to vector<1x8x64xf32>
    tpu.vector_store %arg6[%c6_674, %c0_675, %c0_676], %1419 {strides = array<i32>} : memref<8x8x128xf32, #tpu.memory_space<vmem>>, vector<1x8x64xf32>,
    %c1_677 = arith.constant 1 : index
    %c0_678 = arith.constant 0 : index
    %c64_679 = arith.constant 64 : index
    %1420 = vector.load %arg6[%c1_677, %c0_678, %c64_679] : memref<8x8x128xf32, #tpu.memory_space<vmem>>, vector<1x8x64xf32>
    %1421 = vector.shape_cast %1420 : vector<1x8x64xf32> to vector<8x64xf32>
    %1422 = vector.broadcast %810 : f32 to vector<8x64xf32>
    %1423 = arith.mulf %1422, %1411 : vector<8x64xf32>
    %1424 = arith.addf %1421, %1423 : vector<8x64xf32>
    %c1_680 = arith.constant 1 : index
    %c0_681 = arith.constant 0 : index
    %c64_682 = arith.constant 64 : index
    %1425 = vector.load %arg6[%c1_680, %c0_681, %c64_682] : memref<8x8x128xf32, #tpu.memory_space<vmem>>, vector<1x8x64xf32>
    %1426 = vector.shape_cast %1425 : vector<1x8x64xf32> to vector<8x64xf32>
    %1427 = vector.shape_cast %1424 : vector<8x64xf32> to vector<1x8x64xf32>
    tpu.vector_store %arg6[%c1_680, %c0_681, %c64_682], %1427 {strides = array<i32>} : memref<8x8x128xf32, #tpu.memory_space<vmem>>, vector<1x8x64xf32>,
    %c7_683 = arith.constant 7 : index
    %c0_684 = arith.constant 0 : index
    %c0_685 = arith.constant 0 : index
    %1428 = vector.load %arg7[%c7_683, %c0_684, %c0_685] : memref<8x8x512xf32, #tpu.memory_space<vmem>>, vector<1x8x256xf32>
    %1429 = vector.shape_cast %1428 : vector<1x8x256xf32> to vector<8x256xf32>
    %1430 = arith.truncf %1409 : vector<8x64xf32> to vector<8x64xbf16>
    %cst_686 = arith.constant dense<0.000000e+00> : vector<8x256xf32>
    %1431 = tpu.matmul %1430, %807, %cst_686 {dimension_numbers = #tpu.dot_dimension_numbers<[1], [0], [0], [1], [0, 0, 1, 1], [], []>} : vector<8x64xbf16>, vector<64x256xbf16>, vector<8x256xf32> -> vector<8x256xf32>
    %1432 = arith.addf %1429, %1431 : vector<8x256xf32>
    %c0_687 = arith.constant 0 : index
    %c0_688 = arith.constant 0 : index
    %c256_689 = arith.constant 256 : index
    %1433 = vector.load %arg7[%c0_687, %c0_688, %c256_689] : memref<8x8x512xf32, #tpu.memory_space<vmem>>, vector<1x8x256xf32>
    %1434 = vector.shape_cast %1433 : vector<1x8x256xf32> to vector<8x256xf32>
    %1435 = arith.truncf %1411 : vector<8x64xf32> to vector<8x64xbf16>
    %cst_690 = arith.constant dense<0.000000e+00> : vector<8x256xf32>
    %1436 = tpu.matmul %1435, %809, %cst_690 {dimension_numbers = #tpu.dot_dimension_numbers<[1], [0], [0], [1], [0, 0, 1, 1], [], []>} : vector<8x64xbf16>, vector<64x256xbf16>, vector<8x256xf32> -> vector<8x256xf32>
    %1437 = arith.addf %1434, %1436 : vector<8x256xf32>
    %1438 = vector.extract_strided_slice %1432 {offsets = [0, 0], sizes = [8, 64], strides = [1, 1]} : vector<8x256xf32> to vector<8x64xf32>
    %cst_691 = arith.constant 5.000000e-01 : f32
    %1439 = vector.broadcast %cst_691 : f32 to vector<8x64xf32>
    %1440 = arith.mulf %1439, %1438 : vector<8x64xf32>
    %1441 = math.tanh %1440 : vector<8x64xf32>
    %cst_692 = arith.constant 1.000000e+00 : f32
    %1442 = vector.broadcast %cst_692 : f32 to vector<8x64xf32>
    %1443 = arith.addf %1441, %1442 : vector<8x64xf32>
    %cst_693 = arith.constant 5.000000e-01 : f32
    %1444 = vector.broadcast %cst_693 : f32 to vector<8x64xf32>
    %1445 = arith.mulf %1444, %1443 : vector<8x64xf32>
    %1446 = vector.extract_strided_slice %1437 {offsets = [0, 0], sizes = [8, 64], strides = [1, 1]} : vector<8x256xf32> to vector<8x64xf32>
    %cst_694 = arith.constant 5.000000e-01 : f32
    %1447 = vector.broadcast %cst_694 : f32 to vector<8x64xf32>
    %1448 = arith.mulf %1447, %1446 : vector<8x64xf32>
    %1449 = math.tanh %1448 : vector<8x64xf32>
    %cst_695 = arith.constant 1.000000e+00 : f32
    %1450 = vector.broadcast %cst_695 : f32 to vector<8x64xf32>
    %1451 = arith.addf %1449, %1450 : vector<8x64xf32>
    %cst_696 = arith.constant 5.000000e-01 : f32
    %1452 = vector.broadcast %cst_696 : f32 to vector<8x64xf32>
    %1453 = arith.mulf %1452, %1451 : vector<8x64xf32>
    %1454 = vector.extract_strided_slice %1432 {offsets = [0, 64], sizes = [8, 64], strides = [1, 1]} : vector<8x256xf32> to vector<8x64xf32>
    %cst_697 = arith.constant 5.000000e-01 : f32
    %1455 = vector.broadcast %cst_697 : f32 to vector<8x64xf32>
    %1456 = arith.mulf %1455, %1454 : vector<8x64xf32>
    %1457 = math.tanh %1456 : vector<8x64xf32>
    %cst_698 = arith.constant 1.000000e+00 : f32
    %1458 = vector.broadcast %cst_698 : f32 to vector<8x64xf32>
    %1459 = arith.addf %1457, %1458 : vector<8x64xf32>
    %cst_699 = arith.constant 5.000000e-01 : f32
    %1460 = vector.broadcast %cst_699 : f32 to vector<8x64xf32>
    %1461 = arith.mulf %1460, %1459 : vector<8x64xf32>
    %1462 = vector.extract_strided_slice %1437 {offsets = [0, 64], sizes = [8, 64], strides = [1, 1]} : vector<8x256xf32> to vector<8x64xf32>
    %cst_700 = arith.constant 5.000000e-01 : f32
    %1463 = vector.broadcast %cst_700 : f32 to vector<8x64xf32>
    %1464 = arith.mulf %1463, %1462 : vector<8x64xf32>
    %1465 = math.tanh %1464 : vector<8x64xf32>
    %cst_701 = arith.constant 1.000000e+00 : f32
    %1466 = vector.broadcast %cst_701 : f32 to vector<8x64xf32>
    %1467 = arith.addf %1465, %1466 : vector<8x64xf32>
    %cst_702 = arith.constant 5.000000e-01 : f32
    %1468 = vector.broadcast %cst_702 : f32 to vector<8x64xf32>
    %1469 = arith.mulf %1468, %1467 : vector<8x64xf32>
    %1470 = vector.extract_strided_slice %1432 {offsets = [0, 128], sizes = [8, 64], strides = [1, 1]} : vector<8x256xf32> to vector<8x64xf32>
    %1471 = math.tanh %1470 : vector<8x64xf32>
    %1472 = vector.extract_strided_slice %1437 {offsets = [0, 128], sizes = [8, 64], strides = [1, 1]} : vector<8x256xf32> to vector<8x64xf32>
    %1473 = math.tanh %1472 : vector<8x64xf32>
    %1474 = vector.extract_strided_slice %1432 {offsets = [0, 192], sizes = [8, 64], strides = [1, 1]} : vector<8x256xf32> to vector<8x64xf32>
    %cst_703 = arith.constant 5.000000e-01 : f32
    %1475 = vector.broadcast %cst_703 : f32 to vector<8x64xf32>
    %1476 = arith.mulf %1475, %1474 : vector<8x64xf32>
    %1477 = math.tanh %1476 : vector<8x64xf32>
    %cst_704 = arith.constant 1.000000e+00 : f32
    %1478 = vector.broadcast %cst_704 : f32 to vector<8x64xf32>
    %1479 = arith.addf %1477, %1478 : vector<8x64xf32>
    %cst_705 = arith.constant 5.000000e-01 : f32
    %1480 = vector.broadcast %cst_705 : f32 to vector<8x64xf32>
    %1481 = arith.mulf %1480, %1479 : vector<8x64xf32>
    %1482 = vector.extract_strided_slice %1437 {offsets = [0, 192], sizes = [8, 64], strides = [1, 1]} : vector<8x256xf32> to vector<8x64xf32>
    %cst_706 = arith.constant 5.000000e-01 : f32
    %1483 = vector.broadcast %cst_706 : f32 to vector<8x64xf32>
    %1484 = arith.mulf %1483, %1482 : vector<8x64xf32>
    %1485 = math.tanh %1484 : vector<8x64xf32>
    %cst_707 = arith.constant 1.000000e+00 : f32
    %1486 = vector.broadcast %cst_707 : f32 to vector<8x64xf32>
    %1487 = arith.addf %1485, %1486 : vector<8x64xf32>
    %cst_708 = arith.constant 5.000000e-01 : f32
    %1488 = vector.broadcast %cst_708 : f32 to vector<8x64xf32>
    %1489 = arith.mulf %1488, %1487 : vector<8x64xf32>
    %1490 = arith.mulf %1461, %1404 : vector<8x64xf32>
    %1491 = arith.mulf %1445, %1471 : vector<8x64xf32>
    %1492 = arith.addf %1490, %1491 : vector<8x64xf32>
    %1493 = arith.mulf %1469, %1407 : vector<8x64xf32>
    %1494 = arith.mulf %1453, %1473 : vector<8x64xf32>
    %1495 = arith.addf %1493, %1494 : vector<8x64xf32>
    %1496 = math.tanh %1492 : vector<8x64xf32>
    %1497 = arith.mulf %1481, %1496 : vector<8x64xf32>
    %1498 = math.tanh %1495 : vector<8x64xf32>
    %1499 = arith.mulf %1489, %1498 : vector<8x64xf32>
    %c7_709 = arith.constant 7 : index
    %c0_710 = arith.constant 0 : index
    %c0_711 = arith.constant 0 : index
    %1500 = vector.load %arg6[%c7_709, %c0_710, %c0_711] : memref<8x8x128xf32, #tpu.memory_space<vmem>>, vector<1x8x64xf32>
    %1501 = vector.shape_cast %1500 : vector<1x8x64xf32> to vector<8x64xf32>
    %1502 = vector.broadcast %810 : f32 to vector<8x64xf32>
    %1503 = arith.mulf %1502, %1497 : vector<8x64xf32>
    %1504 = arith.addf %1501, %1503 : vector<8x64xf32>
    %c7_712 = arith.constant 7 : index
    %c0_713 = arith.constant 0 : index
    %c0_714 = arith.constant 0 : index
    %1505 = vector.load %arg6[%c7_712, %c0_713, %c0_714] : memref<8x8x128xf32, #tpu.memory_space<vmem>>, vector<1x8x64xf32>
    %1506 = vector.shape_cast %1505 : vector<1x8x64xf32> to vector<8x64xf32>
    %1507 = vector.shape_cast %1504 : vector<8x64xf32> to vector<1x8x64xf32>
    tpu.vector_store %arg6[%c7_712, %c0_713, %c0_714], %1507 {strides = array<i32>} : memref<8x8x128xf32, #tpu.memory_space<vmem>>, vector<1x8x64xf32>,
    %c0_715 = arith.constant 0 : index
    %c0_716 = arith.constant 0 : index
    %c64_717 = arith.constant 64 : index
    %1508 = vector.load %arg6[%c0_715, %c0_716, %c64_717] : memref<8x8x128xf32, #tpu.memory_space<vmem>>, vector<1x8x64xf32>
    %1509 = vector.shape_cast %1508 : vector<1x8x64xf32> to vector<8x64xf32>
    %1510 = vector.broadcast %810 : f32 to vector<8x64xf32>
    %1511 = arith.mulf %1510, %1499 : vector<8x64xf32>
    %1512 = arith.addf %1509, %1511 : vector<8x64xf32>
    %c0_718 = arith.constant 0 : index
    %c0_719 = arith.constant 0 : index
    %c64_720 = arith.constant 64 : index
    %1513 = vector.load %arg6[%c0_718, %c0_719, %c64_720] : memref<8x8x128xf32, #tpu.memory_space<vmem>>, vector<1x8x64xf32>
    %1514 = vector.shape_cast %1513 : vector<1x8x64xf32> to vector<8x64xf32>
    %1515 = vector.shape_cast %1512 : vector<8x64xf32> to vector<1x8x64xf32>
    tpu.vector_store %arg6[%c0_718, %c0_719, %c64_720], %1515 {strides = array<i32>} : memref<8x8x128xf32, #tpu.memory_space<vmem>>, vector<1x8x64xf32>,
    return
  }
  func.func @transform_0(%arg0: i32) -> i32 {
    %c0_i32 = arith.constant 0 : i32
    %c0_i32_0 = arith.constant 0 : i32
    return %c0_i32 : i32
  }
  func.func @transform_1(%arg0: i32) -> (i32, i32, i32) {
    %c0_i32 = arith.constant 0 : i32
    %c0_i32_0 = arith.constant 0 : i32
    %c0_i32_1 = arith.constant 0 : i32
    %c0_i32_2 = arith.constant 0 : i32
    return %c0_i32, %c0_i32_0, %c0_i32_1 : i32, i32, i32
  }
  func.func @transform_2(%arg0: i32) -> (i32, i32, i32) {
    %c0_i32 = arith.constant 0 : i32
    %c0_i32_0 = arith.constant 0 : i32
    %c0_i32_1 = arith.constant 0 : i32
    %c0_i32_2 = arith.constant 0 : i32
    return %c0_i32, %c0_i32_0, %c0_i32_1 : i32, i32, i32
  }
  func.func @transform_3(%arg0: i32) -> (i32, i32, i32, i32) {
    %c0_i32 = arith.constant 0 : i32
    %c0_i32_0 = arith.constant 0 : i32
    %c0_i32_1 = arith.constant 0 : i32
    %c0_i32_2 = arith.constant 0 : i32
    %c0_i32_3 = arith.constant 0 : i32
    return %c0_i32, %c0_i32_0, %c0_i32_1, %c0_i32_2 : i32, i32, i32, i32
  }
  func.func @transform_4(%arg0: i32) -> (i32, i32) {
    %c0_i32 = arith.constant 0 : i32
    %c0_i32_0 = arith.constant 0 : i32
    %c0_i32_1 = arith.constant 0 : i32
    return %c0_i32, %c0_i32_0 : i32, i32
  }
  func.func @transform_5(%arg0: i32) -> (i32, i32, i32) {
    %c0_i32 = arith.constant 0 : i32
    %c0_i32_0 = arith.constant 0 : i32
    %c0_i32_1 = arith.constant 0 : i32
    %c0_i32_2 = arith.constant 0 : i32
    return %c0_i32, %c0_i32_0, %c0_i32_1 : i32, i32, i32
  }
}

</mosaic_0001>

<llo_original>
// kernel: tpu_custom_call.1
$region0: #{tpu_custom_call.1}
  #allocation0 [shape = 'u32[]', space=smem, size = 0x4, offset = 0x4, fixed_abs, tag = 'smem constant byte address 0x4 - core index']
  #allocation1 [shape = 'u32[144,128]{1,0:T(1,128)}', space=vmem, size = 0x12000, scoped, tag = 'internal scratch']
  #allocation2 [shape = 'f32[8,8,512]{2,1,0:T(8,128)}', space=vmem, size = 0x20000, scoped, tag = 'scratch operand']
  #allocation3 [shape = 'f32[2,8,8,64]{3,2,1,0:T(8,128)}', space=vmem, size = 0x10000, scoped, tag = 'scratch operand']
  %s0 = inlined_call_operand.hbm [shape: f32[3], index: 0, kind: input, shape index: {}]
  %s1 = inlined_call_operand.hbm [shape: f32[8,8,64], index: 1, kind: input, shape index: {}]
  %s2 = inlined_call_operand.hbm [shape: bf16[2,64,512], index: 2, kind: input, shape index: {}]
  %s3 = inlined_call_operand.hbm [shape: bf16[2,2,64,256], index: 3, kind: input, shape index: {}]
  %s4 = inlined_call_operand.hbm [shape: f32[2,512], index: 4, kind: input, shape index: {}]
  %s5 = inlined_call_operand.hbm [shape: f32[8,8,128], index: 5, kind: output, shape index: {}]
  %s6 = sld [smem:[#allocation0]]
  $region50: #{tpu_custom_call.1} parent=0
    _
  %s8 = ssub.s32 1, %s6
  %s9 = scalar_select 0, %s8, %s6
  $region1: #{tpu_custom_call.1} parent=0
    #allocation4 [shape = 'u8[512]{0}', space=smem, size = 0x200, scoped, tag = 'input window, operand 0, single buffered']
    #allocation5 [shape = 's32[1]{0}', space=sflag, size = 0x4, scoped, tag = 'scoped memory for tpu_custom_call.1']
    #allocation6 [shape = 's32[1]{0}', space=sflag, size = 0x4, scoped, tag = 'scoped memory for tpu_custom_call.1']
    #allocation7 [shape = 's32[1]{0}', space=sflag, size = 0x4, scoped, tag = 'scoped memory for tpu_custom_call.1']
    #allocation8 [shape = 'u8[32768]{0}', space=vmem, size = 0x8000, scoped, tag = 'input window, operand 1, single buffered']
    #allocation9 [shape = 'u8[131072]{0}', space=vmem, size = 0x20000, scoped, tag = 'input window, operand 2, single buffered']
    #allocation10 [shape = 's32[1]{0}', space=sflag, size = 0x4, scoped, tag = 'scoped memory for tpu_custom_call.1']
    #allocation11 [shape = 'u8[131072]{0}', space=vmem, size = 0x20000, scoped, tag = 'input window, operand 3, single buffered']
    #allocation12 [shape = 'u8[4096]{0}', space=vmem, size = 0x1000, scoped, tag = 'input window, operand 4, single buffered']
    #allocation13 [shape = 's32[1]{0}', space=sflag, size = 0x4, scoped, tag = 'scoped memory for tpu_custom_call.1']
    #allocation14 [shape = 'u8[32768]{0}', space=vmem, size = 0x8000, scoped, tag = 'output window, operand 0, single buffered']
    %10 = vsyncpa [#allocation7], 0
    %11 = vsyncpa [#allocation5], 0
    %12 = vsyncpa [#allocation10], 0
    %13 = vsyncpa [#allocation13], 0
    %14 = vsyncpa [#allocation6], 0
    // Predicated region
    $region2: #{tpu_custom_call.1} parent=1 // pred_check
      _
    $region3: #{tpu_custom_call.1} parent=1 // pred_check_branch
      %16 = sbr.rel (0) target = $region5
    $region4: #{tpu_custom_call.1} parent=1 // pred_region
      %s18 = ssub.s32 16, 16
      %19 = vsyncadd [#allocation7], %s18
      %22 = dma.hbm_to_smem %s0, 16, [#allocation4], [#allocation7]
    $region5: #{tpu_custom_call.1} parent=1 // pred_fallthru
      _
    // Predicated region
    $region6: #{tpu_custom_call.1} parent=1 // pred_check
      _
    $region7: #{tpu_custom_call.1} parent=1 // pred_check_branch
      %24 = sbr.rel (0) target = $region9
    $region8: #{tpu_custom_call.1} parent=1 // pred_region
      %s26 = ssub.s32 1024, 1024
      %27 = vsyncadd [#allocation5], %s26
      %s28 = sshll.u32 [#allocation8], 4
      %s29 = int_to_ptr.vmem [resolvable:$true] %s28
      %34 = dma.hbm_to_vmem [thread:$0]  %s1, 1024, %s29, [#allocation5], 128, 128, 8
    $region9: #{tpu_custom_call.1} parent=1 // pred_fallthru
      _
    // Predicated region
    $region10: #{tpu_custom_call.1} parent=1 // pred_check
      _
    $region11: #{tpu_custom_call.1} parent=1 // pred_check_branch
      %36 = sbr.rel (0) target = $region13
    $region12: #{tpu_custom_call.1} parent=1 // pred_region
      %s38 = ssub.s32 4096, 4096
      %39 = vsyncadd [#allocation10], %s38
      %s40 = sshll.u32 [#allocation9], 4
      %s41 = int_to_ptr.vmem [resolvable:$true] %s40
      %46 = dma.hbm_to_vmem [thread:$0]  %s2, 4096, %s41, [#allocation10], 256, 256, 16
    $region13: #{tpu_custom_call.1} parent=1 // pred_fallthru
      _
    // Predicated region
    $region14: #{tpu_custom_call.1} parent=1 // pred_check
      _
    $region15: #{tpu_custom_call.1} parent=1 // pred_check_branch
      %48 = sbr.rel (0) target = $region17
    $region16: #{tpu_custom_call.1} parent=1 // pred_region
      %s50 = ssub.s32 4096, 4096
      %51 = vsyncadd [#allocation10], %s50
      %s52 = sshll.u32 [#allocation11], 4
      %s53 = int_to_ptr.vmem [resolvable:$true] %s52
      %58 = dma.hbm_to_vmem [thread:$0]  %s3, 4096, %s53, [#allocation10], 128, 128, 8
    $region17: #{tpu_custom_call.1} parent=1 // pred_fallthru
      _
    // Predicated region
    $region18: #{tpu_custom_call.1} parent=1 // pred_check
      _
    $region19: #{tpu_custom_call.1} parent=1 // pred_check_branch
      %60 = sbr.rel (0) target = $region21
    $region20: #{tpu_custom_call.1} parent=1 // pred_region
      %s62 = ssub.s32 128, 128
      %63 = vsyncadd [#allocation13], %s62
      %s65 = sshll.u32 [#allocation12], 4
      %s66 = int_to_ptr.vmem [resolvable:$true] %s65
      %68 = dma.hbm_to_vmem [thread:$0]  %s4, 128, %s66, [#allocation13]
    $region21: #{tpu_custom_call.1} parent=1 // pred_fallthru
      _
    // Predicated region
    $region22: #{tpu_custom_call.1} parent=1 // pred_check
      _
    $region23: #{tpu_custom_call.1} parent=1 // pred_check_branch
      %70 = sbr.rel (0) target = $region25
    $region24: #{tpu_custom_call.1} parent=1 // pred_region
      %71 = dma.done [#allocation7], 16
    $region25: #{tpu_custom_call.1} parent=1 // pred_fallthru
      _
    // Predicated region
    $region26: #{tpu_custom_call.1} parent=1 // pred_check
      _
    $region27: #{tpu_custom_call.1} parent=1 // pred_check_branch
      %73 = sbr.rel (0) target = $region29
    $region28: #{tpu_custom_call.1} parent=1 // pred_region
      %74 = dma.done [#allocation5], 1024
    $region29: #{tpu_custom_call.1} parent=1 // pred_fallthru
      _
    // Predicated region
    $region30: #{tpu_custom_call.1} parent=1 // pred_check
      _
    $region31: #{tpu_custom_call.1} parent=1 // pred_check_branch
      %76 = sbr.rel (0) target = $region33
    $region32: #{tpu_custom_call.1} parent=1 // pred_region
      %77 = dma.done [#allocation10], 4096
    $region33: #{tpu_custom_call.1} parent=1 // pred_fallthru
      _
    // Predicated region
    $region34: #{tpu_custom_call.1} parent=1 // pred_check
      _
    $region35: #{tpu_custom_call.1} parent=1 // pred_check_branch
      %79 = sbr.rel (0) target = $region37
    $region36: #{tpu_custom_call.1} parent=1 // pred_region
      %80 = dma.done [#allocation10], 4096
    $region37: #{tpu_custom_call.1} parent=1 // pred_fallthru
      _
    // Predicated region
    $region38: #{tpu_custom_call.1} parent=1 // pred_check
      _
    $region39: #{tpu_custom_call.1} parent=1 // pred_check_branch
      %82 = sbr.rel (0) target = $region41
    $region40: #{tpu_custom_call.1} parent=1 // pred_region
      %83 = dma.done [#allocation13], 128
    $region41: #{tpu_custom_call.1} parent=1 // pred_fallthru
      _
    %84 = sfence
    %v86 = vld [vmem:[#allocation8] sm:$0xff]
    %v87 = vld [vmem:[#allocation8 + $0x8] sm:$0xff]
    %v88 = vld [vmem:[#allocation8 + $0x10] sm:$0xff]
    %v89 = vld [vmem:[#allocation8 + $0x18] sm:$0xff]
    %v90 = vld [vmem:[#allocation8 + $0x20] sm:$0xff]
    %v91 = vld [vmem:[#allocation8 + $0x28] sm:$0xff]
    %v92 = vld [vmem:[#allocation8 + $0x30] sm:$0xff]
    %v93 = vld [vmem:[#allocation8 + $0x38] sm:$0xff]
    %s94 = sld [smem:[#allocation4]]
    %v95 = vstv %s94
    %v96 = vmul.f32 %v95, %v86
    %v97 = vmul.f32 %v95, %v87
    %v98 = vmul.f32 %v95, %v88
    %v99 = vmul.f32 %v95, %v89
    %v100 = vmul.f32 %v95, %v90
    %v101 = vmul.f32 %v95, %v91
    %v102 = vmul.f32 %v95, %v92
    %v103 = vmul.f32 %v95, %v93
    %vm104 = vcmask 523264
    %105 = vst.msk [vmem:[#allocation14] sm:$0xff] %vm104, %v96
    %106 = vst.msk [vmem:[#allocation14 + $0x8] sm:$0xff] %vm104, %v97
    %107 = vst.msk [vmem:[#allocation14 + $0x10] sm:$0xff] %vm104, %v98
    %108 = vst.msk [vmem:[#allocation14 + $0x18] sm:$0xff] %vm104, %v99
    %109 = vst.msk [vmem:[#allocation14 + $0x20] sm:$0xff] %vm104, %v100
    %110 = vst.msk [vmem:[#allocation14 + $0x28] sm:$0xff] %vm104, %v101
    %111 = vst.msk [vmem:[#allocation14 + $0x30] sm:$0xff] %vm104, %v102
    %112 = vst.msk [vmem:[#allocation14 + $0x38] sm:$0xff] %vm104, %v103
    %121 = vrot.lane.b32.xlu0 %v96, 64
    %v122 = vpop.permute.xlu0 %121
    %123 = vrot.lane.b32.xlu0 %v97, 64
    %v124 = vpop.permute.xlu0 %123
    %125 = vrot.lane.b32.xlu0 %v98, 64
    %v126 = vpop.permute.xlu0 %125
    %127 = vrot.lane.b32.xlu0 %v99, 64
    %v128 = vpop.permute.xlu0 %127
    %129 = vrot.lane.b32.xlu0 %v100, 64
    %v130 = vpop.permute.xlu0 %129
    %131 = vrot.lane.b32.xlu0 %v101, 64
    %v132 = vpop.permute.xlu0 %131
    %133 = vrot.lane.b32.xlu0 %v102, 64
    %v134 = vpop.permute.xlu0 %133
    %135 = vrot.lane.b32.xlu0 %v103, 64
    %v136 = vpop.permute.xlu0 %135
    %vm145 = vcmask 1048064
    %146 = vst.msk [vmem:[#allocation14] sm:$0xff] %vm145, %v122
    %147 = vst.msk [vmem:[#allocation14 + $0x8] sm:$0xff] %vm145, %v124
    %148 = vst.msk [vmem:[#allocation14 + $0x10] sm:$0xff] %vm145, %v126
    %149 = vst.msk [vmem:[#allocation14 + $0x18] sm:$0xff] %vm145, %v128
    %150 = vst.msk [vmem:[#allocation14 + $0x20] sm:$0xff] %vm145, %v130
    %151 = vst.msk [vmem:[#allocation14 + $0x28] sm:$0xff] %vm145, %v132
    %152 = vst.msk [vmem:[#allocation14 + $0x30] sm:$0xff] %vm145, %v134
    %153 = vst.msk [vmem:[#allocation14 + $0x38] sm:$0xff] %vm145, %v136
    %v154 = vld [vmem:[#allocation12] ss:$2 sm:$0xf]
    %v155 = vpack.c.bf16 %v87, %v86
    %v156 = vpack.c.bf16 %v89, %v88
    %v157 = vpack.c.bf16 %v91, %v90
    %v158 = vpack.c.bf16 %v93, %v92
    %v159 = vld [vmem:[#allocation9] sm:$0xff]
    %v160 = vld [vmem:[#allocation9 + $0x8] sm:$0xff]
    %v161 = vld [vmem:[#allocation9 + $0x10] sm:$0xff]
    %v162 = vld [vmem:[#allocation9 + $0x18] sm:$0xff]
    %v163 = vld [vmem:[#allocation9 + $0x20] sm:$0xff]
    %v164 = vld [vmem:[#allocation9 + $0x28] sm:$0xff]
    %v165 = vld [vmem:[#allocation9 + $0x30] sm:$0xff]
    %v166 = vld [vmem:[#allocation9 + $0x38] sm:$0xff]
    %v167 = vld [vmem:[#allocation9 + $0x40] sm:$0xff]
    %v168 = vld [vmem:[#allocation9 + $0x48] sm:$0xff]
    %v169 = vld [vmem:[#allocation9 + $0x50] sm:$0xff]
    %v170 = vld [vmem:[#allocation9 + $0x58] sm:$0xff]
    %v171 = vld [vmem:[#allocation9 + $0x60] sm:$0xff]
    %v172 = vld [vmem:[#allocation9 + $0x68] sm:$0xff]
    %v173 = vld [vmem:[#allocation9 + $0x70] sm:$0xff]
    %v174 = vld [vmem:[#allocation9 + $0x78] sm:$0xff]
    %v176 = vlaneseq
    %v177 = vshrl.u32 %v176, 7
    %v178 = vsub.s32 0, %v177
    %v179 = vrot.slane %v154, %v178
    %v180 = vlaneseq
    %v181 = vshrl.u32 %v180, 7
    %v182 = vsub.s32 1, %v181
    %v183 = vrot.slane %v154, %v182
    %v184 = vlaneseq
    %v185 = vshrl.u32 %v184, 7
    %v186 = vsub.s32 2, %v185
    %v187 = vrot.slane %v154, %v186
    %v188 = vlaneseq
    %v189 = vshrl.u32 %v188, 7
    %v190 = vsub.s32 3, %v189
    %v191 = vrot.slane %v154, %v190
    %v212 = vunpack.c.l.b16 %v159
    %v213 = vunpack.c.h.b16 %v159
    %v214 = vunpack.c.l.b16 %v160
    %v215 = vunpack.c.h.b16 %v160
    %v216 = vunpack.c.l.b16 %v161
    %v217 = vunpack.c.h.b16 %v161
    %v218 = vunpack.c.l.b16 %v162
    %v219 = vunpack.c.h.b16 %v162
    %v220 = vunpack.c.l.b16 %v163
    %v221 = vunpack.c.h.b16 %v163
    %v222 = vunpack.c.l.b16 %v164
    %v223 = vunpack.c.h.b16 %v164
    %v224 = vunpack.c.l.b16 %v165
    %v225 = vunpack.c.h.b16 %v165
    %v226 = vunpack.c.l.b16 %v166
    %v227 = vunpack.c.h.b16 %v166
    %v228 = vunpack.c.l.b16 %v167
    %v229 = vunpack.c.h.b16 %v167
    %v230 = vunpack.c.l.b16 %v168
    %v231 = vunpack.c.h.b16 %v168
    %v232 = vunpack.c.l.b16 %v169
    %v233 = vunpack.c.h.b16 %v169
    %v234 = vunpack.c.l.b16 %v170
    %v235 = vunpack.c.h.b16 %v170
    %v236 = vunpack.c.l.b16 %v171
    %v237 = vunpack.c.h.b16 %v171
    %v238 = vunpack.c.l.b16 %v172
    %v239 = vunpack.c.h.b16 %v172
    %v240 = vunpack.c.l.b16 %v173
    %v241 = vunpack.c.h.b16 %v173
    %v242 = vunpack.c.l.b16 %v174
    %v243 = vunpack.c.h.b16 %v174
    %v244 = vpack.c.b16 %v216, %v212
    %v245 = vpack.c.b16 %v217, %v213
    %v246 = vpack.c.b16 %v218, %v214
    %v247 = vpack.c.b16 %v219, %v215
    %v248 = vpack.c.b16 %v224, %v220
    %v249 = vpack.c.b16 %v225, %v221
    %v250 = vpack.c.b16 %v226, %v222
    %v251 = vpack.c.b16 %v227, %v223
    %v252 = vpack.c.b16 %v232, %v228
    %v253 = vpack.c.b16 %v233, %v229
    %v254 = vpack.c.b16 %v234, %v230
    %v255 = vpack.c.b16 %v235, %v231
    %v256 = vpack.c.b16 %v240, %v236
    %v257 = vpack.c.b16 %v241, %v237
    %v258 = vpack.c.b16 %v242, %v238
    %v259 = vpack.c.b16 %v243, %v239
    %v277 = vsel %vm104, %v155, 0
    %v280 = vsel %vm104, %v156, 0
    %v283 = vsel %vm104, %v157, 0
    %v286 = vsel %vm104, %v158, 0
    %288 = vmatprep.subr.bf16.mxu0 0
    %289 = vmatpush1.bf16.msra.mxu0 0
    %290 = vmatprep.subr.bf16.mxu0 0
    %291 = vmatpush1.bf16.msra.mxu0 0
    %292 = vmatprep.subr.bf16.mxu0 0
    %293 = vmatpush1.bf16.msra.mxu0 0
    %294 = vmatprep.subr.bf16.mxu0 0
    %295 = vmatpush1.bf16.msra.mxu0 0
    %296 = vmatprep.subr.bf16.mxu0 %v257
    %297 = vmatpush1.bf16.msra.mxu0 %v256
    %298 = vmatprep.subr.bf16.mxu0 %v253
    %299 = vmatpush1.bf16.msra.mxu0 %v252
    %300 = vmatprep.subr.bf16.mxu0 %v249
    %301 = vmatpush1.bf16.msra.mxu0 %v248
    %302 = vmatprep.subr.bf16.mxu0 %v245
    %303 = vmatpush1.bf16.msra.mxu0 %v244
    %304 = vmatprep.subr.bf16.mxu0 0
    %305 = vmatpush2.bf16.msra.mxu0 0
    %306 = vmatprep.subr.bf16.mxu0 0
    %307 = vmatpush2.bf16.msra.mxu0 0
    %308 = vmatprep.subr.bf16.mxu0 0
    %309 = vmatpush2.bf16.msra.mxu0 0
    %310 = vmatprep.subr.bf16.mxu0 0
    %311 = vmatpush2.bf16.msra.mxu0 0
    %312 = vmatprep.subr.bf16.mxu0 0
    %313 = vmatpush2.bf16.msra.mxu0 0
    %314 = vmatprep.subr.bf16.mxu0 0
    %315 = vmatpush2.bf16.msra.mxu0 0
    %316 = vmatprep.subr.bf16.mxu0 0
    %317 = vmatpush2.bf16.msra.mxu0 0
    %318 = vmatprep.subr.bf16.mxu0 0
    %319 = vmatpush2.bf16.msra.mxu0 0
    %320 = vmatprep.mubr.bf16.mxu0 0
    %321 = vmatmul.mubr.bf16.gmra.mxu0 %v277
    %v322 = vpop.f32.mrf.mxu0
    %v323 = vadd.f32 %v179, %v322
    %v324 = vpop.f32.mrf.mxu0
    %v325 = vadd.f32 %v183, %v324
    %v326 = vpop.f32.mrf.mxu0
    %v327 = vadd.f32 %v179, %v326
    %v328 = vpop.f32.mrf.mxu0
    %v329 = vadd.f32 %v183, %v328
    %330 = vmatprep.mubr.bf16.mxu0 0
    %331 = vmatmul.mubr.bf16.gmra.mxu0 %v280
    %v332 = vpop.f32.mrf.mxu0
    %v333 = vadd.f32 %v179, %v332
    %v334 = vpop.f32.mrf.mxu0
    %v335 = vadd.f32 %v183, %v334
    %v336 = vpop.f32.mrf.mxu0
    %v337 = vadd.f32 %v179, %v336
    %v338 = vpop.f32.mrf.mxu0
    %v339 = vadd.f32 %v183, %v338
    %340 = vmatprep.mubr.bf16.mxu0 0
    %341 = vmatmul.mubr.bf16.gmra.mxu0 %v283
    %v342 = vpop.f32.mrf.mxu0
    %v343 = vadd.f32 %v179, %v342
    %v344 = vpop.f32.mrf.mxu0
    %v345 = vadd.f32 %v183, %v344
    %v346 = vpop.f32.mrf.mxu0
    %v347 = vadd.f32 %v179, %v346
    %v348 = vpop.f32.mrf.mxu0
    %v349 = vadd.f32 %v183, %v348
    %350 = vmatprep.mubr.bf16.mxu0 0
    %351 = vmatmul.mubr.bf16.gmra.mxu0 %v286
    %v352 = vpop.f32.mrf.mxu0
    %v353 = vadd.f32 %v179, %v352
    %v354 = vpop.f32.mrf.mxu0
    %v355 = vadd.f32 %v183, %v354
    %v356 = vpop.f32.mrf.mxu0
    %v357 = vadd.f32 %v179, %v356
    %v358 = vpop.f32.mrf.mxu0
    %v359 = vadd.f32 %v183, %v358
    %360 = vdwg.mxu0
    %361 = vmatprep.subr.bf16.mxu0 0
    %362 = vmatpush1.bf16.msra.mxu0 0
    %363 = vmatprep.subr.bf16.mxu0 0
    %364 = vmatpush1.bf16.msra.mxu0 0
    %365 = vmatprep.subr.bf16.mxu0 0
    %366 = vmatpush1.bf16.msra.mxu0 0
    %367 = vmatprep.subr.bf16.mxu0 0
    %368 = vmatpush1.bf16.msra.mxu0 0
    %369 = vmatprep.subr.bf16.mxu0 %v259
    %370 = vmatpush1.bf16.msra.mxu0 %v258
    %371 = vmatprep.subr.bf16.mxu0 %v255
    %372 = vmatpush1.bf16.msra.mxu0 %v254
    %373 = vmatprep.subr.bf16.mxu0 %v251
    %374 = vmatpush1.bf16.msra.mxu0 %v250
    %375 = vmatprep.subr.bf16.mxu0 %v247
    %376 = vmatpush1.bf16.msra.mxu0 %v246
    %377 = vmatprep.subr.bf16.mxu0 0
    %378 = vmatpush2.bf16.msra.mxu0 0
    %379 = vmatprep.subr.bf16.mxu0 0
    %380 = vmatpush2.bf16.msra.mxu0 0
    %381 = vmatprep.subr.bf16.mxu0 0
    %382 = vmatpush2.bf16.msra.mxu0 0
    %383 = vmatprep.subr.bf16.mxu0 0
    %384 = vmatpush2.bf16.msra.mxu0 0
    %385 = vmatprep.subr.bf16.mxu0 0
    %386 = vmatpush2.bf16.msra.mxu0 0
    %387 = vmatprep.subr.bf16.mxu0 0
    %388 = vmatpush2.bf16.msra.mxu0 0
    %389 = vmatprep.subr.bf16.mxu0 0
    %390 = vmatpush2.bf16.msra.mxu0 0
    %391 = vmatprep.subr.bf16.mxu0 0
    %392 = vmatpush2.bf16.msra.mxu0 0
    %393 = vmatprep.mubr.bf16.mxu0 0
    %394 = vmatmul.mubr.bf16.gmra.mxu0 %v277
    %v395 = vpop.f32.mrf.mxu0
    %v396 = vadd.f32 %v187, %v395
    %v397 = vpop.f32.mrf.mxu0
    %v398 = vadd.f32 %v191, %v397
    %v399 = vpop.f32.mrf.mxu0
    %v400 = vadd.f32 %v187, %v399
    %v401 = vpop.f32.mrf.mxu0
    %v402 = vadd.f32 %v191, %v401
    %403 = vmatprep.mubr.bf16.mxu0 0
    %404 = vmatmul.mubr.bf16.gmra.mxu0 %v280
    %v405 = vpop.f32.mrf.mxu0
    %v406 = vadd.f32 %v187, %v405
    %v407 = vpop.f32.mrf.mxu0
    %v408 = vadd.f32 %v191, %v407
    %v409 = vpop.f32.mrf.mxu0
    %v410 = vadd.f32 %v187, %v409
    %v411 = vpop.f32.mrf.mxu0
    %v412 = vadd.f32 %v191, %v411
    %413 = vmatprep.mubr.bf16.mxu0 0
    %414 = vmatmul.mubr.bf16.gmra.mxu0 %v283
    %v415 = vpop.f32.mrf.mxu0
    %v416 = vadd.f32 %v187, %v415
    %v417 = vpop.f32.mrf.mxu0
    %v418 = vadd.f32 %v191, %v417
    %v419 = vpop.f32.mrf.mxu0
    %v420 = vadd.f32 %v187, %v419
    %v421 = vpop.f32.mrf.mxu0
    %v422 = vadd.f32 %v191, %v421
    %423 = vmatprep.mubr.bf16.mxu0 0
    %424 = vmatmul.mubr.bf16.gmra.mxu0 %v286
    %v425 = vpop.f32.mrf.mxu0
    %v426 = vadd.f32 %v187, %v425
    %v427 = vpop.f32.mrf.mxu0
    %v428 = vadd.f32 %v191, %v427
    %v429 = vpop.f32.mrf.mxu0
    %v430 = vadd.f32 %v187, %v429
    %v431 = vpop.f32.mrf.mxu0
    %v432 = vadd.f32 %v191, %v431
    %433 = vdwg.mxu0
    %434 = vst [vmem:[#allocation2] sm:$0xff] %v323
    %435 = vst [vmem:[#allocation2 + $0x8] sm:$0xff] %v325
    %436 = vst [vmem:[#allocation2 + $0x10] sm:$0xff] %v396
    %437 = vst [vmem:[#allocation2 + $0x18] sm:$0xff] %v398
    %438 = vst [vmem:[#allocation2 + $0x20] sm:$0xff] %v327
    %439 = vst [vmem:[#allocation2 + $0x28] sm:$0xff] %v329
    %440 = vst [vmem:[#allocation2 + $0x30] sm:$0xff] %v400
    %441 = vst [vmem:[#allocation2 + $0x38] sm:$0xff] %v402
    %442 = vst [vmem:[#allocation2 + $0x40] sm:$0xff] %v333
    %443 = vst [vmem:[#allocation2 + $0x48] sm:$0xff] %v335
    %444 = vst [vmem:[#allocation2 + $0x50] sm:$0xff] %v406
    %445 = vst [vmem:[#allocation2 + $0x58] sm:$0xff] %v408
    %446 = vst [vmem:[#allocation2 + $0x60] sm:$0xff] %v337
    %447 = vst [vmem:[#allocation2 + $0x68] sm:$0xff] %v339
    %448 = vst [vmem:[#allocation2 + $0x70] sm:$0xff] %v410
    %449 = vst [vmem:[#allocation2 + $0x78] sm:$0xff] %v412
    %450 = vst [vmem:[#allocation2 + $0x80] sm:$0xff] %v343
    %451 = vst [vmem:[#allocation2 + $0x88] sm:$0xff] %v345
    %452 = vst [vmem:[#allocation2 + $0x90] sm:$0xff] %v416
    %453 = vst [vmem:[#allocation2 + $0x98] sm:$0xff] %v418
    %454 = vst [vmem:[#allocation2 + $0xa0] sm:$0xff] %v347
    %455 = vst [vmem:[#allocation2 + $0xa8] sm:$0xff] %v349
    %456 = vst [vmem:[#allocation2 + $0xb0] sm:$0xff] %v420
    %457 = vst [vmem:[#allocation2 + $0xb8] sm:$0xff] %v422
    %458 = vst [vmem:[#allocation2 + $0xc0] sm:$0xff] %v353
    %459 = vst [vmem:[#allocation2 + $0xc8] sm:$0xff] %v355
    %460 = vst [vmem:[#allocation2 + $0xd0] sm:$0xff] %v426
    %461 = vst [vmem:[#allocation2 + $0xd8] sm:$0xff] %v428
    %462 = vst [vmem:[#allocation2 + $0xe0] sm:$0xff] %v357
    %463 = vst [vmem:[#allocation2 + $0xe8] sm:$0xff] %v359
    %464 = vst [vmem:[#allocation2 + $0xf0] sm:$0xff] %v430
    %465 = vst [vmem:[#allocation2 + $0xf8] sm:$0xff] %v432
    %v466 = vld [vmem:[#allocation11] sm:$0xff]
    %v467 = vld [vmem:[#allocation11 + $0x8] sm:$0xff]
    %v468 = vld [vmem:[#allocation11 + $0x10] sm:$0xff]
    %v469 = vld [vmem:[#allocation11 + $0x18] sm:$0xff]
    %v470 = vld [vmem:[#allocation11 + $0x20] sm:$0xff]
    %v471 = vld [vmem:[#allocation11 + $0x28] sm:$0xff]
    %v472 = vld [vmem:[#allocation11 + $0x30] sm:$0xff]
    %v473 = vld [vmem:[#allocation11 + $0x38] sm:$0xff]
    %s474 = scalar_lea.vmem [#allocation11], 128
    %v475 = vld [vmem:[%s474] sm:$0xff]
    %v476 = vld [vmem:[%s474 + $0x8] sm:$0xff]
    %v477 = vld [vmem:[%s474 + $0x10] sm:$0xff]
    %v478 = vld [vmem:[%s474 + $0x18] sm:$0xff]
    %v479 = vld [vmem:[%s474 + $0x20] sm:$0xff]
    %v480 = vld [vmem:[%s474 + $0x28] sm:$0xff]
    %v481 = vld [vmem:[%s474 + $0x30] sm:$0xff]
    %v482 = vld [vmem:[%s474 + $0x38] sm:$0xff]
    %s483 = sld [smem:[#allocation4 + $0x1]]
    %v484 = vld [vmem:[#allocation2] sm:$0xff]
    %v485 = vld [vmem:[#allocation2 + $0x8] sm:$0xff]
    %v494 = vunpack.c.l.b16 %v466
    %v495 = vunpack.c.h.b16 %v466
    %v496 = vunpack.c.l.b16 %v467
    %v497 = vunpack.c.h.b16 %v467
    %v498 = vunpack.c.l.b16 %v468
    %v499 = vunpack.c.h.b16 %v468
    %v500 = vunpack.c.l.b16 %v469
    %v501 = vunpack.c.h.b16 %v469
    %v502 = vunpack.c.l.b16 %v470
    %v503 = vunpack.c.h.b16 %v470
    %v504 = vunpack.c.l.b16 %v471
    %v505 = vunpack.c.h.b16 %v471
    %v506 = vunpack.c.l.b16 %v472
    %v507 = vunpack.c.h.b16 %v472
    %v508 = vunpack.c.l.b16 %v473
    %v509 = vunpack.c.h.b16 %v473
    %v510 = vpack.c.b16 %v496, %v494
    %v511 = vpack.c.b16 %v497, %v495
    %v512 = vpack.c.b16 %v500, %v498
    %v513 = vpack.c.b16 %v501, %v499
    %v514 = vpack.c.b16 %v504, %v502
    %v515 = vpack.c.b16 %v505, %v503
    %v516 = vpack.c.b16 %v508, %v506
    %v517 = vpack.c.b16 %v509, %v507
    %v527 = vsel %vm104, 0, 0
    %529 = vmatprep.subr.bf16.mxu0 0
    %530 = vmatpush1.bf16.msra.mxu0 0
    %531 = vmatprep.subr.bf16.mxu0 0
    %532 = vmatpush1.bf16.msra.mxu0 0
    %533 = vmatprep.subr.bf16.mxu0 0
    %534 = vmatpush1.bf16.msra.mxu0 0
    %535 = vmatprep.subr.bf16.mxu0 0
    %536 = vmatpush1.bf16.msra.mxu0 0
    %537 = vmatprep.subr.bf16.mxu0 %v517
    %538 = vmatpush1.bf16.msra.mxu0 %v516
    %539 = vmatprep.subr.bf16.mxu0 %v515
    %540 = vmatpush1.bf16.msra.mxu0 %v514
    %541 = vmatprep.subr.bf16.mxu0 %v513
    %542 = vmatpush1.bf16.msra.mxu0 %v512
    %543 = vmatprep.subr.bf16.mxu0 %v511
    %544 = vmatpush1.bf16.msra.mxu0 %v510
    %545 = vmatprep.subr.bf16.mxu0 0
    %546 = vmatpush2.bf16.msra.mxu0 0
    %547 = vmatprep.subr.bf16.mxu0 0
    %548 = vmatpush2.bf16.msra.mxu0 0
    %549 = vmatprep.subr.bf16.mxu0 0
    %550 = vmatpush2.bf16.msra.mxu0 0
    %551 = vmatprep.subr.bf16.mxu0 0
    %552 = vmatpush2.bf16.msra.mxu0 0
    %553 = vmatprep.subr.bf16.mxu0 0
    %554 = vmatpush2.bf16.msra.mxu0 0
    %555 = vmatprep.subr.bf16.mxu0 0
    %556 = vmatpush2.bf16.msra.mxu0 0
    %557 = vmatprep.subr.bf16.mxu0 0
    %558 = vmatpush2.bf16.msra.mxu0 0
    %559 = vmatprep.subr.bf16.mxu0 0
    %560 = vmatpush2.bf16.msra.mxu0 0
    %561 = vmatprep.mubr.bf16.mxu0 0
    %562 = vmatmul.mubr.bf16.gmra.mxu0 %v527
    %v563 = vpop.f32.mrf.mxu0
    %v564 = vadd.f32 0.0, %v563
    %v565 = vpop.f32.mrf.mxu0
    %v566 = vadd.f32 0.0, %v565
    %v567 = vpop.f32.mrf.mxu0
    %v568 = vpop.f32.mrf.mxu0
    %569 = vdwg.mxu0
    %v570 = vadd.f32 %v484, %v564
    %v571 = vadd.f32 %v485, %v566
    %s572 = scalar_lea.vmem [#allocation2], 224
    %v573 = vld [vmem:[%s572 + $0x10] sm:$0xff]
    %v574 = vld [vmem:[%s572 + $0x18] sm:$0xff]
    %v583 = vunpack.c.l.b16 %v475
    %v584 = vunpack.c.h.b16 %v475
    %v585 = vunpack.c.l.b16 %v476
    %v586 = vunpack.c.h.b16 %v476
    %v587 = vunpack.c.l.b16 %v477
    %v588 = vunpack.c.h.b16 %v477
    %v589 = vunpack.c.l.b16 %v478
    %v590 = vunpack.c.h.b16 %v478
    %v591 = vunpack.c.l.b16 %v479
    %v592 = vunpack.c.h.b16 %v479
    %v593 = vunpack.c.l.b16 %v480
    %v594 = vunpack.c.h.b16 %v480
    %v595 = vunpack.c.l.b16 %v481
    %v596 = vunpack.c.h.b16 %v481
    %v597 = vunpack.c.l.b16 %v482
    %v598 = vunpack.c.h.b16 %v482
    %v599 = vpack.c.b16 %v585, %v583
    %v600 = vpack.c.b16 %v586, %v584
    %v601 = vpack.c.b16 %v589, %v587
    %v602 = vpack.c.b16 %v590, %v588
    %v603 = vpack.c.b16 %v593, %v591
    %v604 = vpack.c.b16 %v594, %v592
    %v605 = vpack.c.b16 %v597, %v595
    %v606 = vpack.c.b16 %v598, %v596
    %615 = vmatprep.subr.bf16.mxu0 0
    %616 = vmatpush1.bf16.msra.mxu0 0
    %617 = vmatprep.subr.bf16.mxu0 0
    %618 = vmatpush1.bf16.msra.mxu0 0
    %619 = vmatprep.subr.bf16.mxu0 0
    %620 = vmatpush1.bf16.msra.mxu0 0
    %621 = vmatprep.subr.bf16.mxu0 0
    %622 = vmatpush1.bf16.msra.mxu0 0
    %623 = vmatprep.subr.bf16.mxu0 %v606
    %624 = vmatpush1.bf16.msra.mxu0 %v605
    %625 = vmatprep.subr.bf16.mxu0 %v604
    %626 = vmatpush1.bf16.msra.mxu0 %v603
    %627 = vmatprep.subr.bf16.mxu0 %v602
    %628 = vmatpush1.bf16.msra.mxu0 %v601
    %629 = vmatprep.subr.bf16.mxu0 %v600
    %630 = vmatpush1.bf16.msra.mxu0 %v599
    %631 = vmatprep.subr.bf16.mxu0 0
    %632 = vmatpush2.bf16.msra.mxu0 0
    %633 = vmatprep.subr.bf16.mxu0 0
    %634 = vmatpush2.bf16.msra.mxu0 0
    %635 = vmatprep.subr.bf16.mxu0 0
    %636 = vmatpush2.bf16.msra.mxu0 0
    %637 = vmatprep.subr.bf16.mxu0 0
    %638 = vmatpush2.bf16.msra.mxu0 0
    %639 = vmatprep.subr.bf16.mxu0 0
    %640 = vmatpush2.bf16.msra.mxu0 0
    %641 = vmatprep.subr.bf16.mxu0 0
    %642 = vmatpush2.bf16.msra.mxu0 0
    %643 = vmatprep.subr.bf16.mxu0 0
    %644 = vmatpush2.bf16.msra.mxu0 0
    %645 = vmatprep.subr.bf16.mxu0 0
    %646 = vmatpush2.bf16.msra.mxu0 0
    %647 = vmatprep.mubr.bf16.mxu0 0
    %648 = vmatmul.mubr.bf16.gmra.mxu0 %v527
    %v649 = vpop.f32.mrf.mxu0
    %v650 = vadd.f32 0.0, %v649
    %v651 = vpop.f32.mrf.mxu0
    %v652 = vadd.f32 0.0, %v651
    %v653 = vpop.f32.mrf.mxu0
    %v654 = vpop.f32.mrf.mxu0
    %655 = vdwg.mxu0
    %v656 = vadd.f32 %v573, %v650
    %v657 = vadd.f32 %v574, %v652
    %v658 = vmul.f32 %v570, 0.5
    %v659 = vtanh.pop %v658
    %v660 = vadd.f32 %v659, 1.0
    %v661 = vmul.f32 %v660, 0.5
    %v662 = vmul.f32 %v656, 0.5
    %v663 = vtanh.pop %v662
    %v664 = vadd.f32 %v663, 1.0
    %v665 = vmul.f32 %v664, 0.5
    %v666 = vtanh.pop %v571
    %v667 = vtanh.pop %v657
    %v668 = vmul.f32 %v571, 0.5
    %v669 = vtanh.pop %v668
    %v670 = vadd.f32 %v669, 1.0
    %v671 = vmul.f32 %v670, 0.5
    %v672 = vmul.f32 %v657, 0.5
    %v673 = vtanh.pop %v672
    %v674 = vadd.f32 %v673, 1.0
    %v675 = vmul.f32 %v674, 0.5
    %v676 = vmul.f32 %v661, 0.0
    %v677 = vmul.f32 %v661, %v666
    %679 = vrot.lane.b32.xlu0 %v677, 64
    %v680 = vpop.permute.xlu0 %679
    %v682 = vadd.f32 %v676, %v680
    %v683 = vmul.f32 %v665, 0.0
    %v684 = vmul.f32 %v665, %v667
    %686 = vrot.lane.b32.xlu0 %v684, 64
    %v687 = vpop.permute.xlu0 %686
    %v689 = vadd.f32 %v683, %v687
    %v690 = vtanh.pop %v682
    %v691 = vmul.f32 %v671, %v690
    %v692 = vtanh.pop %v689
    %v693 = vmul.f32 %v675, %v692
    %695 = vrot.lane.b32.xlu0 %v691, 64
    %v696 = vpop.permute.xlu0 %695
    %698 = vst.msk [vmem:[#allocation3] sm:$0xff] %vm104, %v696
    %700 = vrot.lane.b32.xlu0 %v693, 64
    %v701 = vpop.permute.xlu0 %700
    %s703 = scalar_lea.vmem [#allocation3], 120
    %704 = vst.msk [vmem:[%s703] sm:$0xff] %vm104, %v701
    %v705 = vld [vmem:[#allocation14] sm:$0xff]
    %v706 = vstv %s483
    %v707 = vmul.f32 %v706, %v691
    %709 = vrot.lane.b32.xlu0 %v707, 64
    %v710 = vpop.permute.xlu0 %709
    %v712 = vadd.f32 %v705, %v710
    %713 = vst.msk [vmem:[#allocation14] sm:$0xff] %vm104, %v712
    %s714 = scalar_lea.vmem [#allocation14], 56
    %v715 = vld [vmem:[%s714] sm:$0xff]
    %v716 = vmul.f32 %v706, %v693
    %v717 = vadd.f32 %v715, %v716
    %718 = vst.msk [vmem:[%s714] sm:$0xff] %vm145, %v717
    %s719 = scalar_lea.vmem [#allocation2], 32
    %v720 = vld [vmem:[%s719] sm:$0xff]
    %v721 = vld [vmem:[%s719 + $0x8] sm:$0xff]
    %v722 = vpack.c.bf16 %v691, %v691
    %724 = vrot.lane.b32.xlu0 %v722, 64
    %v725 = vpop.permute.xlu0 %724
    %v727 = vsel %vm104, %v725, 0
    %729 = vmatprep.subr.bf16.mxu0 0
    %730 = vmatpush1.bf16.msra.mxu0 0
    %731 = vmatprep.subr.bf16.mxu0 0
    %732 = vmatpush1.bf16.msra.mxu0 0
    %733 = vmatprep.subr.bf16.mxu0 0
    %734 = vmatpush1.bf16.msra.mxu0 0
    %735 = vmatprep.subr.bf16.mxu0 0
    %736 = vmatpush1.bf16.msra.mxu0 0
    %737 = vmatprep.subr.bf16.mxu0 %v517
    %738 = vmatpush1.bf16.msra.mxu0 %v516
    %739 = vmatprep.subr.bf16.mxu0 %v515
    %740 = vmatpush1.bf16.msra.mxu0 %v514
    %741 = vmatprep.subr.bf16.mxu0 %v513
    %742 = vmatpush1.bf16.msra.mxu0 %v512
    %743 = vmatprep.subr.bf16.mxu0 %v511
    %744 = vmatpush1.bf16.msra.mxu0 %v510
    %745 = vmatprep.subr.bf16.mxu0 0
    %746 = vmatpush2.bf16.msra.mxu0 0
    %747 = vmatprep.subr.bf16.mxu0 0
    %748 = vmatpush2.bf16.msra.mxu0 0
    %749 = vmatprep.subr.bf16.mxu0 0
    %750 = vmatpush2.bf16.msra.mxu0 0
    %751 = vmatprep.subr.bf16.mxu0 0
    %752 = vmatpush2.bf16.msra.mxu0 0
    %753 = vmatprep.subr.bf16.mxu0 0
    %754 = vmatpush2.bf16.msra.mxu0 0
    %755 = vmatprep.subr.bf16.mxu0 0
    %756 = vmatpush2.bf16.msra.mxu0 0
    %757 = vmatprep.subr.bf16.mxu0 0
    %758 = vmatpush2.bf16.msra.mxu0 0
    %759 = vmatprep.subr.bf16.mxu0 0
    %760 = vmatpush2.bf16.msra.mxu0 0
    %761 = vmatprep.mubr.bf16.mxu0 0
    %762 = vmatmul.mubr.bf16.gmra.mxu0 %v727
    %v763 = vpop.f32.mrf.mxu0
    %v764 = vadd.f32 0.0, %v763
    %v765 = vpop.f32.mrf.mxu0
    %v766 = vadd.f32 0.0, %v765
    %v767 = vpop.f32.mrf.mxu0
    %v768 = vpop.f32.mrf.mxu0
    %769 = vdwg.mxu0
    %v770 = vadd.f32 %v720, %v764
    %v771 = vadd.f32 %v721, %v766
    %s772 = scalar_lea.vmem [#allocation2], 192
    %v773 = vld [vmem:[%s772 + $0x10] sm:$0xff]
    %v774 = vld [vmem:[%s772 + $0x18] sm:$0xff]
    %v775 = vpack.c.bf16 %v693, %v693
    %777 = vrot.lane.b32.xlu0 %v775, 64
    %v778 = vpop.permute.xlu0 %777
    %v780 = vsel %vm104, %v778, 0
    %782 = vmatprep.subr.bf16.mxu0 0
    %783 = vmatpush1.bf16.msra.mxu0 0
    %784 = vmatprep.subr.bf16.mxu0 0
    %785 = vmatpush1.bf16.msra.mxu0 0
    %786 = vmatprep.subr.bf16.mxu0 0
    %787 = vmatpush1.bf16.msra.mxu0 0
    %788 = vmatprep.subr.bf16.mxu0 0
    %789 = vmatpush1.bf16.msra.mxu0 0
    %790 = vmatprep.subr.bf16.mxu0 %v606
    %791 = vmatpush1.bf16.msra.mxu0 %v605
    %792 = vmatprep.subr.bf16.mxu0 %v604
    %793 = vmatpush1.bf16.msra.mxu0 %v603
    %794 = vmatprep.subr.bf16.mxu0 %v602
    %795 = vmatpush1.bf16.msra.mxu0 %v601
    %796 = vmatprep.subr.bf16.mxu0 %v600
    %797 = vmatpush1.bf16.msra.mxu0 %v599
    %798 = vmatprep.subr.bf16.mxu0 0
    %799 = vmatpush2.bf16.msra.mxu0 0
    %800 = vmatprep.subr.bf16.mxu0 0
    %801 = vmatpush2.bf16.msra.mxu0 0
    %802 = vmatprep.subr.bf16.mxu0 0
    %803 = vmatpush2.bf16.msra.mxu0 0
    %804 = vmatprep.subr.bf16.mxu0 0
    %805 = vmatpush2.bf16.msra.mxu0 0
    %806 = vmatprep.subr.bf16.mxu0 0
    %807 = vmatpush2.bf16.msra.mxu0 0
    %808 = vmatprep.subr.bf16.mxu0 0
    %809 = vmatpush2.bf16.msra.mxu0 0
    %810 = vmatprep.subr.bf16.mxu0 0
    %811 = vmatpush2.bf16.msra.mxu0 0
    %812 = vmatprep.subr.bf16.mxu0 0
    %813 = vmatpush2.bf16.msra.mxu0 0
    %814 = vmatprep.mubr.bf16.mxu0 0
    %815 = vmatmul.mubr.bf16.gmra.mxu0 %v780
    %v816 = vpop.f32.mrf.mxu0
    %v817 = vadd.f32 0.0, %v816
    %v818 = vpop.f32.mrf.mxu0
    %v819 = vadd.f32 0.0, %v818
    %v820 = vpop.f32.mrf.mxu0
    %v821 = vpop.f32.mrf.mxu0
    %822 = vdwg.mxu0
    %v823 = vadd.f32 %v773, %v817
    %v824 = vadd.f32 %v774, %v819
    %v825 = vmul.f32 %v770, 0.5
    %v826 = vtanh.pop %v825
    %v827 = vadd.f32 %v826, 1.0
    %v828 = vmul.f32 %v827, 0.5
    %v829 = vmul.f32 %v823, 0.5
    %v830 = vtanh.pop %v829
    %v831 = vadd.f32 %v830, 1.0
    %v832 = vmul.f32 %v831, 0.5
    %v833 = vtanh.pop %v771
    %v834 = vtanh.pop %v824
    %v835 = vmul.f32 %v771, 0.5
    %v836 = vtanh.pop %v835
    %v837 = vadd.f32 %v836, 1.0
    %v838 = vmul.f32 %v837, 0.5
    %v839 = vmul.f32 %v824, 0.5
    %v840 = vtanh.pop %v839
    %v841 = vadd.f32 %v840, 1.0
    %v842 = vmul.f32 %v841, 0.5
    %v843 = vmul.f32 %v828, %v682
    %v844 = vmul.f32 %v828, %v833
    %846 = vrot.lane.b32.xlu0 %v844, 64
    %v847 = vpop.permute.xlu0 %846
    %v849 = vadd.f32 %v843, %v847
    %v850 = vmul.f32 %v832, %v689
    %v851 = vmul.f32 %v832, %v834
    %853 = vrot.lane.b32.xlu0 %v851, 64
    %v854 = vpop.permute.xlu0 %853
    %v856 = vadd.f32 %v850, %v854
    %v857 = vtanh.pop %v849
    %v858 = vmul.f32 %v838, %v857
    %v859 = vtanh.pop %v856
    %v860 = vmul.f32 %v842, %v859
    %862 = vrot.lane.b32.xlu0 %v858, 64
    %v863 = vpop.permute.xlu0 %862
    %s865 = scalar_lea.vmem [#allocation3], 8
    %866 = vst.msk [vmem:[%s865] sm:$0xff] %vm104, %v863
    %868 = vrot.lane.b32.xlu0 %v860, 64
    %v869 = vpop.permute.xlu0 %868
    %s871 = scalar_lea.vmem [#allocation3], 112
    %872 = vst.msk [vmem:[%s871] sm:$0xff] %vm104, %v869
    %s873 = scalar_lea.vmem [#allocation14], 8
    %v874 = vld [vmem:[%s873] sm:$0xff]
    %v875 = vmul.f32 %v706, %v858
    %877 = vrot.lane.b32.xlu0 %v875, 64
    %v878 = vpop.permute.xlu0 %877
    %v880 = vadd.f32 %v874, %v878
    %881 = vst.msk [vmem:[%s873] sm:$0xff] %vm104, %v880
    %s882 = scalar_lea.vmem [#allocation14], 48
    %v883 = vld [vmem:[%s882] sm:$0xff]
    %v884 = vmul.f32 %v706, %v860
    %v885 = vadd.f32 %v883, %v884
    %886 = vst.msk [vmem:[%s882] sm:$0xff] %vm145, %v885
    %s887 = scalar_lea.vmem [#allocation2], 64
    %v888 = vld [vmem:[%s887] sm:$0xff]
    %v889 = vld [vmem:[%s887 + $0x8] sm:$0xff]
    %v890 = vpack.c.bf16 %v858, %v858
    %892 = vrot.lane.b32.xlu0 %v890, 64
    %v893 = vpop.permute.xlu0 %892
    %v895 = vsel %vm104, %v893, 0
    %897 = vmatprep.subr.bf16.mxu0 0
    %898 = vmatpush1.bf16.msra.mxu0 0
    %899 = vmatprep.subr.bf16.mxu0 0
    %900 = vmatpush1.bf16.msra.mxu0 0
    %901 = vmatprep.subr.bf16.mxu0 0
    %902 = vmatpush1.bf16.msra.mxu0 0
    %903 = vmatprep.subr.bf16.mxu0 0
    %904 = vmatpush1.bf16.msra.mxu0 0
    %905 = vmatprep.subr.bf16.mxu0 %v517
    %906 = vmatpush1.bf16.msra.mxu0 %v516
    %907 = vmatprep.subr.bf16.mxu0 %v515
    %908 = vmatpush1.bf16.msra.mxu0 %v514
    %909 = vmatprep.subr.bf16.mxu0 %v513
    %910 = vmatpush1.bf16.msra.mxu0 %v512
    %911 = vmatprep.subr.bf16.mxu0 %v511
    %912 = vmatpush1.bf16.msra.mxu0 %v510
    %913 = vmatprep.subr.bf16.mxu0 0
    %914 = vmatpush2.bf16.msra.mxu0 0
    %915 = vmatprep.subr.bf16.mxu0 0
    %916 = vmatpush2.bf16.msra.mxu0 0
    %917 = vmatprep.subr.bf16.mxu0 0
    %918 = vmatpush2.bf16.msra.mxu0 0
    %919 = vmatprep.subr.bf16.mxu0 0
    %920 = vmatpush2.bf16.msra.mxu0 0
    %921 = vmatprep.subr.bf16.mxu0 0
    %922 = vmatpush2.bf16.msra.mxu0 0
    %923 = vmatprep.subr.bf16.mxu0 0
    %924 = vmatpush2.bf16.msra.mxu0 0
    %925 = vmatprep.subr.bf16.mxu0 0
    %926 = vmatpush2.bf16.msra.mxu0 0
    %927 = vmatprep.subr.bf16.mxu0 0
    %928 = vmatpush2.bf16.msra.mxu0 0
    %929 = vmatprep.mubr.bf16.mxu0 0
    %930 = vmatmul.mubr.bf16.gmra.mxu0 %v895
    %v931 = vpop.f32.mrf.mxu0
    %v932 = vadd.f32 0.0, %v931
    %v933 = vpop.f32.mrf.mxu0
    %v934 = vadd.f32 0.0, %v933
    %v935 = vpop.f32.mrf.mxu0
    %v936 = vpop.f32.mrf.mxu0
    %937 = vdwg.mxu0
    %v938 = vadd.f32 %v888, %v932
    %v939 = vadd.f32 %v889, %v934
    %s940 = scalar_lea.vmem [#allocation2], 160
    %v941 = vld [vmem:[%s940 + $0x10] sm:$0xff]
    %v942 = vld [vmem:[%s940 + $0x18] sm:$0xff]
    %v943 = vpack.c.bf16 %v860, %v860
    %945 = vrot.lane.b32.xlu0 %v943, 64
    %v946 = vpop.permute.xlu0 %945
    %v948 = vsel %vm104, %v946, 0
    %950 = vmatprep.subr.bf16.mxu0 0
    %951 = vmatpush1.bf16.msra.mxu0 0
    %952 = vmatprep.subr.bf16.mxu0 0
    %953 = vmatpush1.bf16.msra.mxu0 0
    %954 = vmatprep.subr.bf16.mxu0 0
    %955 = vmatpush1.bf16.msra.mxu0 0
    %956 = vmatprep.subr.bf16.mxu0 0
    %957 = vmatpush1.bf16.msra.mxu0 0
    %958 = vmatprep.subr.bf16.mxu0 %v606
    %959 = vmatpush1.bf16.msra.mxu0 %v605
    %960 = vmatprep.subr.bf16.mxu0 %v604
    %961 = vmatpush1.bf16.msra.mxu0 %v603
    %962 = vmatprep.subr.bf16.mxu0 %v602
    %963 = vmatpush1.bf16.msra.mxu0 %v601
    %964 = vmatprep.subr.bf16.mxu0 %v600
    %965 = vmatpush1.bf16.msra.mxu0 %v599
    %966 = vmatprep.subr.bf16.mxu0 0
    %967 = vmatpush2.bf16.msra.mxu0 0
    %968 = vmatprep.subr.bf16.mxu0 0
    %969 = vmatpush2.bf16.msra.mxu0 0
    %970 = vmatprep.subr.bf16.mxu0 0
    %971 = vmatpush2.bf16.msra.mxu0 0
    %972 = vmatprep.subr.bf16.mxu0 0
    %973 = vmatpush2.bf16.msra.mxu0 0
    %974 = vmatprep.subr.bf16.mxu0 0
    %975 = vmatpush2.bf16.msra.mxu0 0
    %976 = vmatprep.subr.bf16.mxu0 0
    %977 = vmatpush2.bf16.msra.mxu0 0
    %978 = vmatprep.subr.bf16.mxu0 0
    %979 = vmatpush2.bf16.msra.mxu0 0
    %980 = vmatprep.subr.bf16.mxu0 0
    %981 = vmatpush2.bf16.msra.mxu0 0
    %982 = vmatprep.mubr.bf16.mxu0 0
    %983 = vmatmul.mubr.bf16.gmra.mxu0 %v948
    %v984 = vpop.f32.mrf.mxu0
    %v985 = vadd.f32 0.0, %v984
    %v986 = vpop.f32.mrf.mxu0
    %v987 = vadd.f32 0.0, %v986
    %v988 = vpop.f32.mrf.mxu0
    %v989 = vpop.f32.mrf.mxu0
    %990 = vdwg.mxu0
    %v991 = vadd.f32 %v941, %v985
    %v992 = vadd.f32 %v942, %v987
    %v993 = vmul.f32 %v938, 0.5
    %v994 = vtanh.pop %v993
    %v995 = vadd.f32 %v994, 1.0
    %v996 = vmul.f32 %v995, 0.5
    %v997 = vmul.f32 %v991, 0.5
    %v998 = vtanh.pop %v997
    %v999 = vadd.f32 %v998, 1.0
    %v1000 = vmul.f32 %v999, 0.5
    %v1001 = vtanh.pop %v939
    %v1002 = vtanh.pop %v992
    %v1003 = vmul.f32 %v939, 0.5
    %v1004 = vtanh.pop %v1003
    %v1005 = vadd.f32 %v1004, 1.0
    %v1006 = vmul.f32 %v1005, 0.5
    %v1007 = vmul.f32 %v992, 0.5
    %v1008 = vtanh.pop %v1007
    %v1009 = vadd.f32 %v1008, 1.0
    %v1010 = vmul.f32 %v1009, 0.5
    %v1011 = vmul.f32 %v996, %v849
    %v1012 = vmul.f32 %v996, %v1001
    %1014 = vrot.lane.b32.xlu0 %v1012, 64
    %v1015 = vpop.permute.xlu0 %1014
    %v1017 = vadd.f32 %v1011, %v1015
    %v1018 = vmul.f32 %v1000, %v856
    %v1019 = vmul.f32 %v1000, %v1002
    %1021 = vrot.lane.b32.xlu0 %v1019, 64
    %v1022 = vpop.permute.xlu0 %1021
    %v1024 = vadd.f32 %v1018, %v1022
    %v1025 = vtanh.pop %v1017
    %v1026 = vmul.f32 %v1006, %v1025
    %v1027 = vtanh.pop %v1024
    %v1028 = vmul.f32 %v1010, %v1027
    %1030 = vrot.lane.b32.xlu0 %v1026, 64
    %v1031 = vpop.permute.xlu0 %1030
    %s1033 = scalar_lea.vmem [#allocation3], 16
    %1034 = vst.msk [vmem:[%s1033] sm:$0xff] %vm104, %v1031
    %1036 = vrot.lane.b32.xlu0 %v1028, 64
    %v1037 = vpop.permute.xlu0 %1036
    %s1039 = scalar_lea.vmem [#allocation3], 104
    %1040 = vst.msk [vmem:[%s1039] sm:$0xff] %vm104, %v1037
    %s1041 = scalar_lea.vmem [#allocation14], 16
    %v1042 = vld [vmem:[%s1041] sm:$0xff]
    %v1043 = vmul.f32 %v706, %v1026
    %1045 = vrot.lane.b32.xlu0 %v1043, 64
    %v1046 = vpop.permute.xlu0 %1045
    %v1048 = vadd.f32 %v1042, %v1046
    %1049 = vst.msk [vmem:[%s1041] sm:$0xff] %vm104, %v1048
    %s1050 = scalar_lea.vmem [#allocation14], 40
    %v1051 = vld [vmem:[%s1050] sm:$0xff]
    %v1052 = vmul.f32 %v706, %v1028
    %v1053 = vadd.f32 %v1051, %v1052
    %1054 = vst.msk [vmem:[%s1050] sm:$0xff] %vm145, %v1053
    %s1055 = scalar_lea.vmem [#allocation2], 96
    %v1056 = vld [vmem:[%s1055] sm:$0xff]
    %v1057 = vld [vmem:[%s1055 + $0x8] sm:$0xff]
    %v1058 = vpack.c.bf16 %v1026, %v1026
    %1060 = vrot.lane.b32.xlu0 %v1058, 64
    %v1061 = vpop.permute.xlu0 %1060
    %v1063 = vsel %vm104, %v1061, 0
    %1065 = vmatprep.subr.bf16.mxu0 0
    %1066 = vmatpush1.bf16.msra.mxu0 0
    %1067 = vmatprep.subr.bf16.mxu0 0
    %1068 = vmatpush1.bf16.msra.mxu0 0
    %1069 = vmatprep.subr.bf16.mxu0 0
    %1070 = vmatpush1.bf16.msra.mxu0 0
    %1071 = vmatprep.subr.bf16.mxu0 0
    %1072 = vmatpush1.bf16.msra.mxu0 0
    %1073 = vmatprep.subr.bf16.mxu0 %v517
    %1074 = vmatpush1.bf16.msra.mxu0 %v516
    %1075 = vmatprep.subr.bf16.mxu0 %v515
    %1076 = vmatpush1.bf16.msra.mxu0 %v514
    %1077 = vmatprep.subr.bf16.mxu0 %v513
    %1078 = vmatpush1.bf16.msra.mxu0 %v512
    %1079 = vmatprep.subr.bf16.mxu0 %v511
    %1080 = vmatpush1.bf16.msra.mxu0 %v510
    %1081 = vmatprep.subr.bf16.mxu0 0
    %1082 = vmatpush2.bf16.msra.mxu0 0
    %1083 = vmatprep.subr.bf16.mxu0 0
    %1084 = vmatpush2.bf16.msra.mxu0 0
    %1085 = vmatprep.subr.bf16.mxu0 0
    %1086 = vmatpush2.bf16.msra.mxu0 0
    %1087 = vmatprep.subr.bf16.mxu0 0
    %1088 = vmatpush2.bf16.msra.mxu0 0
    %1089 = vmatprep.subr.bf16.mxu0 0
    %1090 = vmatpush2.bf16.msra.mxu0 0
    %1091 = vmatprep.subr.bf16.mxu0 0
    %1092 = vmatpush2.bf16.msra.mxu0 0
    %1093 = vmatprep.subr.bf16.mxu0 0
    %1094 = vmatpush2.bf16.msra.mxu0 0
    %1095 = vmatprep.subr.bf16.mxu0 0
    %1096 = vmatpush2.bf16.msra.mxu0 0
    %1097 = vmatprep.mubr.bf16.mxu0 0
    %1098 = vmatmul.mubr.bf16.gmra.mxu0 %v1063
    %v1099 = vpop.f32.mrf.mxu0
    %v1100 = vadd.f32 0.0, %v1099
    %v1101 = vpop.f32.mrf.mxu0
    %v1102 = vadd.f32 0.0, %v1101
    %v1103 = vpop.f32.mrf.mxu0
    %v1104 = vpop.f32.mrf.mxu0
    %1105 = vdwg.mxu0
    %v1106 = vadd.f32 %v1056, %v1100
    %v1107 = vadd.f32 %v1057, %v1102
    %s1108 = scalar_lea.vmem [#allocation2], 128
    %v1109 = vld [vmem:[%s1108 + $0x10] sm:$0xff]
    %v1110 = vld [vmem:[%s1108 + $0x18] sm:$0xff]
    %v1111 = vpack.c.bf16 %v1028, %v1028
    %1113 = vrot.lane.b32.xlu0 %v1111, 64
    %v1114 = vpop.permute.xlu0 %1113
    %v1116 = vsel %vm104, %v1114, 0
    %1118 = vmatprep.subr.bf16.mxu0 0
    %1119 = vmatpush1.bf16.msra.mxu0 0
    %1120 = vmatprep.subr.bf16.mxu0 0
    %1121 = vmatpush1.bf16.msra.mxu0 0
    %1122 = vmatprep.subr.bf16.mxu0 0
    %1123 = vmatpush1.bf16.msra.mxu0 0
    %1124 = vmatprep.subr.bf16.mxu0 0
    %1125 = vmatpush1.bf16.msra.mxu0 0
    %1126 = vmatprep.subr.bf16.mxu0 %v606
    %1127 = vmatpush1.bf16.msra.mxu0 %v605
    %1128 = vmatprep.subr.bf16.mxu0 %v604
    %1129 = vmatpush1.bf16.msra.mxu0 %v603
    %1130 = vmatprep.subr.bf16.mxu0 %v602
    %1131 = vmatpush1.bf16.msra.mxu0 %v601
    %1132 = vmatprep.subr.bf16.mxu0 %v600
    %1133 = vmatpush1.bf16.msra.mxu0 %v599
    %1134 = vmatprep.subr.bf16.mxu0 0
    %1135 = vmatpush2.bf16.msra.mxu0 0
    %1136 = vmatprep.subr.bf16.mxu0 0
    %1137 = vmatpush2.bf16.msra.mxu0 0
    %1138 = vmatprep.subr.bf16.mxu0 0
    %1139 = vmatpush2.bf16.msra.mxu0 0
    %1140 = vmatprep.subr.bf16.mxu0 0
    %1141 = vmatpush2.bf16.msra.mxu0 0
    %1142 = vmatprep.subr.bf16.mxu0 0
    %1143 = vmatpush2.bf16.msra.mxu0 0
    %1144 = vmatprep.subr.bf16.mxu0 0
    %1145 = vmatpush2.bf16.msra.mxu0 0
    %1146 = vmatprep.subr.bf16.mxu0 0
    %1147 = vmatpush2.bf16.msra.mxu0 0
    %1148 = vmatprep.subr.bf16.mxu0 0
    %1149 = vmatpush2.bf16.msra.mxu0 0
    %1150 = vmatprep.mubr.bf16.mxu0 0
    %1151 = vmatmul.mubr.bf16.gmra.mxu0 %v1116
    %v1152 = vpop.f32.mrf.mxu0
    %v1153 = vadd.f32 0.0, %v1152
    %v1154 = vpop.f32.mrf.mxu0
    %v1155 = vadd.f32 0.0, %v1154
    %v1156 = vpop.f32.mrf.mxu0
    %v1157 = vpop.f32.mrf.mxu0
    %1158 = vdwg.mxu0
    %v1159 = vadd.f32 %v1109, %v1153
    %v1160 = vadd.f32 %v1110, %v1155
    %v1161 = vmul.f32 %v1106, 0.5
    %v1162 = vtanh.pop %v1161
    %v1163 = vadd.f32 %v1162, 1.0
    %v1164 = vmul.f32 %v1163, 0.5
    %v1165 = vmul.f32 %v1159, 0.5
    %v1166 = vtanh.pop %v1165
    %v1167 = vadd.f32 %v1166, 1.0
    %v1168 = vmul.f32 %v1167, 0.5
    %v1169 = vtanh.pop %v1107
    %v1170 = vtanh.pop %v1160
    %v1171 = vmul.f32 %v1107, 0.5
    %v1172 = vtanh.pop %v1171
    %v1173 = vadd.f32 %v1172, 1.0
    %v1174 = vmul.f32 %v1173, 0.5
    %v1175 = vmul.f32 %v1160, 0.5
    %v1176 = vtanh.pop %v1175
    %v1177 = vadd.f32 %v1176, 1.0
    %v1178 = vmul.f32 %v1177, 0.5
    %v1179 = vmul.f32 %v1164, %v1017
    %v1180 = vmul.f32 %v1164, %v1169
    %1182 = vrot.lane.b32.xlu0 %v1180, 64
    %v1183 = vpop.permute.xlu0 %1182
    %v1185 = vadd.f32 %v1179, %v1183
    %v1186 = vmul.f32 %v1168, %v1024
    %v1187 = vmul.f32 %v1168, %v1170
    %1189 = vrot.lane.b32.xlu0 %v1187, 64
    %v1190 = vpop.permute.xlu0 %1189
    %v1192 = vadd.f32 %v1186, %v1190
    %v1193 = vtanh.pop %v1185
    %v1194 = vmul.f32 %v1174, %v1193
    %v1195 = vtanh.pop %v1192
    %v1196 = vmul.f32 %v1178, %v1195
    %1198 = vrot.lane.b32.xlu0 %v1194, 64
    %v1199 = vpop.permute.xlu0 %1198
    %s1201 = scalar_lea.vmem [#allocation3], 24
    %1202 = vst.msk [vmem:[%s1201] sm:$0xff] %vm104, %v1199
    %1204 = vrot.lane.b32.xlu0 %v1196, 64
    %v1205 = vpop.permute.xlu0 %1204
    %s1207 = scalar_lea.vmem [#allocation3], 96
    %1208 = vst.msk [vmem:[%s1207] sm:$0xff] %vm104, %v1205
    %s1209 = scalar_lea.vmem [#allocation14], 24
    %v1210 = vld [vmem:[%s1209] sm:$0xff]
    %v1211 = vmul.f32 %v706, %v1194
    %1213 = vrot.lane.b32.xlu0 %v1211, 64
    %v1214 = vpop.permute.xlu0 %1213
    %v1216 = vadd.f32 %v1210, %v1214
    %1217 = vst.msk [vmem:[%s1209] sm:$0xff] %vm104, %v1216
    %s1218 = scalar_lea.vmem [#allocation14], 32
    %v1219 = vld [vmem:[%s1218] sm:$0xff]
    %v1220 = vmul.f32 %v706, %v1196
    %v1221 = vadd.f32 %v1219, %v1220
    %1222 = vst.msk [vmem:[%s1218] sm:$0xff] %vm145, %v1221
    %v1223 = vld [vmem:[%s1108] sm:$0xff]
    %v1224 = vld [vmem:[%s1108 + $0x8] sm:$0xff]
    %v1225 = vpack.c.bf16 %v1194, %v1194
    %1227 = vrot.lane.b32.xlu0 %v1225, 64
    %v1228 = vpop.permute.xlu0 %1227
    %v1230 = vsel %vm104, %v1228, 0
    %1232 = vmatprep.subr.bf16.mxu0 0
    %1233 = vmatpush1.bf16.msra.mxu0 0
    %1234 = vmatprep.subr.bf16.mxu0 0
    %1235 = vmatpush1.bf16.msra.mxu0 0
    %1236 = vmatprep.subr.bf16.mxu0 0
    %1237 = vmatpush1.bf16.msra.mxu0 0
    %1238 = vmatprep.subr.bf16.mxu0 0
    %1239 = vmatpush1.bf16.msra.mxu0 0
    %1240 = vmatprep.subr.bf16.mxu0 %v517
    %1241 = vmatpush1.bf16.msra.mxu0 %v516
    %1242 = vmatprep.subr.bf16.mxu0 %v515
    %1243 = vmatpush1.bf16.msra.mxu0 %v514
    %1244 = vmatprep.subr.bf16.mxu0 %v513
    %1245 = vmatpush1.bf16.msra.mxu0 %v512
    %1246 = vmatprep.subr.bf16.mxu0 %v511
    %1247 = vmatpush1.bf16.msra.mxu0 %v510
    %1248 = vmatprep.subr.bf16.mxu0 0
    %1249 = vmatpush2.bf16.msra.mxu0 0
    %1250 = vmatprep.subr.bf16.mxu0 0
    %1251 = vmatpush2.bf16.msra.mxu0 0
    %1252 = vmatprep.subr.bf16.mxu0 0
    %1253 = vmatpush2.bf16.msra.mxu0 0
    %1254 = vmatprep.subr.bf16.mxu0 0
    %1255 = vmatpush2.bf16.msra.mxu0 0
    %1256 = vmatprep.subr.bf16.mxu0 0
    %1257 = vmatpush2.bf16.msra.mxu0 0
    %1258 = vmatprep.subr.bf16.mxu0 0
    %1259 = vmatpush2.bf16.msra.mxu0 0
    %1260 = vmatprep.subr.bf16.mxu0 0
    %1261 = vmatpush2.bf16.msra.mxu0 0
    %1262 = vmatprep.subr.bf16.mxu0 0
    %1263 = vmatpush2.bf16.msra.mxu0 0
    %1264 = vmatprep.mubr.bf16.mxu0 0
    %1265 = vmatmul.mubr.bf16.gmra.mxu0 %v1230
    %v1266 = vpop.f32.mrf.mxu0
    %v1267 = vadd.f32 0.0, %v1266
    %v1268 = vpop.f32.mrf.mxu0
    %v1269 = vadd.f32 0.0, %v1268
    %v1270 = vpop.f32.mrf.mxu0
    %v1271 = vpop.f32.mrf.mxu0
    %1272 = vdwg.mxu0
    %v1273 = vadd.f32 %v1223, %v1267
    %v1274 = vadd.f32 %v1224, %v1269
    %v1275 = vld [vmem:[%s1055 + $0x10] sm:$0xff]
    %v1276 = vld [vmem:[%s1055 + $0x18] sm:$0xff]
    %v1277 = vpack.c.bf16 %v1196, %v1196
    %1279 = vrot.lane.b32.xlu0 %v1277, 64
    %v1280 = vpop.permute.xlu0 %1279
    %v1282 = vsel %vm104, %v1280, 0
    %1284 = vmatprep.subr.bf16.mxu0 0
    %1285 = vmatpush1.bf16.msra.mxu0 0
    %1286 = vmatprep.subr.bf16.mxu0 0
    %1287 = vmatpush1.bf16.msra.mxu0 0
    %1288 = vmatprep.subr.bf16.mxu0 0
    %1289 = vmatpush1.bf16.msra.mxu0 0
    %1290 = vmatprep.subr.bf16.mxu0 0
    %1291 = vmatpush1.bf16.msra.mxu0 0
    %1292 = vmatprep.subr.bf16.mxu0 %v606
    %1293 = vmatpush1.bf16.msra.mxu0 %v605
    %1294 = vmatprep.subr.bf16.mxu0 %v604
    %1295 = vmatpush1.bf16.msra.mxu0 %v603
    %1296 = vmatprep.subr.bf16.mxu0 %v602
    %1297 = vmatpush1.bf16.msra.mxu0 %v601
    %1298 = vmatprep.subr.bf16.mxu0 %v600
    %1299 = vmatpush1.bf16.msra.mxu0 %v599
    %1300 = vmatprep.subr.bf16.mxu0 0
    %1301 = vmatpush2.bf16.msra.mxu0 0
    %1302 = vmatprep.subr.bf16.mxu0 0
    %1303 = vmatpush2.bf16.msra.mxu0 0
    %1304 = vmatprep.subr.bf16.mxu0 0
    %1305 = vmatpush2.bf16.msra.mxu0 0
    %1306 = vmatprep.subr.bf16.mxu0 0
    %1307 = vmatpush2.bf16.msra.mxu0 0
    %1308 = vmatprep.subr.bf16.mxu0 0
    %1309 = vmatpush2.bf16.msra.mxu0 0
    %1310 = vmatprep.subr.bf16.mxu0 0
    %1311 = vmatpush2.bf16.msra.mxu0 0
    %1312 = vmatprep.subr.bf16.mxu0 0
    %1313 = vmatpush2.bf16.msra.mxu0 0
    %1314 = vmatprep.subr.bf16.mxu0 0
    %1315 = vmatpush2.bf16.msra.mxu0 0
    %1316 = vmatprep.mubr.bf16.mxu0 0
    %1317 = vmatmul.mubr.bf16.gmra.mxu0 %v1282
    %v1318 = vpop.f32.mrf.mxu0
    %v1319 = vadd.f32 0.0, %v1318
    %v1320 = vpop.f32.mrf.mxu0
    %v1321 = vadd.f32 0.0, %v1320
    %v1322 = vpop.f32.mrf.mxu0
    %v1323 = vpop.f32.mrf.mxu0
    %1324 = vdwg.mxu0
    %v1325 = vadd.f32 %v1275, %v1319
    %v1326 = vadd.f32 %v1276, %v1321
    %v1327 = vmul.f32 %v1273, 0.5
    %v1328 = vtanh.pop %v1327
    %v1329 = vadd.f32 %v1328, 1.0
    %v1330 = vmul.f32 %v1329, 0.5
    %v1331 = vmul.f32 %v1325, 0.5
    %v1332 = vtanh.pop %v1331
    %v1333 = vadd.f32 %v1332, 1.0
    %v1334 = vmul.f32 %v1333, 0.5
    %v1335 = vtanh.pop %v1274
    %v1336 = vtanh.pop %v1326
    %v1337 = vmul.f32 %v1274, 0.5
    %v1338 = vtanh.pop %v1337
    %v1339 = vadd.f32 %v1338, 1.0
    %v1340 = vmul.f32 %v1339, 0.5
    %v1341 = vmul.f32 %v1326, 0.5
    %v1342 = vtanh.pop %v1341
    %v1343 = vadd.f32 %v1342, 1.0
    %v1344 = vmul.f32 %v1343, 0.5
    %v1345 = vmul.f32 %v1330, %v1185
    %v1346 = vmul.f32 %v1330, %v1335
    %1348 = vrot.lane.b32.xlu0 %v1346, 64
    %v1349 = vpop.permute.xlu0 %1348
    %v1351 = vadd.f32 %v1345, %v1349
    %v1352 = vmul.f32 %v1334, %v1192
    %v1353 = vmul.f32 %v1334, %v1336
    %1355 = vrot.lane.b32.xlu0 %v1353, 64
    %v1356 = vpop.permute.xlu0 %1355
    %v1358 = vadd.f32 %v1352, %v1356
    %v1359 = vtanh.pop %v1351
    %v1360 = vmul.f32 %v1340, %v1359
    %v1361 = vtanh.pop %v1358
    %v1362 = vmul.f32 %v1344, %v1361
    %1364 = vrot.lane.b32.xlu0 %v1360, 64
    %v1365 = vpop.permute.xlu0 %1364
    %s1367 = scalar_lea.vmem [#allocation3], 32
    %1368 = vst.msk [vmem:[%s1367] sm:$0xff] %vm104, %v1365
    %1370 = vrot.lane.b32.xlu0 %v1362, 64
    %v1371 = vpop.permute.xlu0 %1370
    %s1373 = scalar_lea.vmem [#allocation3], 88
    %1374 = vst.msk [vmem:[%s1373] sm:$0xff] %vm104, %v1371
    %v1375 = vld [vmem:[%s1218] sm:$0xff]
    %v1376 = vmul.f32 %v706, %v1360
    %1378 = vrot.lane.b32.xlu0 %v1376, 64
    %v1379 = vpop.permute.xlu0 %1378
    %v1381 = vadd.f32 %v1375, %v1379
    %1382 = vst.msk [vmem:[%s1218] sm:$0xff] %vm104, %v1381
    %v1383 = vld [vmem:[%s1209] sm:$0xff]
    %v1384 = vmul.f32 %v706, %v1362
    %v1385 = vadd.f32 %v1383, %v1384
    %1386 = vst.msk [vmem:[%s1209] sm:$0xff] %vm145, %v1385
    %v1387 = vld [vmem:[%s940] sm:$0xff]
    %v1388 = vld [vmem:[%s940 + $0x8] sm:$0xff]
    %v1389 = vpack.c.bf16 %v1360, %v1360
    %1391 = vrot.lane.b32.xlu0 %v1389, 64
    %v1392 = vpop.permute.xlu0 %1391
    %v1394 = vsel %vm104, %v1392, 0
    %1396 = vmatprep.subr.bf16.mxu0 0
    %1397 = vmatpush1.bf16.msra.mxu0 0
    %1398 = vmatprep.subr.bf16.mxu0 0
    %1399 = vmatpush1.bf16.msra.mxu0 0
    %1400 = vmatprep.subr.bf16.mxu0 0
    %1401 = vmatpush1.bf16.msra.mxu0 0
    %1402 = vmatprep.subr.bf16.mxu0 0
    %1403 = vmatpush1.bf16.msra.mxu0 0
    %1404 = vmatprep.subr.bf16.mxu0 %v517
    %1405 = vmatpush1.bf16.msra.mxu0 %v516
    %1406 = vmatprep.subr.bf16.mxu0 %v515
    %1407 = vmatpush1.bf16.msra.mxu0 %v514
    %1408 = vmatprep.subr.bf16.mxu0 %v513
    %1409 = vmatpush1.bf16.msra.mxu0 %v512
    %1410 = vmatprep.subr.bf16.mxu0 %v511
    %1411 = vmatpush1.bf16.msra.mxu0 %v510
    %1412 = vmatprep.subr.bf16.mxu0 0
    %1413 = vmatpush2.bf16.msra.mxu0 0
    %1414 = vmatprep.subr.bf16.mxu0 0
    %1415 = vmatpush2.bf16.msra.mxu0 0
    %1416 = vmatprep.subr.bf16.mxu0 0
    %1417 = vmatpush2.bf16.msra.mxu0 0
    %1418 = vmatprep.subr.bf16.mxu0 0
    %1419 = vmatpush2.bf16.msra.mxu0 0
    %1420 = vmatprep.subr.bf16.mxu0 0
    %1421 = vmatpush2.bf16.msra.mxu0 0
    %1422 = vmatprep.subr.bf16.mxu0 0
    %1423 = vmatpush2.bf16.msra.mxu0 0
    %1424 = vmatprep.subr.bf16.mxu0 0
    %1425 = vmatpush2.bf16.msra.mxu0 0
    %1426 = vmatprep.subr.bf16.mxu0 0
    %1427 = vmatpush2.bf16.msra.mxu0 0
    %1428 = vmatprep.mubr.bf16.mxu0 0
    %1429 = vmatmul.mubr.bf16.gmra.mxu0 %v1394
    %v1430 = vpop.f32.mrf.mxu0
    %v1431 = vadd.f32 0.0, %v1430
    %v1432 = vpop.f32.mrf.mxu0
    %v1433 = vadd.f32 0.0, %v1432
    %v1434 = vpop.f32.mrf.mxu0
    %v1435 = vpop.f32.mrf.mxu0
    %1436 = vdwg.mxu0
    %v1437 = vadd.f32 %v1387, %v1431
    %v1438 = vadd.f32 %v1388, %v1433
    %v1439 = vld [vmem:[%s887 + $0x10] sm:$0xff]
    %v1440 = vld [vmem:[%s887 + $0x18] sm:$0xff]
    %v1441 = vpack.c.bf16 %v1362, %v1362
    %1443 = vrot.lane.b32.xlu0 %v1441, 64
    %v1444 = vpop.permute.xlu0 %1443
    %v1446 = vsel %vm104, %v1444, 0
    %1448 = vmatprep.subr.bf16.mxu0 0
    %1449 = vmatpush1.bf16.msra.mxu0 0
    %1450 = vmatprep.subr.bf16.mxu0 0
    %1451 = vmatpush1.bf16.msra.mxu0 0
    %1452 = vmatprep.subr.bf16.mxu0 0
    %1453 = vmatpush1.bf16.msra.mxu0 0
    %1454 = vmatprep.subr.bf16.mxu0 0
    %1455 = vmatpush1.bf16.msra.mxu0 0
    %1456 = vmatprep.subr.bf16.mxu0 %v606
    %1457 = vmatpush1.bf16.msra.mxu0 %v605
    %1458 = vmatprep.subr.bf16.mxu0 %v604
    %1459 = vmatpush1.bf16.msra.mxu0 %v603
    %1460 = vmatprep.subr.bf16.mxu0 %v602
    %1461 = vmatpush1.bf16.msra.mxu0 %v601
    %1462 = vmatprep.subr.bf16.mxu0 %v600
    %1463 = vmatpush1.bf16.msra.mxu0 %v599
    %1464 = vmatprep.subr.bf16.mxu0 0
    %1465 = vmatpush2.bf16.msra.mxu0 0
    %1466 = vmatprep.subr.bf16.mxu0 0
    %1467 = vmatpush2.bf16.msra.mxu0 0
    %1468 = vmatprep.subr.bf16.mxu0 0
    %1469 = vmatpush2.bf16.msra.mxu0 0
    %1470 = vmatprep.subr.bf16.mxu0 0
    %1471 = vmatpush2.bf16.msra.mxu0 0
    %1472 = vmatprep.subr.bf16.mxu0 0
    %1473 = vmatpush2.bf16.msra.mxu0 0
    %1474 = vmatprep.subr.bf16.mxu0 0
    %1475 = vmatpush2.bf16.msra.mxu0 0
    %1476 = vmatprep.subr.bf16.mxu0 0
    %1477 = vmatpush2.bf16.msra.mxu0 0
    %1478 = vmatprep.subr.bf16.mxu0 0
    %1479 = vmatpush2.bf16.msra.mxu0 0
    %1480 = vmatprep.mubr.bf16.mxu0 0
    %1481 = vmatmul.mubr.bf16.gmra.mxu0 %v1446
    %v1482 = vpop.f32.mrf.mxu0
    %v1483 = vadd.f32 0.0, %v1482
    %v1484 = vpop.f32.mrf.mxu0
    %v1485 = vadd.f32 0.0, %v1484
    %v1486 = vpop.f32.mrf.mxu0
    %v1487 = vpop.f32.mrf.mxu0
    %1488 = vdwg.mxu0
    %v1489 = vadd.f32 %v1439, %v1483
    %v1490 = vadd.f32 %v1440, %v1485
    %v1491 = vmul.f32 %v1437, 0.5
    %v1492 = vtanh.pop %v1491
    %v1493 = vadd.f32 %v1492, 1.0
    %v1494 = vmul.f32 %v1493, 0.5
    %v1495 = vmul.f32 %v1489, 0.5
    %v1496 = vtanh.pop %v1495
    %v1497 = vadd.f32 %v1496, 1.0
    %v1498 = vmul.f32 %v1497, 0.5
    %v1499 = vtanh.pop %v1438
    %v1500 = vtanh.pop %v1490
    %v1501 = vmul.f32 %v1438, 0.5
    %v1502 = vtanh.pop %v1501
    %v1503 = vadd.f32 %v1502, 1.0
    %v1504 = vmul.f32 %v1503, 0.5
    %v1505 = vmul.f32 %v1490, 0.5
    %v1506 = vtanh.pop %v1505
    %v1507 = vadd.f32 %v1506, 1.0
    %v1508 = vmul.f32 %v1507, 0.5
    %v1509 = vmul.f32 %v1494, %v1351
    %v1510 = vmul.f32 %v1494, %v1499
    %1512 = vrot.lane.b32.xlu0 %v1510, 64
    %v1513 = vpop.permute.xlu0 %1512
    %v1515 = vadd.f32 %v1509, %v1513
    %v1516 = vmul.f32 %v1498, %v1358
    %v1517 = vmul.f32 %v1498, %v1500
    %1519 = vrot.lane.b32.xlu0 %v1517, 64
    %v1520 = vpop.permute.xlu0 %1519
    %v1522 = vadd.f32 %v1516, %v1520
    %v1523 = vtanh.pop %v1515
    %v1524 = vmul.f32 %v1504, %v1523
    %v1525 = vtanh.pop %v1522
    %v1526 = vmul.f32 %v1508, %v1525
    %1528 = vrot.lane.b32.xlu0 %v1524, 64
    %v1529 = vpop.permute.xlu0 %1528
    %s1531 = scalar_lea.vmem [#allocation3], 40
    %1532 = vst.msk [vmem:[%s1531] sm:$0xff] %vm104, %v1529
    %1534 = vrot.lane.b32.xlu0 %v1526, 64
    %v1535 = vpop.permute.xlu0 %1534
    %s1537 = scalar_lea.vmem [#allocation3], 80
    %1538 = vst.msk [vmem:[%s1537] sm:$0xff] %vm104, %v1535
    %v1539 = vld [vmem:[%s1050] sm:$0xff]
    %v1540 = vmul.f32 %v706, %v1524
    %1542 = vrot.lane.b32.xlu0 %v1540, 64
    %v1543 = vpop.permute.xlu0 %1542
    %v1545 = vadd.f32 %v1539, %v1543
    %1546 = vst.msk [vmem:[%s1050] sm:$0xff] %vm104, %v1545
    %v1547 = vld [vmem:[%s1041] sm:$0xff]
    %v1548 = vmul.f32 %v706, %v1526
    %v1549 = vadd.f32 %v1547, %v1548
    %1550 = vst.msk [vmem:[%s1041] sm:$0xff] %vm145, %v1549
    %v1551 = vld [vmem:[%s772] sm:$0xff]
    %v1552 = vld [vmem:[%s772 + $0x8] sm:$0xff]
    %v1553 = vpack.c.bf16 %v1524, %v1524
    %1555 = vrot.lane.b32.xlu0 %v1553, 64
    %v1556 = vpop.permute.xlu0 %1555
    %v1558 = vsel %vm104, %v1556, 0
    %1560 = vmatprep.subr.bf16.mxu0 0
    %1561 = vmatpush1.bf16.msra.mxu0 0
    %1562 = vmatprep.subr.bf16.mxu0 0
    %1563 = vmatpush1.bf16.msra.mxu0 0
    %1564 = vmatprep.subr.bf16.mxu0 0
    %1565 = vmatpush1.bf16.msra.mxu0 0
    %1566 = vmatprep.subr.bf16.mxu0 0
    %1567 = vmatpush1.bf16.msra.mxu0 0
    %1568 = vmatprep.subr.bf16.mxu0 %v517
    %1569 = vmatpush1.bf16.msra.mxu0 %v516
    %1570 = vmatprep.subr.bf16.mxu0 %v515
    %1571 = vmatpush1.bf16.msra.mxu0 %v514
    %1572 = vmatprep.subr.bf16.mxu0 %v513
    %1573 = vmatpush1.bf16.msra.mxu0 %v512
    %1574 = vmatprep.subr.bf16.mxu0 %v511
    %1575 = vmatpush1.bf16.msra.mxu0 %v510
    %1576 = vmatprep.subr.bf16.mxu0 0
    %1577 = vmatpush2.bf16.msra.mxu0 0
    %1578 = vmatprep.subr.bf16.mxu0 0
    %1579 = vmatpush2.bf16.msra.mxu0 0
    %1580 = vmatprep.subr.bf16.mxu0 0
    %1581 = vmatpush2.bf16.msra.mxu0 0
    %1582 = vmatprep.subr.bf16.mxu0 0
    %1583 = vmatpush2.bf16.msra.mxu0 0
    %1584 = vmatprep.subr.bf16.mxu0 0
    %1585 = vmatpush2.bf16.msra.mxu0 0
    %1586 = vmatprep.subr.bf16.mxu0 0
    %1587 = vmatpush2.bf16.msra.mxu0 0
    %1588 = vmatprep.subr.bf16.mxu0 0
    %1589 = vmatpush2.bf16.msra.mxu0 0
    %1590 = vmatprep.subr.bf16.mxu0 0
    %1591 = vmatpush2.bf16.msra.mxu0 0
    %1592 = vmatprep.mubr.bf16.mxu0 0
    %1593 = vmatmul.mubr.bf16.gmra.mxu0 %v1558
    %v1594 = vpop.f32.mrf.mxu0
    %v1595 = vadd.f32 0.0, %v1594
    %v1596 = vpop.f32.mrf.mxu0
    %v1597 = vadd.f32 0.0, %v1596
    %v1598 = vpop.f32.mrf.mxu0
    %v1599 = vpop.f32.mrf.mxu0
    %1600 = vdwg.mxu0
    %v1601 = vadd.f32 %v1551, %v1595
    %v1602 = vadd.f32 %v1552, %v1597
    %v1603 = vld [vmem:[%s719 + $0x10] sm:$0xff]
    %v1604 = vld [vmem:[%s719 + $0x18] sm:$0xff]
    %v1605 = vpack.c.bf16 %v1526, %v1526
    %1607 = vrot.lane.b32.xlu0 %v1605, 64
    %v1608 = vpop.permute.xlu0 %1607
    %v1610 = vsel %vm104, %v1608, 0
    %1612 = vmatprep.subr.bf16.mxu0 0
    %1613 = vmatpush1.bf16.msra.mxu0 0
    %1614 = vmatprep.subr.bf16.mxu0 0
    %1615 = vmatpush1.bf16.msra.mxu0 0
    %1616 = vmatprep.subr.bf16.mxu0 0
    %1617 = vmatpush1.bf16.msra.mxu0 0
    %1618 = vmatprep.subr.bf16.mxu0 0
    %1619 = vmatpush1.bf16.msra.mxu0 0
    %1620 = vmatprep.subr.bf16.mxu0 %v606
    %1621 = vmatpush1.bf16.msra.mxu0 %v605
    %1622 = vmatprep.subr.bf16.mxu0 %v604
    %1623 = vmatpush1.bf16.msra.mxu0 %v603
    %1624 = vmatprep.subr.bf16.mxu0 %v602
    %1625 = vmatpush1.bf16.msra.mxu0 %v601
    %1626 = vmatprep.subr.bf16.mxu0 %v600
    %1627 = vmatpush1.bf16.msra.mxu0 %v599
    %1628 = vmatprep.subr.bf16.mxu0 0
    %1629 = vmatpush2.bf16.msra.mxu0 0
    %1630 = vmatprep.subr.bf16.mxu0 0
    %1631 = vmatpush2.bf16.msra.mxu0 0
    %1632 = vmatprep.subr.bf16.mxu0 0
    %1633 = vmatpush2.bf16.msra.mxu0 0
    %1634 = vmatprep.subr.bf16.mxu0 0
    %1635 = vmatpush2.bf16.msra.mxu0 0
    %1636 = vmatprep.subr.bf16.mxu0 0
    %1637 = vmatpush2.bf16.msra.mxu0 0
    %1638 = vmatprep.subr.bf16.mxu0 0
    %1639 = vmatpush2.bf16.msra.mxu0 0
    %1640 = vmatprep.subr.bf16.mxu0 0
    %1641 = vmatpush2.bf16.msra.mxu0 0
    %1642 = vmatprep.subr.bf16.mxu0 0
    %1643 = vmatpush2.bf16.msra.mxu0 0
    %1644 = vmatprep.mubr.bf16.mxu0 0
    %1645 = vmatmul.mubr.bf16.gmra.mxu0 %v1610
    %v1646 = vpop.f32.mrf.mxu0
    %v1647 = vadd.f32 0.0, %v1646
    %v1648 = vpop.f32.mrf.mxu0
    %v1649 = vadd.f32 0.0, %v1648
    %v1650 = vpop.f32.mrf.mxu0
    %v1651 = vpop.f32.mrf.mxu0
    %1652 = vdwg.mxu0
    %v1653 = vadd.f32 %v1603, %v1647
    %v1654 = vadd.f32 %v1604, %v1649
    %v1655 = vmul.f32 %v1601, 0.5
    %v1656 = vtanh.pop %v1655
    %v1657 = vadd.f32 %v1656, 1.0
    %v1658 = vmul.f32 %v1657, 0.5
    %v1659 = vmul.f32 %v1653, 0.5
    %v1660 = vtanh.pop %v1659
    %v1661 = vadd.f32 %v1660, 1.0
    %v1662 = vmul.f32 %v1661, 0.5
    %v1663 = vtanh.pop %v1602
    %v1664 = vtanh.pop %v1654
    %v1665 = vmul.f32 %v1602, 0.5
    %v1666 = vtanh.pop %v1665
    %v1667 = vadd.f32 %v1666, 1.0
    %v1668 = vmul.f32 %v1667, 0.5
    %v1669 = vmul.f32 %v1654, 0.5
    %v1670 = vtanh.pop %v1669
    %v1671 = vadd.f32 %v1670, 1.0
    %v1672 = vmul.f32 %v1671, 0.5
    %v1673 = vmul.f32 %v1658, %v1515
    %v1674 = vmul.f32 %v1658, %v1663
    %1676 = vrot.lane.b32.xlu0 %v1674, 64
    %v1677 = vpop.permute.xlu0 %1676
    %v1679 = vadd.f32 %v1673, %v1677
    %v1680 = vmul.f32 %v1662, %v1522
    %v1681 = vmul.f32 %v1662, %v1664
    %1683 = vrot.lane.b32.xlu0 %v1681, 64
    %v1684 = vpop.permute.xlu0 %1683
    %v1686 = vadd.f32 %v1680, %v1684
    %v1687 = vtanh.pop %v1679
    %v1688 = vmul.f32 %v1668, %v1687
    %v1689 = vtanh.pop %v1686
    %v1690 = vmul.f32 %v1672, %v1689
    %1692 = vrot.lane.b32.xlu0 %v1688, 64
    %v1693 = vpop.permute.xlu0 %1692
    %s1695 = scalar_lea.vmem [#allocation3], 48
    %1696 = vst.msk [vmem:[%s1695] sm:$0xff] %vm104, %v1693
    %1698 = vrot.lane.b32.xlu0 %v1690, 64
    %v1699 = vpop.permute.xlu0 %1698
    %s1701 = scalar_lea.vmem [#allocation3], 72
    %1702 = vst.msk [vmem:[%s1701] sm:$0xff] %vm104, %v1699
    %v1703 = vld [vmem:[%s882] sm:$0xff]
    %v1704 = vmul.f32 %v706, %v1688
    %1706 = vrot.lane.b32.xlu0 %v1704, 64
    %v1707 = vpop.permute.xlu0 %1706
    %v1709 = vadd.f32 %v1703, %v1707
    %1710 = vst.msk [vmem:[%s882] sm:$0xff] %vm104, %v1709
    %v1711 = vld [vmem:[%s873] sm:$0xff]
    %v1712 = vmul.f32 %v706, %v1690
    %v1713 = vadd.f32 %v1711, %v1712
    %1714 = vst.msk [vmem:[%s873] sm:$0xff] %vm145, %v1713
    %v1715 = vld [vmem:[%s572] sm:$0xff]
    %v1716 = vld [vmem:[%s572 + $0x8] sm:$0xff]
    %v1717 = vpack.c.bf16 %v1688, %v1688
    %1719 = vrot.lane.b32.xlu0 %v1717, 64
    %v1720 = vpop.permute.xlu0 %1719
    %v1722 = vsel %vm104, %v1720, 0
    %1724 = vmatprep.subr.bf16.mxu0 0
    %1725 = vmatpush1.bf16.msra.mxu0 0
    %1726 = vmatprep.subr.bf16.mxu0 0
    %1727 = vmatpush1.bf16.msra.mxu0 0
    %1728 = vmatprep.subr.bf16.mxu0 0
    %1729 = vmatpush1.bf16.msra.mxu0 0
    %1730 = vmatprep.subr.bf16.mxu0 0
    %1731 = vmatpush1.bf16.msra.mxu0 0
    %1732 = vmatprep.subr.bf16.mxu0 %v517
    %1733 = vmatpush1.bf16.msra.mxu0 %v516
    %1734 = vmatprep.subr.bf16.mxu0 %v515
    %1735 = vmatpush1.bf16.msra.mxu0 %v514
    %1736 = vmatprep.subr.bf16.mxu0 %v513
    %1737 = vmatpush1.bf16.msra.mxu0 %v512
    %1738 = vmatprep.subr.bf16.mxu0 %v511
    %1739 = vmatpush1.bf16.msra.mxu0 %v510
    %1740 = vmatprep.subr.bf16.mxu0 0
    %1741 = vmatpush2.bf16.msra.mxu0 0
    %1742 = vmatprep.subr.bf16.mxu0 0
    %1743 = vmatpush2.bf16.msra.mxu0 0
    %1744 = vmatprep.subr.bf16.mxu0 0
    %1745 = vmatpush2.bf16.msra.mxu0 0
    %1746 = vmatprep.subr.bf16.mxu0 0
    %1747 = vmatpush2.bf16.msra.mxu0 0
    %1748 = vmatprep.subr.bf16.mxu0 0
    %1749 = vmatpush2.bf16.msra.mxu0 0
    %1750 = vmatprep.subr.bf16.mxu0 0
    %1751 = vmatpush2.bf16.msra.mxu0 0
    %1752 = vmatprep.subr.bf16.mxu0 0
    %1753 = vmatpush2.bf16.msra.mxu0 0
    %1754 = vmatprep.subr.bf16.mxu0 0
    %1755 = vmatpush2.bf16.msra.mxu0 0
    %1756 = vmatprep.mubr.bf16.mxu0 0
    %1757 = vmatmul.mubr.bf16.gmra.mxu0 %v1722
    %v1758 = vpop.f32.mrf.mxu0
    %v1759 = vadd.f32 0.0, %v1758
    %v1760 = vpop.f32.mrf.mxu0
    %v1761 = vadd.f32 0.0, %v1760
    %v1762 = vpop.f32.mrf.mxu0
    %v1763 = vpop.f32.mrf.mxu0
    %1764 = vdwg.mxu0
    %v1765 = vadd.f32 %v1715, %v1759
    %v1766 = vadd.f32 %v1716, %v1761
    %v1767 = vld [vmem:[#allocation2 + $0x10] sm:$0xff]
    %v1768 = vld [vmem:[#allocation2 + $0x18] sm:$0xff]
    %v1769 = vpack.c.bf16 %v1690, %v1690
    %1771 = vrot.lane.b32.xlu0 %v1769, 64
    %v1772 = vpop.permute.xlu0 %1771
    %v1774 = vsel %vm104, %v1772, 0
    %1776 = vmatprep.subr.bf16.mxu0 0
    %1777 = vmatpush1.bf16.msra.mxu0 0
    %1778 = vmatprep.subr.bf16.mxu0 0
    %1779 = vmatpush1.bf16.msra.mxu0 0
    %1780 = vmatprep.subr.bf16.mxu0 0
    %1781 = vmatpush1.bf16.msra.mxu0 0
    %1782 = vmatprep.subr.bf16.mxu0 0
    %1783 = vmatpush1.bf16.msra.mxu0 0
    %1784 = vmatprep.subr.bf16.mxu0 %v606
    %1785 = vmatpush1.bf16.msra.mxu0 %v605
    %1786 = vmatprep.subr.bf16.mxu0 %v604
    %1787 = vmatpush1.bf16.msra.mxu0 %v603
    %1788 = vmatprep.subr.bf16.mxu0 %v602
    %1789 = vmatpush1.bf16.msra.mxu0 %v601
    %1790 = vmatprep.subr.bf16.mxu0 %v600
    %1791 = vmatpush1.bf16.msra.mxu0 %v599
    %1792 = vmatprep.subr.bf16.mxu0 0
    %1793 = vmatpush2.bf16.msra.mxu0 0
    %1794 = vmatprep.subr.bf16.mxu0 0
    %1795 = vmatpush2.bf16.msra.mxu0 0
    %1796 = vmatprep.subr.bf16.mxu0 0
    %1797 = vmatpush2.bf16.msra.mxu0 0
    %1798 = vmatprep.subr.bf16.mxu0 0
    %1799 = vmatpush2.bf16.msra.mxu0 0
    %1800 = vmatprep.subr.bf16.mxu0 0
    %1801 = vmatpush2.bf16.msra.mxu0 0
    %1802 = vmatprep.subr.bf16.mxu0 0
    %1803 = vmatpush2.bf16.msra.mxu0 0
    %1804 = vmatprep.subr.bf16.mxu0 0
    %1805 = vmatpush2.bf16.msra.mxu0 0
    %1806 = vmatprep.subr.bf16.mxu0 0
    %1807 = vmatpush2.bf16.msra.mxu0 0
    %1808 = vmatprep.mubr.bf16.mxu0 0
    %1809 = vmatmul.mubr.bf16.gmra.mxu0 %v1774
    %v1810 = vpop.f32.mrf.mxu0
    %v1811 = vadd.f32 0.0, %v1810
    %v1812 = vpop.f32.mrf.mxu0
    %v1813 = vadd.f32 0.0, %v1812
    %v1814 = vpop.f32.mrf.mxu0
    %v1815 = vpop.f32.mrf.mxu0
    %1816 = vdwg.mxu0
    %v1817 = vadd.f32 %v1767, %v1811
    %v1818 = vadd.f32 %v1768, %v1813
    %v1819 = vmul.f32 %v1765, 0.5
    %v1820 = vtanh.pop %v1819
    %v1821 = vadd.f32 %v1820, 1.0
    %v1822 = vmul.f32 %v1821, 0.5
    %v1823 = vmul.f32 %v1817, 0.5
    %v1824 = vtanh.pop %v1823
    %v1825 = vadd.f32 %v1824, 1.0
    %v1826 = vmul.f32 %v1825, 0.5
    %v1827 = vtanh.pop %v1766
    %v1828 = vtanh.pop %v1818
    %v1829 = vmul.f32 %v1766, 0.5
    %v1830 = vtanh.pop %v1829
    %v1831 = vadd.f32 %v1830, 1.0
    %v1832 = vmul.f32 %v1831, 0.5
    %v1833 = vmul.f32 %v1818, 0.5
    %v1834 = vtanh.pop %v1833
    %v1835 = vadd.f32 %v1834, 1.0
    %v1836 = vmul.f32 %v1835, 0.5
    %v1837 = vmul.f32 %v1822, %v1679
    %v1838 = vmul.f32 %v1822, %v1827
    %1840 = vrot.lane.b32.xlu0 %v1838, 64
    %v1841 = vpop.permute.xlu0 %1840
    %v1843 = vadd.f32 %v1837, %v1841
    %v1844 = vmul.f32 %v1826, %v1686
    %v1845 = vmul.f32 %v1826, %v1828
    %1847 = vrot.lane.b32.xlu0 %v1845, 64
    %v1848 = vpop.permute.xlu0 %1847
    %v1850 = vadd.f32 %v1844, %v1848
    %v1851 = vtanh.pop %v1843
    %v1852 = vmul.f32 %v1832, %v1851
    %v1853 = vtanh.pop %v1850
    %v1854 = vmul.f32 %v1836, %v1853
    %1856 = vrot.lane.b32.xlu0 %v1852, 64
    %v1857 = vpop.permute.xlu0 %1856
    %s1859 = scalar_lea.vmem [#allocation3], 56
    %1860 = vst.msk [vmem:[%s1859] sm:$0xff] %vm104, %v1857
    %1862 = vrot.lane.b32.xlu0 %v1854, 64
    %v1863 = vpop.permute.xlu0 %1862
    %s1865 = scalar_lea.vmem [#allocation3], 64
    %1866 = vst.msk [vmem:[%s1865] sm:$0xff] %vm104, %v1863
    %v1867 = vld [vmem:[%s714] sm:$0xff]
    %v1868 = vmul.f32 %v706, %v1852
    %1870 = vrot.lane.b32.xlu0 %v1868, 64
    %v1871 = vpop.permute.xlu0 %1870
    %v1873 = vadd.f32 %v1867, %v1871
    %1874 = vst.msk [vmem:[%s714] sm:$0xff] %vm104, %v1873
    %v1875 = vld [vmem:[#allocation14] sm:$0xff]
    %v1876 = vmul.f32 %v706, %v1854
    %v1877 = vadd.f32 %v1875, %v1876
    %1878 = vst.msk [vmem:[#allocation14] sm:$0xff] %vm145, %v1877
    %s1879 = scalar_lea.vmem [#allocation12], 1
    %v1880 = vld [vmem:[%s1879] ss:$2 sm:$0xf]
    %s1881 = scalar_lea.vmem [#allocation9], 128
    %v1882 = vld [vmem:[%s1881] sm:$0xff]
    %v1883 = vld [vmem:[%s1881 + $0x8] sm:$0xff]
    %v1884 = vld [vmem:[%s1881 + $0x10] sm:$0xff]
    %v1885 = vld [vmem:[%s1881 + $0x18] sm:$0xff]
    %v1886 = vld [vmem:[%s1881 + $0x20] sm:$0xff]
    %v1887 = vld [vmem:[%s1881 + $0x28] sm:$0xff]
    %v1888 = vld [vmem:[%s1881 + $0x30] sm:$0xff]
    %v1889 = vld [vmem:[%s1881 + $0x38] sm:$0xff]
    %v1890 = vld [vmem:[%s1881 + $0x40] sm:$0xff]
    %v1891 = vld [vmem:[%s1881 + $0x48] sm:$0xff]
    %v1892 = vld [vmem:[%s1881 + $0x50] sm:$0xff]
    %v1893 = vld [vmem:[%s1881 + $0x58] sm:$0xff]
    %v1894 = vld [vmem:[%s1881 + $0x60] sm:$0xff]
    %v1895 = vld [vmem:[%s1881 + $0x68] sm:$0xff]
    %v1896 = vld [vmem:[%s1881 + $0x70] sm:$0xff]
    %v1897 = vld [vmem:[%s1881 + $0x78] sm:$0xff]
    %v1898 = vld [vmem:[#allocation3] sm:$0xff]
    %v1899 = vld [vmem:[#allocation3 + $0x8] sm:$0xff]
    %v1900 = vld [vmem:[#allocation3 + $0x10] sm:$0xff]
    %v1901 = vld [vmem:[#allocation3 + $0x18] sm:$0xff]
    %v1902 = vld [vmem:[#allocation3 + $0x20] sm:$0xff]
    %v1903 = vld [vmem:[#allocation3 + $0x28] sm:$0xff]
    %v1904 = vld [vmem:[#allocation3 + $0x30] sm:$0xff]
    %v1905 = vld [vmem:[#allocation3 + $0x38] sm:$0xff]
    %v1906 = vpack.c.bf16 %v1899, %v1898
    %v1907 = vpack.c.bf16 %v1901, %v1900
    %v1908 = vpack.c.bf16 %v1903, %v1902
    %v1909 = vpack.c.bf16 %v1905, %v1904
    %v1911 = vlaneseq
    %v1912 = vshrl.u32 %v1911, 7
    %v1913 = vsub.s32 0, %v1912
    %v1914 = vrot.slane %v1880, %v1913
    %v1915 = vlaneseq
    %v1916 = vshrl.u32 %v1915, 7
    %v1917 = vsub.s32 1, %v1916
    %v1918 = vrot.slane %v1880, %v1917
    %v1929 = vunpack.c.l.b16 %v1882
    %v1930 = vunpack.c.h.b16 %v1882
    %v1931 = vunpack.c.l.b16 %v1884
    %v1932 = vunpack.c.h.b16 %v1884
    %v1933 = vunpack.c.l.b16 %v1886
    %v1934 = vunpack.c.h.b16 %v1886
    %v1935 = vunpack.c.l.b16 %v1888
    %v1936 = vunpack.c.h.b16 %v1888
    %v1937 = vunpack.c.l.b16 %v1890
    %v1938 = vunpack.c.h.b16 %v1890
    %v1939 = vunpack.c.l.b16 %v1892
    %v1940 = vunpack.c.h.b16 %v1892
    %v1941 = vunpack.c.l.b16 %v1894
    %v1942 = vunpack.c.h.b16 %v1894
    %v1943 = vunpack.c.l.b16 %v1896
    %v1944 = vunpack.c.h.b16 %v1896
    %v1945 = vpack.c.b16 %v1931, %v1929
    %v1946 = vpack.c.b16 %v1932, %v1930
    %v1947 = vpack.c.b16 %v1935, %v1933
    %v1948 = vpack.c.b16 %v1936, %v1934
    %v1949 = vpack.c.b16 %v1939, %v1937
    %v1950 = vpack.c.b16 %v1940, %v1938
    %v1951 = vpack.c.b16 %v1943, %v1941
    %v1952 = vpack.c.b16 %v1944, %v1942
    %v1962 = vsel %vm104, %v1906, 0
    %v1965 = vsel %vm104, %v1907, 0
    %v1968 = vsel %vm104, %v1908, 0
    %v1971 = vsel %vm104, %v1909, 0
    %1973 = vmatprep.subr.bf16.mxu0 0
    %1974 = vmatpush1.bf16.msra.mxu0 0
    %1975 = vmatprep.subr.bf16.mxu0 0
    %1976 = vmatpush1.bf16.msra.mxu0 0
    %1977 = vmatprep.subr.bf16.mxu0 0
    %1978 = vmatpush1.bf16.msra.mxu0 0
    %1979 = vmatprep.subr.bf16.mxu0 0
    %1980 = vmatpush1.bf16.msra.mxu0 0
    %1981 = vmatprep.subr.bf16.mxu0 %v1952
    %1982 = vmatpush1.bf16.msra.mxu0 %v1951
    %1983 = vmatprep.subr.bf16.mxu0 %v1950
    %1984 = vmatpush1.bf16.msra.mxu0 %v1949
    %1985 = vmatprep.subr.bf16.mxu0 %v1948
    %1986 = vmatpush1.bf16.msra.mxu0 %v1947
    %1987 = vmatprep.subr.bf16.mxu0 %v1946
    %1988 = vmatpush1.bf16.msra.mxu0 %v1945
    %1989 = vmatprep.subr.bf16.mxu0 0
    %1990 = vmatpush2.bf16.msra.mxu0 0
    %1991 = vmatprep.subr.bf16.mxu0 0
    %1992 = vmatpush2.bf16.msra.mxu0 0
    %1993 = vmatprep.subr.bf16.mxu0 0
    %1994 = vmatpush2.bf16.msra.mxu0 0
    %1995 = vmatprep.subr.bf16.mxu0 0
    %1996 = vmatpush2.bf16.msra.mxu0 0
    %1997 = vmatprep.subr.bf16.mxu0 0
    %1998 = vmatpush2.bf16.msra.mxu0 0
    %1999 = vmatprep.subr.bf16.mxu0 0
    %2000 = vmatpush2.bf16.msra.mxu0 0
    %2001 = vmatprep.subr.bf16.mxu0 0
    %2002 = vmatpush2.bf16.msra.mxu0 0
    %2003 = vmatprep.subr.bf16.mxu0 0
    %2004 = vmatpush2.bf16.msra.mxu0 0
    %2005 = vmatprep.mubr.bf16.mxu0 0
    %2006 = vmatmul.mubr.bf16.gmra.mxu0 %v1962
    %v2007 = vpop.f32.mrf.mxu0
    %v2008 = vadd.f32 %v1914, %v2007
    %v2009 = vpop.f32.mrf.mxu0
    %v2010 = vadd.f32 %v1918, %v2009
    %v2011 = vpop.f32.mrf.mxu0
    %v2012 = vadd.f32 %v1914, %v2011
    %v2013 = vpop.f32.mrf.mxu0
    %v2014 = vadd.f32 %v1918, %v2013
    %2015 = vmatprep.mubr.bf16.mxu0 0
    %2016 = vmatmul.mubr.bf16.gmra.mxu0 %v1965
    %v2017 = vpop.f32.mrf.mxu0
    %v2018 = vadd.f32 %v1914, %v2017
    %v2019 = vpop.f32.mrf.mxu0
    %v2020 = vadd.f32 %v1918, %v2019
    %v2021 = vpop.f32.mrf.mxu0
    %v2022 = vadd.f32 %v1914, %v2021
    %v2023 = vpop.f32.mrf.mxu0
    %v2024 = vadd.f32 %v1918, %v2023
    %2025 = vmatprep.mubr.bf16.mxu0 0
    %2026 = vmatmul.mubr.bf16.gmra.mxu0 %v1968
    %v2027 = vpop.f32.mrf.mxu0
    %v2028 = vadd.f32 %v1914, %v2027
    %v2029 = vpop.f32.mrf.mxu0
    %v2030 = vadd.f32 %v1918, %v2029
    %v2031 = vpop.f32.mrf.mxu0
    %v2032 = vadd.f32 %v1914, %v2031
    %v2033 = vpop.f32.mrf.mxu0
    %v2034 = vadd.f32 %v1918, %v2033
    %2035 = vmatprep.mubr.bf16.mxu0 0
    %2036 = vmatmul.mubr.bf16.gmra.mxu0 %v1971
    %v2037 = vpop.f32.mrf.mxu0
    %v2038 = vadd.f32 %v1914, %v2037
    %v2039 = vpop.f32.mrf.mxu0
    %v2040 = vadd.f32 %v1918, %v2039
    %v2041 = vpop.f32.mrf.mxu0
    %v2042 = vadd.f32 %v1914, %v2041
    %v2043 = vpop.f32.mrf.mxu0
    %v2044 = vadd.f32 %v1918, %v2043
    %2045 = vdwg.mxu0
    %2046 = vst [vmem:[#allocation2] sm:$0xff] %v2008
    %2047 = vst [vmem:[#allocation2 + $0x8] sm:$0xff] %v2010
    %2048 = vst [vmem:[#allocation2 + $0x20] sm:$0xff] %v2012
    %2049 = vst [vmem:[#allocation2 + $0x28] sm:$0xff] %v2014
    %2050 = vst [vmem:[#allocation2 + $0x40] sm:$0xff] %v2018
    %2051 = vst [vmem:[#allocation2 + $0x48] sm:$0xff] %v2020
    %2052 = vst [vmem:[#allocation2 + $0x60] sm:$0xff] %v2022
    %2053 = vst [vmem:[#allocation2 + $0x68] sm:$0xff] %v2024
    %2054 = vst [vmem:[#allocation2 + $0x80] sm:$0xff] %v2028
    %2055 = vst [vmem:[#allocation2 + $0x88] sm:$0xff] %v2030
    %2056 = vst [vmem:[#allocation2 + $0xa0] sm:$0xff] %v2032
    %2057 = vst [vmem:[#allocation2 + $0xa8] sm:$0xff] %v2034
    %2058 = vst [vmem:[#allocation2 + $0xc0] sm:$0xff] %v2038
    %2059 = vst [vmem:[#allocation2 + $0xc8] sm:$0xff] %v2040
    %2060 = vst [vmem:[#allocation2 + $0xe0] sm:$0xff] %v2042
    %2061 = vst [vmem:[#allocation2 + $0xe8] sm:$0xff] %v2044
    %v2062 = vld [vmem:[%s1865] sm:$0xff]
    %v2063 = vld [vmem:[%s1865 + $0x8] sm:$0xff]
    %v2064 = vld [vmem:[%s1865 + $0x10] sm:$0xff]
    %v2065 = vld [vmem:[%s1865 + $0x18] sm:$0xff]
    %v2066 = vld [vmem:[%s1865 + $0x20] sm:$0xff]
    %v2067 = vld [vmem:[%s1865 + $0x28] sm:$0xff]
    %v2068 = vld [vmem:[%s1865 + $0x30] sm:$0xff]
    %v2069 = vld [vmem:[%s1865 + $0x38] sm:$0xff]
    %v2070 = vpack.c.bf16 %v2063, %v2062
    %v2071 = vpack.c.bf16 %v2065, %v2064
    %v2072 = vpack.c.bf16 %v2067, %v2066
    %v2073 = vpack.c.bf16 %v2069, %v2068
    %v2074 = vrot.slane %v1880, 2
    %v2075 = vlaneseq
    %v2076 = vshrl.u32 %v2075, 7
    %v2077 = vsub.s32 0, %v2076
    %v2078 = vrot.slane %v2074, %v2077
    %v2079 = vlaneseq
    %v2080 = vshrl.u32 %v2079, 7
    %v2081 = vsub.s32 1, %v2080
    %v2082 = vrot.slane %v2074, %v2081
    %v2093 = vunpack.c.l.b16 %v1883
    %v2094 = vunpack.c.h.b16 %v1883
    %v2095 = vunpack.c.l.b16 %v1885
    %v2096 = vunpack.c.h.b16 %v1885
    %v2097 = vunpack.c.l.b16 %v1887
    %v2098 = vunpack.c.h.b16 %v1887
    %v2099 = vunpack.c.l.b16 %v1889
    %v2100 = vunpack.c.h.b16 %v1889
    %v2101 = vunpack.c.l.b16 %v1891
    %v2102 = vunpack.c.h.b16 %v1891
    %v2103 = vunpack.c.l.b16 %v1893
    %v2104 = vunpack.c.h.b16 %v1893
    %v2105 = vunpack.c.l.b16 %v1895
    %v2106 = vunpack.c.h.b16 %v1895
    %v2107 = vunpack.c.l.b16 %v1897
    %v2108 = vunpack.c.h.b16 %v1897
    %v2109 = vpack.c.b16 %v2095, %v2093
    %v2110 = vpack.c.b16 %v2096, %v2094
    %v2111 = vpack.c.b16 %v2099, %v2097
    %v2112 = vpack.c.b16 %v2100, %v2098
    %v2113 = vpack.c.b16 %v2103, %v2101
    %v2114 = vpack.c.b16 %v2104, %v2102
    %v2115 = vpack.c.b16 %v2107, %v2105
    %v2116 = vpack.c.b16 %v2108, %v2106
    %v2126 = vsel %vm104, %v2070, 0
    %v2129 = vsel %vm104, %v2071, 0
    %v2132 = vsel %vm104, %v2072, 0
    %v2135 = vsel %vm104, %v2073, 0
    %2137 = vmatprep.subr.bf16.mxu0 0
    %2138 = vmatpush1.bf16.msra.mxu0 0
    %2139 = vmatprep.subr.bf16.mxu0 0
    %2140 = vmatpush1.bf16.msra.mxu0 0
    %2141 = vmatprep.subr.bf16.mxu0 0
    %2142 = vmatpush1.bf16.msra.mxu0 0
    %2143 = vmatprep.subr.bf16.mxu0 0
    %2144 = vmatpush1.bf16.msra.mxu0 0
    %2145 = vmatprep.subr.bf16.mxu0 %v2116
    %2146 = vmatpush1.bf16.msra.mxu0 %v2115
    %2147 = vmatprep.subr.bf16.mxu0 %v2114
    %2148 = vmatpush1.bf16.msra.mxu0 %v2113
    %2149 = vmatprep.subr.bf16.mxu0 %v2112
    %2150 = vmatpush1.bf16.msra.mxu0 %v2111
    %2151 = vmatprep.subr.bf16.mxu0 %v2110
    %2152 = vmatpush1.bf16.msra.mxu0 %v2109
    %2153 = vmatprep.subr.bf16.mxu0 0
    %2154 = vmatpush2.bf16.msra.mxu0 0
    %2155 = vmatprep.subr.bf16.mxu0 0
    %2156 = vmatpush2.bf16.msra.mxu0 0
    %2157 = vmatprep.subr.bf16.mxu0 0
    %2158 = vmatpush2.bf16.msra.mxu0 0
    %2159 = vmatprep.subr.bf16.mxu0 0
    %2160 = vmatpush2.bf16.msra.mxu0 0
    %2161 = vmatprep.subr.bf16.mxu0 0
    %2162 = vmatpush2.bf16.msra.mxu0 0
    %2163 = vmatprep.subr.bf16.mxu0 0
    %2164 = vmatpush2.bf16.msra.mxu0 0
    %2165 = vmatprep.subr.bf16.mxu0 0
    %2166 = vmatpush2.bf16.msra.mxu0 0
    %2167 = vmatprep.subr.bf16.mxu0 0
    %2168 = vmatpush2.bf16.msra.mxu0 0
    %2169 = vmatprep.mubr.bf16.mxu0 0
    %2170 = vmatmul.mubr.bf16.gmra.mxu0 %v2126
    %v2171 = vpop.f32.mrf.mxu0
    %v2172 = vadd.f32 %v2078, %v2171
    %v2173 = vpop.f32.mrf.mxu0
    %v2174 = vadd.f32 %v2082, %v2173
    %v2175 = vpop.f32.mrf.mxu0
    %v2176 = vadd.f32 %v2078, %v2175
    %v2177 = vpop.f32.mrf.mxu0
    %v2178 = vadd.f32 %v2082, %v2177
    %2179 = vmatprep.mubr.bf16.mxu0 0
    %2180 = vmatmul.mubr.bf16.gmra.mxu0 %v2129
    %v2181 = vpop.f32.mrf.mxu0
    %v2182 = vadd.f32 %v2078, %v2181
    %v2183 = vpop.f32.mrf.mxu0
    %v2184 = vadd.f32 %v2082, %v2183
    %v2185 = vpop.f32.mrf.mxu0
    %v2186 = vadd.f32 %v2078, %v2185
    %v2187 = vpop.f32.mrf.mxu0
    %v2188 = vadd.f32 %v2082, %v2187
    %2189 = vmatprep.mubr.bf16.mxu0 0
    %2190 = vmatmul.mubr.bf16.gmra.mxu0 %v2132
    %v2191 = vpop.f32.mrf.mxu0
    %v2192 = vadd.f32 %v2078, %v2191
    %v2193 = vpop.f32.mrf.mxu0
    %v2194 = vadd.f32 %v2082, %v2193
    %v2195 = vpop.f32.mrf.mxu0
    %v2196 = vadd.f32 %v2078, %v2195
    %v2197 = vpop.f32.mrf.mxu0
    %v2198 = vadd.f32 %v2082, %v2197
    %2199 = vmatprep.mubr.bf16.mxu0 0
    %2200 = vmatmul.mubr.bf16.gmra.mxu0 %v2135
    %v2201 = vpop.f32.mrf.mxu0
    %v2202 = vadd.f32 %v2078, %v2201
    %v2203 = vpop.f32.mrf.mxu0
    %v2204 = vadd.f32 %v2082, %v2203
    %v2205 = vpop.f32.mrf.mxu0
    %v2206 = vadd.f32 %v2078, %v2205
    %v2207 = vpop.f32.mrf.mxu0
    %v2208 = vadd.f32 %v2082, %v2207
    %2209 = vdwg.mxu0
    %2210 = vst [vmem:[#allocation2 + $0x10] sm:$0xff] %v2172
    %2211 = vst [vmem:[#allocation2 + $0x18] sm:$0xff] %v2174
    %2212 = vst [vmem:[#allocation2 + $0x30] sm:$0xff] %v2176
    %2213 = vst [vmem:[#allocation2 + $0x38] sm:$0xff] %v2178
    %2214 = vst [vmem:[#allocation2 + $0x50] sm:$0xff] %v2182
    %2215 = vst [vmem:[#allocation2 + $0x58] sm:$0xff] %v2184
    %2216 = vst [vmem:[#allocation2 + $0x70] sm:$0xff] %v2186
    %2217 = vst [vmem:[#allocation2 + $0x78] sm:$0xff] %v2188
    %2218 = vst [vmem:[#allocation2 + $0x90] sm:$0xff] %v2192
    %2219 = vst [vmem:[#allocation2 + $0x98] sm:$0xff] %v2194
    %2220 = vst [vmem:[#allocation2 + $0xb0] sm:$0xff] %v2196
    %2221 = vst [vmem:[#allocation2 + $0xb8] sm:$0xff] %v2198
    %2222 = vst [vmem:[#allocation2 + $0xd0] sm:$0xff] %v2202
    %2223 = vst [vmem:[#allocation2 + $0xd8] sm:$0xff] %v2204
    %2224 = vst [vmem:[#allocation2 + $0xf0] sm:$0xff] %v2206
    %2225 = vst [vmem:[#allocation2 + $0xf8] sm:$0xff] %v2208
    %s2226 = scalar_lea.vmem [#allocation11], 64
    %v2227 = vld [vmem:[%s2226] sm:$0xff]
    %v2228 = vld [vmem:[%s2226 + $0x8] sm:$0xff]
    %v2229 = vld [vmem:[%s2226 + $0x10] sm:$0xff]
    %v2230 = vld [vmem:[%s2226 + $0x18] sm:$0xff]
    %v2231 = vld [vmem:[%s2226 + $0x20] sm:$0xff]
    %v2232 = vld [vmem:[%s2226 + $0x28] sm:$0xff]
    %v2233 = vld [vmem:[%s2226 + $0x30] sm:$0xff]
    %v2234 = vld [vmem:[%s2226 + $0x38] sm:$0xff]
    %s2235 = scalar_lea.vmem [#allocation11], 192
    %v2236 = vld [vmem:[%s2235] sm:$0xff]
    %v2237 = vld [vmem:[%s2235 + $0x8] sm:$0xff]
    %v2238 = vld [vmem:[%s2235 + $0x10] sm:$0xff]
    %v2239 = vld [vmem:[%s2235 + $0x18] sm:$0xff]
    %v2240 = vld [vmem:[%s2235 + $0x20] sm:$0xff]
    %v2241 = vld [vmem:[%s2235 + $0x28] sm:$0xff]
    %v2242 = vld [vmem:[%s2235 + $0x30] sm:$0xff]
    %v2243 = vld [vmem:[%s2235 + $0x38] sm:$0xff]
    %s2244 = sld [smem:[#allocation4 + $0x2]]
    %v2245 = vld [vmem:[#allocation2] sm:$0xff]
    %v2246 = vld [vmem:[#allocation2 + $0x8] sm:$0xff]
    %v2255 = vunpack.c.l.b16 %v2227
    %v2256 = vunpack.c.h.b16 %v2227
    %v2257 = vunpack.c.l.b16 %v2228
    %v2258 = vunpack.c.h.b16 %v2228
    %v2259 = vunpack.c.l.b16 %v2229
    %v2260 = vunpack.c.h.b16 %v2229
    %v2261 = vunpack.c.l.b16 %v2230
    %v2262 = vunpack.c.h.b16 %v2230
    %v2263 = vunpack.c.l.b16 %v2231
    %v2264 = vunpack.c.h.b16 %v2231
    %v2265 = vunpack.c.l.b16 %v2232
    %v2266 = vunpack.c.h.b16 %v2232
    %v2267 = vunpack.c.l.b16 %v2233
    %v2268 = vunpack.c.h.b16 %v2233
    %v2269 = vunpack.c.l.b16 %v2234
    %v2270 = vunpack.c.h.b16 %v2234
    %v2271 = vpack.c.b16 %v2257, %v2255
    %v2272 = vpack.c.b16 %v2258, %v2256
    %v2273 = vpack.c.b16 %v2261, %v2259
    %v2274 = vpack.c.b16 %v2262, %v2260
    %v2275 = vpack.c.b16 %v2265, %v2263
    %v2276 = vpack.c.b16 %v2266, %v2264
    %v2277 = vpack.c.b16 %v2269, %v2267
    %v2278 = vpack.c.b16 %v2270, %v2268
    %2287 = vmatprep.subr.bf16.mxu0 0
    %2288 = vmatpush1.bf16.msra.mxu0 0
    %2289 = vmatprep.subr.bf16.mxu0 0
    %2290 = vmatpush1.bf16.msra.mxu0 0
    %2291 = vmatprep.subr.bf16.mxu0 0
    %2292 = vmatpush1.bf16.msra.mxu0 0
    %2293 = vmatprep.subr.bf16.mxu0 0
    %2294 = vmatpush1.bf16.msra.mxu0 0
    %2295 = vmatprep.subr.bf16.mxu0 %v2278
    %2296 = vmatpush1.bf16.msra.mxu0 %v2277
    %2297 = vmatprep.subr.bf16.mxu0 %v2276
    %2298 = vmatpush1.bf16.msra.mxu0 %v2275
    %2299 = vmatprep.subr.bf16.mxu0 %v2274
    %2300 = vmatpush1.bf16.msra.mxu0 %v2273
    %2301 = vmatprep.subr.bf16.mxu0 %v2272
    %2302 = vmatpush1.bf16.msra.mxu0 %v2271
    %2303 = vmatprep.subr.bf16.mxu0 0
    %2304 = vmatpush2.bf16.msra.mxu0 0
    %2305 = vmatprep.subr.bf16.mxu0 0
    %2306 = vmatpush2.bf16.msra.mxu0 0
    %2307 = vmatprep.subr.bf16.mxu0 0
    %2308 = vmatpush2.bf16.msra.mxu0 0
    %2309 = vmatprep.subr.bf16.mxu0 0
    %2310 = vmatpush2.bf16.msra.mxu0 0
    %2311 = vmatprep.subr.bf16.mxu0 0
    %2312 = vmatpush2.bf16.msra.mxu0 0
    %2313 = vmatprep.subr.bf16.mxu0 0
    %2314 = vmatpush2.bf16.msra.mxu0 0
    %2315 = vmatprep.subr.bf16.mxu0 0
    %2316 = vmatpush2.bf16.msra.mxu0 0
    %2317 = vmatprep.subr.bf16.mxu0 0
    %2318 = vmatpush2.bf16.msra.mxu0 0
    %2319 = vmatprep.mubr.bf16.mxu0 0
    %2320 = vmatmul.mubr.bf16.gmra.mxu0 %v527
    %v2321 = vpop.f32.mrf.mxu0
    %v2322 = vadd.f32 0.0, %v2321
    %v2323 = vpop.f32.mrf.mxu0
    %v2324 = vadd.f32 0.0, %v2323
    %v2325 = vpop.f32.mrf.mxu0
    %v2326 = vpop.f32.mrf.mxu0
    %2327 = vdwg.mxu0
    %v2328 = vadd.f32 %v2245, %v2322
    %v2329 = vadd.f32 %v2246, %v2324
    %v2330 = vld [vmem:[%s572 + $0x10] sm:$0xff]
    %v2331 = vld [vmem:[%s572 + $0x18] sm:$0xff]
    %v2340 = vunpack.c.l.b16 %v2236
    %v2341 = vunpack.c.h.b16 %v2236
    %v2342 = vunpack.c.l.b16 %v2237
    %v2343 = vunpack.c.h.b16 %v2237
    %v2344 = vunpack.c.l.b16 %v2238
    %v2345 = vunpack.c.h.b16 %v2238
    %v2346 = vunpack.c.l.b16 %v2239
    %v2347 = vunpack.c.h.b16 %v2239
    %v2348 = vunpack.c.l.b16 %v2240
    %v2349 = vunpack.c.h.b16 %v2240
    %v2350 = vunpack.c.l.b16 %v2241
    %v2351 = vunpack.c.h.b16 %v2241
    %v2352 = vunpack.c.l.b16 %v2242
    %v2353 = vunpack.c.h.b16 %v2242
    %v2354 = vunpack.c.l.b16 %v2243
    %v2355 = vunpack.c.h.b16 %v2243
    %v2356 = vpack.c.b16 %v2342, %v2340
    %v2357 = vpack.c.b16 %v2343, %v2341
    %v2358 = vpack.c.b16 %v2346, %v2344
    %v2359 = vpack.c.b16 %v2347, %v2345
    %v2360 = vpack.c.b16 %v2350, %v2348
    %v2361 = vpack.c.b16 %v2351, %v2349
    %v2362 = vpack.c.b16 %v2354, %v2352
    %v2363 = vpack.c.b16 %v2355, %v2353
    %2372 = vmatprep.subr.bf16.mxu0 0
    %2373 = vmatpush1.bf16.msra.mxu0 0
    %2374 = vmatprep.subr.bf16.mxu0 0
    %2375 = vmatpush1.bf16.msra.mxu0 0
    %2376 = vmatprep.subr.bf16.mxu0 0
    %2377 = vmatpush1.bf16.msra.mxu0 0
    %2378 = vmatprep.subr.bf16.mxu0 0
    %2379 = vmatpush1.bf16.msra.mxu0 0
    %2380 = vmatprep.subr.bf16.mxu0 %v2363
    %2381 = vmatpush1.bf16.msra.mxu0 %v2362
    %2382 = vmatprep.subr.bf16.mxu0 %v2361
    %2383 = vmatpush1.bf16.msra.mxu0 %v2360
    %2384 = vmatprep.subr.bf16.mxu0 %v2359
    %2385 = vmatpush1.bf16.msra.mxu0 %v2358
    %2386 = vmatprep.subr.bf16.mxu0 %v2357
    %2387 = vmatpush1.bf16.msra.mxu0 %v2356
    %2388 = vmatprep.subr.bf16.mxu0 0
    %2389 = vmatpush2.bf16.msra.mxu0 0
    %2390 = vmatprep.subr.bf16.mxu0 0
    %2391 = vmatpush2.bf16.msra.mxu0 0
    %2392 = vmatprep.subr.bf16.mxu0 0
    %2393 = vmatpush2.bf16.msra.mxu0 0
    %2394 = vmatprep.subr.bf16.mxu0 0
    %2395 = vmatpush2.bf16.msra.mxu0 0
    %2396 = vmatprep.subr.bf16.mxu0 0
    %2397 = vmatpush2.bf16.msra.mxu0 0
    %2398 = vmatprep.subr.bf16.mxu0 0
    %2399 = vmatpush2.bf16.msra.mxu0 0
    %2400 = vmatprep.subr.bf16.mxu0 0
    %2401 = vmatpush2.bf16.msra.mxu0 0
    %2402 = vmatprep.subr.bf16.mxu0 0
    %2403 = vmatpush2.bf16.msra.mxu0 0
    %2404 = vmatprep.mubr.bf16.mxu0 0
    %2405 = vmatmul.mubr.bf16.gmra.mxu0 %v527
    %v2406 = vpop.f32.mrf.mxu0
    %v2407 = vadd.f32 0.0, %v2406
    %v2408 = vpop.f32.mrf.mxu0
    %v2409 = vadd.f32 0.0, %v2408
    %v2410 = vpop.f32.mrf.mxu0
    %v2411 = vpop.f32.mrf.mxu0
    %2412 = vdwg.mxu0
    %v2413 = vadd.f32 %v2330, %v2407
    %v2414 = vadd.f32 %v2331, %v2409
    %v2415 = vmul.f32 %v2328, 0.5
    %v2416 = vtanh.pop %v2415
    %v2417 = vadd.f32 %v2416, 1.0
    %v2418 = vmul.f32 %v2417, 0.5
    %v2419 = vmul.f32 %v2413, 0.5
    %v2420 = vtanh.pop %v2419
    %v2421 = vadd.f32 %v2420, 1.0
    %v2422 = vmul.f32 %v2421, 0.5
    %v2423 = vtanh.pop %v2329
    %v2424 = vtanh.pop %v2414
    %v2425 = vmul.f32 %v2329, 0.5
    %v2426 = vtanh.pop %v2425
    %v2427 = vadd.f32 %v2426, 1.0
    %v2428 = vmul.f32 %v2427, 0.5
    %v2429 = vmul.f32 %v2414, 0.5
    %v2430 = vtanh.pop %v2429
    %v2431 = vadd.f32 %v2430, 1.0
    %v2432 = vmul.f32 %v2431, 0.5
    %v2433 = vmul.f32 %v2418, 0.0
    %v2434 = vmul.f32 %v2418, %v2423
    %2436 = vrot.lane.b32.xlu0 %v2434, 64
    %v2437 = vpop.permute.xlu0 %2436
    %v2439 = vadd.f32 %v2433, %v2437
    %v2440 = vmul.f32 %v2422, 0.0
    %v2441 = vmul.f32 %v2422, %v2424
    %2443 = vrot.lane.b32.xlu0 %v2441, 64
    %v2444 = vpop.permute.xlu0 %2443
    %v2446 = vadd.f32 %v2440, %v2444
    %v2447 = vtanh.pop %v2439
    %v2448 = vmul.f32 %v2428, %v2447
    %v2449 = vtanh.pop %v2446
    %v2450 = vmul.f32 %v2432, %v2449
    %v2451 = vld [vmem:[#allocation14] sm:$0xff]
    %v2452 = vstv %s2244
    %v2453 = vmul.f32 %v2452, %v2448
    %2455 = vrot.lane.b32.xlu0 %v2453, 64
    %v2456 = vpop.permute.xlu0 %2455
    %v2458 = vadd.f32 %v2451, %v2456
    %2459 = vst.msk [vmem:[#allocation14] sm:$0xff] %vm104, %v2458
    %v2460 = vld [vmem:[%s714] sm:$0xff]
    %v2461 = vmul.f32 %v2452, %v2450
    %v2462 = vadd.f32 %v2460, %v2461
    %2463 = vst.msk [vmem:[%s714] sm:$0xff] %vm145, %v2462
    %v2464 = vld [vmem:[%s719] sm:$0xff]
    %v2465 = vld [vmem:[%s719 + $0x8] sm:$0xff]
    %v2466 = vpack.c.bf16 %v2448, %v2448
    %2468 = vrot.lane.b32.xlu0 %v2466, 64
    %v2469 = vpop.permute.xlu0 %2468
    %v2471 = vsel %vm104, %v2469, 0
    %2473 = vmatprep.subr.bf16.mxu0 0
    %2474 = vmatpush1.bf16.msra.mxu0 0
    %2475 = vmatprep.subr.bf16.mxu0 0
    %2476 = vmatpush1.bf16.msra.mxu0 0
    %2477 = vmatprep.subr.bf16.mxu0 0
    %2478 = vmatpush1.bf16.msra.mxu0 0
    %2479 = vmatprep.subr.bf16.mxu0 0
    %2480 = vmatpush1.bf16.msra.mxu0 0
    %2481 = vmatprep.subr.bf16.mxu0 %v2278
    %2482 = vmatpush1.bf16.msra.mxu0 %v2277
    %2483 = vmatprep.subr.bf16.mxu0 %v2276
    %2484 = vmatpush1.bf16.msra.mxu0 %v2275
    %2485 = vmatprep.subr.bf16.mxu0 %v2274
    %2486 = vmatpush1.bf16.msra.mxu0 %v2273
    %2487 = vmatprep.subr.bf16.mxu0 %v2272
    %2488 = vmatpush1.bf16.msra.mxu0 %v2271
    %2489 = vmatprep.subr.bf16.mxu0 0
    %2490 = vmatpush2.bf16.msra.mxu0 0
    %2491 = vmatprep.subr.bf16.mxu0 0
    %2492 = vmatpush2.bf16.msra.mxu0 0
    %2493 = vmatprep.subr.bf16.mxu0 0
    %2494 = vmatpush2.bf16.msra.mxu0 0
    %2495 = vmatprep.subr.bf16.mxu0 0
    %2496 = vmatpush2.bf16.msra.mxu0 0
    %2497 = vmatprep.subr.bf16.mxu0 0
    %2498 = vmatpush2.bf16.msra.mxu0 0
    %2499 = vmatprep.subr.bf16.mxu0 0
    %2500 = vmatpush2.bf16.msra.mxu0 0
    %2501 = vmatprep.subr.bf16.mxu0 0
    %2502 = vmatpush2.bf16.msra.mxu0 0
    %2503 = vmatprep.subr.bf16.mxu0 0
    %2504 = vmatpush2.bf16.msra.mxu0 0
    %2505 = vmatprep.mubr.bf16.mxu0 0
    %2506 = vmatmul.mubr.bf16.gmra.mxu0 %v2471
    %v2507 = vpop.f32.mrf.mxu0
    %v2508 = vadd.f32 0.0, %v2507
    %v2509 = vpop.f32.mrf.mxu0
    %v2510 = vadd.f32 0.0, %v2509
    %v2511 = vpop.f32.mrf.mxu0
    %v2512 = vpop.f32.mrf.mxu0
    %2513 = vdwg.mxu0
    %v2514 = vadd.f32 %v2464, %v2508
    %v2515 = vadd.f32 %v2465, %v2510
    %v2516 = vld [vmem:[%s772 + $0x10] sm:$0xff]
    %v2517 = vld [vmem:[%s772 + $0x18] sm:$0xff]
    %v2518 = vpack.c.bf16 %v2450, %v2450
    %2520 = vrot.lane.b32.xlu0 %v2518, 64
    %v2521 = vpop.permute.xlu0 %2520
    %v2523 = vsel %vm104, %v2521, 0
    %2525 = vmatprep.subr.bf16.mxu0 0
    %2526 = vmatpush1.bf16.msra.mxu0 0
    %2527 = vmatprep.subr.bf16.mxu0 0
    %2528 = vmatpush1.bf16.msra.mxu0 0
    %2529 = vmatprep.subr.bf16.mxu0 0
    %2530 = vmatpush1.bf16.msra.mxu0 0
    %2531 = vmatprep.subr.bf16.mxu0 0
    %2532 = vmatpush1.bf16.msra.mxu0 0
    %2533 = vmatprep.subr.bf16.mxu0 %v2363
    %2534 = vmatpush1.bf16.msra.mxu0 %v2362
    %2535 = vmatprep.subr.bf16.mxu0 %v2361
    %2536 = vmatpush1.bf16.msra.mxu0 %v2360
    %2537 = vmatprep.subr.bf16.mxu0 %v2359
    %2538 = vmatpush1.bf16.msra.mxu0 %v2358
    %2539 = vmatprep.subr.bf16.mxu0 %v2357
    %2540 = vmatpush1.bf16.msra.mxu0 %v2356
    %2541 = vmatprep.subr.bf16.mxu0 0
    %2542 = vmatpush2.bf16.msra.mxu0 0
    %2543 = vmatprep.subr.bf16.mxu0 0
    %2544 = vmatpush2.bf16.msra.mxu0 0
    %2545 = vmatprep.subr.bf16.mxu0 0
    %2546 = vmatpush2.bf16.msra.mxu0 0
    %2547 = vmatprep.subr.bf16.mxu0 0
    %2548 = vmatpush2.bf16.msra.mxu0 0
    %2549 = vmatprep.subr.bf16.mxu0 0
    %2550 = vmatpush2.bf16.msra.mxu0 0
    %2551 = vmatprep.subr.bf16.mxu0 0
    %2552 = vmatpush2.bf16.msra.mxu0 0
    %2553 = vmatprep.subr.bf16.mxu0 0
    %2554 = vmatpush2.bf16.msra.mxu0 0
    %2555 = vmatprep.subr.bf16.mxu0 0
    %2556 = vmatpush2.bf16.msra.mxu0 0
    %2557 = vmatprep.mubr.bf16.mxu0 0
    %2558 = vmatmul.mubr.bf16.gmra.mxu0 %v2523
    %v2559 = vpop.f32.mrf.mxu0
    %v2560 = vadd.f32 0.0, %v2559
    %v2561 = vpop.f32.mrf.mxu0
    %v2562 = vadd.f32 0.0, %v2561
    %v2563 = vpop.f32.mrf.mxu0
    %v2564 = vpop.f32.mrf.mxu0
    %2565 = vdwg.mxu0
    %v2566 = vadd.f32 %v2516, %v2560
    %v2567 = vadd.f32 %v2517, %v2562
    %v2568 = vmul.f32 %v2514, 0.5
    %v2569 = vtanh.pop %v2568
    %v2570 = vadd.f32 %v2569, 1.0
    %v2571 = vmul.f32 %v2570, 0.5
    %v2572 = vmul.f32 %v2566, 0.5
    %v2573 = vtanh.pop %v2572
    %v2574 = vadd.f32 %v2573, 1.0
    %v2575 = vmul.f32 %v2574, 0.5
    %v2576 = vtanh.pop %v2515
    %v2577 = vtanh.pop %v2567
    %v2578 = vmul.f32 %v2515, 0.5
    %v2579 = vtanh.pop %v2578
    %v2580 = vadd.f32 %v2579, 1.0
    %v2581 = vmul.f32 %v2580, 0.5
    %v2582 = vmul.f32 %v2567, 0.5
    %v2583 = vtanh.pop %v2582
    %v2584 = vadd.f32 %v2583, 1.0
    %v2585 = vmul.f32 %v2584, 0.5
    %v2586 = vmul.f32 %v2571, %v2439
    %v2587 = vmul.f32 %v2571, %v2576
    %2589 = vrot.lane.b32.xlu0 %v2587, 64
    %v2590 = vpop.permute.xlu0 %2589
    %v2592 = vadd.f32 %v2586, %v2590
    %v2593 = vmul.f32 %v2575, %v2446
    %v2594 = vmul.f32 %v2575, %v2577
    %2596 = vrot.lane.b32.xlu0 %v2594, 64
    %v2597 = vpop.permute.xlu0 %2596
    %v2599 = vadd.f32 %v2593, %v2597
    %v2600 = vtanh.pop %v2592
    %v2601 = vmul.f32 %v2581, %v2600
    %v2602 = vtanh.pop %v2599
    %v2603 = vmul.f32 %v2585, %v2602
    %v2604 = vld [vmem:[%s873] sm:$0xff]
    %v2605 = vmul.f32 %v2452, %v2601
    %2607 = vrot.lane.b32.xlu0 %v2605, 64
    %v2608 = vpop.permute.xlu0 %2607
    %v2610 = vadd.f32 %v2604, %v2608
    %2611 = vst.msk [vmem:[%s873] sm:$0xff] %vm104, %v2610
    %v2612 = vld [vmem:[%s882] sm:$0xff]
    %v2613 = vmul.f32 %v2452, %v2603
    %v2614 = vadd.f32 %v2612, %v2613
    %2615 = vst.msk [vmem:[%s882] sm:$0xff] %vm145, %v2614
    %v2616 = vld [vmem:[%s887] sm:$0xff]
    %v2617 = vld [vmem:[%s887 + $0x8] sm:$0xff]
    %v2618 = vpack.c.bf16 %v2601, %v2601
    %2620 = vrot.lane.b32.xlu0 %v2618, 64
    %v2621 = vpop.permute.xlu0 %2620
    %v2623 = vsel %vm104, %v2621, 0
    %2625 = vmatprep.subr.bf16.mxu0 0
    %2626 = vmatpush1.bf16.msra.mxu0 0
    %2627 = vmatprep.subr.bf16.mxu0 0
    %2628 = vmatpush1.bf16.msra.mxu0 0
    %2629 = vmatprep.subr.bf16.mxu0 0
    %2630 = vmatpush1.bf16.msra.mxu0 0
    %2631 = vmatprep.subr.bf16.mxu0 0
    %2632 = vmatpush1.bf16.msra.mxu0 0
    %2633 = vmatprep.subr.bf16.mxu0 %v2278
    %2634 = vmatpush1.bf16.msra.mxu0 %v2277
    %2635 = vmatprep.subr.bf16.mxu0 %v2276
    %2636 = vmatpush1.bf16.msra.mxu0 %v2275
    %2637 = vmatprep.subr.bf16.mxu0 %v2274
    %2638 = vmatpush1.bf16.msra.mxu0 %v2273
    %2639 = vmatprep.subr.bf16.mxu0 %v2272
    %2640 = vmatpush1.bf16.msra.mxu0 %v2271
    %2641 = vmatprep.subr.bf16.mxu0 0
    %2642 = vmatpush2.bf16.msra.mxu0 0
    %2643 = vmatprep.subr.bf16.mxu0 0
    %2644 = vmatpush2.bf16.msra.mxu0 0
    %2645 = vmatprep.subr.bf16.mxu0 0
    %2646 = vmatpush2.bf16.msra.mxu0 0
    %2647 = vmatprep.subr.bf16.mxu0 0
    %2648 = vmatpush2.bf16.msra.mxu0 0
    %2649 = vmatprep.subr.bf16.mxu0 0
    %2650 = vmatpush2.bf16.msra.mxu0 0
    %2651 = vmatprep.subr.bf16.mxu0 0
    %2652 = vmatpush2.bf16.msra.mxu0 0
    %2653 = vmatprep.subr.bf16.mxu0 0
    %2654 = vmatpush2.bf16.msra.mxu0 0
    %2655 = vmatprep.subr.bf16.mxu0 0
    %2656 = vmatpush2.bf16.msra.mxu0 0
    %2657 = vmatprep.mubr.bf16.mxu0 0
    %2658 = vmatmul.mubr.bf16.gmra.mxu0 %v2623
    %v2659 = vpop.f32.mrf.mxu0
    %v2660 = vadd.f32 0.0, %v2659
    %v2661 = vpop.f32.mrf.mxu0
    %v2662 = vadd.f32 0.0, %v2661
    %v2663 = vpop.f32.mrf.mxu0
    %v2664 = vpop.f32.mrf.mxu0
    %2665 = vdwg.mxu0
    %v2666 = vadd.f32 %v2616, %v2660
    %v2667 = vadd.f32 %v2617, %v2662
    %v2668 = vld [vmem:[%s940 + $0x10] sm:$0xff]
    %v2669 = vld [vmem:[%s940 + $0x18] sm:$0xff]
    %v2670 = vpack.c.bf16 %v2603, %v2603
    %2672 = vrot.lane.b32.xlu0 %v2670, 64
    %v2673 = vpop.permute.xlu0 %2672
    %v2675 = vsel %vm104, %v2673, 0
    %2677 = vmatprep.subr.bf16.mxu0 0
    %2678 = vmatpush1.bf16.msra.mxu0 0
    %2679 = vmatprep.subr.bf16.mxu0 0
    %2680 = vmatpush1.bf16.msra.mxu0 0
    %2681 = vmatprep.subr.bf16.mxu0 0
    %2682 = vmatpush1.bf16.msra.mxu0 0
    %2683 = vmatprep.subr.bf16.mxu0 0
    %2684 = vmatpush1.bf16.msra.mxu0 0
    %2685 = vmatprep.subr.bf16.mxu0 %v2363
    %2686 = vmatpush1.bf16.msra.mxu0 %v2362
    %2687 = vmatprep.subr.bf16.mxu0 %v2361
    %2688 = vmatpush1.bf16.msra.mxu0 %v2360
    %2689 = vmatprep.subr.bf16.mxu0 %v2359
    %2690 = vmatpush1.bf16.msra.mxu0 %v2358
    %2691 = vmatprep.subr.bf16.mxu0 %v2357
    %2692 = vmatpush1.bf16.msra.mxu0 %v2356
    %2693 = vmatprep.subr.bf16.mxu0 0
    %2694 = vmatpush2.bf16.msra.mxu0 0
    %2695 = vmatprep.subr.bf16.mxu0 0
    %2696 = vmatpush2.bf16.msra.mxu0 0
    %2697 = vmatprep.subr.bf16.mxu0 0
    %2698 = vmatpush2.bf16.msra.mxu0 0
    %2699 = vmatprep.subr.bf16.mxu0 0
    %2700 = vmatpush2.bf16.msra.mxu0 0
    %2701 = vmatprep.subr.bf16.mxu0 0
    %2702 = vmatpush2.bf16.msra.mxu0 0
    %2703 = vmatprep.subr.bf16.mxu0 0
    %2704 = vmatpush2.bf16.msra.mxu0 0
    %2705 = vmatprep.subr.bf16.mxu0 0
    %2706 = vmatpush2.bf16.msra.mxu0 0
    %2707 = vmatprep.subr.bf16.mxu0 0
    %2708 = vmatpush2.bf16.msra.mxu0 0
    %2709 = vmatprep.mubr.bf16.mxu0 0
    %2710 = vmatmul.mubr.bf16.gmra.mxu0 %v2675
    %v2711 = vpop.f32.mrf.mxu0
    %v2712 = vadd.f32 0.0, %v2711
    %v2713 = vpop.f32.mrf.mxu0
    %v2714 = vadd.f32 0.0, %v2713
    %v2715 = vpop.f32.mrf.mxu0
    %v2716 = vpop.f32.mrf.mxu0
    %2717 = vdwg.mxu0
    %v2718 = vadd.f32 %v2668, %v2712
    %v2719 = vadd.f32 %v2669, %v2714
    %v2720 = vmul.f32 %v2666, 0.5
    %v2721 = vtanh.pop %v2720
    %v2722 = vadd.f32 %v2721, 1.0
    %v2723 = vmul.f32 %v2722, 0.5
    %v2724 = vmul.f32 %v2718, 0.5
    %v2725 = vtanh.pop %v2724
    %v2726 = vadd.f32 %v2725, 1.0
    %v2727 = vmul.f32 %v2726, 0.5
    %v2728 = vtanh.pop %v2667
    %v2729 = vtanh.pop %v2719
    %v2730 = vmul.f32 %v2667, 0.5
    %v2731 = vtanh.pop %v2730
    %v2732 = vadd.f32 %v2731, 1.0
    %v2733 = vmul.f32 %v2732, 0.5
    %v2734 = vmul.f32 %v2719, 0.5
    %v2735 = vtanh.pop %v2734
    %v2736 = vadd.f32 %v2735, 1.0
    %v2737 = vmul.f32 %v2736, 0.5
    %v2738 = vmul.f32 %v2723, %v2592
    %v2739 = vmul.f32 %v2723, %v2728
    %2741 = vrot.lane.b32.xlu0 %v2739, 64
    %v2742 = vpop.permute.xlu0 %2741
    %v2744 = vadd.f32 %v2738, %v2742
    %v2745 = vmul.f32 %v2727, %v2599
    %v2746 = vmul.f32 %v2727, %v2729
    %2748 = vrot.lane.b32.xlu0 %v2746, 64
    %v2749 = vpop.permute.xlu0 %2748
    %v2751 = vadd.f32 %v2745, %v2749
    %v2752 = vtanh.pop %v2744
    %v2753 = vmul.f32 %v2733, %v2752
    %v2754 = vtanh.pop %v2751
    %v2755 = vmul.f32 %v2737, %v2754
    %v2756 = vld [vmem:[%s1041] sm:$0xff]
    %v2757 = vmul.f32 %v2452, %v2753
    %2759 = vrot.lane.b32.xlu0 %v2757, 64
    %v2760 = vpop.permute.xlu0 %2759
    %v2762 = vadd.f32 %v2756, %v2760
    %2763 = vst.msk [vmem:[%s1041] sm:$0xff] %vm104, %v2762
    %v2764 = vld [vmem:[%s1050] sm:$0xff]
    %v2765 = vmul.f32 %v2452, %v2755
    %v2766 = vadd.f32 %v2764, %v2765
    %2767 = vst.msk [vmem:[%s1050] sm:$0xff] %vm145, %v2766
    %v2768 = vld [vmem:[%s1055] sm:$0xff]
    %v2769 = vld [vmem:[%s1055 + $0x8] sm:$0xff]
    %v2770 = vpack.c.bf16 %v2753, %v2753
    %2772 = vrot.lane.b32.xlu0 %v2770, 64
    %v2773 = vpop.permute.xlu0 %2772
    %v2775 = vsel %vm104, %v2773, 0
    %2777 = vmatprep.subr.bf16.mxu0 0
    %2778 = vmatpush1.bf16.msra.mxu0 0
    %2779 = vmatprep.subr.bf16.mxu0 0
    %2780 = vmatpush1.bf16.msra.mxu0 0
    %2781 = vmatprep.subr.bf16.mxu0 0
    %2782 = vmatpush1.bf16.msra.mxu0 0
    %2783 = vmatprep.subr.bf16.mxu0 0
    %2784 = vmatpush1.bf16.msra.mxu0 0
    %2785 = vmatprep.subr.bf16.mxu0 %v2278
    %2786 = vmatpush1.bf16.msra.mxu0 %v2277
    %2787 = vmatprep.subr.bf16.mxu0 %v2276
    %2788 = vmatpush1.bf16.msra.mxu0 %v2275
    %2789 = vmatprep.subr.bf16.mxu0 %v2274
    %2790 = vmatpush1.bf16.msra.mxu0 %v2273
    %2791 = vmatprep.subr.bf16.mxu0 %v2272
    %2792 = vmatpush1.bf16.msra.mxu0 %v2271
    %2793 = vmatprep.subr.bf16.mxu0 0
    %2794 = vmatpush2.bf16.msra.mxu0 0
    %2795 = vmatprep.subr.bf16.mxu0 0
    %2796 = vmatpush2.bf16.msra.mxu0 0
    %2797 = vmatprep.subr.bf16.mxu0 0
    %2798 = vmatpush2.bf16.msra.mxu0 0
    %2799 = vmatprep.subr.bf16.mxu0 0
    %2800 = vmatpush2.bf16.msra.mxu0 0
    %2801 = vmatprep.subr.bf16.mxu0 0
    %2802 = vmatpush2.bf16.msra.mxu0 0
    %2803 = vmatprep.subr.bf16.mxu0 0
    %2804 = vmatpush2.bf16.msra.mxu0 0
    %2805 = vmatprep.subr.bf16.mxu0 0
    %2806 = vmatpush2.bf16.msra.mxu0 0
    %2807 = vmatprep.subr.bf16.mxu0 0
    %2808 = vmatpush2.bf16.msra.mxu0 0
    %2809 = vmatprep.mubr.bf16.mxu0 0
    %2810 = vmatmul.mubr.bf16.gmra.mxu0 %v2775
    %v2811 = vpop.f32.mrf.mxu0
    %v2812 = vadd.f32 0.0, %v2811
    %v2813 = vpop.f32.mrf.mxu0
    %v2814 = vadd.f32 0.0, %v2813
    %v2815 = vpop.f32.mrf.mxu0
    %v2816 = vpop.f32.mrf.mxu0
    %2817 = vdwg.mxu0
    %v2818 = vadd.f32 %v2768, %v2812
    %v2819 = vadd.f32 %v2769, %v2814
    %v2820 = vld [vmem:[%s1108 + $0x10] sm:$0xff]
    %v2821 = vld [vmem:[%s1108 + $0x18] sm:$0xff]
    %v2822 = vpack.c.bf16 %v2755, %v2755
    %2824 = vrot.lane.b32.xlu0 %v2822, 64
    %v2825 = vpop.permute.xlu0 %2824
    %v2827 = vsel %vm104, %v2825, 0
    %2829 = vmatprep.subr.bf16.mxu0 0
    %2830 = vmatpush1.bf16.msra.mxu0 0
    %2831 = vmatprep.subr.bf16.mxu0 0
    %2832 = vmatpush1.bf16.msra.mxu0 0
    %2833 = vmatprep.subr.bf16.mxu0 0
    %2834 = vmatpush1.bf16.msra.mxu0 0
    %2835 = vmatprep.subr.bf16.mxu0 0
    %2836 = vmatpush1.bf16.msra.mxu0 0
    %2837 = vmatprep.subr.bf16.mxu0 %v2363
    %2838 = vmatpush1.bf16.msra.mxu0 %v2362
    %2839 = vmatprep.subr.bf16.mxu0 %v2361
    %2840 = vmatpush1.bf16.msra.mxu0 %v2360
    %2841 = vmatprep.subr.bf16.mxu0 %v2359
    %2842 = vmatpush1.bf16.msra.mxu0 %v2358
    %2843 = vmatprep.subr.bf16.mxu0 %v2357
    %2844 = vmatpush1.bf16.msra.mxu0 %v2356
    %2845 = vmatprep.subr.bf16.mxu0 0
    %2846 = vmatpush2.bf16.msra.mxu0 0
    %2847 = vmatprep.subr.bf16.mxu0 0
    %2848 = vmatpush2.bf16.msra.mxu0 0
    %2849 = vmatprep.subr.bf16.mxu0 0
    %2850 = vmatpush2.bf16.msra.mxu0 0
    %2851 = vmatprep.subr.bf16.mxu0 0
    %2852 = vmatpush2.bf16.msra.mxu0 0
    %2853 = vmatprep.subr.bf16.mxu0 0
    %2854 = vmatpush2.bf16.msra.mxu0 0
    %2855 = vmatprep.subr.bf16.mxu0 0
    %2856 = vmatpush2.bf16.msra.mxu0 0
    %2857 = vmatprep.subr.bf16.mxu0 0
    %2858 = vmatpush2.bf16.msra.mxu0 0
    %2859 = vmatprep.subr.bf16.mxu0 0
    %2860 = vmatpush2.bf16.msra.mxu0 0
    %2861 = vmatprep.mubr.bf16.mxu0 0
    %2862 = vmatmul.mubr.bf16.gmra.mxu0 %v2827
    %v2863 = vpop.f32.mrf.mxu0
    %v2864 = vadd.f32 0.0, %v2863
    %v2865 = vpop.f32.mrf.mxu0
    %v2866 = vadd.f32 0.0, %v2865
    %v2867 = vpop.f32.mrf.mxu0
    %v2868 = vpop.f32.mrf.mxu0
    %2869 = vdwg.mxu0
    %v2870 = vadd.f32 %v2820, %v2864
    %v2871 = vadd.f32 %v2821, %v2866
    %v2872 = vmul.f32 %v2818, 0.5
    %v2873 = vtanh.pop %v2872
    %v2874 = vadd.f32 %v2873, 1.0
    %v2875 = vmul.f32 %v2874, 0.5
    %v2876 = vmul.f32 %v2870, 0.5
    %v2877 = vtanh.pop %v2876
    %v2878 = vadd.f32 %v2877, 1.0
    %v2879 = vmul.f32 %v2878, 0.5
    %v2880 = vtanh.pop %v2819
    %v2881 = vtanh.pop %v2871
    %v2882 = vmul.f32 %v2819, 0.5
    %v2883 = vtanh.pop %v2882
    %v2884 = vadd.f32 %v2883, 1.0
    %v2885 = vmul.f32 %v2884, 0.5
    %v2886 = vmul.f32 %v2871, 0.5
    %v2887 = vtanh.pop %v2886
    %v2888 = vadd.f32 %v2887, 1.0
    %v2889 = vmul.f32 %v2888, 0.5
    %v2890 = vmul.f32 %v2875, %v2744
    %v2891 = vmul.f32 %v2875, %v2880
    %2893 = vrot.lane.b32.xlu0 %v2891, 64
    %v2894 = vpop.permute.xlu0 %2893
    %v2896 = vadd.f32 %v2890, %v2894
    %v2897 = vmul.f32 %v2879, %v2751
    %v2898 = vmul.f32 %v2879, %v2881
    %2900 = vrot.lane.b32.xlu0 %v2898, 64
    %v2901 = vpop.permute.xlu0 %2900
    %v2903 = vadd.f32 %v2897, %v2901
    %v2904 = vtanh.pop %v2896
    %v2905 = vmul.f32 %v2885, %v2904
    %v2906 = vtanh.pop %v2903
    %v2907 = vmul.f32 %v2889, %v2906
    %v2908 = vld [vmem:[%s1209] sm:$0xff]
    %v2909 = vmul.f32 %v2452, %v2905
    %2911 = vrot.lane.b32.xlu0 %v2909, 64
    %v2912 = vpop.permute.xlu0 %2911
    %v2914 = vadd.f32 %v2908, %v2912
    %2915 = vst.msk [vmem:[%s1209] sm:$0xff] %vm104, %v2914
    %v2916 = vld [vmem:[%s1218] sm:$0xff]
    %v2917 = vmul.f32 %v2452, %v2907
    %v2918 = vadd.f32 %v2916, %v2917
    %2919 = vst.msk [vmem:[%s1218] sm:$0xff] %vm145, %v2918
    %v2920 = vld [vmem:[%s1108] sm:$0xff]
    %v2921 = vld [vmem:[%s1108 + $0x8] sm:$0xff]
    %v2922 = vpack.c.bf16 %v2905, %v2905
    %2924 = vrot.lane.b32.xlu0 %v2922, 64
    %v2925 = vpop.permute.xlu0 %2924
    %v2927 = vsel %vm104, %v2925, 0
    %2929 = vmatprep.subr.bf16.mxu0 0
    %2930 = vmatpush1.bf16.msra.mxu0 0
    %2931 = vmatprep.subr.bf16.mxu0 0
    %2932 = vmatpush1.bf16.msra.mxu0 0
    %2933 = vmatprep.subr.bf16.mxu0 0
    %2934 = vmatpush1.bf16.msra.mxu0 0
    %2935 = vmatprep.subr.bf16.mxu0 0
    %2936 = vmatpush1.bf16.msra.mxu0 0
    %2937 = vmatprep.subr.bf16.mxu0 %v2278
    %2938 = vmatpush1.bf16.msra.mxu0 %v2277
    %2939 = vmatprep.subr.bf16.mxu0 %v2276
    %2940 = vmatpush1.bf16.msra.mxu0 %v2275
    %2941 = vmatprep.subr.bf16.mxu0 %v2274
    %2942 = vmatpush1.bf16.msra.mxu0 %v2273
    %2943 = vmatprep.subr.bf16.mxu0 %v2272
    %2944 = vmatpush1.bf16.msra.mxu0 %v2271
    %2945 = vmatprep.subr.bf16.mxu0 0
    %2946 = vmatpush2.bf16.msra.mxu0 0
    %2947 = vmatprep.subr.bf16.mxu0 0
    %2948 = vmatpush2.bf16.msra.mxu0 0
    %2949 = vmatprep.subr.bf16.mxu0 0
    %2950 = vmatpush2.bf16.msra.mxu0 0
    %2951 = vmatprep.subr.bf16.mxu0 0
    %2952 = vmatpush2.bf16.msra.mxu0 0
    %2953 = vmatprep.subr.bf16.mxu0 0
    %2954 = vmatpush2.bf16.msra.mxu0 0
    %2955 = vmatprep.subr.bf16.mxu0 0
    %2956 = vmatpush2.bf16.msra.mxu0 0
    %2957 = vmatprep.subr.bf16.mxu0 0
    %2958 = vmatpush2.bf16.msra.mxu0 0
    %2959 = vmatprep.subr.bf16.mxu0 0
    %2960 = vmatpush2.bf16.msra.mxu0 0
    %2961 = vmatprep.mubr.bf16.mxu0 0
    %2962 = vmatmul.mubr.bf16.gmra.mxu0 %v2927
    %v2963 = vpop.f32.mrf.mxu0
    %v2964 = vadd.f32 0.0, %v2963
    %v2965 = vpop.f32.mrf.mxu0
    %v2966 = vadd.f32 0.0, %v2965
    %v2967 = vpop.f32.mrf.mxu0
    %v2968 = vpop.f32.mrf.mxu0
    %2969 = vdwg.mxu0
    %v2970 = vadd.f32 %v2920, %v2964
    %v2971 = vadd.f32 %v2921, %v2966
    %v2972 = vld [vmem:[%s1055 + $0x10] sm:$0xff]
    %v2973 = vld [vmem:[%s1055 + $0x18] sm:$0xff]
    %v2974 = vpack.c.bf16 %v2907, %v2907
    %2976 = vrot.lane.b32.xlu0 %v2974, 64
    %v2977 = vpop.permute.xlu0 %2976
    %v2979 = vsel %vm104, %v2977, 0
    %2981 = vmatprep.subr.bf16.mxu0 0
    %2982 = vmatpush1.bf16.msra.mxu0 0
    %2983 = vmatprep.subr.bf16.mxu0 0
    %2984 = vmatpush1.bf16.msra.mxu0 0
    %2985 = vmatprep.subr.bf16.mxu0 0
    %2986 = vmatpush1.bf16.msra.mxu0 0
    %2987 = vmatprep.subr.bf16.mxu0 0
    %2988 = vmatpush1.bf16.msra.mxu0 0
    %2989 = vmatprep.subr.bf16.mxu0 %v2363
    %2990 = vmatpush1.bf16.msra.mxu0 %v2362
    %2991 = vmatprep.subr.bf16.mxu0 %v2361
    %2992 = vmatpush1.bf16.msra.mxu0 %v2360
    %2993 = vmatprep.subr.bf16.mxu0 %v2359
    %2994 = vmatpush1.bf16.msra.mxu0 %v2358
    %2995 = vmatprep.subr.bf16.mxu0 %v2357
    %2996 = vmatpush1.bf16.msra.mxu0 %v2356
    %2997 = vmatprep.subr.bf16.mxu0 0
    %2998 = vmatpush2.bf16.msra.mxu0 0
    %2999 = vmatprep.subr.bf16.mxu0 0
    %3000 = vmatpush2.bf16.msra.mxu0 0
    %3001 = vmatprep.subr.bf16.mxu0 0
    %3002 = vmatpush2.bf16.msra.mxu0 0
    %3003 = vmatprep.subr.bf16.mxu0 0
    %3004 = vmatpush2.bf16.msra.mxu0 0
    %3005 = vmatprep.subr.bf16.mxu0 0
    %3006 = vmatpush2.bf16.msra.mxu0 0
    %3007 = vmatprep.subr.bf16.mxu0 0
    %3008 = vmatpush2.bf16.msra.mxu0 0
    %3009 = vmatprep.subr.bf16.mxu0 0
    %3010 = vmatpush2.bf16.msra.mxu0 0
    %3011 = vmatprep.subr.bf16.mxu0 0
    %3012 = vmatpush2.bf16.msra.mxu0 0
    %3013 = vmatprep.mubr.bf16.mxu0 0
    %3014 = vmatmul.mubr.bf16.gmra.mxu0 %v2979
    %v3015 = vpop.f32.mrf.mxu0
    %v3016 = vadd.f32 0.0, %v3015
    %v3017 = vpop.f32.mrf.mxu0
    %v3018 = vadd.f32 0.0, %v3017
    %v3019 = vpop.f32.mrf.mxu0
    %v3020 = vpop.f32.mrf.mxu0
    %3021 = vdwg.mxu0
    %v3022 = vadd.f32 %v2972, %v3016
    %v3023 = vadd.f32 %v2973, %v3018
    %v3024 = vmul.f32 %v2970, 0.5
    %v3025 = vtanh.pop %v3024
    %v3026 = vadd.f32 %v3025, 1.0
    %v3027 = vmul.f32 %v3026, 0.5
    %v3028 = vmul.f32 %v3022, 0.5
    %v3029 = vtanh.pop %v3028
    %v3030 = vadd.f32 %v3029, 1.0
    %v3031 = vmul.f32 %v3030, 0.5
    %v3032 = vtanh.pop %v2971
    %v3033 = vtanh.pop %v3023
    %v3034 = vmul.f32 %v2971, 0.5
    %v3035 = vtanh.pop %v3034
    %v3036 = vadd.f32 %v3035, 1.0
    %v3037 = vmul.f32 %v3036, 0.5
    %v3038 = vmul.f32 %v3023, 0.5
    %v3039 = vtanh.pop %v3038
    %v3040 = vadd.f32 %v3039, 1.0
    %v3041 = vmul.f32 %v3040, 0.5
    %v3042 = vmul.f32 %v3027, %v2896
    %v3043 = vmul.f32 %v3027, %v3032
    %3045 = vrot.lane.b32.xlu0 %v3043, 64
    %v3046 = vpop.permute.xlu0 %3045
    %v3048 = vadd.f32 %v3042, %v3046
    %v3049 = vmul.f32 %v3031, %v2903
    %v3050 = vmul.f32 %v3031, %v3033
    %3052 = vrot.lane.b32.xlu0 %v3050, 64
    %v3053 = vpop.permute.xlu0 %3052
    %v3055 = vadd.f32 %v3049, %v3053
    %v3056 = vtanh.pop %v3048
    %v3057 = vmul.f32 %v3037, %v3056
    %v3058 = vtanh.pop %v3055
    %v3059 = vmul.f32 %v3041, %v3058
    %v3060 = vld [vmem:[%s1218] sm:$0xff]
    %v3061 = vmul.f32 %v2452, %v3057
    %3063 = vrot.lane.b32.xlu0 %v3061, 64
    %v3064 = vpop.permute.xlu0 %3063
    %v3066 = vadd.f32 %v3060, %v3064
    %3067 = vst.msk [vmem:[%s1218] sm:$0xff] %vm104, %v3066
    %v3068 = vld [vmem:[%s1209] sm:$0xff]
    %v3069 = vmul.f32 %v2452, %v3059
    %v3070 = vadd.f32 %v3068, %v3069
    %3071 = vst.msk [vmem:[%s1209] sm:$0xff] %vm145, %v3070
    %v3072 = vld [vmem:[%s940] sm:$0xff]
    %v3073 = vld [vmem:[%s940 + $0x8] sm:$0xff]
    %v3074 = vpack.c.bf16 %v3057, %v3057
    %3076 = vrot.lane.b32.xlu0 %v3074, 64
    %v3077 = vpop.permute.xlu0 %3076
    %v3079 = vsel %vm104, %v3077, 0
    %3081 = vmatprep.subr.bf16.mxu0 0
    %3082 = vmatpush1.bf16.msra.mxu0 0
    %3083 = vmatprep.subr.bf16.mxu0 0
    %3084 = vmatpush1.bf16.msra.mxu0 0
    %3085 = vmatprep.subr.bf16.mxu0 0
    %3086 = vmatpush1.bf16.msra.mxu0 0
    %3087 = vmatprep.subr.bf16.mxu0 0
    %3088 = vmatpush1.bf16.msra.mxu0 0
    %3089 = vmatprep.subr.bf16.mxu0 %v2278
    %3090 = vmatpush1.bf16.msra.mxu0 %v2277
    %3091 = vmatprep.subr.bf16.mxu0 %v2276
    %3092 = vmatpush1.bf16.msra.mxu0 %v2275
    %3093 = vmatprep.subr.bf16.mxu0 %v2274
    %3094 = vmatpush1.bf16.msra.mxu0 %v2273
    %3095 = vmatprep.subr.bf16.mxu0 %v2272
    %3096 = vmatpush1.bf16.msra.mxu0 %v2271
    %3097 = vmatprep.subr.bf16.mxu0 0
    %3098 = vmatpush2.bf16.msra.mxu0 0
    %3099 = vmatprep.subr.bf16.mxu0 0
    %3100 = vmatpush2.bf16.msra.mxu0 0
    %3101 = vmatprep.subr.bf16.mxu0 0
    %3102 = vmatpush2.bf16.msra.mxu0 0
    %3103 = vmatprep.subr.bf16.mxu0 0
    %3104 = vmatpush2.bf16.msra.mxu0 0
    %3105 = vmatprep.subr.bf16.mxu0 0
    %3106 = vmatpush2.bf16.msra.mxu0 0
    %3107 = vmatprep.subr.bf16.mxu0 0
    %3108 = vmatpush2.bf16.msra.mxu0 0
    %3109 = vmatprep.subr.bf16.mxu0 0
    %3110 = vmatpush2.bf16.msra.mxu0 0
    %3111 = vmatprep.subr.bf16.mxu0 0
    %3112 = vmatpush2.bf16.msra.mxu0 0
    %3113 = vmatprep.mubr.bf16.mxu0 0
    %3114 = vmatmul.mubr.bf16.gmra.mxu0 %v3079
    %v3115 = vpop.f32.mrf.mxu0
    %v3116 = vadd.f32 0.0, %v3115
    %v3117 = vpop.f32.mrf.mxu0
    %v3118 = vadd.f32 0.0, %v3117
    %v3119 = vpop.f32.mrf.mxu0
    %v3120 = vpop.f32.mrf.mxu0
    %3121 = vdwg.mxu0
    %v3122 = vadd.f32 %v3072, %v3116
    %v3123 = vadd.f32 %v3073, %v3118
    %v3124 = vld [vmem:[%s887 + $0x10] sm:$0xff]
    %v3125 = vld [vmem:[%s887 + $0x18] sm:$0xff]
    %v3126 = vpack.c.bf16 %v3059, %v3059
    %3128 = vrot.lane.b32.xlu0 %v3126, 64
    %v3129 = vpop.permute.xlu0 %3128
    %v3131 = vsel %vm104, %v3129, 0
    %3133 = vmatprep.subr.bf16.mxu0 0
    %3134 = vmatpush1.bf16.msra.mxu0 0
    %3135 = vmatprep.subr.bf16.mxu0 0
    %3136 = vmatpush1.bf16.msra.mxu0 0
    %3137 = vmatprep.subr.bf16.mxu0 0
    %3138 = vmatpush1.bf16.msra.mxu0 0
    %3139 = vmatprep.subr.bf16.mxu0 0
    %3140 = vmatpush1.bf16.msra.mxu0 0
    %3141 = vmatprep.subr.bf16.mxu0 %v2363
    %3142 = vmatpush1.bf16.msra.mxu0 %v2362
    %3143 = vmatprep.subr.bf16.mxu0 %v2361
    %3144 = vmatpush1.bf16.msra.mxu0 %v2360
    %3145 = vmatprep.subr.bf16.mxu0 %v2359
    %3146 = vmatpush1.bf16.msra.mxu0 %v2358
    %3147 = vmatprep.subr.bf16.mxu0 %v2357
    %3148 = vmatpush1.bf16.msra.mxu0 %v2356
    %3149 = vmatprep.subr.bf16.mxu0 0
    %3150 = vmatpush2.bf16.msra.mxu0 0
    %3151 = vmatprep.subr.bf16.mxu0 0
    %3152 = vmatpush2.bf16.msra.mxu0 0
    %3153 = vmatprep.subr.bf16.mxu0 0
    %3154 = vmatpush2.bf16.msra.mxu0 0
    %3155 = vmatprep.subr.bf16.mxu0 0
    %3156 = vmatpush2.bf16.msra.mxu0 0
    %3157 = vmatprep.subr.bf16.mxu0 0
    %3158 = vmatpush2.bf16.msra.mxu0 0
    %3159 = vmatprep.subr.bf16.mxu0 0
    %3160 = vmatpush2.bf16.msra.mxu0 0
    %3161 = vmatprep.subr.bf16.mxu0 0
    %3162 = vmatpush2.bf16.msra.mxu0 0
    %3163 = vmatprep.subr.bf16.mxu0 0
    %3164 = vmatpush2.bf16.msra.mxu0 0
    %3165 = vmatprep.mubr.bf16.mxu0 0
    %3166 = vmatmul.mubr.bf16.gmra.mxu0 %v3131
    %v3167 = vpop.f32.mrf.mxu0
    %v3168 = vadd.f32 0.0, %v3167
    %v3169 = vpop.f32.mrf.mxu0
    %v3170 = vadd.f32 0.0, %v3169
    %v3171 = vpop.f32.mrf.mxu0
    %v3172 = vpop.f32.mrf.mxu0
    %3173 = vdwg.mxu0
    %v3174 = vadd.f32 %v3124, %v3168
    %v3175 = vadd.f32 %v3125, %v3170
    %v3176 = vmul.f32 %v3122, 0.5
    %v3177 = vtanh.pop %v3176
    %v3178 = vadd.f32 %v3177, 1.0
    %v3179 = vmul.f32 %v3178, 0.5
    %v3180 = vmul.f32 %v3174, 0.5
    %v3181 = vtanh.pop %v3180
    %v3182 = vadd.f32 %v3181, 1.0
    %v3183 = vmul.f32 %v3182, 0.5
    %v3184 = vtanh.pop %v3123
    %v3185 = vtanh.pop %v3175
    %v3186 = vmul.f32 %v3123, 0.5
    %v3187 = vtanh.pop %v3186
    %v3188 = vadd.f32 %v3187, 1.0
    %v3189 = vmul.f32 %v3188, 0.5
    %v3190 = vmul.f32 %v3175, 0.5
    %v3191 = vtanh.pop %v3190
    %v3192 = vadd.f32 %v3191, 1.0
    %v3193 = vmul.f32 %v3192, 0.5
    %v3194 = vmul.f32 %v3179, %v3048
    %v3195 = vmul.f32 %v3179, %v3184
    %3197 = vrot.lane.b32.xlu0 %v3195, 64
    %v3198 = vpop.permute.xlu0 %3197
    %v3200 = vadd.f32 %v3194, %v3198
    %v3201 = vmul.f32 %v3183, %v3055
    %v3202 = vmul.f32 %v3183, %v3185
    %3204 = vrot.lane.b32.xlu0 %v3202, 64
    %v3205 = vpop.permute.xlu0 %3204
    %v3207 = vadd.f32 %v3201, %v3205
    %v3208 = vtanh.pop %v3200
    %v3209 = vmul.f32 %v3189, %v3208
    %v3210 = vtanh.pop %v3207
    %v3211 = vmul.f32 %v3193, %v3210
    %v3212 = vld [vmem:[%s1050] sm:$0xff]
    %v3213 = vmul.f32 %v2452, %v3209
    %3215 = vrot.lane.b32.xlu0 %v3213, 64
    %v3216 = vpop.permute.xlu0 %3215
    %v3218 = vadd.f32 %v3212, %v3216
    %3219 = vst.msk [vmem:[%s1050] sm:$0xff] %vm104, %v3218
    %v3220 = vld [vmem:[%s1041] sm:$0xff]
    %v3221 = vmul.f32 %v2452, %v3211
    %v3222 = vadd.f32 %v3220, %v3221
    %3223 = vst.msk [vmem:[%s1041] sm:$0xff] %vm145, %v3222
    %v3224 = vld [vmem:[%s772] sm:$0xff]
    %v3225 = vld [vmem:[%s772 + $0x8] sm:$0xff]
    %v3226 = vpack.c.bf16 %v3209, %v3209
    %3228 = vrot.lane.b32.xlu0 %v3226, 64
    %v3229 = vpop.permute.xlu0 %3228
    %v3231 = vsel %vm104, %v3229, 0
    %3233 = vmatprep.subr.bf16.mxu0 0
    %3234 = vmatpush1.bf16.msra.mxu0 0
    %3235 = vmatprep.subr.bf16.mxu0 0
    %3236 = vmatpush1.bf16.msra.mxu0 0
    %3237 = vmatprep.subr.bf16.mxu0 0
    %3238 = vmatpush1.bf16.msra.mxu0 0
    %3239 = vmatprep.subr.bf16.mxu0 0
    %3240 = vmatpush1.bf16.msra.mxu0 0
    %3241 = vmatprep.subr.bf16.mxu0 %v2278
    %3242 = vmatpush1.bf16.msra.mxu0 %v2277
    %3243 = vmatprep.subr.bf16.mxu0 %v2276
    %3244 = vmatpush1.bf16.msra.mxu0 %v2275
    %3245 = vmatprep.subr.bf16.mxu0 %v2274
    %3246 = vmatpush1.bf16.msra.mxu0 %v2273
    %3247 = vmatprep.subr.bf16.mxu0 %v2272
    %3248 = vmatpush1.bf16.msra.mxu0 %v2271
    %3249 = vmatprep.subr.bf16.mxu0 0
    %3250 = vmatpush2.bf16.msra.mxu0 0
    %3251 = vmatprep.subr.bf16.mxu0 0
    %3252 = vmatpush2.bf16.msra.mxu0 0
    %3253 = vmatprep.subr.bf16.mxu0 0
    %3254 = vmatpush2.bf16.msra.mxu0 0
    %3255 = vmatprep.subr.bf16.mxu0 0
    %3256 = vmatpush2.bf16.msra.mxu0 0
    %3257 = vmatprep.subr.bf16.mxu0 0
    %3258 = vmatpush2.bf16.msra.mxu0 0
    %3259 = vmatprep.subr.bf16.mxu0 0
    %3260 = vmatpush2.bf16.msra.mxu0 0
    %3261 = vmatprep.subr.bf16.mxu0 0
    %3262 = vmatpush2.bf16.msra.mxu0 0
    %3263 = vmatprep.subr.bf16.mxu0 0
    %3264 = vmatpush2.bf16.msra.mxu0 0
    %3265 = vmatprep.mubr.bf16.mxu0 0
    %3266 = vmatmul.mubr.bf16.gmra.mxu0 %v3231
    %v3267 = vpop.f32.mrf.mxu0
    %v3268 = vadd.f32 0.0, %v3267
    %v3269 = vpop.f32.mrf.mxu0
    %v3270 = vadd.f32 0.0, %v3269
    %v3271 = vpop.f32.mrf.mxu0
    %v3272 = vpop.f32.mrf.mxu0
    %3273 = vdwg.mxu0
    %v3274 = vadd.f32 %v3224, %v3268
    %v3275 = vadd.f32 %v3225, %v3270
    %v3276 = vld [vmem:[%s719 + $0x10] sm:$0xff]
    %v3277 = vld [vmem:[%s719 + $0x18] sm:$0xff]
    %v3278 = vpack.c.bf16 %v3211, %v3211
    %3280 = vrot.lane.b32.xlu0 %v3278, 64
    %v3281 = vpop.permute.xlu0 %3280
    %v3283 = vsel %vm104, %v3281, 0
    %3285 = vmatprep.subr.bf16.mxu0 0
    %3286 = vmatpush1.bf16.msra.mxu0 0
    %3287 = vmatprep.subr.bf16.mxu0 0
    %3288 = vmatpush1.bf16.msra.mxu0 0
    %3289 = vmatprep.subr.bf16.mxu0 0
    %3290 = vmatpush1.bf16.msra.mxu0 0
    %3291 = vmatprep.subr.bf16.mxu0 0
    %3292 = vmatpush1.bf16.msra.mxu0 0
    %3293 = vmatprep.subr.bf16.mxu0 %v2363
    %3294 = vmatpush1.bf16.msra.mxu0 %v2362
    %3295 = vmatprep.subr.bf16.mxu0 %v2361
    %3296 = vmatpush1.bf16.msra.mxu0 %v2360
    %3297 = vmatprep.subr.bf16.mxu0 %v2359
    %3298 = vmatpush1.bf16.msra.mxu0 %v2358
    %3299 = vmatprep.subr.bf16.mxu0 %v2357
    %3300 = vmatpush1.bf16.msra.mxu0 %v2356
    %3301 = vmatprep.subr.bf16.mxu0 0
    %3302 = vmatpush2.bf16.msra.mxu0 0
    %3303 = vmatprep.subr.bf16.mxu0 0
    %3304 = vmatpush2.bf16.msra.mxu0 0
    %3305 = vmatprep.subr.bf16.mxu0 0
    %3306 = vmatpush2.bf16.msra.mxu0 0
    %3307 = vmatprep.subr.bf16.mxu0 0
    %3308 = vmatpush2.bf16.msra.mxu0 0
    %3309 = vmatprep.subr.bf16.mxu0 0
    %3310 = vmatpush2.bf16.msra.mxu0 0
    %3311 = vmatprep.subr.bf16.mxu0 0
    %3312 = vmatpush2.bf16.msra.mxu0 0
    %3313 = vmatprep.subr.bf16.mxu0 0
    %3314 = vmatpush2.bf16.msra.mxu0 0
    %3315 = vmatprep.subr.bf16.mxu0 0
    %3316 = vmatpush2.bf16.msra.mxu0 0
    %3317 = vmatprep.mubr.bf16.mxu0 0
    %3318 = vmatmul.mubr.bf16.gmra.mxu0 %v3283
    %v3319 = vpop.f32.mrf.mxu0
    %v3320 = vadd.f32 0.0, %v3319
    %v3321 = vpop.f32.mrf.mxu0
    %v3322 = vadd.f32 0.0, %v3321
    %v3323 = vpop.f32.mrf.mxu0
    %v3324 = vpop.f32.mrf.mxu0
    %3325 = vdwg.mxu0
    %v3326 = vadd.f32 %v3276, %v3320
    %v3327 = vadd.f32 %v3277, %v3322
    %v3328 = vmul.f32 %v3274, 0.5
    %v3329 = vtanh.pop %v3328
    %v3330 = vadd.f32 %v3329, 1.0
    %v3331 = vmul.f32 %v3330, 0.5
    %v3332 = vmul.f32 %v3326, 0.5
    %v3333 = vtanh.pop %v3332
    %v3334 = vadd.f32 %v3333, 1.0
    %v3335 = vmul.f32 %v3334, 0.5
    %v3336 = vtanh.pop %v3275
    %v3337 = vtanh.pop %v3327
    %v3338 = vmul.f32 %v3275, 0.5
    %v3339 = vtanh.pop %v3338
    %v3340 = vadd.f32 %v3339, 1.0
    %v3341 = vmul.f32 %v3340, 0.5
    %v3342 = vmul.f32 %v3327, 0.5
    %v3343 = vtanh.pop %v3342
    %v3344 = vadd.f32 %v3343, 1.0
    %v3345 = vmul.f32 %v3344, 0.5
    %v3346 = vmul.f32 %v3331, %v3200
    %v3347 = vmul.f32 %v3331, %v3336
    %3349 = vrot.lane.b32.xlu0 %v3347, 64
    %v3350 = vpop.permute.xlu0 %3349
    %v3352 = vadd.f32 %v3346, %v3350
    %v3353 = vmul.f32 %v3335, %v3207
    %v3354 = vmul.f32 %v3335, %v3337
    %3356 = vrot.lane.b32.xlu0 %v3354, 64
    %v3357 = vpop.permute.xlu0 %3356
    %v3359 = vadd.f32 %v3353, %v3357
    %v3360 = vtanh.pop %v3352
    %v3361 = vmul.f32 %v3341, %v3360
    %v3362 = vtanh.pop %v3359
    %v3363 = vmul.f32 %v3345, %v3362
    %v3364 = vld [vmem:[%s882] sm:$0xff]
    %v3365 = vmul.f32 %v2452, %v3361
    %3367 = vrot.lane.b32.xlu0 %v3365, 64
    %v3368 = vpop.permute.xlu0 %3367
    %v3370 = vadd.f32 %v3364, %v3368
    %3371 = vst.msk [vmem:[%s882] sm:$0xff] %vm104, %v3370
    %v3372 = vld [vmem:[%s873] sm:$0xff]
    %v3373 = vmul.f32 %v2452, %v3363
    %v3374 = vadd.f32 %v3372, %v3373
    %3375 = vst.msk [vmem:[%s873] sm:$0xff] %vm145, %v3374
    %v3376 = vld [vmem:[%s572] sm:$0xff]
    %v3377 = vld [vmem:[%s572 + $0x8] sm:$0xff]
    %v3378 = vpack.c.bf16 %v3361, %v3361
    %3380 = vrot.lane.b32.xlu0 %v3378, 64
    %v3381 = vpop.permute.xlu0 %3380
    %v3383 = vsel %vm104, %v3381, 0
    %3385 = vmatprep.subr.bf16.mxu0 0
    %3386 = vmatpush1.bf16.msra.mxu0 0
    %3387 = vmatprep.subr.bf16.mxu0 0
    %3388 = vmatpush1.bf16.msra.mxu0 0
    %3389 = vmatprep.subr.bf16.mxu0 0
    %3390 = vmatpush1.bf16.msra.mxu0 0
    %3391 = vmatprep.subr.bf16.mxu0 0
    %3392 = vmatpush1.bf16.msra.mxu0 0
    %3393 = vmatprep.subr.bf16.mxu0 %v2278
    %3394 = vmatpush1.bf16.msra.mxu0 %v2277
    %3395 = vmatprep.subr.bf16.mxu0 %v2276
    %3396 = vmatpush1.bf16.msra.mxu0 %v2275
    %3397 = vmatprep.subr.bf16.mxu0 %v2274
    %3398 = vmatpush1.bf16.msra.mxu0 %v2273
    %3399 = vmatprep.subr.bf16.mxu0 %v2272
    %3400 = vmatpush1.bf16.msra.mxu0 %v2271
    %3401 = vmatprep.subr.bf16.mxu0 0
    %3402 = vmatpush2.bf16.msra.mxu0 0
    %3403 = vmatprep.subr.bf16.mxu0 0
    %3404 = vmatpush2.bf16.msra.mxu0 0
    %3405 = vmatprep.subr.bf16.mxu0 0
    %3406 = vmatpush2.bf16.msra.mxu0 0
    %3407 = vmatprep.subr.bf16.mxu0 0
    %3408 = vmatpush2.bf16.msra.mxu0 0
    %3409 = vmatprep.subr.bf16.mxu0 0
    %3410 = vmatpush2.bf16.msra.mxu0 0
    %3411 = vmatprep.subr.bf16.mxu0 0
    %3412 = vmatpush2.bf16.msra.mxu0 0
    %3413 = vmatprep.subr.bf16.mxu0 0
    %3414 = vmatpush2.bf16.msra.mxu0 0
    %3415 = vmatprep.subr.bf16.mxu0 0
    %3416 = vmatpush2.bf16.msra.mxu0 0
    %3417 = vmatprep.mubr.bf16.mxu0 0
    %3418 = vmatmul.mubr.bf16.gmra.mxu0 %v3383
    %v3419 = vpop.f32.mrf.mxu0
    %v3420 = vadd.f32 0.0, %v3419
    %v3421 = vpop.f32.mrf.mxu0
    %v3422 = vadd.f32 0.0, %v3421
    %v3423 = vpop.f32.mrf.mxu0
    %v3424 = vpop.f32.mrf.mxu0
    %3425 = vdwg.mxu0
    %v3426 = vadd.f32 %v3376, %v3420
    %v3427 = vadd.f32 %v3377, %v3422
    %v3428 = vld [vmem:[#allocation2 + $0x10] sm:$0xff]
    %v3429 = vld [vmem:[#allocation2 + $0x18] sm:$0xff]
    %v3430 = vpack.c.bf16 %v3363, %v3363
    %3432 = vrot.lane.b32.xlu0 %v3430, 64
    %v3433 = vpop.permute.xlu0 %3432
    %v3435 = vsel %vm104, %v3433, 0
    %3437 = vmatprep.subr.bf16.mxu0 0
    %3438 = vmatpush1.bf16.msra.mxu0 0
    %3439 = vmatprep.subr.bf16.mxu0 0
    %3440 = vmatpush1.bf16.msra.mxu0 0
    %3441 = vmatprep.subr.bf16.mxu0 0
    %3442 = vmatpush1.bf16.msra.mxu0 0
    %3443 = vmatprep.subr.bf16.mxu0 0
    %3444 = vmatpush1.bf16.msra.mxu0 0
    %3445 = vmatprep.subr.bf16.mxu0 %v2363
    %3446 = vmatpush1.bf16.msra.mxu0 %v2362
    %3447 = vmatprep.subr.bf16.mxu0 %v2361
    %3448 = vmatpush1.bf16.msra.mxu0 %v2360
    %3449 = vmatprep.subr.bf16.mxu0 %v2359
    %3450 = vmatpush1.bf16.msra.mxu0 %v2358
    %3451 = vmatprep.subr.bf16.mxu0 %v2357
    %3452 = vmatpush1.bf16.msra.mxu0 %v2356
    %3453 = vmatprep.subr.bf16.mxu0 0
    %3454 = vmatpush2.bf16.msra.mxu0 0
    %3455 = vmatprep.subr.bf16.mxu0 0
    %3456 = vmatpush2.bf16.msra.mxu0 0
    %3457 = vmatprep.subr.bf16.mxu0 0
    %3458 = vmatpush2.bf16.msra.mxu0 0
    %3459 = vmatprep.subr.bf16.mxu0 0
    %3460 = vmatpush2.bf16.msra.mxu0 0
    %3461 = vmatprep.subr.bf16.mxu0 0
    %3462 = vmatpush2.bf16.msra.mxu0 0
    %3463 = vmatprep.subr.bf16.mxu0 0
    %3464 = vmatpush2.bf16.msra.mxu0 0
    %3465 = vmatprep.subr.bf16.mxu0 0
    %3466 = vmatpush2.bf16.msra.mxu0 0
    %3467 = vmatprep.subr.bf16.mxu0 0
    %3468 = vmatpush2.bf16.msra.mxu0 0
    %3469 = vmatprep.mubr.bf16.mxu0 0
    %3470 = vmatmul.mubr.bf16.gmra.mxu0 %v3435
    %v3471 = vpop.f32.mrf.mxu0
    %v3472 = vadd.f32 0.0, %v3471
    %v3473 = vpop.f32.mrf.mxu0
    %v3474 = vadd.f32 0.0, %v3473
    %v3475 = vpop.f32.mrf.mxu0
    %v3476 = vpop.f32.mrf.mxu0
    %3477 = vdwg.mxu0
    %v3478 = vadd.f32 %v3428, %v3472
    %v3479 = vadd.f32 %v3429, %v3474
    %v3480 = vmul.f32 %v3426, 0.5
    %v3481 = vtanh.pop %v3480
    %v3482 = vadd.f32 %v3481, 1.0
    %v3483 = vmul.f32 %v3482, 0.5
    %v3484 = vmul.f32 %v3478, 0.5
    %v3485 = vtanh.pop %v3484
    %v3486 = vadd.f32 %v3485, 1.0
    %v3487 = vmul.f32 %v3486, 0.5
    %v3488 = vtanh.pop %v3427
    %v3489 = vtanh.pop %v3479
    %v3490 = vmul.f32 %v3427, 0.5
    %v3491 = vtanh.pop %v3490
    %v3492 = vadd.f32 %v3491, 1.0
    %v3493 = vmul.f32 %v3492, 0.5
    %v3494 = vmul.f32 %v3479, 0.5
    %v3495 = vtanh.pop %v3494
    %v3496 = vadd.f32 %v3495, 1.0
    %v3497 = vmul.f32 %v3496, 0.5
    %v3498 = vmul.f32 %v3483, %v3352
    %v3499 = vmul.f32 %v3483, %v3488
    %3501 = vrot.lane.b32.xlu0 %v3499, 64
    %v3502 = vpop.permute.xlu0 %3501
    %v3504 = vadd.f32 %v3498, %v3502
    %v3505 = vmul.f32 %v3487, %v3359
    %v3506 = vmul.f32 %v3487, %v3489
    %3508 = vrot.lane.b32.xlu0 %v3506, 64
    %v3509 = vpop.permute.xlu0 %3508
    %v3511 = vadd.f32 %v3505, %v3509
    %v3512 = vtanh.pop %v3504
    %v3513 = vmul.f32 %v3493, %v3512
    %v3514 = vtanh.pop %v3511
    %v3515 = vmul.f32 %v3497, %v3514
    %v3516 = vld [vmem:[%s714] sm:$0xff]
    %v3517 = vmul.f32 %v2452, %v3513
    %3519 = vrot.lane.b32.xlu0 %v3517, 64
    %v3520 = vpop.permute.xlu0 %3519
    %v3522 = vadd.f32 %v3516, %v3520
    %3523 = vst.msk [vmem:[%s714] sm:$0xff] %vm104, %v3522
    %v3524 = vld [vmem:[#allocation14] sm:$0xff]
    %v3525 = vmul.f32 %v2452, %v3515
    %v3526 = vadd.f32 %v3524, %v3525
    %3527 = vst.msk [vmem:[#allocation14] sm:$0xff] %vm145, %v3526
    // Predicated region
    $region42: #{tpu_custom_call.1} parent=1 // pred_check
      _
    $region43: #{tpu_custom_call.1} parent=1 // pred_check_branch
      %3529 = sbr.rel (0) target = $region45
    $region44: #{tpu_custom_call.1} parent=1 // pred_region
      %s3531 = ssub.s32 1024, 1024
      %3532 = vsyncadd [#allocation6], %s3531
      %s3533 = sshll.u32 [#allocation14], 4
      %s3534 = int_to_ptr.vmem [resolvable:$true] %s3533
      %3539 = dma.vmem_to_hbm [thread:$0]  %s3534, 1024, %s5, [#allocation6], 128, 128, 8
    $region45: #{tpu_custom_call.1} parent=1 // pred_fallthru
      _
    // Predicated region
    $region46: #{tpu_custom_call.1} parent=1 // pred_check
      _
    $region47: #{tpu_custom_call.1} parent=1 // pred_check_branch
      %3541 = sbr.rel (0) target = $region49
    $region48: #{tpu_custom_call.1} parent=1 // pred_region
      %3542 = dma.done [#allocation6], 1024
    $region49: #{tpu_custom_call.1} parent=1 // pred_fallthru
      _
    %3543 = vsyncpa [#allocation5], 1
    %3544 = vsyncpa [#allocation10], 1
    %3545 = vsyncpa [#allocation13], 1
    %3546 = vsyncpa [#allocation6], 1
    %3547 = vsyncpa [#allocation7], 1

</llo_original>
